<compile_context>
chip_gen: v7x
topology: tpu7x:2x2x1
jax: 0.10.0
libtpu: 0.0.40
codegen_flags: <defaults>
</compile_context>

<pallas_src>
import functools

import jax
import jax.numpy as jnp
from jax.experimental import pallas as pl
from jax.experimental.pallas import tpu as pltpu

_VMEM_LIMIT_BYTES = 48 * 1024 * 1024


# ----------------------------------------------------------------------------
# Pallas kernels
# ----------------------------------------------------------------------------
def _conv_acc(x, w_ref, K, Ho):
    """Lane-packed Toeplitz conv: K accumulated MXU matmuls.

    x: (Hp, Wp*Cin) f32 value; w_ref: (K, Wp*Cin, Wo*Cout) bf16 ref holding the
    width-Toeplitz expansion of the (K, K, Cin, Cout) kernel.
    Returns (Ho, Wo*Cout) f32 -- already lane-dense for the store.
    """
    wo_cout = w_ref.shape[-1]
    acc = jnp.zeros((Ho, wo_cout), jnp.float32)
    for kh in range(K):                                   # K <= 7, unrolled
        lhs = x[kh:kh + Ho, :].astype(jnp.bfloat16)       # sublane slice only
        acc = acc + jnp.dot(lhs, w_ref[kh],
                            preferred_element_type=jnp.float32)
    return acc


def _conv_stats_kernel(*refs, K, Ho, has_prologue):
    """Conv + per-(wo, channel) [sum, sumsq] epilogue (for BatchNorm stats).

    Optional prologue: x <- relu(x * scale + shift) on the lane-packed input,
    used to fuse the previous layer's BN+ReLU into this conv.  Only valid when
    the input was REFLECTION padded (affine+ReLU commutes with reflection,
    not with zero padding).
    """
    if has_prologue:
        x_ref, ps_ref, pb_ref, w_ref, o_ref, stats_ref = refs
    else:
        x_ref, w_ref, o_ref, stats_ref = refs
    x = x_ref[0]                                          # (Hp, Wp*Cin) f32
    if has_prologue:
        x = jnp.maximum(x * ps_ref[...] + pb_ref[...], 0.0)
    acc = _conv_acc(x, w_ref, K, Ho)                      # (Ho, Wo*Cout) f32
    o_ref[0] = acc                                        # lane-dense store
    s1 = jnp.sum(acc, axis=0, keepdims=True)
    s2 = jnp.sum(acc * acc, axis=0, keepdims=True)
    stats_ref[0] = jnp.concatenate([s1, s2], axis=0)      # (2, Wo*Cout)


def _conv_bias_sigmoid_kernel(*refs, K, Ho, has_prologue):
    """Conv + (optional BN+ReLU prologue) + bias + sigmoid (network head)."""
    if has_prologue:
        x_ref, ps_ref, pb_ref, w_ref, b_ref, o_ref = refs
    else:
        x_ref, w_ref, b_ref, o_ref = refs
    x = x_ref[0]
    if has_prologue:
        x = jnp.maximum(x * ps_ref[...] + pb_ref[...], 0.0)
    acc = _conv_acc(x, w_ref, K, Ho) + b_ref[...]
    # sigmoid = 1 / (1 + exp(-x)): exp and approx reciprocal both run on the EUP.
    o_ref[0] = pl.reciprocal(1.0 + jnp.exp(-acc), approx=True)


def _affine_act_kernel(x_ref, scale_ref, shift_ref, *rest, act, has_res):
    """Fused per-channel affine (BN normalize) + optional ReLU + residual add,
    on lane-dense (H, W*C) blocks (scale/shift pre-tiled to W*C on the host)."""
    if has_res:
        res_ref, o_ref = rest
    else:
        (o_ref,) = rest
    y = x_ref[0] * scale_ref[...] + shift_ref[...]
    if act == "relu":
        y = jnp.maximum(y, 0.0)
    if has_res:
        y = y + res_ref[0]
    o_ref[0] = y


# ----------------------------------------------------------------------------
# Pallas wrappers
# ----------------------------------------------------------------------------
def _toeplitz_weight(w, wp):
    """(K, K, Cin, Cout) conv kernel -> (K, Wp*Cin, Wo*Cout) width-Toeplitz
    matrices (bf16) so each kh contributes one lane-dense MXU matmul."""
    k, _, cin, cout = w.shape
    wo = wp - k + 1
    wt = jnp.zeros((k, wp, cin, wo, cout), jnp.float32)
    for off in range(wo):
        wt = wt.at[:, off:off + k, :, off, :].set(w.astype(jnp.float32))
    return wt.reshape(k, wp * cin, wo * cout).astype(jnp.bfloat16)


def _tile_chan(v, reps):
    """(C,) per-channel vector -> (1, reps*C) lane-packed (w-major, c-minor)."""
    return jnp.tile(v.astype(jnp.float32).reshape(-1), reps).reshape(1, -1)


def conv2d_stats(x, w, prologue=None):
    """Valid stride-1 conv (lane-packed) + per-(wo,channel) [sum, sumsq].

    x: (N, Hp, Wp, Cin), w: (K, K, Cin, Cout).
    Returns (y, stats): y (N, Ho, Wo, Cout) f32; stats (N, 2, Wo*Cout) f32 with
    the per-image [sum, sumsq] of y over Ho for each (wo, channel) slot.
    prologue=(scale, shift): relu(x*scale+shift) fused on the input (only valid
    for reflection-padded inputs).
    """
    n, hp, wp, cin = x.shape
    k = w.shape[0]
    cout = w.shape[-1]
    ho, wo = hp - k + 1, wp - k + 1
    wt = _toeplitz_weight(w, wp)
    x2 = x.reshape(n, hp, wp * cin).astype(jnp.float32)

    in_specs = [pl.BlockSpec((1, hp, wp * cin), lambda i: (i, 0, 0))]
    args = [x2]
    if prologue is not None:
        in_specs += [pl.BlockSpec((1, wp * cin), lambda i: (0, 0)),
                     pl.BlockSpec((1, wp * cin), lambda i: (0, 0))]
        args += [_tile_chan(prologue[0], wp), _tile_chan(prologue[1], wp)]
    in_specs.append(pl.BlockSpec((k, wp * cin, wo * cout), lambda i: (0, 0, 0)))
    args.append(wt)

    kernel = functools.partial(_conv_stats_kernel, K=k, Ho=ho,
                               has_prologue=prologue is not None)
    y, stats = pl.pallas_call(
        kernel,
        out_shape=(jax.ShapeDtypeStruct((n, ho, wo * cout), jnp.float32),
                   jax.ShapeDtypeStruct((n, 2, wo * cout), jnp.float32)),
        grid=(n,),
        in_specs=in_specs,
        out_specs=(pl.BlockSpec((1, ho, wo * cout), lambda i: (i, 0, 0)),
                   pl.BlockSpec((1, 2, wo * cout), lambda i: (i, 0, 0))),
        compiler_params=pltpu.CompilerParams(
            dimension_semantics=("parallel",),
            vmem_limit_bytes=_VMEM_LIMIT_BYTES),
    )(*args)
    return y.reshape(n, ho, wo, cout), stats


def conv2d_bias_sigmoid(x, w, b, prologue=None):
    """Valid stride-1 conv with fused (optional BN+ReLU prologue) + bias + sigmoid."""
    n, hp, wp, cin = x.shape
    k = w.shape[0]
    cout = w.shape[-1]
    ho, wo = hp - k + 1, wp - k + 1
    wt = _toeplitz_weight(w, wp)
    x2 = x.reshape(n, hp, wp * cin).astype(jnp.float32)
    b2 = _tile_chan(b, wo)

    in_specs = [pl.BlockSpec((1, hp, wp * cin), lambda i: (i, 0, 0))]
    args = [x2]
    if prologue is not None:
        in_specs += [pl.BlockSpec((1, wp * cin), lambda i: (0, 0)),
                     pl.BlockSpec((1, wp * cin), lambda i: (0, 0))]
        args += [_tile_chan(prologue[0], wp), _tile_chan(prologue[1], wp)]
    in_specs += [pl.BlockSpec((k, wp * cin, wo * cout), lambda i: (0, 0, 0)),
                 pl.BlockSpec((1, wo * cout), lambda i: (0, 0))]
    args += [wt, b2]

    kernel = functools.partial(_conv_bias_sigmoid_kernel, K=k, Ho=ho,
                               has_prologue=prologue is not None)
    y = pl.pallas_call(
        kernel,
        out_shape=jax.ShapeDtypeStruct((n, ho, wo * cout), jnp.float32),
        grid=(n,),
        in_specs=in_specs,
        out_specs=pl.BlockSpec((1, ho, wo * cout), lambda i: (i, 0, 0)),
        compiler_params=pltpu.CompilerParams(
            dimension_semantics=("parallel",),
            vmem_limit_bytes=_VMEM_LIMIT_BYTES),
    )(*args)
    return y.reshape(n, ho, wo, cout)


def affine_act(x, scale, shift, act=None, residual=None):
    """Per-channel affine + optional ReLU + optional residual, lane-dense blocks."""
    n, h, w, c = x.shape
    wc = w * c
    x2 = x.reshape(n, h, wc).astype(jnp.float32)
    in_specs = [pl.BlockSpec((1, h, wc), lambda i: (i, 0, 0)),
                pl.BlockSpec((1, wc), lambda i: (0, 0)),
                pl.BlockSpec((1, wc), lambda i: (0, 0))]
    args = [x2, _tile_chan(scale, w), _tile_chan(shift, w)]
    if residual is not None:
        in_specs.append(pl.BlockSpec((1, h, wc), lambda i: (i, 0, 0)))
        args.append(residual.reshape(n, h, wc).astype(jnp.float32))
    kernel = functools.partial(_affine_act_kernel, act=act,
                               has_res=residual is not None)
    y = pl.pallas_call(
        kernel,
        out_shape=jax.ShapeDtypeStruct((n, h, wc), jnp.float32),
        grid=(n,),
        in_specs=in_specs,
        out_specs=pl.BlockSpec((1, h, wc), lambda i: (i, 0, 0)),
        compiler_params=pltpu.CompilerParams(
            dimension_semantics=("parallel",),
            vmem_limit_bytes=_VMEM_LIMIT_BYTES),
    )(*args)
    return y.reshape(n, h, w, c)


# ----------------------------------------------------------------------------
# JAX glue (padding, space<->depth reindexing, weight rearrangement, BN math)
# ----------------------------------------------------------------------------
def reflect_pad(x, p):
    return jnp.pad(x, ((0, 0), (p, p), (p, p), (0, 0)), mode="reflect")


def zero_pad(x, p):
    return jnp.pad(x, ((0, 0), (p, p), (p, p), (0, 0)))


def space_to_depth2(x):
    """(N, H, W, C) even H, W -> (N, H/2, W/2, 4C); channel order (rh, rw, c)."""
    n, h, w, c = x.shape
    x = x.reshape(n, h // 2, 2, w // 2, 2, c)
    x = jnp.transpose(x, (0, 1, 3, 2, 4, 5))
    return x.reshape(n, h // 2, w // 2, 4 * c)


def depth_to_space2(x, cout):
    """(N, H, W, 4*cout) with channel order (a, b, c) -> (N, 2H, 2W, cout)."""
    n, h, w, _ = x.shape
    x = x.reshape(n, h, w, 2, 2, cout)
    x = jnp.transpose(x, (0, 1, 3, 2, 4, 5))
    return x.reshape(n, 2 * h, 2 * w, cout)


def stride2_conv_weight(w):
    """(3,3,Cin,Cout) stride-2 conv kernel -> (2,2,4*Cin,Cout) stride-1 kernel
    acting on the space-to-depth transform of the zero-padded input."""
    _, _, cin, cout = w.shape
    wp = jnp.pad(w, ((0, 1), (0, 1), (0, 0), (0, 0)))       # (4,4,Cin,Cout)
    wp = wp.reshape(2, 2, 2, 2, cin, cout)                  # (ah, rh, aw, rw, ci, co)
    wp = jnp.transpose(wp, (0, 2, 1, 3, 4, 5))              # (ah, aw, rh, rw, ci, co)
    return wp.reshape(2, 2, 4 * cin, cout)


def convtranspose2_weight(w_t):
    """PyTorch ConvTranspose2d(k=3, s=2, p=1, op=1) weight (Cin, Cout, 3, 3) ->
    (2, 2, Cin, 4*Cout) stride-1 conv kernel over the bottom/right zero-padded
    input, producing the 4 output phases as channel groups in (a, b, co) order."""
    cin, cout = w_t.shape[0], w_t.shape[1]
    taps = {(0, 0): 1, (1, 0): 2, (1, 1): 0}   # (output phase, input delta) -> tap
    w = jnp.zeros((2, 2, cin, 2, 2, cout), w_t.dtype)
    for (a, dh), kh in taps.items():
        for (b, dw), kw in taps.items():
            w = w.at[dh, dw, :, a, b, :].set(w_t[:, :, kh, kw])
    return w.reshape(2, 2, cin, 4 * cout)


def bn_scale_shift(stats, count, gamma, beta, eps=1e-5, phases=1):
    """Fold per-image (2, Wo*C') [sum, sumsq] into BN(train) scale/shift."""
    n = stats.shape[0]
    c_total = phases * gamma.shape[0]
    s = stats.reshape(n, 2, -1, c_total).sum(axis=(0, 2))   # (2, phases*C)
    if phases > 1:
        s = s.reshape(2, phases, -1).sum(axis=1)            # fold phase groups
    mean = s[0] / count
    var = jnp.maximum(s[1] / count - mean * mean, 0.0)       # biased var (train)
    scale = gamma * jax.lax.rsqrt(var + eps)
    shift = beta - mean * scale
    return scale, shift


# ----------------------------------------------------------------------------
# Parameters + forward
# ----------------------------------------------------------------------------
def init_params(key, in_ch, out_ch, ngf, blocks):
    keys = iter(jax.random.split(key, 64))

    def conv_w(k, cin, cout):
        return 0.1 * jax.random.normal(next(keys), (k, k, cin, cout), jnp.float32)

    p = {}
    p["stem_w"] = conv_w(7, in_ch, ngf)
    p["stem_gamma"], p["stem_beta"] = jnp.ones((ngf,)), jnp.zeros((ngf,))
    for i in range(2):
        mult = 2 ** i
        cin, cout = ngf * mult, ngf * mult * 2
        p[f"down{i}_w"] = conv_w(3, cin, cout)
        p[f"down{i}_gamma"], p[f"down{i}_beta"] = jnp.ones((cout,)), jnp.zeros((cout,))
    c = ngf * 4
    for b in range(blocks):
        p[f"res{b}_w1"] = conv_w(3, c, c)
        p[f"res{b}_g1"], p[f"res{b}_b1"] = jnp.ones((c,)), jnp.zeros((c,))
        p[f"res{b}_w2"] = conv_w(3, c, c)
        p[f"res{b}_g2"], p[f"res{b}_b2"] = jnp.ones((c,)), jnp.zeros((c,))
    for i in range(2):
        mult = 2 ** (2 - i)
        cin, cout = ngf * mult, ngf * mult // 2
        # PyTorch ConvTranspose2d weight layout: (Cin, Cout, K, K)
        p[f"up{i}_w"] = 0.1 * jax.random.normal(next(keys), (cin, cout, 3, 3),
                                                jnp.float32)
        p[f"up{i}_gamma"], p[f"up{i}_beta"] = jnp.ones((cout,)), jnp.zeros((cout,))
    p["head_w"] = conv_w(7, ngf, out_ch)
    p["head_b"] = 0.1 * jax.random.normal(next(keys), (out_ch,), jnp.float32)
    return p


def generator_forward(params, x_nchw, *, blocks):
    x = jnp.transpose(x_nchw, (0, 2, 3, 1)).astype(jnp.float32)   # NCHW -> NHWC

    def bn(y, stats, gamma, beta, act, residual=None, phases=1):
        count = y.shape[0] * y.shape[1] * y.shape[2] * phases
        scale, shift = bn_scale_shift(stats, count, gamma, beta, phases=phases)
        if phases > 1:
            scale, shift = jnp.tile(scale, phases), jnp.tile(shift, phases)
        return affine_act(y, scale, shift, act=act, residual=residual)

    # stem: ReflectionPad(3) -> Conv7x7 -> BN -> ReLU
    y, st = conv2d_stats(reflect_pad(x, 3), params["stem_w"])
    h = bn(y, st, params["stem_gamma"], params["stem_beta"], act="relu")

    # 2x downsample: Conv3x3 s2 p1 -> BN -> ReLU   (as 2x2 conv on s2d input)
    for i in range(2):
        xp = space_to_depth2(zero_pad(h, 1))
        y, st = conv2d_stats(xp, stride2_conv_weight(params[f"down{i}_w"]))
        h = bn(y, st, params[f"down{i}_gamma"], params[f"down{i}_beta"], act="relu")

    # residual blocks
    for b in range(blocks):
        nhw = h.shape[0] * h.shape[1] * h.shape[2]
        y1, st1 = conv2d_stats(reflect_pad(h, 1), params[f"res{b}_w1"])
        sc1, sh1 = bn_scale_shift(st1, nhw, params[f"res{b}_g1"], params[f"res{b}_b1"])
        # BN1 + ReLU is fused into conv2's prologue (reflection pad commutes
        # with the per-channel affine + ReLU).
        y2, st2 = conv2d_stats(reflect_pad(y1, 1), params[f"res{b}_w2"],
                               prologue=(sc1, sh1))
        # TODO(synk): fuse BN2 + residual into the next block's conv1 prologue.
        h = bn(y2, st2, params[f"res{b}_g2"], params[f"res{b}_b2"], act=None,
               residual=h)

    # 2x upsample: ConvTranspose3x3 s2 p1 op1 -> BN -> ReLU
    head_prologue = None
    for i in range(2):
        cout = params[f"up{i}_w"].shape[1]
        xe = jnp.pad(h, ((0, 0), (0, 1), (0, 1), (0, 0)))
        y, st = conv2d_stats(xe, convtranspose2_weight(params[f"up{i}_w"]))
        if i == 0:
            y = bn(y, st, params[f"up{i}_gamma"], params[f"up{i}_beta"],
                   act="relu", phases=4)
            h = depth_to_space2(y, cout)
        else:
            # Last BN+ReLU is deferred into the head conv's prologue
            # (per-channel affine+ReLU commutes with depth-to-space and
            # reflection padding).
            count = y.shape[0] * y.shape[1] * y.shape[2] * 4
            head_prologue = bn_scale_shift(st, count, params[f"up{i}_gamma"],
                                           params[f"up{i}_beta"], phases=4)
            h = depth_to_space2(y, cout)

    # head: ReflectionPad(3) -> [fused BN+ReLU] -> Conv7x7 (+bias) -> Sigmoid
    h = conv2d_bias_sigmoid(reflect_pad(h, 3), params["head_w"], params["head_b"],
                            prologue=head_prologue)
    return jnp.transpose(h, (0, 3, 1, 2))                          # NHWC -> NCHW


if __name__ == "__main__":
    key = jax.random.PRNGKey(0)
    k_params, k_x = jax.random.split(key)

    in_ch, out_ch, ngf, blocks = 4, 4, 8, 2
    params = init_params(k_params, in_ch, out_ch, ngf, blocks)
    x = jax.random.normal(k_x, (2, in_ch, 16, 16), jnp.float32)

    fwd = jax.jit(functools.partial(generator_forward, blocks=blocks))
    y = fwd(params, x)
    jax.block_until_ready(y)

    assert y.shape == (2, out_ch, 16, 16), y.shape
    assert bool(jnp.all(jnp.isfinite(y)))
    print("KERNEL_OK")
</pallas_src>

<mosaic_0001>
module attributes {stable_mosaic.version = 11 : i64} {
  func.func @_conv_stats_kernel(%arg0: i32, %arg1: memref<1x22x88xf32, #tpu.memory_space<vmem>>, %arg2: memref<7x88x128xbf16, #tpu.memory_space<vmem>>, %arg3: memref<1x16x128xf32, #tpu.memory_space<vmem>>, %arg4: memref<1x2x128xf32, #tpu.memory_space<vmem>>) attributes {dimension_semantics = [#tpu.dimension_semantics<parallel>], iteration_bounds = array<i64: 2>, scalar_prefetch = 0 : i64, scratch_operands = 0 : i64, tpu.core_type = #tpu.core_type<tc>, window_params = [{transform_indices = @transform_0, window_bounds = array<i64: 1, 22, 88>}, {pipeline_mode = #tpu.pipeline_mode<synchronous>, transform_indices = @transform_1, window_bounds = array<i64: 7, 88, 128>}, {transform_indices = @transform_2, window_bounds = array<i64: 1, 16, 128>}, {transform_indices = @transform_3, window_bounds = array<i64: 1, 2, 128>}]} {
    %c0 = arith.constant 0 : index
    %c0_0 = arith.constant 0 : index
    %c0_1 = arith.constant 0 : index
    %0 = vector.load %arg1[%c0, %c0_0, %c0_1] : memref<1x22x88xf32, #tpu.memory_space<vmem>>, vector<1x22x88xf32>
    %1 = vector.shape_cast %0 : vector<1x22x88xf32> to vector<22x88xf32>
    %cst = arith.constant 0.000000e+00 : f32
    %2 = vector.broadcast %cst : f32 to vector<16x128xf32>
    %3 = vector.extract_strided_slice %1 {offsets = [0, 0], sizes = [16, 88], strides = [1, 1]} : vector<22x88xf32> to vector<16x88xf32>
    %4 = arith.truncf %3 : vector<16x88xf32> to vector<16x88xbf16>
    %c0_2 = arith.constant 0 : index
    %c0_3 = arith.constant 0 : index
    %c0_4 = arith.constant 0 : index
    %5 = vector.load %arg2[%c0_2, %c0_3, %c0_4] : memref<7x88x128xbf16, #tpu.memory_space<vmem>>, vector<1x88x128xbf16>
    %6 = vector.shape_cast %5 : vector<1x88x128xbf16> to vector<88x128xbf16>
    %cst_5 = arith.constant dense<0.000000e+00> : vector<16x128xf32>
    %7 = tpu.matmul %4, %6, %cst_5 {dimension_numbers = #tpu.dot_dimension_numbers<[1], [0], [0], [1], [0, 0, 1, 1], [], []>} : vector<16x88xbf16>, vector<88x128xbf16>, vector<16x128xf32> -> vector<16x128xf32>
    %8 = arith.addf %2, %7 : vector<16x128xf32>
    %9 = vector.extract_strided_slice %1 {offsets = [1, 0], sizes = [16, 88], strides = [1, 1]} : vector<22x88xf32> to vector<16x88xf32>
    %10 = arith.truncf %9 : vector<16x88xf32> to vector<16x88xbf16>
    %c1 = arith.constant 1 : index
    %c0_6 = arith.constant 0 : index
    %c0_7 = arith.constant 0 : index
    %11 = vector.load %arg2[%c1, %c0_6, %c0_7] : memref<7x88x128xbf16, #tpu.memory_space<vmem>>, vector<1x88x128xbf16>
    %12 = vector.shape_cast %11 : vector<1x88x128xbf16> to vector<88x128xbf16>
    %cst_8 = arith.constant dense<0.000000e+00> : vector<16x128xf32>
    %13 = tpu.matmul %10, %12, %cst_8 {dimension_numbers = #tpu.dot_dimension_numbers<[1], [0], [0], [1], [0, 0, 1, 1], [], []>} : vector<16x88xbf16>, vector<88x128xbf16>, vector<16x128xf32> -> vector<16x128xf32>
    %14 = arith.addf %8, %13 : vector<16x128xf32>
    %15 = vector.extract_strided_slice %1 {offsets = [2, 0], sizes = [16, 88], strides = [1, 1]} : vector<22x88xf32> to vector<16x88xf32>
    %16 = arith.truncf %15 : vector<16x88xf32> to vector<16x88xbf16>
    %c2 = arith.constant 2 : index
    %c0_9 = arith.constant 0 : index
    %c0_10 = arith.constant 0 : index
    %17 = vector.load %arg2[%c2, %c0_9, %c0_10] : memref<7x88x128xbf16, #tpu.memory_space<vmem>>, vector<1x88x128xbf16>
    %18 = vector.shape_cast %17 : vector<1x88x128xbf16> to vector<88x128xbf16>
    %cst_11 = arith.constant dense<0.000000e+00> : vector<16x128xf32>
    %19 = tpu.matmul %16, %18, %cst_11 {dimension_numbers = #tpu.dot_dimension_numbers<[1], [0], [0], [1], [0, 0, 1, 1], [], []>} : vector<16x88xbf16>, vector<88x128xbf16>, vector<16x128xf32> -> vector<16x128xf32>
    %20 = arith.addf %14, %19 : vector<16x128xf32>
    %21 = vector.extract_strided_slice %1 {offsets = [3, 0], sizes = [16, 88], strides = [1, 1]} : vector<22x88xf32> to vector<16x88xf32>
    %22 = arith.truncf %21 : vector<16x88xf32> to vector<16x88xbf16>
    %c3 = arith.constant 3 : index
    %c0_12 = arith.constant 0 : index
    %c0_13 = arith.constant 0 : index
    %23 = vector.load %arg2[%c3, %c0_12, %c0_13] : memref<7x88x128xbf16, #tpu.memory_space<vmem>>, vector<1x88x128xbf16>
    %24 = vector.shape_cast %23 : vector<1x88x128xbf16> to vector<88x128xbf16>
    %cst_14 = arith.constant dense<0.000000e+00> : vector<16x128xf32>
    %25 = tpu.matmul %22, %24, %cst_14 {dimension_numbers = #tpu.dot_dimension_numbers<[1], [0], [0], [1], [0, 0, 1, 1], [], []>} : vector<16x88xbf16>, vector<88x128xbf16>, vector<16x128xf32> -> vector<16x128xf32>
    %26 = arith.addf %20, %25 : vector<16x128xf32>
    %27 = vector.extract_strided_slice %1 {offsets = [4, 0], sizes = [16, 88], strides = [1, 1]} : vector<22x88xf32> to vector<16x88xf32>
    %28 = arith.truncf %27 : vector<16x88xf32> to vector<16x88xbf16>
    %c4 = arith.constant 4 : index
    %c0_15 = arith.constant 0 : index
    %c0_16 = arith.constant 0 : index
    %29 = vector.load %arg2[%c4, %c0_15, %c0_16] : memref<7x88x128xbf16, #tpu.memory_space<vmem>>, vector<1x88x128xbf16>
    %30 = vector.shape_cast %29 : vector<1x88x128xbf16> to vector<88x128xbf16>
    %cst_17 = arith.constant dense<0.000000e+00> : vector<16x128xf32>
    %31 = tpu.matmul %28, %30, %cst_17 {dimension_numbers = #tpu.dot_dimension_numbers<[1], [0], [0], [1], [0, 0, 1, 1], [], []>} : vector<16x88xbf16>, vector<88x128xbf16>, vector<16x128xf32> -> vector<16x128xf32>
    %32 = arith.addf %26, %31 : vector<16x128xf32>
    %33 = vector.extract_strided_slice %1 {offsets = [5, 0], sizes = [16, 88], strides = [1, 1]} : vector<22x88xf32> to vector<16x88xf32>
    %34 = arith.truncf %33 : vector<16x88xf32> to vector<16x88xbf16>
    %c5 = arith.constant 5 : index
    %c0_18 = arith.constant 0 : index
    %c0_19 = arith.constant 0 : index
    %35 = vector.load %arg2[%c5, %c0_18, %c0_19] : memref<7x88x128xbf16, #tpu.memory_space<vmem>>, vector<1x88x128xbf16>
    %36 = vector.shape_cast %35 : vector<1x88x128xbf16> to vector<88x128xbf16>
    %cst_20 = arith.constant dense<0.000000e+00> : vector<16x128xf32>
    %37 = tpu.matmul %34, %36, %cst_20 {dimension_numbers = #tpu.dot_dimension_numbers<[1], [0], [0], [1], [0, 0, 1, 1], [], []>} : vector<16x88xbf16>, vector<88x128xbf16>, vector<16x128xf32> -> vector<16x128xf32>
    %38 = arith.addf %32, %37 : vector<16x128xf32>
    %39 = vector.extract_strided_slice %1 {offsets = [6, 0], sizes = [16, 88], strides = [1, 1]} : vector<22x88xf32> to vector<16x88xf32>
    %40 = arith.truncf %39 : vector<16x88xf32> to vector<16x88xbf16>
    %c6 = arith.constant 6 : index
    %c0_21 = arith.constant 0 : index
    %c0_22 = arith.constant 0 : index
    %41 = vector.load %arg2[%c6, %c0_21, %c0_22] : memref<7x88x128xbf16, #tpu.memory_space<vmem>>, vector<1x88x128xbf16>
    %42 = vector.shape_cast %41 : vector<1x88x128xbf16> to vector<88x128xbf16>
    %cst_23 = arith.constant dense<0.000000e+00> : vector<16x128xf32>
    %43 = tpu.matmul %40, %42, %cst_23 {dimension_numbers = #tpu.dot_dimension_numbers<[1], [0], [0], [1], [0, 0, 1, 1], [], []>} : vector<16x88xbf16>, vector<88x128xbf16>, vector<16x128xf32> -> vector<16x128xf32>
    %44 = arith.addf %38, %43 : vector<16x128xf32>
    %c0_24 = arith.constant 0 : index
    %c0_25 = arith.constant 0 : index
    %c0_26 = arith.constant 0 : index
    %45 = vector.load %arg3[%c0_24, %c0_25, %c0_26] : memref<1x16x128xf32, #tpu.memory_space<vmem>>, vector<1x16x128xf32>
    %46 = vector.shape_cast %45 : vector<1x16x128xf32> to vector<16x128xf32>
    %47 = vector.shape_cast %44 : vector<16x128xf32> to vector<1x16x128xf32>
    tpu.vector_store %arg3[%c0_24, %c0_25, %c0_26], %47 {strides = array<i32>} : memref<1x16x128xf32, #tpu.memory_space<vmem>>, vector<1x16x128xf32>,
    %cst_27 = arith.constant dense<0.000000e+00> : vector<128xf32>
    %48 = vector.multi_reduction <add>, %44, %cst_27 [0] : vector<16x128xf32> to vector<128xf32>
    %49 = vector.shape_cast %48 : vector<128xf32> to vector<1x128xf32>
    %50 = arith.mulf %44, %44 : vector<16x128xf32>
    %cst_28 = arith.constant dense<0.000000e+00> : vector<128xf32>
    %51 = vector.multi_reduction <add>, %50, %cst_28 [0] : vector<16x128xf32> to vector<128xf32>
    %52 = vector.shape_cast %51 : vector<128xf32> to vector<1x128xf32>
    %53 = tpu.concatenate %49, %52 in 0 : vector<1x128xf32>, vector<1x128xf32> -> vector<2x128xf32>
    %c0_29 = arith.constant 0 : index
    %c0_30 = arith.constant 0 : index
    %c0_31 = arith.constant 0 : index
    %54 = vector.load %arg4[%c0_29, %c0_30, %c0_31] : memref<1x2x128xf32, #tpu.memory_space<vmem>>, vector<1x2x128xf32>
    %55 = vector.shape_cast %54 : vector<1x2x128xf32> to vector<2x128xf32>
    %56 = vector.shape_cast %53 : vector<2x128xf32> to vector<1x2x128xf32>
    tpu.vector_store %arg4[%c0_29, %c0_30, %c0_31], %56 {strides = array<i32>} : memref<1x2x128xf32, #tpu.memory_space<vmem>>, vector<1x2x128xf32>,
    return
  }
  func.func @transform_0(%arg0: i32) -> (i32, i32, i32) {
    %c0_i32 = arith.constant 0 : i32
    %c0_i32_0 = arith.constant 0 : i32
    %c0_i32_1 = arith.constant 0 : i32
    return %arg0, %c0_i32, %c0_i32_0 : i32, i32, i32
  }
  func.func @transform_1(%arg0: i32) -> (i32, i32, i32) {
    %c0_i32 = arith.constant 0 : i32
    %c0_i32_0 = arith.constant 0 : i32
    %c0_i32_1 = arith.constant 0 : i32
    %c0_i32_2 = arith.constant 0 : i32
    return %c0_i32, %c0_i32_0, %c0_i32_1 : i32, i32, i32
  }
  func.func @transform_2(%arg0: i32) -> (i32, i32, i32) {
    %c0_i32 = arith.constant 0 : i32
    %c0_i32_0 = arith.constant 0 : i32
    %c0_i32_1 = arith.constant 0 : i32
    return %arg0, %c0_i32, %c0_i32_0 : i32, i32, i32
  }
  func.func @transform_3(%arg0: i32) -> (i32, i32, i32) {
    %c0_i32 = arith.constant 0 : i32
    %c0_i32_0 = arith.constant 0 : i32
    %c0_i32_1 = arith.constant 0 : i32
    return %arg0, %c0_i32, %c0_i32_0 : i32, i32, i32
  }
}

module attributes {stable_mosaic.version = 11 : i64} {
  func.func @_affine_act_kernel(%arg0: i32, %arg1: memref<1x16x128xf32, #tpu.memory_space<vmem>>, %arg2: memref<1x128xf32, #tpu.memory_space<vmem>>, %arg3: memref<1x128xf32, #tpu.memory_space<vmem>>, %arg4: memref<1x16x128xf32, #tpu.memory_space<vmem>>) attributes {dimension_semantics = [#tpu.dimension_semantics<parallel>], iteration_bounds = array<i64: 2>, scalar_prefetch = 0 : i64, scratch_operands = 0 : i64, tpu.core_type = #tpu.core_type<tc>, window_params = [{transform_indices = @transform_0, window_bounds = array<i64: 1, 16, 128>}, {pipeline_mode = #tpu.pipeline_mode<synchronous>, transform_indices = @transform_1, window_bounds = array<i64: 1, 128>}, {pipeline_mode = #tpu.pipeline_mode<synchronous>, transform_indices = @transform_2, window_bounds = array<i64: 1, 128>}, {transform_indices = @transform_3, window_bounds = array<i64: 1, 16, 128>}]} {
    %c0 = arith.constant 0 : index
    %c0_0 = arith.constant 0 : index
    %c0_1 = arith.constant 0 : index
    %0 = vector.load %arg1[%c0, %c0_0, %c0_1] : memref<1x16x128xf32, #tpu.memory_space<vmem>>, vector<1x16x128xf32>
    %1 = vector.shape_cast %0 : vector<1x16x128xf32> to vector<16x128xf32>
    %c0_2 = arith.constant 0 : index
    %c0_3 = arith.constant 0 : index
    %2 = vector.load %arg2[%c0_2, %c0_3] : memref<1x128xf32, #tpu.memory_space<vmem>>, vector<1x128xf32>
    %3 = vector.broadcast %2 : vector<1x128xf32> to vector<16x128xf32>
    %4 = arith.mulf %1, %3 : vector<16x128xf32>
    %c0_4 = arith.constant 0 : index
    %c0_5 = arith.constant 0 : index
    %5 = vector.load %arg3[%c0_4, %c0_5] : memref<1x128xf32, #tpu.memory_space<vmem>>, vector<1x128xf32>
    %6 = vector.broadcast %5 : vector<1x128xf32> to vector<16x128xf32>
    %7 = arith.addf %4, %6 : vector<16x128xf32>
    %cst = arith.constant 0.000000e+00 : f32
    %8 = vector.broadcast %cst : f32 to vector<16x128xf32>
    %9 = arith.maximumf %7, %8 : vector<16x128xf32>
    %c0_6 = arith.constant 0 : index
    %c0_7 = arith.constant 0 : index
    %c0_8 = arith.constant 0 : index
    %10 = vector.load %arg4[%c0_6, %c0_7, %c0_8] : memref<1x16x128xf32, #tpu.memory_space<vmem>>, vector<1x16x128xf32>
    %11 = vector.shape_cast %10 : vector<1x16x128xf32> to vector<16x128xf32>
    %12 = vector.shape_cast %9 : vector<16x128xf32> to vector<1x16x128xf32>
    tpu.vector_store %arg4[%c0_6, %c0_7, %c0_8], %12 {strides = array<i32>} : memref<1x16x128xf32, #tpu.memory_space<vmem>>, vector<1x16x128xf32>,
    return
  }
  func.func @transform_0(%arg0: i32) -> (i32, i32, i32) {
    %c0_i32 = arith.constant 0 : i32
    %c0_i32_0 = arith.constant 0 : i32
    %c0_i32_1 = arith.constant 0 : i32
    return %arg0, %c0_i32, %c0_i32_0 : i32, i32, i32
  }
  func.func @transform_1(%arg0: i32) -> (i32, i32) {
    %c0_i32 = arith.constant 0 : i32
    %c0_i32_0 = arith.constant 0 : i32
    %c0_i32_1 = arith.constant 0 : i32
    return %c0_i32, %c0_i32_0 : i32, i32
  }
  func.func @transform_2(%arg0: i32) -> (i32, i32) {
    %c0_i32 = arith.constant 0 : i32
    %c0_i32_0 = arith.constant 0 : i32
    %c0_i32_1 = arith.constant 0 : i32
    return %c0_i32, %c0_i32_0 : i32, i32
  }
  func.func @transform_3(%arg0: i32) -> (i32, i32, i32) {
    %c0_i32 = arith.constant 0 : i32
    %c0_i32_0 = arith.constant 0 : i32
    %c0_i32_1 = arith.constant 0 : i32
    return %arg0, %c0_i32, %c0_i32_0 : i32, i32, i32
  }
}

module attributes {stable_mosaic.version = 11 : i64} {
  func.func @_conv_stats_kernel(%arg0: i32, %arg1: memref<1x9x288xf32, #tpu.memory_space<vmem>>, %arg2: memref<2x288x128xbf16, #tpu.memory_space<vmem>>, %arg3: memref<1x8x128xf32, #tpu.memory_space<vmem>>, %arg4: memref<1x2x128xf32, #tpu.memory_space<vmem>>) attributes {dimension_semantics = [#tpu.dimension_semantics<parallel>], iteration_bounds = array<i64: 2>, scalar_prefetch = 0 : i64, scratch_operands = 0 : i64, tpu.core_type = #tpu.core_type<tc>, window_params = [{transform_indices = @transform_0, window_bounds = array<i64: 1, 9, 288>}, {pipeline_mode = #tpu.pipeline_mode<synchronous>, transform_indices = @transform_1, window_bounds = array<i64: 2, 288, 128>}, {transform_indices = @transform_2, window_bounds = array<i64: 1, 8, 128>}, {transform_indices = @transform_3, window_bounds = array<i64: 1, 2, 128>}]} {
    %c0 = arith.constant 0 : index
    %c0_0 = arith.constant 0 : index
    %c0_1 = arith.constant 0 : index
    %0 = vector.load %arg1[%c0, %c0_0, %c0_1] : memref<1x9x288xf32, #tpu.memory_space<vmem>>, vector<1x9x288xf32>
    %1 = vector.shape_cast %0 : vector<1x9x288xf32> to vector<9x288xf32>
    %cst = arith.constant 0.000000e+00 : f32
    %2 = vector.broadcast %cst : f32 to vector<8x128xf32>
    %3 = vector.extract_strided_slice %1 {offsets = [0, 0], sizes = [8, 288], strides = [1, 1]} : vector<9x288xf32> to vector<8x288xf32>
    %4 = arith.truncf %3 : vector<8x288xf32> to vector<8x288xbf16>
    %c0_2 = arith.constant 0 : index
    %c0_3 = arith.constant 0 : index
    %c0_4 = arith.constant 0 : index
    %5 = vector.load %arg2[%c0_2, %c0_3, %c0_4] : memref<2x288x128xbf16, #tpu.memory_space<vmem>>, vector<1x288x128xbf16>
    %6 = vector.shape_cast %5 : vector<1x288x128xbf16> to vector<288x128xbf16>
    %cst_5 = arith.constant dense<0.000000e+00> : vector<8x128xf32>
    %7 = tpu.matmul %4, %6, %cst_5 {dimension_numbers = #tpu.dot_dimension_numbers<[1], [0], [0], [1], [0, 0, 1, 1], [], []>} : vector<8x288xbf16>, vector<288x128xbf16>, vector<8x128xf32> -> vector<8x128xf32>
    %8 = arith.addf %2, %7 : vector<8x128xf32>
    %9 = vector.extract_strided_slice %1 {offsets = [1, 0], sizes = [8, 288], strides = [1, 1]} : vector<9x288xf32> to vector<8x288xf32>
    %10 = arith.truncf %9 : vector<8x288xf32> to vector<8x288xbf16>
    %c1 = arith.constant 1 : index
    %c0_6 = arith.constant 0 : index
    %c0_7 = arith.constant 0 : index
    %11 = vector.load %arg2[%c1, %c0_6, %c0_7] : memref<2x288x128xbf16, #tpu.memory_space<vmem>>, vector<1x288x128xbf16>
    %12 = vector.shape_cast %11 : vector<1x288x128xbf16> to vector<288x128xbf16>
    %cst_8 = arith.constant dense<0.000000e+00> : vector<8x128xf32>
    %13 = tpu.matmul %10, %12, %cst_8 {dimension_numbers = #tpu.dot_dimension_numbers<[1], [0], [0], [1], [0, 0, 1, 1], [], []>} : vector<8x288xbf16>, vector<288x128xbf16>, vector<8x128xf32> -> vector<8x128xf32>
    %14 = arith.addf %8, %13 : vector<8x128xf32>
    %c0_9 = arith.constant 0 : index
    %c0_10 = arith.constant 0 : index
    %c0_11 = arith.constant 0 : index
    %15 = vector.load %arg3[%c0_9, %c0_10, %c0_11] : memref<1x8x128xf32, #tpu.memory_space<vmem>>, vector<1x8x128xf32>
    %16 = vector.shape_cast %15 : vector<1x8x128xf32> to vector<8x128xf32>
    %17 = vector.shape_cast %14 : vector<8x128xf32> to vector<1x8x128xf32>
    tpu.vector_store %arg3[%c0_9, %c0_10, %c0_11], %17 {strides = array<i32>} : memref<1x8x128xf32, #tpu.memory_space<vmem>>, vector<1x8x128xf32>,
    %cst_12 = arith.constant dense<0.000000e+00> : vector<128xf32>
    %18 = vector.multi_reduction <add>, %14, %cst_12 [0] : vector<8x128xf32> to vector<128xf32>
    %19 = vector.shape_cast %18 : vector<128xf32> to vector<1x128xf32>
    %20 = arith.mulf %14, %14 : vector<8x128xf32>
    %cst_13 = arith.constant dense<0.000000e+00> : vector<128xf32>
    %21 = vector.multi_reduction <add>, %20, %cst_13 [0] : vector<8x128xf32> to vector<128xf32>
    %22 = vector.shape_cast %21 : vector<128xf32> to vector<1x128xf32>
    %23 = tpu.concatenate %19, %22 in 0 : vector<1x128xf32>, vector<1x128xf32> -> vector<2x128xf32>
    %c0_14 = arith.constant 0 : index
    %c0_15 = arith.constant 0 : index
    %c0_16 = arith.constant 0 : index
    %24 = vector.load %arg4[%c0_14, %c0_15, %c0_16] : memref<1x2x128xf32, #tpu.memory_space<vmem>>, vector<1x2x128xf32>
    %25 = vector.shape_cast %24 : vector<1x2x128xf32> to vector<2x128xf32>
    %26 = vector.shape_cast %23 : vector<2x128xf32> to vector<1x2x128xf32>
    tpu.vector_store %arg4[%c0_14, %c0_15, %c0_16], %26 {strides = array<i32>} : memref<1x2x128xf32, #tpu.memory_space<vmem>>, vector<1x2x128xf32>,
    return
  }
  func.func @transform_0(%arg0: i32) -> (i32, i32, i32) {
    %c0_i32 = arith.constant 0 : i32
    %c0_i32_0 = arith.constant 0 : i32
    %c0_i32_1 = arith.constant 0 : i32
    return %arg0, %c0_i32, %c0_i32_0 : i32, i32, i32
  }
  func.func @transform_1(%arg0: i32) -> (i32, i32, i32) {
    %c0_i32 = arith.constant 0 : i32
    %c0_i32_0 = arith.constant 0 : i32
    %c0_i32_1 = arith.constant 0 : i32
    %c0_i32_2 = arith.constant 0 : i32
    return %c0_i32, %c0_i32_0, %c0_i32_1 : i32, i32, i32
  }
  func.func @transform_2(%arg0: i32) -> (i32, i32, i32) {
    %c0_i32 = arith.constant 0 : i32
    %c0_i32_0 = arith.constant 0 : i32
    %c0_i32_1 = arith.constant 0 : i32
    return %arg0, %c0_i32, %c0_i32_0 : i32, i32, i32
  }
  func.func @transform_3(%arg0: i32) -> (i32, i32, i32) {
    %c0_i32 = arith.constant 0 : i32
    %c0_i32_0 = arith.constant 0 : i32
    %c0_i32_1 = arith.constant 0 : i32
    return %arg0, %c0_i32, %c0_i32_0 : i32, i32, i32
  }
}

module attributes {stable_mosaic.version = 11 : i64} {
  func.func @_affine_act_kernel(%arg0: i32, %arg1: memref<1x8x128xf32, #tpu.memory_space<vmem>>, %arg2: memref<1x128xf32, #tpu.memory_space<vmem>>, %arg3: memref<1x128xf32, #tpu.memory_space<vmem>>, %arg4: memref<1x8x128xf32, #tpu.memory_space<vmem>>) attributes {dimension_semantics = [#tpu.dimension_semantics<parallel>], iteration_bounds = array<i64: 2>, scalar_prefetch = 0 : i64, scratch_operands = 0 : i64, tpu.core_type = #tpu.core_type<tc>, window_params = [{transform_indices = @transform_0, window_bounds = array<i64: 1, 8, 128>}, {pipeline_mode = #tpu.pipeline_mode<synchronous>, transform_indices = @transform_1, window_bounds = array<i64: 1, 128>}, {pipeline_mode = #tpu.pipeline_mode<synchronous>, transform_indices = @transform_2, window_bounds = array<i64: 1, 128>}, {transform_indices = @transform_3, window_bounds = array<i64: 1, 8, 128>}]} {
    %c0 = arith.constant 0 : index
    %c0_0 = arith.constant 0 : index
    %c0_1 = arith.constant 0 : index
    %0 = vector.load %arg1[%c0, %c0_0, %c0_1] : memref<1x8x128xf32, #tpu.memory_space<vmem>>, vector<1x8x128xf32>
    %1 = vector.shape_cast %0 : vector<1x8x128xf32> to vector<8x128xf32>
    %c0_2 = arith.constant 0 : index
    %c0_3 = arith.constant 0 : index
    %2 = vector.load %arg2[%c0_2, %c0_3] : memref<1x128xf32, #tpu.memory_space<vmem>>, vector<1x128xf32>
    %3 = vector.broadcast %2 : vector<1x128xf32> to vector<8x128xf32>
    %4 = arith.mulf %1, %3 : vector<8x128xf32>
    %c0_4 = arith.constant 0 : index
    %c0_5 = arith.constant 0 : index
    %5 = vector.load %arg3[%c0_4, %c0_5] : memref<1x128xf32, #tpu.memory_space<vmem>>, vector<1x128xf32>
    %6 = vector.broadcast %5 : vector<1x128xf32> to vector<8x128xf32>
    %7 = arith.addf %4, %6 : vector<8x128xf32>
    %cst = arith.constant 0.000000e+00 : f32
    %8 = vector.broadcast %cst : f32 to vector<8x128xf32>
    %9 = arith.maximumf %7, %8 : vector<8x128xf32>
    %c0_6 = arith.constant 0 : index
    %c0_7 = arith.constant 0 : index
    %c0_8 = arith.constant 0 : index
    %10 = vector.load %arg4[%c0_6, %c0_7, %c0_8] : memref<1x8x128xf32, #tpu.memory_space<vmem>>, vector<1x8x128xf32>
    %11 = vector.shape_cast %10 : vector<1x8x128xf32> to vector<8x128xf32>
    %12 = vector.shape_cast %9 : vector<8x128xf32> to vector<1x8x128xf32>
    tpu.vector_store %arg4[%c0_6, %c0_7, %c0_8], %12 {strides = array<i32>} : memref<1x8x128xf32, #tpu.memory_space<vmem>>, vector<1x8x128xf32>,
    return
  }
  func.func @transform_0(%arg0: i32) -> (i32, i32, i32) {
    %c0_i32 = arith.constant 0 : i32
    %c0_i32_0 = arith.constant 0 : i32
    %c0_i32_1 = arith.constant 0 : i32
    return %arg0, %c0_i32, %c0_i32_0 : i32, i32, i32
  }
  func.func @transform_1(%arg0: i32) -> (i32, i32) {
    %c0_i32 = arith.constant 0 : i32
    %c0_i32_0 = arith.constant 0 : i32
    %c0_i32_1 = arith.constant 0 : i32
    return %c0_i32, %c0_i32_0 : i32, i32
  }
  func.func @transform_2(%arg0: i32) -> (i32, i32) {
    %c0_i32 = arith.constant 0 : i32
    %c0_i32_0 = arith.constant 0 : i32
    %c0_i32_1 = arith.constant 0 : i32
    return %c0_i32, %c0_i32_0 : i32, i32
  }
  func.func @transform_3(%arg0: i32) -> (i32, i32, i32) {
    %c0_i32 = arith.constant 0 : i32
    %c0_i32_0 = arith.constant 0 : i32
    %c0_i32_1 = arith.constant 0 : i32
    return %arg0, %c0_i32, %c0_i32_0 : i32, i32, i32
  }
}

module attributes {stable_mosaic.version = 11 : i64} {
  func.func @_conv_stats_kernel(%arg0: i32, %arg1: memref<1x5x320xf32, #tpu.memory_space<vmem>>, %arg2: memref<2x320x128xbf16, #tpu.memory_space<vmem>>, %arg3: memref<1x4x128xf32, #tpu.memory_space<vmem>>, %arg4: memref<1x2x128xf32, #tpu.memory_space<vmem>>) attributes {dimension_semantics = [#tpu.dimension_semantics<parallel>], iteration_bounds = array<i64: 2>, scalar_prefetch = 0 : i64, scratch_operands = 0 : i64, tpu.core_type = #tpu.core_type<tc>, window_params = [{transform_indices = @transform_0, window_bounds = array<i64: 1, 5, 320>}, {pipeline_mode = #tpu.pipeline_mode<synchronous>, transform_indices = @transform_1, window_bounds = array<i64: 2, 320, 128>}, {transform_indices = @transform_2, window_bounds = array<i64: 1, 4, 128>}, {transform_indices = @transform_3, window_bounds = array<i64: 1, 2, 128>}]} {
    %c0 = arith.constant 0 : index
    %c0_0 = arith.constant 0 : index
    %c0_1 = arith.constant 0 : index
    %0 = vector.load %arg1[%c0, %c0_0, %c0_1] : memref<1x5x320xf32, #tpu.memory_space<vmem>>, vector<1x5x320xf32>
    %1 = vector.shape_cast %0 : vector<1x5x320xf32> to vector<5x320xf32>
    %cst = arith.constant 0.000000e+00 : f32
    %2 = vector.broadcast %cst : f32 to vector<4x128xf32>
    %3 = vector.extract_strided_slice %1 {offsets = [0, 0], sizes = [4, 320], strides = [1, 1]} : vector<5x320xf32> to vector<4x320xf32>
    %4 = arith.truncf %3 : vector<4x320xf32> to vector<4x320xbf16>
    %c0_2 = arith.constant 0 : index
    %c0_3 = arith.constant 0 : index
    %c0_4 = arith.constant 0 : index
    %5 = vector.load %arg2[%c0_2, %c0_3, %c0_4] : memref<2x320x128xbf16, #tpu.memory_space<vmem>>, vector<1x320x128xbf16>
    %6 = vector.shape_cast %5 : vector<1x320x128xbf16> to vector<320x128xbf16>
    %cst_5 = arith.constant dense<0.000000e+00> : vector<4x128xf32>
    %7 = tpu.matmul %4, %6, %cst_5 {dimension_numbers = #tpu.dot_dimension_numbers<[1], [0], [0], [1], [0, 0, 1, 1], [], []>} : vector<4x320xbf16>, vector<320x128xbf16>, vector<4x128xf32> -> vector<4x128xf32>
    %8 = arith.addf %2, %7 : vector<4x128xf32>
    %9 = vector.extract_strided_slice %1 {offsets = [1, 0], sizes = [4, 320], strides = [1, 1]} : vector<5x320xf32> to vector<4x320xf32>
    %10 = arith.truncf %9 : vector<4x320xf32> to vector<4x320xbf16>
    %c1 = arith.constant 1 : index
    %c0_6 = arith.constant 0 : index
    %c0_7 = arith.constant 0 : index
    %11 = vector.load %arg2[%c1, %c0_6, %c0_7] : memref<2x320x128xbf16, #tpu.memory_space<vmem>>, vector<1x320x128xbf16>
    %12 = vector.shape_cast %11 : vector<1x320x128xbf16> to vector<320x128xbf16>
    %cst_8 = arith.constant dense<0.000000e+00> : vector<4x128xf32>
    %13 = tpu.matmul %10, %12, %cst_8 {dimension_numbers = #tpu.dot_dimension_numbers<[1], [0], [0], [1], [0, 0, 1, 1], [], []>} : vector<4x320xbf16>, vector<320x128xbf16>, vector<4x128xf32> -> vector<4x128xf32>
    %14 = arith.addf %8, %13 : vector<4x128xf32>
    %c0_9 = arith.constant 0 : index
    %c0_10 = arith.constant 0 : index
    %c0_11 = arith.constant 0 : index
    %15 = vector.load %arg3[%c0_9, %c0_10, %c0_11] : memref<1x4x128xf32, #tpu.memory_space<vmem>>, vector<1x4x128xf32>
    %16 = vector.shape_cast %15 : vector<1x4x128xf32> to vector<4x128xf32>
    %17 = vector.shape_cast %14 : vector<4x128xf32> to vector<1x4x128xf32>
    tpu.vector_store %arg3[%c0_9, %c0_10, %c0_11], %17 {strides = array<i32>} : memref<1x4x128xf32, #tpu.memory_space<vmem>>, vector<1x4x128xf32>,
    %cst_12 = arith.constant dense<0.000000e+00> : vector<128xf32>
    %18 = vector.multi_reduction <add>, %14, %cst_12 [0] : vector<4x128xf32> to vector<128xf32>
    %19 = vector.shape_cast %18 : vector<128xf32> to vector<1x128xf32>
    %20 = arith.mulf %14, %14 : vector<4x128xf32>
    %cst_13 = arith.constant dense<0.000000e+00> : vector<128xf32>
    %21 = vector.multi_reduction <add>, %20, %cst_13 [0] : vector<4x128xf32> to vector<128xf32>
    %22 = vector.shape_cast %21 : vector<128xf32> to vector<1x128xf32>
    %23 = tpu.concatenate %19, %22 in 0 : vector<1x128xf32>, vector<1x128xf32> -> vector<2x128xf32>
    %c0_14 = arith.constant 0 : index
    %c0_15 = arith.constant 0 : index
    %c0_16 = arith.constant 0 : index
    %24 = vector.load %arg4[%c0_14, %c0_15, %c0_16] : memref<1x2x128xf32, #tpu.memory_space<vmem>>, vector<1x2x128xf32>
    %25 = vector.shape_cast %24 : vector<1x2x128xf32> to vector<2x128xf32>
    %26 = vector.shape_cast %23 : vector<2x128xf32> to vector<1x2x128xf32>
    tpu.vector_store %arg4[%c0_14, %c0_15, %c0_16], %26 {strides = array<i32>} : memref<1x2x128xf32, #tpu.memory_space<vmem>>, vector<1x2x128xf32>,
    return
  }
  func.func @transform_0(%arg0: i32) -> (i32, i32, i32) {
    %c0_i32 = arith.constant 0 : i32
    %c0_i32_0 = arith.constant 0 : i32
    %c0_i32_1 = arith.constant 0 : i32
    return %arg0, %c0_i32, %c0_i32_0 : i32, i32, i32
  }
  func.func @transform_1(%arg0: i32) -> (i32, i32, i32) {
    %c0_i32 = arith.constant 0 : i32
    %c0_i32_0 = arith.constant 0 : i32
    %c0_i32_1 = arith.constant 0 : i32
    %c0_i32_2 = arith.constant 0 : i32
    return %c0_i32, %c0_i32_0, %c0_i32_1 : i32, i32, i32
  }
  func.func @transform_2(%arg0: i32) -> (i32, i32, i32) {
    %c0_i32 = arith.constant 0 : i32
    %c0_i32_0 = arith.constant 0 : i32
    %c0_i32_1 = arith.constant 0 : i32
    return %arg0, %c0_i32, %c0_i32_0 : i32, i32, i32
  }
  func.func @transform_3(%arg0: i32) -> (i32, i32, i32) {
    %c0_i32 = arith.constant 0 : i32
    %c0_i32_0 = arith.constant 0 : i32
    %c0_i32_1 = arith.constant 0 : i32
    return %arg0, %c0_i32, %c0_i32_0 : i32, i32, i32
  }
}

module attributes {stable_mosaic.version = 11 : i64} {
  func.func @_affine_act_kernel(%arg0: i32, %arg1: memref<1x4x128xf32, #tpu.memory_space<vmem>>, %arg2: memref<1x128xf32, #tpu.memory_space<vmem>>, %arg3: memref<1x128xf32, #tpu.memory_space<vmem>>, %arg4: memref<1x4x128xf32, #tpu.memory_space<vmem>>) attributes {dimension_semantics = [#tpu.dimension_semantics<parallel>], iteration_bounds = array<i64: 2>, scalar_prefetch = 0 : i64, scratch_operands = 0 : i64, tpu.core_type = #tpu.core_type<tc>, window_params = [{transform_indices = @transform_0, window_bounds = array<i64: 1, 4, 128>}, {pipeline_mode = #tpu.pipeline_mode<synchronous>, transform_indices = @transform_1, window_bounds = array<i64: 1, 128>}, {pipeline_mode = #tpu.pipeline_mode<synchronous>, transform_indices = @transform_2, window_bounds = array<i64: 1, 128>}, {transform_indices = @transform_3, window_bounds = array<i64: 1, 4, 128>}]} {
    %c0 = arith.constant 0 : index
    %c0_0 = arith.constant 0 : index
    %c0_1 = arith.constant 0 : index
    %0 = vector.load %arg1[%c0, %c0_0, %c0_1] : memref<1x4x128xf32, #tpu.memory_space<vmem>>, vector<1x4x128xf32>
    %1 = vector.shape_cast %0 : vector<1x4x128xf32> to vector<4x128xf32>
    %c0_2 = arith.constant 0 : index
    %c0_3 = arith.constant 0 : index
    %2 = vector.load %arg2[%c0_2, %c0_3] : memref<1x128xf32, #tpu.memory_space<vmem>>, vector<1x128xf32>
    %3 = vector.broadcast %2 : vector<1x128xf32> to vector<4x128xf32>
    %4 = arith.mulf %1, %3 : vector<4x128xf32>
    %c0_4 = arith.constant 0 : index
    %c0_5 = arith.constant 0 : index
    %5 = vector.load %arg3[%c0_4, %c0_5] : memref<1x128xf32, #tpu.memory_space<vmem>>, vector<1x128xf32>
    %6 = vector.broadcast %5 : vector<1x128xf32> to vector<4x128xf32>
    %7 = arith.addf %4, %6 : vector<4x128xf32>
    %cst = arith.constant 0.000000e+00 : f32
    %8 = vector.broadcast %cst : f32 to vector<4x128xf32>
    %9 = arith.maximumf %7, %8 : vector<4x128xf32>
    %c0_6 = arith.constant 0 : index
    %c0_7 = arith.constant 0 : index
    %c0_8 = arith.constant 0 : index
    %10 = vector.load %arg4[%c0_6, %c0_7, %c0_8] : memref<1x4x128xf32, #tpu.memory_space<vmem>>, vector<1x4x128xf32>
    %11 = vector.shape_cast %10 : vector<1x4x128xf32> to vector<4x128xf32>
    %12 = vector.shape_cast %9 : vector<4x128xf32> to vector<1x4x128xf32>
    tpu.vector_store %arg4[%c0_6, %c0_7, %c0_8], %12 {strides = array<i32>} : memref<1x4x128xf32, #tpu.memory_space<vmem>>, vector<1x4x128xf32>,
    return
  }
  func.func @transform_0(%arg0: i32) -> (i32, i32, i32) {
    %c0_i32 = arith.constant 0 : i32
    %c0_i32_0 = arith.constant 0 : i32
    %c0_i32_1 = arith.constant 0 : i32
    return %arg0, %c0_i32, %c0_i32_0 : i32, i32, i32
  }
  func.func @transform_1(%arg0: i32) -> (i32, i32) {
    %c0_i32 = arith.constant 0 : i32
    %c0_i32_0 = arith.constant 0 : i32
    %c0_i32_1 = arith.constant 0 : i32
    return %c0_i32, %c0_i32_0 : i32, i32
  }
  func.func @transform_2(%arg0: i32) -> (i32, i32) {
    %c0_i32 = arith.constant 0 : i32
    %c0_i32_0 = arith.constant 0 : i32
    %c0_i32_1 = arith.constant 0 : i32
    return %c0_i32, %c0_i32_0 : i32, i32
  }
  func.func @transform_3(%arg0: i32) -> (i32, i32, i32) {
    %c0_i32 = arith.constant 0 : i32
    %c0_i32_0 = arith.constant 0 : i32
    %c0_i32_1 = arith.constant 0 : i32
    return %arg0, %c0_i32, %c0_i32_0 : i32, i32, i32
  }
}

module attributes {stable_mosaic.version = 11 : i64} {
  func.func @_conv_stats_kernel(%arg0: i32, %arg1: memref<1x6x192xf32, #tpu.memory_space<vmem>>, %arg2: memref<3x192x128xbf16, #tpu.memory_space<vmem>>, %arg3: memref<1x4x128xf32, #tpu.memory_space<vmem>>, %arg4: memref<1x2x128xf32, #tpu.memory_space<vmem>>) attributes {dimension_semantics = [#tpu.dimension_semantics<parallel>], iteration_bounds = array<i64: 2>, scalar_prefetch = 0 : i64, scratch_operands = 0 : i64, tpu.core_type = #tpu.core_type<tc>, window_params = [{transform_indices = @transform_0, window_bounds = array<i64: 1, 6, 192>}, {pipeline_mode = #tpu.pipeline_mode<synchronous>, transform_indices = @transform_1, window_bounds = array<i64: 3, 192, 128>}, {transform_indices = @transform_2, window_bounds = array<i64: 1, 4, 128>}, {transform_indices = @transform_3, window_bounds = array<i64: 1, 2, 128>}]} {
    %c0 = arith.constant 0 : index
    %c0_0 = arith.constant 0 : index
    %c0_1 = arith.constant 0 : index
    %0 = vector.load %arg1[%c0, %c0_0, %c0_1] : memref<1x6x192xf32, #tpu.memory_space<vmem>>, vector<1x6x192xf32>
    %1 = vector.shape_cast %0 : vector<1x6x192xf32> to vector<6x192xf32>
    %cst = arith.constant 0.000000e+00 : f32
    %2 = vector.broadcast %cst : f32 to vector<4x128xf32>
    %3 = vector.extract_strided_slice %1 {offsets = [0, 0], sizes = [4, 192], strides = [1, 1]} : vector<6x192xf32> to vector<4x192xf32>
    %4 = arith.truncf %3 : vector<4x192xf32> to vector<4x192xbf16>
    %c0_2 = arith.constant 0 : index
    %c0_3 = arith.constant 0 : index
    %c0_4 = arith.constant 0 : index
    %5 = vector.load %arg2[%c0_2, %c0_3, %c0_4] : memref<3x192x128xbf16, #tpu.memory_space<vmem>>, vector<1x192x128xbf16>
    %6 = vector.shape_cast %5 : vector<1x192x128xbf16> to vector<192x128xbf16>
    %cst_5 = arith.constant dense<0.000000e+00> : vector<4x128xf32>
    %7 = tpu.matmul %4, %6, %cst_5 {dimension_numbers = #tpu.dot_dimension_numbers<[1], [0], [0], [1], [0, 0, 1, 1], [], []>} : vector<4x192xbf16>, vector<192x128xbf16>, vector<4x128xf32> -> vector<4x128xf32>
    %8 = arith.addf %2, %7 : vector<4x128xf32>
    %9 = vector.extract_strided_slice %1 {offsets = [1, 0], sizes = [4, 192], strides = [1, 1]} : vector<6x192xf32> to vector<4x192xf32>
    %10 = arith.truncf %9 : vector<4x192xf32> to vector<4x192xbf16>
    %c1 = arith.constant 1 : index
    %c0_6 = arith.constant 0 : index
    %c0_7 = arith.constant 0 : index
    %11 = vector.load %arg2[%c1, %c0_6, %c0_7] : memref<3x192x128xbf16, #tpu.memory_space<vmem>>, vector<1x192x128xbf16>
    %12 = vector.shape_cast %11 : vector<1x192x128xbf16> to vector<192x128xbf16>
    %cst_8 = arith.constant dense<0.000000e+00> : vector<4x128xf32>
    %13 = tpu.matmul %10, %12, %cst_8 {dimension_numbers = #tpu.dot_dimension_numbers<[1], [0], [0], [1], [0, 0, 1, 1], [], []>} : vector<4x192xbf16>, vector<192x128xbf16>, vector<4x128xf32> -> vector<4x128xf32>
    %14 = arith.addf %8, %13 : vector<4x128xf32>
    %15 = vector.extract_strided_slice %1 {offsets = [2, 0], sizes = [4, 192], strides = [1, 1]} : vector<6x192xf32> to vector<4x192xf32>
    %16 = arith.truncf %15 : vector<4x192xf32> to vector<4x192xbf16>
    %c2 = arith.constant 2 : index
    %c0_9 = arith.constant 0 : index
    %c0_10 = arith.constant 0 : index
    %17 = vector.load %arg2[%c2, %c0_9, %c0_10] : memref<3x192x128xbf16, #tpu.memory_space<vmem>>, vector<1x192x128xbf16>
    %18 = vector.shape_cast %17 : vector<1x192x128xbf16> to vector<192x128xbf16>
    %cst_11 = arith.constant dense<0.000000e+00> : vector<4x128xf32>
    %19 = tpu.matmul %16, %18, %cst_11 {dimension_numbers = #tpu.dot_dimension_numbers<[1], [0], [0], [1], [0, 0, 1, 1], [], []>} : vector<4x192xbf16>, vector<192x128xbf16>, vector<4x128xf32> -> vector<4x128xf32>
    %20 = arith.addf %14, %19 : vector<4x128xf32>
    %c0_12 = arith.constant 0 : index
    %c0_13 = arith.constant 0 : index
    %c0_14 = arith.constant 0 : index
    %21 = vector.load %arg3[%c0_12, %c0_13, %c0_14] : memref<1x4x128xf32, #tpu.memory_space<vmem>>, vector<1x4x128xf32>
    %22 = vector.shape_cast %21 : vector<1x4x128xf32> to vector<4x128xf32>
    %23 = vector.shape_cast %20 : vector<4x128xf32> to vector<1x4x128xf32>
    tpu.vector_store %arg3[%c0_12, %c0_13, %c0_14], %23 {strides = array<i32>} : memref<1x4x128xf32, #tpu.memory_space<vmem>>, vector<1x4x128xf32>,
    %cst_15 = arith.constant dense<0.000000e+00> : vector<128xf32>
    %24 = vector.multi_reduction <add>, %20, %cst_15 [0] : vector<4x128xf32> to vector<128xf32>
    %25 = vector.shape_cast %24 : vector<128xf32> to vector<1x128xf32>
    %26 = arith.mulf %20, %20 : vector<4x128xf32>
    %cst_16 = arith.constant dense<0.000000e+00> : vector<128xf32>
    %27 = vector.multi_reduction <add>, %26, %cst_16 [0] : vector<4x128xf32> to vector<128xf32>
    %28 = vector.shape_cast %27 : vector<128xf32> to vector<1x128xf32>
    %29 = tpu.concatenate %25, %28 in 0 : vector<1x128xf32>, vector<1x128xf32> -> vector<2x128xf32>
    %c0_17 = arith.constant 0 : index
    %c0_18 = arith.constant 0 : index
    %c0_19 = arith.constant 0 : index
    %30 = vector.load %arg4[%c0_17, %c0_18, %c0_19] : memref<1x2x128xf32, #tpu.memory_space<vmem>>, vector<1x2x128xf32>
    %31 = vector.shape_cast %30 : vector<1x2x128xf32> to vector<2x128xf32>
    %32 = vector.shape_cast %29 : vector<2x128xf32> to vector<1x2x128xf32>
    tpu.vector_store %arg4[%c0_17, %c0_18, %c0_19], %32 {strides = array<i32>} : memref<1x2x128xf32, #tpu.memory_space<vmem>>, vector<1x2x128xf32>,
    return
  }
  func.func @transform_0(%arg0: i32) -> (i32, i32, i32) {
    %c0_i32 = arith.constant 0 : i32
    %c0_i32_0 = arith.constant 0 : i32
    %c0_i32_1 = arith.constant 0 : i32
    return %arg0, %c0_i32, %c0_i32_0 : i32, i32, i32
  }
  func.func @transform_1(%arg0: i32) -> (i32, i32, i32) {
    %c0_i32 = arith.constant 0 : i32
    %c0_i32_0 = arith.constant 0 : i32
    %c0_i32_1 = arith.constant 0 : i32
    %c0_i32_2 = arith.constant 0 : i32
    return %c0_i32, %c0_i32_0, %c0_i32_1 : i32, i32, i32
  }
  func.func @transform_2(%arg0: i32) -> (i32, i32, i32) {
    %c0_i32 = arith.constant 0 : i32
    %c0_i32_0 = arith.constant 0 : i32
    %c0_i32_1 = arith.constant 0 : i32
    return %arg0, %c0_i32, %c0_i32_0 : i32, i32, i32
  }
  func.func @transform_3(%arg0: i32) -> (i32, i32, i32) {
    %c0_i32 = arith.constant 0 : i32
    %c0_i32_0 = arith.constant 0 : i32
    %c0_i32_1 = arith.constant 0 : i32
    return %arg0, %c0_i32, %c0_i32_0 : i32, i32, i32
  }
}

module attributes {stable_mosaic.version = 11 : i64} {
  func.func @_conv_stats_kernel(%arg0: i32, %arg1: memref<1x6x192xf32, #tpu.memory_space<vmem>>, %arg2: memref<1x192xf32, #tpu.memory_space<vmem>>, %arg3: memref<1x192xf32, #tpu.memory_space<vmem>>, %arg4: memref<3x192x128xbf16, #tpu.memory_space<vmem>>, %arg5: memref<1x4x128xf32, #tpu.memory_space<vmem>>, %arg6: memref<1x2x128xf32, #tpu.memory_space<vmem>>) attributes {dimension_semantics = [#tpu.dimension_semantics<parallel>], iteration_bounds = array<i64: 2>, scalar_prefetch = 0 : i64, scratch_operands = 0 : i64, tpu.core_type = #tpu.core_type<tc>, window_params = [{transform_indices = @transform_0, window_bounds = array<i64: 1, 6, 192>}, {pipeline_mode = #tpu.pipeline_mode<synchronous>, transform_indices = @transform_1, window_bounds = array<i64: 1, 192>}, {pipeline_mode = #tpu.pipeline_mode<synchronous>, transform_indices = @transform_2, window_bounds = array<i64: 1, 192>}, {pipeline_mode = #tpu.pipeline_mode<synchronous>, transform_indices = @transform_3, window_bounds = array<i64: 3, 192, 128>}, {transform_indices = @transform_4, window_bounds = array<i64: 1, 4, 128>}, {transform_indices = @transform_5, window_bounds = array<i64: 1, 2, 128>}]} {
    %c0 = arith.constant 0 : index
    %c0_0 = arith.constant 0 : index
    %c0_1 = arith.constant 0 : index
    %0 = vector.load %arg1[%c0, %c0_0, %c0_1] : memref<1x6x192xf32, #tpu.memory_space<vmem>>, vector<1x6x192xf32>
    %1 = vector.shape_cast %0 : vector<1x6x192xf32> to vector<6x192xf32>
    %c0_2 = arith.constant 0 : index
    %c0_3 = arith.constant 0 : index
    %2 = vector.load %arg2[%c0_2, %c0_3] : memref<1x192xf32, #tpu.memory_space<vmem>>, vector<1x192xf32>
    %3 = vector.broadcast %2 : vector<1x192xf32> to vector<6x192xf32>
    %4 = arith.mulf %1, %3 : vector<6x192xf32>
    %c0_4 = arith.constant 0 : index
    %c0_5 = arith.constant 0 : index
    %5 = vector.load %arg3[%c0_4, %c0_5] : memref<1x192xf32, #tpu.memory_space<vmem>>, vector<1x192xf32>
    %6 = vector.broadcast %5 : vector<1x192xf32> to vector<6x192xf32>
    %7 = arith.addf %4, %6 : vector<6x192xf32>
    %cst = arith.constant 0.000000e+00 : f32
    %8 = vector.broadcast %cst : f32 to vector<6x192xf32>
    %9 = arith.maximumf %7, %8 : vector<6x192xf32>
    %cst_6 = arith.constant 0.000000e+00 : f32
    %10 = vector.broadcast %cst_6 : f32 to vector<4x128xf32>
    %11 = vector.extract_strided_slice %9 {offsets = [0, 0], sizes = [4, 192], strides = [1, 1]} : vector<6x192xf32> to vector<4x192xf32>
    %12 = arith.truncf %11 : vector<4x192xf32> to vector<4x192xbf16>
    %c0_7 = arith.constant 0 : index
    %c0_8 = arith.constant 0 : index
    %c0_9 = arith.constant 0 : index
    %13 = vector.load %arg4[%c0_7, %c0_8, %c0_9] : memref<3x192x128xbf16, #tpu.memory_space<vmem>>, vector<1x192x128xbf16>
    %14 = vector.shape_cast %13 : vector<1x192x128xbf16> to vector<192x128xbf16>
    %cst_10 = arith.constant dense<0.000000e+00> : vector<4x128xf32>
    %15 = tpu.matmul %12, %14, %cst_10 {dimension_numbers = #tpu.dot_dimension_numbers<[1], [0], [0], [1], [0, 0, 1, 1], [], []>} : vector<4x192xbf16>, vector<192x128xbf16>, vector<4x128xf32> -> vector<4x128xf32>
    %16 = arith.addf %10, %15 : vector<4x128xf32>
    %17 = vector.extract_strided_slice %9 {offsets = [1, 0], sizes = [4, 192], strides = [1, 1]} : vector<6x192xf32> to vector<4x192xf32>
    %18 = arith.truncf %17 : vector<4x192xf32> to vector<4x192xbf16>
    %c1 = arith.constant 1 : index
    %c0_11 = arith.constant 0 : index
    %c0_12 = arith.constant 0 : index
    %19 = vector.load %arg4[%c1, %c0_11, %c0_12] : memref<3x192x128xbf16, #tpu.memory_space<vmem>>, vector<1x192x128xbf16>
    %20 = vector.shape_cast %19 : vector<1x192x128xbf16> to vector<192x128xbf16>
    %cst_13 = arith.constant dense<0.000000e+00> : vector<4x128xf32>
    %21 = tpu.matmul %18, %20, %cst_13 {dimension_numbers = #tpu.dot_dimension_numbers<[1], [0], [0], [1], [0, 0, 1, 1], [], []>} : vector<4x192xbf16>, vector<192x128xbf16>, vector<4x128xf32> -> vector<4x128xf32>
    %22 = arith.addf %16, %21 : vector<4x128xf32>
    %23 = vector.extract_strided_slice %9 {offsets = [2, 0], sizes = [4, 192], strides = [1, 1]} : vector<6x192xf32> to vector<4x192xf32>
    %24 = arith.truncf %23 : vector<4x192xf32> to vector<4x192xbf16>
    %c2 = arith.constant 2 : index
    %c0_14 = arith.constant 0 : index
    %c0_15 = arith.constant 0 : index
    %25 = vector.load %arg4[%c2, %c0_14, %c0_15] : memref<3x192x128xbf16, #tpu.memory_space<vmem>>, vector<1x192x128xbf16>
    %26 = vector.shape_cast %25 : vector<1x192x128xbf16> to vector<192x128xbf16>
    %cst_16 = arith.constant dense<0.000000e+00> : vector<4x128xf32>
    %27 = tpu.matmul %24, %26, %cst_16 {dimension_numbers = #tpu.dot_dimension_numbers<[1], [0], [0], [1], [0, 0, 1, 1], [], []>} : vector<4x192xbf16>, vector<192x128xbf16>, vector<4x128xf32> -> vector<4x128xf32>
    %28 = arith.addf %22, %27 : vector<4x128xf32>
    %c0_17 = arith.constant 0 : index
    %c0_18 = arith.constant 0 : index
    %c0_19 = arith.constant 0 : index
    %29 = vector.load %arg5[%c0_17, %c0_18, %c0_19] : memref<1x4x128xf32, #tpu.memory_space<vmem>>, vector<1x4x128xf32>
    %30 = vector.shape_cast %29 : vector<1x4x128xf32> to vector<4x128xf32>
    %31 = vector.shape_cast %28 : vector<4x128xf32> to vector<1x4x128xf32>
    tpu.vector_store %arg5[%c0_17, %c0_18, %c0_19], %31 {strides = array<i32>} : memref<1x4x128xf32, #tpu.memory_space<vmem>>, vector<1x4x128xf32>,
    %cst_20 = arith.constant dense<0.000000e+00> : vector<128xf32>
    %32 = vector.multi_reduction <add>, %28, %cst_20 [0] : vector<4x128xf32> to vector<128xf32>
    %33 = vector.shape_cast %32 : vector<128xf32> to vector<1x128xf32>
    %34 = arith.mulf %28, %28 : vector<4x128xf32>
    %cst_21 = arith.constant dense<0.000000e+00> : vector<128xf32>
    %35 = vector.multi_reduction <add>, %34, %cst_21 [0] : vector<4x128xf32> to vector<128xf32>
    %36 = vector.shape_cast %35 : vector<128xf32> to vector<1x128xf32>
    %37 = tpu.concatenate %33, %36 in 0 : vector<1x128xf32>, vector<1x128xf32> -> vector<2x128xf32>
    %c0_22 = arith.constant 0 : index
    %c0_23 = arith.constant 0 : index
    %c0_24 = arith.constant 0 : index
    %38 = vector.load %arg6[%c0_22, %c0_23, %c0_24] : memref<1x2x128xf32, #tpu.memory_space<vmem>>, vector<1x2x128xf32>
    %39 = vector.shape_cast %38 : vector<1x2x128xf32> to vector<2x128xf32>
    %40 = vector.shape_cast %37 : vector<2x128xf32> to vector<1x2x128xf32>
    tpu.vector_store %arg6[%c0_22, %c0_23, %c0_24], %40 {strides = array<i32>} : memref<1x2x128xf32, #tpu.memory_space<vmem>>, vector<1x2x128xf32>,
    return
  }
  func.func @transform_0(%arg0: i32) -> (i32, i32, i32) {
    %c0_i32 = arith.constant 0 : i32
    %c0_i32_0 = arith.constant 0 : i32
    %c0_i32_1 = arith.constant 0 : i32
    return %arg0, %c0_i32, %c0_i32_0 : i32, i32, i32
  }
  func.func @transform_1(%arg0: i32) -> (i32, i32) {
    %c0_i32 = arith.constant 0 : i32
    %c0_i32_0 = arith.constant 0 : i32
    %c0_i32_1 = arith.constant 0 : i32
    return %c0_i32, %c0_i32_0 : i32, i32
  }
  func.func @transform_2(%arg0: i32) -> (i32, i32) {
    %c0_i32 = arith.constant 0 : i32
    %c0_i32_0 = arith.constant 0 : i32
    %c0_i32_1 = arith.constant 0 : i32
    return %c0_i32, %c0_i32_0 : i32, i32
  }
  func.func @transform_3(%arg0: i32) -> (i32, i32, i32) {
    %c0_i32 = arith.constant 0 : i32
    %c0_i32_0 = arith.constant 0 : i32
    %c0_i32_1 = arith.constant 0 : i32
    %c0_i32_2 = arith.constant 0 : i32
    return %c0_i32, %c0_i32_0, %c0_i32_1 : i32, i32, i32
  }
  func.func @transform_4(%arg0: i32) -> (i32, i32, i32) {
    %c0_i32 = arith.constant 0 : i32
    %c0_i32_0 = arith.constant 0 : i32
    %c0_i32_1 = arith.constant 0 : i32
    return %arg0, %c0_i32, %c0_i32_0 : i32, i32, i32
  }
  func.func @transform_5(%arg0: i32) -> (i32, i32, i32) {
    %c0_i32 = arith.constant 0 : i32
    %c0_i32_0 = arith.constant 0 : i32
    %c0_i32_1 = arith.constant 0 : i32
    return %arg0, %c0_i32, %c0_i32_0 : i32, i32, i32
  }
}

module attributes {stable_mosaic.version = 11 : i64} {
  func.func @_affine_act_kernel(%arg0: i32, %arg1: memref<1x4x128xf32, #tpu.memory_space<vmem>>, %arg2: memref<1x128xf32, #tpu.memory_space<vmem>>, %arg3: memref<1x128xf32, #tpu.memory_space<vmem>>, %arg4: memref<1x4x128xf32, #tpu.memory_space<vmem>>, %arg5: memref<1x4x128xf32, #tpu.memory_space<vmem>>) attributes {dimension_semantics = [#tpu.dimension_semantics<parallel>], iteration_bounds = array<i64: 2>, scalar_prefetch = 0 : i64, scratch_operands = 0 : i64, tpu.core_type = #tpu.core_type<tc>, window_params = [{transform_indices = @transform_0, window_bounds = array<i64: 1, 4, 128>}, {pipeline_mode = #tpu.pipeline_mode<synchronous>, transform_indices = @transform_1, window_bounds = array<i64: 1, 128>}, {pipeline_mode = #tpu.pipeline_mode<synchronous>, transform_indices = @transform_2, window_bounds = array<i64: 1, 128>}, {transform_indices = @transform_3, window_bounds = array<i64: 1, 4, 128>}, {transform_indices = @transform_4, window_bounds = array<i64: 1, 4, 128>}]} {
    %c0 = arith.constant 0 : index
    %c0_0 = arith.constant 0 : index
    %c0_1 = arith.constant 0 : index
    %0 = vector.load %arg1[%c0, %c0_0, %c0_1] : memref<1x4x128xf32, #tpu.memory_space<vmem>>, vector<1x4x128xf32>
    %1 = vector.shape_cast %0 : vector<1x4x128xf32> to vector<4x128xf32>
    %c0_2 = arith.constant 0 : index
    %c0_3 = arith.constant 0 : index
    %2 = vector.load %arg2[%c0_2, %c0_3] : memref<1x128xf32, #tpu.memory_space<vmem>>, vector<1x128xf32>
    %3 = vector.broadcast %2 : vector<1x128xf32> to vector<4x128xf32>
    %4 = arith.mulf %1, %3 : vector<4x128xf32>
    %c0_4 = arith.constant 0 : index
    %c0_5 = arith.constant 0 : index
    %5 = vector.load %arg3[%c0_4, %c0_5] : memref<1x128xf32, #tpu.memory_space<vmem>>, vector<1x128xf32>
    %6 = vector.broadcast %5 : vector<1x128xf32> to vector<4x128xf32>
    %7 = arith.addf %4, %6 : vector<4x128xf32>
    %c0_6 = arith.constant 0 : index
    %c0_7 = arith.constant 0 : index
    %c0_8 = arith.constant 0 : index
    %8 = vector.load %arg4[%c0_6, %c0_7, %c0_8] : memref<1x4x128xf32, #tpu.memory_space<vmem>>, vector<1x4x128xf32>
    %9 = vector.shape_cast %8 : vector<1x4x128xf32> to vector<4x128xf32>
    %10 = arith.addf %7, %9 : vector<4x128xf32>
    %c0_9 = arith.constant 0 : index
    %c0_10 = arith.constant 0 : index
    %c0_11 = arith.constant 0 : index
    %11 = vector.load %arg5[%c0_9, %c0_10, %c0_11] : memref<1x4x128xf32, #tpu.memory_space<vmem>>, vector<1x4x128xf32>
    %12 = vector.shape_cast %11 : vector<1x4x128xf32> to vector<4x128xf32>
    %13 = vector.shape_cast %10 : vector<4x128xf32> to vector<1x4x128xf32>
    tpu.vector_store %arg5[%c0_9, %c0_10, %c0_11], %13 {strides = array<i32>} : memref<1x4x128xf32, #tpu.memory_space<vmem>>, vector<1x4x128xf32>,
    return
  }
  func.func @transform_0(%arg0: i32) -> (i32, i32, i32) {
    %c0_i32 = arith.constant 0 : i32
    %c0_i32_0 = arith.constant 0 : i32
    %c0_i32_1 = arith.constant 0 : i32
    return %arg0, %c0_i32, %c0_i32_0 : i32, i32, i32
  }
  func.func @transform_1(%arg0: i32) -> (i32, i32) {
    %c0_i32 = arith.constant 0 : i32
    %c0_i32_0 = arith.constant 0 : i32
    %c0_i32_1 = arith.constant 0 : i32
    return %c0_i32, %c0_i32_0 : i32, i32
  }
  func.func @transform_2(%arg0: i32) -> (i32, i32) {
    %c0_i32 = arith.constant 0 : i32
    %c0_i32_0 = arith.constant 0 : i32
    %c0_i32_1 = arith.constant 0 : i32
    return %c0_i32, %c0_i32_0 : i32, i32
  }
  func.func @transform_3(%arg0: i32) -> (i32, i32, i32) {
    %c0_i32 = arith.constant 0 : i32
    %c0_i32_0 = arith.constant 0 : i32
    %c0_i32_1 = arith.constant 0 : i32
    return %arg0, %c0_i32, %c0_i32_0 : i32, i32, i32
  }
  func.func @transform_4(%arg0: i32) -> (i32, i32, i32) {
    %c0_i32 = arith.constant 0 : i32
    %c0_i32_0 = arith.constant 0 : i32
    %c0_i32_1 = arith.constant 0 : i32
    return %arg0, %c0_i32, %c0_i32_0 : i32, i32, i32
  }
}

module attributes {stable_mosaic.version = 11 : i64} {
  func.func @_conv_stats_kernel(%arg0: i32, %arg1: memref<1x5x160xf32, #tpu.memory_space<vmem>>, %arg2: memref<2x160x256xbf16, #tpu.memory_space<vmem>>, %arg3: memref<1x4x256xf32, #tpu.memory_space<vmem>>, %arg4: memref<1x2x256xf32, #tpu.memory_space<vmem>>) attributes {dimension_semantics = [#tpu.dimension_semantics<parallel>], iteration_bounds = array<i64: 2>, scalar_prefetch = 0 : i64, scratch_operands = 0 : i64, tpu.core_type = #tpu.core_type<tc>, window_params = [{transform_indices = @transform_0, window_bounds = array<i64: 1, 5, 160>}, {pipeline_mode = #tpu.pipeline_mode<synchronous>, transform_indices = @transform_1, window_bounds = array<i64: 2, 160, 256>}, {transform_indices = @transform_2, window_bounds = array<i64: 1, 4, 256>}, {transform_indices = @transform_3, window_bounds = array<i64: 1, 2, 256>}]} {
    %c0 = arith.constant 0 : index
    %c0_0 = arith.constant 0 : index
    %c0_1 = arith.constant 0 : index
    %0 = vector.load %arg1[%c0, %c0_0, %c0_1] : memref<1x5x160xf32, #tpu.memory_space<vmem>>, vector<1x5x160xf32>
    %1 = vector.shape_cast %0 : vector<1x5x160xf32> to vector<5x160xf32>
    %cst = arith.constant 0.000000e+00 : f32
    %2 = vector.broadcast %cst : f32 to vector<4x256xf32>
    %3 = vector.extract_strided_slice %1 {offsets = [0, 0], sizes = [4, 160], strides = [1, 1]} : vector<5x160xf32> to vector<4x160xf32>
    %4 = arith.truncf %3 : vector<4x160xf32> to vector<4x160xbf16>
    %c0_2 = arith.constant 0 : index
    %c0_3 = arith.constant 0 : index
    %c0_4 = arith.constant 0 : index
    %5 = vector.load %arg2[%c0_2, %c0_3, %c0_4] : memref<2x160x256xbf16, #tpu.memory_space<vmem>>, vector<1x160x256xbf16>
    %6 = vector.shape_cast %5 : vector<1x160x256xbf16> to vector<160x256xbf16>
    %cst_5 = arith.constant dense<0.000000e+00> : vector<4x256xf32>
    %7 = tpu.matmul %4, %6, %cst_5 {dimension_numbers = #tpu.dot_dimension_numbers<[1], [0], [0], [1], [0, 0, 1, 1], [], []>} : vector<4x160xbf16>, vector<160x256xbf16>, vector<4x256xf32> -> vector<4x256xf32>
    %8 = arith.addf %2, %7 : vector<4x256xf32>
    %9 = vector.extract_strided_slice %1 {offsets = [1, 0], sizes = [4, 160], strides = [1, 1]} : vector<5x160xf32> to vector<4x160xf32>
    %10 = arith.truncf %9 : vector<4x160xf32> to vector<4x160xbf16>
    %c1 = arith.constant 1 : index
    %c0_6 = arith.constant 0 : index
    %c0_7 = arith.constant 0 : index
    %11 = vector.load %arg2[%c1, %c0_6, %c0_7] : memref<2x160x256xbf16, #tpu.memory_space<vmem>>, vector<1x160x256xbf16>
    %12 = vector.shape_cast %11 : vector<1x160x256xbf16> to vector<160x256xbf16>
    %cst_8 = arith.constant dense<0.000000e+00> : vector<4x256xf32>
    %13 = tpu.matmul %10, %12, %cst_8 {dimension_numbers = #tpu.dot_dimension_numbers<[1], [0], [0], [1], [0, 0, 1, 1], [], []>} : vector<4x160xbf16>, vector<160x256xbf16>, vector<4x256xf32> -> vector<4x256xf32>
    %14 = arith.addf %8, %13 : vector<4x256xf32>
    %c0_9 = arith.constant 0 : index
    %c0_10 = arith.constant 0 : index
    %c0_11 = arith.constant 0 : index
    %15 = vector.load %arg3[%c0_9, %c0_10, %c0_11] : memref<1x4x256xf32, #tpu.memory_space<vmem>>, vector<1x4x256xf32>
    %16 = vector.shape_cast %15 : vector<1x4x256xf32> to vector<4x256xf32>
    %17 = vector.shape_cast %14 : vector<4x256xf32> to vector<1x4x256xf32>
    tpu.vector_store %arg3[%c0_9, %c0_10, %c0_11], %17 {strides = array<i32>} : memref<1x4x256xf32, #tpu.memory_space<vmem>>, vector<1x4x256xf32>,
    %cst_12 = arith.constant dense<0.000000e+00> : vector<256xf32>
    %18 = vector.multi_reduction <add>, %14, %cst_12 [0] : vector<4x256xf32> to vector<256xf32>
    %19 = vector.shape_cast %18 : vector<256xf32> to vector<1x256xf32>
    %20 = arith.mulf %14, %14 : vector<4x256xf32>
    %cst_13 = arith.constant dense<0.000000e+00> : vector<256xf32>
    %21 = vector.multi_reduction <add>, %20, %cst_13 [0] : vector<4x256xf32> to vector<256xf32>
    %22 = vector.shape_cast %21 : vector<256xf32> to vector<1x256xf32>
    %23 = tpu.concatenate %19, %22 in 0 : vector<1x256xf32>, vector<1x256xf32> -> vector<2x256xf32>
    %c0_14 = arith.constant 0 : index
    %c0_15 = arith.constant 0 : index
    %c0_16 = arith.constant 0 : index
    %24 = vector.load %arg4[%c0_14, %c0_15, %c0_16] : memref<1x2x256xf32, #tpu.memory_space<vmem>>, vector<1x2x256xf32>
    %25 = vector.shape_cast %24 : vector<1x2x256xf32> to vector<2x256xf32>
    %26 = vector.shape_cast %23 : vector<2x256xf32> to vector<1x2x256xf32>
    tpu.vector_store %arg4[%c0_14, %c0_15, %c0_16], %26 {strides = array<i32>} : memref<1x2x256xf32, #tpu.memory_space<vmem>>, vector<1x2x256xf32>,
    return
  }
  func.func @transform_0(%arg0: i32) -> (i32, i32, i32) {
    %c0_i32 = arith.constant 0 : i32
    %c0_i32_0 = arith.constant 0 : i32
    %c0_i32_1 = arith.constant 0 : i32
    return %arg0, %c0_i32, %c0_i32_0 : i32, i32, i32
  }
  func.func @transform_1(%arg0: i32) -> (i32, i32, i32) {
    %c0_i32 = arith.constant 0 : i32
    %c0_i32_0 = arith.constant 0 : i32
    %c0_i32_1 = arith.constant 0 : i32
    %c0_i32_2 = arith.constant 0 : i32
    return %c0_i32, %c0_i32_0, %c0_i32_1 : i32, i32, i32
  }
  func.func @transform_2(%arg0: i32) -> (i32, i32, i32) {
    %c0_i32 = arith.constant 0 : i32
    %c0_i32_0 = arith.constant 0 : i32
    %c0_i32_1 = arith.constant 0 : i32
    return %arg0, %c0_i32, %c0_i32_0 : i32, i32, i32
  }
  func.func @transform_3(%arg0: i32) -> (i32, i32, i32) {
    %c0_i32 = arith.constant 0 : i32
    %c0_i32_0 = arith.constant 0 : i32
    %c0_i32_1 = arith.constant 0 : i32
    return %arg0, %c0_i32, %c0_i32_0 : i32, i32, i32
  }
}

module attributes {stable_mosaic.version = 11 : i64} {
  func.func @_affine_act_kernel(%arg0: i32, %arg1: memref<1x4x256xf32, #tpu.memory_space<vmem>>, %arg2: memref<1x256xf32, #tpu.memory_space<vmem>>, %arg3: memref<1x256xf32, #tpu.memory_space<vmem>>, %arg4: memref<1x4x256xf32, #tpu.memory_space<vmem>>) attributes {dimension_semantics = [#tpu.dimension_semantics<parallel>], iteration_bounds = array<i64: 2>, scalar_prefetch = 0 : i64, scratch_operands = 0 : i64, tpu.core_type = #tpu.core_type<tc>, window_params = [{transform_indices = @transform_0, window_bounds = array<i64: 1, 4, 256>}, {pipeline_mode = #tpu.pipeline_mode<synchronous>, transform_indices = @transform_1, window_bounds = array<i64: 1, 256>}, {pipeline_mode = #tpu.pipeline_mode<synchronous>, transform_indices = @transform_2, window_bounds = array<i64: 1, 256>}, {transform_indices = @transform_3, window_bounds = array<i64: 1, 4, 256>}]} {
    %c0 = arith.constant 0 : index
    %c0_0 = arith.constant 0 : index
    %c0_1 = arith.constant 0 : index
    %0 = vector.load %arg1[%c0, %c0_0, %c0_1] : memref<1x4x256xf32, #tpu.memory_space<vmem>>, vector<1x4x256xf32>
    %1 = vector.shape_cast %0 : vector<1x4x256xf32> to vector<4x256xf32>
    %c0_2 = arith.constant 0 : index
    %c0_3 = arith.constant 0 : index
    %2 = vector.load %arg2[%c0_2, %c0_3] : memref<1x256xf32, #tpu.memory_space<vmem>>, vector<1x256xf32>
    %3 = vector.broadcast %2 : vector<1x256xf32> to vector<4x256xf32>
    %4 = arith.mulf %1, %3 : vector<4x256xf32>
    %c0_4 = arith.constant 0 : index
    %c0_5 = arith.constant 0 : index
    %5 = vector.load %arg3[%c0_4, %c0_5] : memref<1x256xf32, #tpu.memory_space<vmem>>, vector<1x256xf32>
    %6 = vector.broadcast %5 : vector<1x256xf32> to vector<4x256xf32>
    %7 = arith.addf %4, %6 : vector<4x256xf32>
    %cst = arith.constant 0.000000e+00 : f32
    %8 = vector.broadcast %cst : f32 to vector<4x256xf32>
    %9 = arith.maximumf %7, %8 : vector<4x256xf32>
    %c0_6 = arith.constant 0 : index
    %c0_7 = arith.constant 0 : index
    %c0_8 = arith.constant 0 : index
    %10 = vector.load %arg4[%c0_6, %c0_7, %c0_8] : memref<1x4x256xf32, #tpu.memory_space<vmem>>, vector<1x4x256xf32>
    %11 = vector.shape_cast %10 : vector<1x4x256xf32> to vector<4x256xf32>
    %12 = vector.shape_cast %9 : vector<4x256xf32> to vector<1x4x256xf32>
    tpu.vector_store %arg4[%c0_6, %c0_7, %c0_8], %12 {strides = array<i32>} : memref<1x4x256xf32, #tpu.memory_space<vmem>>, vector<1x4x256xf32>,
    return
  }
  func.func @transform_0(%arg0: i32) -> (i32, i32, i32) {
    %c0_i32 = arith.constant 0 : i32
    %c0_i32_0 = arith.constant 0 : i32
    %c0_i32_1 = arith.constant 0 : i32
    return %arg0, %c0_i32, %c0_i32_0 : i32, i32, i32
  }
  func.func @transform_1(%arg0: i32) -> (i32, i32) {
    %c0_i32 = arith.constant 0 : i32
    %c0_i32_0 = arith.constant 0 : i32
    %c0_i32_1 = arith.constant 0 : i32
    return %c0_i32, %c0_i32_0 : i32, i32
  }
  func.func @transform_2(%arg0: i32) -> (i32, i32) {
    %c0_i32 = arith.constant 0 : i32
    %c0_i32_0 = arith.constant 0 : i32
    %c0_i32_1 = arith.constant 0 : i32
    return %c0_i32, %c0_i32_0 : i32, i32
  }
  func.func @transform_3(%arg0: i32) -> (i32, i32, i32) {
    %c0_i32 = arith.constant 0 : i32
    %c0_i32_0 = arith.constant 0 : i32
    %c0_i32_1 = arith.constant 0 : i32
    return %arg0, %c0_i32, %c0_i32_0 : i32, i32, i32
  }
}

module attributes {stable_mosaic.version = 11 : i64} {
  func.func @_conv_stats_kernel(%arg0: i32, %arg1: memref<1x9x144xf32, #tpu.memory_space<vmem>>, %arg2: memref<2x144x256xbf16, #tpu.memory_space<vmem>>, %arg3: memref<1x8x256xf32, #tpu.memory_space<vmem>>, %arg4: memref<1x2x256xf32, #tpu.memory_space<vmem>>) attributes {dimension_semantics = [#tpu.dimension_semantics<parallel>], iteration_bounds = array<i64: 2>, scalar_prefetch = 0 : i64, scratch_operands = 0 : i64, tpu.core_type = #tpu.core_type<tc>, window_params = [{transform_indices = @transform_0, window_bounds = array<i64: 1, 9, 144>}, {pipeline_mode = #tpu.pipeline_mode<synchronous>, transform_indices = @transform_1, window_bounds = array<i64: 2, 144, 256>}, {transform_indices = @transform_2, window_bounds = array<i64: 1, 8, 256>}, {transform_indices = @transform_3, window_bounds = array<i64: 1, 2, 256>}]} {
    %c0 = arith.constant 0 : index
    %c0_0 = arith.constant 0 : index
    %c0_1 = arith.constant 0 : index
    %0 = vector.load %arg1[%c0, %c0_0, %c0_1] : memref<1x9x144xf32, #tpu.memory_space<vmem>>, vector<1x9x144xf32>
    %1 = vector.shape_cast %0 : vector<1x9x144xf32> to vector<9x144xf32>
    %cst = arith.constant 0.000000e+00 : f32
    %2 = vector.broadcast %cst : f32 to vector<8x256xf32>
    %3 = vector.extract_strided_slice %1 {offsets = [0, 0], sizes = [8, 144], strides = [1, 1]} : vector<9x144xf32> to vector<8x144xf32>
    %4 = arith.truncf %3 : vector<8x144xf32> to vector<8x144xbf16>
    %c0_2 = arith.constant 0 : index
    %c0_3 = arith.constant 0 : index
    %c0_4 = arith.constant 0 : index
    %5 = vector.load %arg2[%c0_2, %c0_3, %c0_4] : memref<2x144x256xbf16, #tpu.memory_space<vmem>>, vector<1x144x256xbf16>
    %6 = vector.shape_cast %5 : vector<1x144x256xbf16> to vector<144x256xbf16>
    %cst_5 = arith.constant dense<0.000000e+00> : vector<8x256xf32>
    %7 = tpu.matmul %4, %6, %cst_5 {dimension_numbers = #tpu.dot_dimension_numbers<[1], [0], [0], [1], [0, 0, 1, 1], [], []>} : vector<8x144xbf16>, vector<144x256xbf16>, vector<8x256xf32> -> vector<8x256xf32>
    %8 = arith.addf %2, %7 : vector<8x256xf32>
    %9 = vector.extract_strided_slice %1 {offsets = [1, 0], sizes = [8, 144], strides = [1, 1]} : vector<9x144xf32> to vector<8x144xf32>
    %10 = arith.truncf %9 : vector<8x144xf32> to vector<8x144xbf16>
    %c1 = arith.constant 1 : index
    %c0_6 = arith.constant 0 : index
    %c0_7 = arith.constant 0 : index
    %11 = vector.load %arg2[%c1, %c0_6, %c0_7] : memref<2x144x256xbf16, #tpu.memory_space<vmem>>, vector<1x144x256xbf16>
    %12 = vector.shape_cast %11 : vector<1x144x256xbf16> to vector<144x256xbf16>
    %cst_8 = arith.constant dense<0.000000e+00> : vector<8x256xf32>
    %13 = tpu.matmul %10, %12, %cst_8 {dimension_numbers = #tpu.dot_dimension_numbers<[1], [0], [0], [1], [0, 0, 1, 1], [], []>} : vector<8x144xbf16>, vector<144x256xbf16>, vector<8x256xf32> -> vector<8x256xf32>
    %14 = arith.addf %8, %13 : vector<8x256xf32>
    %c0_9 = arith.constant 0 : index
    %c0_10 = arith.constant 0 : index
    %c0_11 = arith.constant 0 : index
    %15 = vector.load %arg3[%c0_9, %c0_10, %c0_11] : memref<1x8x256xf32, #tpu.memory_space<vmem>>, vector<1x8x256xf32>
    %16 = vector.shape_cast %15 : vector<1x8x256xf32> to vector<8x256xf32>
    %17 = vector.shape_cast %14 : vector<8x256xf32> to vector<1x8x256xf32>
    tpu.vector_store %arg3[%c0_9, %c0_10, %c0_11], %17 {strides = array<i32>} : memref<1x8x256xf32, #tpu.memory_space<vmem>>, vector<1x8x256xf32>,
    %cst_12 = arith.constant dense<0.000000e+00> : vector<256xf32>
    %18 = vector.multi_reduction <add>, %14, %cst_12 [0] : vector<8x256xf32> to vector<256xf32>
    %19 = vector.shape_cast %18 : vector<256xf32> to vector<1x256xf32>
    %20 = arith.mulf %14, %14 : vector<8x256xf32>
    %cst_13 = arith.constant dense<0.000000e+00> : vector<256xf32>
    %21 = vector.multi_reduction <add>, %20, %cst_13 [0] : vector<8x256xf32> to vector<256xf32>
    %22 = vector.shape_cast %21 : vector<256xf32> to vector<1x256xf32>
    %23 = tpu.concatenate %19, %22 in 0 : vector<1x256xf32>, vector<1x256xf32> -> vector<2x256xf32>
    %c0_14 = arith.constant 0 : index
    %c0_15 = arith.constant 0 : index
    %c0_16 = arith.constant 0 : index
    %24 = vector.load %arg4[%c0_14, %c0_15, %c0_16] : memref<1x2x256xf32, #tpu.memory_space<vmem>>, vector<1x2x256xf32>
    %25 = vector.shape_cast %24 : vector<1x2x256xf32> to vector<2x256xf32>
    %26 = vector.shape_cast %23 : vector<2x256xf32> to vector<1x2x256xf32>
    tpu.vector_store %arg4[%c0_14, %c0_15, %c0_16], %26 {strides = array<i32>} : memref<1x2x256xf32, #tpu.memory_space<vmem>>, vector<1x2x256xf32>,
    return
  }
  func.func @transform_0(%arg0: i32) -> (i32, i32, i32) {
    %c0_i32 = arith.constant 0 : i32
    %c0_i32_0 = arith.constant 0 : i32
    %c0_i32_1 = arith.constant 0 : i32
    return %arg0, %c0_i32, %c0_i32_0 : i32, i32, i32
  }
  func.func @transform_1(%arg0: i32) -> (i32, i32, i32) {
    %c0_i32 = arith.constant 0 : i32
    %c0_i32_0 = arith.constant 0 : i32
    %c0_i32_1 = arith.constant 0 : i32
    %c0_i32_2 = arith.constant 0 : i32
    return %c0_i32, %c0_i32_0, %c0_i32_1 : i32, i32, i32
  }
  func.func @transform_2(%arg0: i32) -> (i32, i32, i32) {
    %c0_i32 = arith.constant 0 : i32
    %c0_i32_0 = arith.constant 0 : i32
    %c0_i32_1 = arith.constant 0 : i32
    return %arg0, %c0_i32, %c0_i32_0 : i32, i32, i32
  }
  func.func @transform_3(%arg0: i32) -> (i32, i32, i32) {
    %c0_i32 = arith.constant 0 : i32
    %c0_i32_0 = arith.constant 0 : i32
    %c0_i32_1 = arith.constant 0 : i32
    return %arg0, %c0_i32, %c0_i32_0 : i32, i32, i32
  }
}

module attributes {stable_mosaic.version = 11 : i64} {
  func.func @_conv_bias_sigmoid_kernel(%arg0: i32, %arg1: memref<1x22x176xf32, #tpu.memory_space<vmem>>, %arg2: memref<1x176xf32, #tpu.memory_space<vmem>>, %arg3: memref<1x176xf32, #tpu.memory_space<vmem>>, %arg4: memref<7x176x64xbf16, #tpu.memory_space<vmem>>, %arg5: memref<1x64xf32, #tpu.memory_space<vmem>>, %arg6: memref<1x16x64xf32, #tpu.memory_space<vmem>>) attributes {dimension_semantics = [#tpu.dimension_semantics<parallel>], iteration_bounds = array<i64: 2>, scalar_prefetch = 0 : i64, scratch_operands = 0 : i64, tpu.core_type = #tpu.core_type<tc>, window_params = [{transform_indices = @transform_0, window_bounds = array<i64: 1, 22, 176>}, {pipeline_mode = #tpu.pipeline_mode<synchronous>, transform_indices = @transform_1, window_bounds = array<i64: 1, 176>}, {pipeline_mode = #tpu.pipeline_mode<synchronous>, transform_indices = @transform_2, window_bounds = array<i64: 1, 176>}, {pipeline_mode = #tpu.pipeline_mode<synchronous>, transform_indices = @transform_3, window_bounds = array<i64: 7, 176, 64>}, {pipeline_mode = #tpu.pipeline_mode<synchronous>, transform_indices = @transform_4, window_bounds = array<i64: 1, 64>}, {transform_indices = @transform_5, window_bounds = array<i64: 1, 16, 64>}]} {
    %c0 = arith.constant 0 : index
    %c0_0 = arith.constant 0 : index
    %c0_1 = arith.constant 0 : index
    %0 = vector.load %arg1[%c0, %c0_0, %c0_1] : memref<1x22x176xf32, #tpu.memory_space<vmem>>, vector<1x22x176xf32>
    %1 = vector.shape_cast %0 : vector<1x22x176xf32> to vector<22x176xf32>
    %c0_2 = arith.constant 0 : index
    %c0_3 = arith.constant 0 : index
    %2 = vector.load %arg2[%c0_2, %c0_3] : memref<1x176xf32, #tpu.memory_space<vmem>>, vector<1x176xf32>
    %3 = vector.broadcast %2 : vector<1x176xf32> to vector<22x176xf32>
    %4 = arith.mulf %1, %3 : vector<22x176xf32>
    %c0_4 = arith.constant 0 : index
    %c0_5 = arith.constant 0 : index
    %5 = vector.load %arg3[%c0_4, %c0_5] : memref<1x176xf32, #tpu.memory_space<vmem>>, vector<1x176xf32>
    %6 = vector.broadcast %5 : vector<1x176xf32> to vector<22x176xf32>
    %7 = arith.addf %4, %6 : vector<22x176xf32>
    %cst = arith.constant 0.000000e+00 : f32
    %8 = vector.broadcast %cst : f32 to vector<22x176xf32>
    %9 = arith.maximumf %7, %8 : vector<22x176xf32>
    %cst_6 = arith.constant 0.000000e+00 : f32
    %10 = vector.broadcast %cst_6 : f32 to vector<16x64xf32>
    %11 = vector.extract_strided_slice %9 {offsets = [0, 0], sizes = [16, 176], strides = [1, 1]} : vector<22x176xf32> to vector<16x176xf32>
    %12 = arith.truncf %11 : vector<16x176xf32> to vector<16x176xbf16>
    %c0_7 = arith.constant 0 : index
    %c0_8 = arith.constant 0 : index
    %c0_9 = arith.constant 0 : index
    %13 = vector.load %arg4[%c0_7, %c0_8, %c0_9] : memref<7x176x64xbf16, #tpu.memory_space<vmem>>, vector<1x176x64xbf16>
    %14 = vector.shape_cast %13 : vector<1x176x64xbf16> to vector<176x64xbf16>
    %cst_10 = arith.constant dense<0.000000e+00> : vector<16x64xf32>
    %15 = tpu.matmul %12, %14, %cst_10 {dimension_numbers = #tpu.dot_dimension_numbers<[1], [0], [0], [1], [0, 0, 1, 1], [], []>} : vector<16x176xbf16>, vector<176x64xbf16>, vector<16x64xf32> -> vector<16x64xf32>
    %16 = arith.addf %10, %15 : vector<16x64xf32>
    %17 = vector.extract_strided_slice %9 {offsets = [1, 0], sizes = [16, 176], strides = [1, 1]} : vector<22x176xf32> to vector<16x176xf32>
    %18 = arith.truncf %17 : vector<16x176xf32> to vector<16x176xbf16>
    %c1 = arith.constant 1 : index
    %c0_11 = arith.constant 0 : index
    %c0_12 = arith.constant 0 : index
    %19 = vector.load %arg4[%c1, %c0_11, %c0_12] : memref<7x176x64xbf16, #tpu.memory_space<vmem>>, vector<1x176x64xbf16>
    %20 = vector.shape_cast %19 : vector<1x176x64xbf16> to vector<176x64xbf16>
    %cst_13 = arith.constant dense<0.000000e+00> : vector<16x64xf32>
    %21 = tpu.matmul %18, %20, %cst_13 {dimension_numbers = #tpu.dot_dimension_numbers<[1], [0], [0], [1], [0, 0, 1, 1], [], []>} : vector<16x176xbf16>, vector<176x64xbf16>, vector<16x64xf32> -> vector<16x64xf32>
    %22 = arith.addf %16, %21 : vector<16x64xf32>
    %23 = vector.extract_strided_slice %9 {offsets = [2, 0], sizes = [16, 176], strides = [1, 1]} : vector<22x176xf32> to vector<16x176xf32>
    %24 = arith.truncf %23 : vector<16x176xf32> to vector<16x176xbf16>
    %c2 = arith.constant 2 : index
    %c0_14 = arith.constant 0 : index
    %c0_15 = arith.constant 0 : index
    %25 = vector.load %arg4[%c2, %c0_14, %c0_15] : memref<7x176x64xbf16, #tpu.memory_space<vmem>>, vector<1x176x64xbf16>
    %26 = vector.shape_cast %25 : vector<1x176x64xbf16> to vector<176x64xbf16>
    %cst_16 = arith.constant dense<0.000000e+00> : vector<16x64xf32>
    %27 = tpu.matmul %24, %26, %cst_16 {dimension_numbers = #tpu.dot_dimension_numbers<[1], [0], [0], [1], [0, 0, 1, 1], [], []>} : vector<16x176xbf16>, vector<176x64xbf16>, vector<16x64xf32> -> vector<16x64xf32>
    %28 = arith.addf %22, %27 : vector<16x64xf32>
    %29 = vector.extract_strided_slice %9 {offsets = [3, 0], sizes = [16, 176], strides = [1, 1]} : vector<22x176xf32> to vector<16x176xf32>
    %30 = arith.truncf %29 : vector<16x176xf32> to vector<16x176xbf16>
    %c3 = arith.constant 3 : index
    %c0_17 = arith.constant 0 : index
    %c0_18 = arith.constant 0 : index
    %31 = vector.load %arg4[%c3, %c0_17, %c0_18] : memref<7x176x64xbf16, #tpu.memory_space<vmem>>, vector<1x176x64xbf16>
    %32 = vector.shape_cast %31 : vector<1x176x64xbf16> to vector<176x64xbf16>
    %cst_19 = arith.constant dense<0.000000e+00> : vector<16x64xf32>
    %33 = tpu.matmul %30, %32, %cst_19 {dimension_numbers = #tpu.dot_dimension_numbers<[1], [0], [0], [1], [0, 0, 1, 1], [], []>} : vector<16x176xbf16>, vector<176x64xbf16>, vector<16x64xf32> -> vector<16x64xf32>
    %34 = arith.addf %28, %33 : vector<16x64xf32>
    %35 = vector.extract_strided_slice %9 {offsets = [4, 0], sizes = [16, 176], strides = [1, 1]} : vector<22x176xf32> to vector<16x176xf32>
    %36 = arith.truncf %35 : vector<16x176xf32> to vector<16x176xbf16>
    %c4 = arith.constant 4 : index
    %c0_20 = arith.constant 0 : index
    %c0_21 = arith.constant 0 : index
    %37 = vector.load %arg4[%c4, %c0_20, %c0_21] : memref<7x176x64xbf16, #tpu.memory_space<vmem>>, vector<1x176x64xbf16>
    %38 = vector.shape_cast %37 : vector<1x176x64xbf16> to vector<176x64xbf16>
    %cst_22 = arith.constant dense<0.000000e+00> : vector<16x64xf32>
    %39 = tpu.matmul %36, %38, %cst_22 {dimension_numbers = #tpu.dot_dimension_numbers<[1], [0], [0], [1], [0, 0, 1, 1], [], []>} : vector<16x176xbf16>, vector<176x64xbf16>, vector<16x64xf32> -> vector<16x64xf32>
    %40 = arith.addf %34, %39 : vector<16x64xf32>
    %41 = vector.extract_strided_slice %9 {offsets = [5, 0], sizes = [16, 176], strides = [1, 1]} : vector<22x176xf32> to vector<16x176xf32>
    %42 = arith.truncf %41 : vector<16x176xf32> to vector<16x176xbf16>
    %c5 = arith.constant 5 : index
    %c0_23 = arith.constant 0 : index
    %c0_24 = arith.constant 0 : index
    %43 = vector.load %arg4[%c5, %c0_23, %c0_24] : memref<7x176x64xbf16, #tpu.memory_space<vmem>>, vector<1x176x64xbf16>
    %44 = vector.shape_cast %43 : vector<1x176x64xbf16> to vector<176x64xbf16>
    %cst_25 = arith.constant dense<0.000000e+00> : vector<16x64xf32>
    %45 = tpu.matmul %42, %44, %cst_25 {dimension_numbers = #tpu.dot_dimension_numbers<[1], [0], [0], [1], [0, 0, 1, 1], [], []>} : vector<16x176xbf16>, vector<176x64xbf16>, vector<16x64xf32> -> vector<16x64xf32>
    %46 = arith.addf %40, %45 : vector<16x64xf32>
    %47 = vector.extract_strided_slice %9 {offsets = [6, 0], sizes = [16, 176], strides = [1, 1]} : vector<22x176xf32> to vector<16x176xf32>
    %48 = arith.truncf %47 : vector<16x176xf32> to vector<16x176xbf16>
    %c6 = arith.constant 6 : index
    %c0_26 = arith.constant 0 : index
    %c0_27 = arith.constant 0 : index
    %49 = vector.load %arg4[%c6, %c0_26, %c0_27] : memref<7x176x64xbf16, #tpu.memory_space<vmem>>, vector<1x176x64xbf16>
    %50 = vector.shape_cast %49 : vector<1x176x64xbf16> to vector<176x64xbf16>
    %cst_28 = arith.constant dense<0.000000e+00> : vector<16x64xf32>
    %51 = tpu.matmul %48, %50, %cst_28 {dimension_numbers = #tpu.dot_dimension_numbers<[1], [0], [0], [1], [0, 0, 1, 1], [], []>} : vector<16x176xbf16>, vector<176x64xbf16>, vector<16x64xf32> -> vector<16x64xf32>
    %52 = arith.addf %46, %51 : vector<16x64xf32>
    %c0_29 = arith.constant 0 : index
    %c0_30 = arith.constant 0 : index
    %53 = vector.load %arg5[%c0_29, %c0_30] : memref<1x64xf32, #tpu.memory_space<vmem>>, vector<1x64xf32>
    %54 = vector.broadcast %53 : vector<1x64xf32> to vector<16x64xf32>
    %55 = arith.addf %52, %54 : vector<16x64xf32>
    %cst_31 = arith.constant 0.000000e+00 : f32
    %56 = vector.broadcast %cst_31 : f32 to vector<16x64xf32>
    %57 = arith.subf %56, %55 : vector<16x64xf32>
    %58 = math.exp %57 : vector<16x64xf32>
    %cst_32 = arith.constant 1.000000e+00 : f32
    %59 = vector.broadcast %cst_32 : f32 to vector<16x64xf32>
    %60 = arith.addf %59, %58 : vector<16x64xf32>
    %61 = tpu.reciprocal %60 {approx = true} : vector<16x64xf32> -> vector<16x64xf32>
    %c0_33 = arith.constant 0 : index
    %c0_34 = arith.constant 0 : index
    %c0_35 = arith.constant 0 : index
    %62 = vector.load %arg6[%c0_33, %c0_34, %c0_35] : memref<1x16x64xf32, #tpu.memory_space<vmem>>, vector<1x16x64xf32>
    %63 = vector.shape_cast %62 : vector<1x16x64xf32> to vector<16x64xf32>
    %64 = vector.shape_cast %61 : vector<16x64xf32> to vector<1x16x64xf32>
    tpu.vector_store %arg6[%c0_33, %c0_34, %c0_35], %64 {strides = array<i32>} : memref<1x16x64xf32, #tpu.memory_space<vmem>>, vector<1x16x64xf32>,
    return
  }
  func.func @transform_0(%arg0: i32) -> (i32, i32, i32) {
    %c0_i32 = arith.constant 0 : i32
    %c0_i32_0 = arith.constant 0 : i32
    %c0_i32_1 = arith.constant 0 : i32
    return %arg0, %c0_i32, %c0_i32_0 : i32, i32, i32
  }
  func.func @transform_1(%arg0: i32) -> (i32, i32) {
    %c0_i32 = arith.constant 0 : i32
    %c0_i32_0 = arith.constant 0 : i32
    %c0_i32_1 = arith.constant 0 : i32
    return %c0_i32, %c0_i32_0 : i32, i32
  }
  func.func @transform_2(%arg0: i32) -> (i32, i32) {
    %c0_i32 = arith.constant 0 : i32
    %c0_i32_0 = arith.constant 0 : i32
    %c0_i32_1 = arith.constant 0 : i32
    return %c0_i32, %c0_i32_0 : i32, i32
  }
  func.func @transform_3(%arg0: i32) -> (i32, i32, i32) {
    %c0_i32 = arith.constant 0 : i32
    %c0_i32_0 = arith.constant 0 : i32
    %c0_i32_1 = arith.constant 0 : i32
    %c0_i32_2 = arith.constant 0 : i32
    return %c0_i32, %c0_i32_0, %c0_i32_1 : i32, i32, i32
  }
  func.func @transform_4(%arg0: i32) -> (i32, i32) {
    %c0_i32 = arith.constant 0 : i32
    %c0_i32_0 = arith.constant 0 : i32
    %c0_i32_1 = arith.constant 0 : i32
    return %c0_i32, %c0_i32_0 : i32, i32
  }
  func.func @transform_5(%arg0: i32) -> (i32, i32, i32) {
    %c0_i32 = arith.constant 0 : i32
    %c0_i32_0 = arith.constant 0 : i32
    %c0_i32_1 = arith.constant 0 : i32
    return %arg0, %c0_i32, %c0_i32_0 : i32, i32, i32
  }
}

</mosaic_0001>

<llo_original>
// kernel: tile.106
$region0: #{tile.106}
  #allocation0 [shape = 's32[1]{0}', space=sflag, size = 0x4, scoped, tag = 'scoped memory for tile.106']
  %s0 = inlined_call_operand.vmem [shape: f32[8], index: 0, kind: input, shape index: {}]
  %s1 = inlined_call_operand.vmem [shape: f32[16,8], index: 1, kind: output, shape index: {}]
  // Predicated region
  $region2: #{tile.106} parent=0 // pred_check
    _
  $region3: #{tile.106} parent=0 // pred_check_branch
    %3 = sbr.rel (0) target = $region5
  $region4: #{tile.106} parent=0 // pred_region
    _
  $region5: #{tile.106} parent=0 // pred_fallthru
    _
  %v4 = vld [vmem:[%s0] ss:$0 sm:$0xff]
  %5 = vst [vmem:[%s1] sm:$0xff] %v4
  %s6 = scalar_lea.vmem %s1, 8
  %7 = vst [vmem:[%s6] sm:$0xff] %v4

// kernel: tile.107
$region0: #{tile.107}
  %s0 = inlined_call_operand.vmem [shape: f32[16,8], index: 0, kind: input, shape index: {}]
  %s1 = inlined_call_operand.vmem [shape: f32[1,128], index: 1, kind: output, shape index: {}]
  $region1: #{tile.107} parent=0
    #allocation0 [shape = 'u8[4096]{0}', space=vmem, size = 0x1000, scoped, tag = 'scoped mem for output reshape']
    %v2 = vld [vmem:[%s0] sm:$0x1]
    %vm3 = vcmask 64512
    %4 = vst.msk [vmem:[#allocation0] sm:$0x1] %vm3, %v2
    %s5 = scalar_lea.vmem %s0, 15
    %v6 = vld [vmem:[%s5] sm:$0x1]
    %7 = vrot.lane.b32.xlu0 %v6, 120
    %v8 = vpop.permute.xlu0 %7
    %vm9 = vcmask 1048512
    %10 = vst.msk [vmem:[#allocation0] sm:$0x1] %vm9, %v8
    %s11 = scalar_lea.vmem %s0, 14
    %v12 = vld [vmem:[%s11] sm:$0x1]
    %13 = vrot.lane.b32.xlu0 %v12, 112
    %v14 = vpop.permute.xlu0 %13
    %vm15 = vcmask 982912
    %16 = vst.msk [vmem:[#allocation0] sm:$0x1] %vm15, %v14
    %s17 = scalar_lea.vmem %s0, 13
    %v18 = vld [vmem:[%s17] sm:$0x1]
    %19 = vrot.lane.b32.xlu0 %v18, 104
    %v20 = vpop.permute.xlu0 %19
    %vm21 = vcmask 917312
    %22 = vst.msk [vmem:[#allocation0] sm:$0x1] %vm21, %v20
    %s23 = scalar_lea.vmem %s0, 12
    %v24 = vld [vmem:[%s23] sm:$0x1]
    %25 = vrot.lane.b32.xlu0 %v24, 96
    %v26 = vpop.permute.xlu0 %25
    %vm27 = vcmask 851712
    %28 = vst.msk [vmem:[#allocation0] sm:$0x1] %vm27, %v26
    %s29 = scalar_lea.vmem %s0, 11
    %v30 = vld [vmem:[%s29] sm:$0x1]
    %31 = vrot.lane.b32.xlu0 %v30, 88
    %v32 = vpop.permute.xlu0 %31
    %vm33 = vcmask 786112
    %34 = vst.msk [vmem:[#allocation0] sm:$0x1] %vm33, %v32
    %s35 = scalar_lea.vmem %s0, 10
    %v36 = vld [vmem:[%s35] sm:$0x1]
    %37 = vrot.lane.b32.xlu0 %v36, 80
    %v38 = vpop.permute.xlu0 %37
    %vm39 = vcmask 720512
    %40 = vst.msk [vmem:[#allocation0] sm:$0x1] %vm39, %v38
    %s41 = scalar_lea.vmem %s0, 9
    %v42 = vld [vmem:[%s41] sm:$0x1]
    %43 = vrot.lane.b32.xlu0 %v42, 72
    %v44 = vpop.permute.xlu0 %43
    %vm45 = vcmask 654912
    %46 = vst.msk [vmem:[#allocation0] sm:$0x1] %vm45, %v44
    %s47 = scalar_lea.vmem %s0, 8
    %v48 = vld [vmem:[%s47] sm:$0x1]
    %49 = vrot.lane.b32.xlu0 %v48, 64
    %v50 = vpop.permute.xlu0 %49
    %vm51 = vcmask 589312
    %52 = vst.msk [vmem:[#allocation0] sm:$0x1] %vm51, %v50
    %s53 = scalar_lea.vmem %s0, 7
    %v54 = vld [vmem:[%s53] sm:$0x1]
    %55 = vrot.lane.b32.xlu0 %v54, 56
    %v56 = vpop.permute.xlu0 %55
    %vm57 = vcmask 523712
    %58 = vst.msk [vmem:[#allocation0] sm:$0x1] %vm57, %v56
    %s59 = scalar_lea.vmem %s0, 6
    %v60 = vld [vmem:[%s59] sm:$0x1]
    %61 = vrot.lane.b32.xlu0 %v60, 48
    %v62 = vpop.permute.xlu0 %61
    %vm63 = vcmask 458112
    %64 = vst.msk [vmem:[#allocation0] sm:$0x1] %vm63, %v62
    %s65 = scalar_lea.vmem %s0, 5
    %v66 = vld [vmem:[%s65] sm:$0x1]
    %67 = vrot.lane.b32.xlu0 %v66, 40
    %v68 = vpop.permute.xlu0 %67
    %vm69 = vcmask 392512
    %70 = vst.msk [vmem:[#allocation0] sm:$0x1] %vm69, %v68
    %s71 = scalar_lea.vmem %s0, 4
    %v72 = vld [vmem:[%s71] sm:$0x1]
    %73 = vrot.lane.b32.xlu0 %v72, 32
    %v74 = vpop.permute.xlu0 %73
    %vm75 = vcmask 326912
    %76 = vst.msk [vmem:[#allocation0] sm:$0x1] %vm75, %v74
    %s77 = scalar_lea.vmem %s0, 3
    %v78 = vld [vmem:[%s77] sm:$0x1]
    %79 = vrot.lane.b32.xlu0 %v78, 24
    %v80 = vpop.permute.xlu0 %79
    %vm81 = vcmask 261312
    %82 = vst.msk [vmem:[#allocation0] sm:$0x1] %vm81, %v80
    %s83 = scalar_lea.vmem %s0, 2
    %v84 = vld [vmem:[%s83] sm:$0x1]
    %85 = vrot.lane.b32.xlu0 %v84, 16
    %v86 = vpop.permute.xlu0 %85
    %vm87 = vcmask 195712
    %88 = vst.msk [vmem:[#allocation0] sm:$0x1] %vm87, %v86
    %s89 = scalar_lea.vmem %s0, 1
    %v90 = vld [vmem:[%s89] sm:$0x1]
    %91 = vrot.lane.b32.xlu0 %v90, 8
    %v92 = vpop.permute.xlu0 %91
    %vm93 = vcmask 130112
    %94 = vst.msk [vmem:[#allocation0] sm:$0x1] %vm93, %v92
    %s96 = sshllo.u32 0, 1
    %v98 = vld [vmem:[#allocation0] sm:%s96]
    %s99 = sshllo.u32 0, 1
    %100 = vst [vmem:[%s1] sm:%s99] %v98

// kernel: generator_forward.17
$region0: #{generator_forward.17}
  #allocation0 [shape = 'u32[]', space=smem, size = 0x4, offset = 0x4, fixed_abs, tag = 'smem constant byte address 0x4 - core index']
  #allocation1 [shape = 'u32[144,128]{1,0:T(1,128)}', space=vmem, size = 0x12000, scoped, tag = 'internal scratch']
  %s0 = inlined_call_operand.vmem [shape: f32[2,16,128], index: 0, kind: input, shape index: {}]
  %s1 = inlined_call_operand.vmem [shape: f32[1,128], index: 1, kind: input, shape index: {}]
  %s2 = inlined_call_operand.vmem [shape: f32[1,128], index: 2, kind: input, shape index: {}]
  %s3 = inlined_call_operand.vmem [shape: f32[2,16,128], index: 3, kind: output, shape index: {}]
  %s4 = sld [smem:[#allocation0]]
  $region45: #{generator_forward.17} parent=0
    _
  %s6 = ssub.s32 1, %s4
  %s7 = scalar_select 0, %s6, %s4
  loop: start=0, step=1, limit=4
  $region2: #{generator_forward.17} parent=0 // loop_pre_header
    _
  $region3: #{generator_forward.17} parent=0 // loop_header
    %s9 = sphi 0, %s13
    %p10 = scmp.ge.s32.totalorder %s9, 4
    %s19 = sphi 0, %s21
    %s22 = sphi 0, %s19
    %s23 = sphi 0, %s22
    %s39 = sphi 0, %s23
    %s43 = sphi 0, %s43
    %s45 = sphi 0, %s43
    %s46 = sphi 0, %s45
    %s60 = sphi 0, %s46
    %s64 = sphi 0, %s64
    %s66 = sphi 0, %s64
    %s67 = sphi 0, %s66
    %s81 = sphi 0, %s67
    %s87 = sphi 0, %s89
    %s90 = sphi 0, %s87
    %s91 = sphi 0, %s90
    %s107 = sphi 0, %s91
  $region4: #{generator_forward.17} parent=0 // loop_header_branch
    %12 = sbr.rel (%p10) target = $region8
  $region5: #{generator_forward.17} parent=0 // loop_body
    %s14 = ssub.s32 %s9, 1
    %s15 = ssub.s32 %s9, 2
    %s16 = sadd.s32 %s9, 1
    %s17 = ssub.s32 %s9, %s16
    %p18 = scmp.eq.s32.totalorder %s17, 0
    %s20 = sadd.s32 %s19, 1
    %s21 = scalar_select %p18, %s19, %s20
    %p24 = pneg %p18
    %p25 = scmp.eq.s32.totalorder %s9, 1
    %p26 = por %p24, %p25
    %p27 = scmp.ne.s32.totalorder %s19, %s22
    %p28 = scmp.eq.s32.totalorder %s9, 0
    %p29 = por %p27, %p28
    %p30 = scmp.ne.s32.totalorder %s19, %s22
    %p31 = scmp.eq.s32.totalorder %s14, 1
    %p32 = por %p30, %p31
    %p33 = scmp.ne.s32.totalorder %s22, %s23
    %p34 = scmp.eq.s32.totalorder %s14, 0
    %p35 = por %p33, %p34
    %p36 = scmp.ne.s32.totalorder %s22, %s23
    %p37 = scmp.eq.s32.totalorder %s15, 1
    %p38 = por %p36, %p37
    %p40 = scmp.ne.s32.totalorder %s23, %s39
    %p41 = scmp.eq.s32.totalorder %s15, 0
    %p42 = por %p40, %p41
    %s44 = sadd.s32 %s43, 1
    %p47 = scmp.eq.s32.totalorder %s9, 1
    %p48 = scmp.ne.s32.totalorder %s43, %s45
    %p49 = scmp.eq.s32.totalorder %s9, 0
    %p50 = por %p48, %p49
    %p51 = scmp.ne.s32.totalorder %s43, %s45
    %p52 = scmp.eq.s32.totalorder %s14, 1
    %p53 = por %p51, %p52
    %p54 = scmp.ne.s32.totalorder %s45, %s46
    %p55 = scmp.eq.s32.totalorder %s14, 0
    %p56 = por %p54, %p55
    %p57 = scmp.ne.s32.totalorder %s45, %s46
    %p58 = scmp.eq.s32.totalorder %s15, 1
    %p59 = por %p57, %p58
    %p61 = scmp.ne.s32.totalorder %s46, %s60
    %p62 = scmp.eq.s32.totalorder %s15, 0
    %p63 = por %p61, %p62
    %s65 = sadd.s32 %s64, 1
    %p68 = scmp.eq.s32.totalorder %s9, 1
    %p69 = scmp.ne.s32.totalorder %s64, %s66
    %p70 = scmp.eq.s32.totalorder %s9, 0
    %p71 = por %p69, %p70
    %p72 = scmp.ne.s32.totalorder %s64, %s66
    %p73 = scmp.eq.s32.totalorder %s14, 1
    %p74 = por %p72, %p73
    %p75 = scmp.ne.s32.totalorder %s66, %s67
    %p76 = scmp.eq.s32.totalorder %s14, 0
    %p77 = por %p75, %p76
    %p78 = scmp.ne.s32.totalorder %s66, %s67
    %p79 = scmp.eq.s32.totalorder %s15, 1
    %p80 = por %p78, %p79
    %p82 = scmp.ne.s32.totalorder %s67, %s81
    %p83 = scmp.eq.s32.totalorder %s15, 0
    %p84 = por %p82, %p83
    %s85 = ssub.s32 %s9, %s16
    %p86 = scmp.eq.s32.totalorder %s85, 0
    %s88 = sadd.s32 %s87, 1
    %s89 = scalar_select %p86, %s87, %s88
    %p92 = pneg %p86
    %p93 = scmp.eq.s32.totalorder %s9, 1
    %p94 = por %p92, %p93
    %p95 = scmp.ne.s32.totalorder %s87, %s90
    %p96 = scmp.eq.s32.totalorder %s9, 0
    %p97 = por %p95, %p96
    %p98 = scmp.ne.s32.totalorder %s87, %s90
    %p99 = scmp.eq.s32.totalorder %s14, 1
    %p100 = por %p98, %p99
    %p101 = scmp.ne.s32.totalorder %s90, %s91
    %p102 = scmp.eq.s32.totalorder %s14, 0
    %p103 = por %p101, %p102
    %p104 = scmp.ne.s32.totalorder %s90, %s91
    %p105 = scmp.eq.s32.totalorder %s15, 1
    %p106 = por %p104, %p105
    %p108 = scmp.ne.s32.totalorder %s91, %s107
    %p109 = scmp.eq.s32.totalorder %s15, 0
    %p110 = por %p108, %p109
    %p111 = scmp.le.s32.totalorder 1, %s9
    %p112 = scmp.lt.s32.totalorder %s9, 3
    %p113 = pnand %p111, %p112
    %p114 = pneg %p113
    // Predicated region
    $region9: #{generator_forward.17} parent=5 // pred_check
      _
    $region10: #{generator_forward.17} parent=5 // pred_check_branch
      %116 = sbr.rel (%p113) target = $region12
    $region11: #{generator_forward.17} parent=5 // pred_region
      %s117 = ssub.s32 %s9, 1
      // Predicated region
      $region13: #{generator_forward.17} parent=11 // pred_check
        %p118 = pneg %p56
      $region14: #{generator_forward.17} parent=11 // pred_check_branch
        %120 = sbr.rel (%p118) target = $region16
      $region15: #{generator_forward.17} parent=11 // pred_region
        _
      $region16: #{generator_forward.17} parent=11 // pred_fallthru
        _
      // Predicated region
      $region17: #{generator_forward.17} parent=11 // pred_check
        %p121 = pneg %p77
      $region18: #{generator_forward.17} parent=11 // pred_check_branch
        %123 = sbr.rel (%p121) target = $region20
      $region19: #{generator_forward.17} parent=11 // pred_region
        _
      $region20: #{generator_forward.17} parent=11 // pred_fallthru
        _
    $region12: #{generator_forward.17} parent=5 // pred_fallthru
      _
    %p124 = scmp.lt.s32.totalorder %s9, 2
    // Predicated region
    $region21: #{generator_forward.17} parent=5 // pred_check
      %p125 = pneg %p124
    $region22: #{generator_forward.17} parent=5 // pred_check_branch
      %127 = sbr.rel (%p125) target = $region24
    $region23: #{generator_forward.17} parent=5 // pred_region
      // Predicated region
      $region25: #{generator_forward.17} parent=23 // pred_check
        %p128 = pneg %p29
      $region26: #{generator_forward.17} parent=23 // pred_check_branch
        %130 = sbr.rel (%p128) target = $region28
      $region27: #{generator_forward.17} parent=23 // pred_region
        %p131 = scmp.lt.s32.totalorder %s9, 1
        %s132 = scalar_select %p131, %s9, 1
        %s133 = smul.addr %s132, 2
        %s134 = smul.addr %s133, 8
        %s135 = scalar_lea.vmem %s0, %s134
      $region28: #{generator_forward.17} parent=23 // pred_fallthru
        _
    $region24: #{generator_forward.17} parent=5 // pred_fallthru
      _
    %p136 = scmp.le.s32.totalorder 1, %s9
    %p137 = scmp.lt.s32.totalorder %s9, 3
    %p138 = pnand %p136, %p137
    %p139 = pneg %p138
    // Predicated region
    $region29: #{generator_forward.17} parent=5 // pred_check
      _
    $region30: #{generator_forward.17} parent=5 // pred_check_branch
      %141 = sbr.rel (%p138) target = $region32
    $region31: #{generator_forward.17} parent=5 // pred_region
      %s142 = ssub.s32 %s9, 1
      %p143 = scmp.lt.s32.totalorder %s14, 1
      %s144 = scalar_select %p143, %s14, 1
      %s145 = smul.addr %s144, 2
      %s146 = smul.addr %s145, 8
      %s147 = scalar_lea.vmem %s0, %s146
      %p148 = pneg %p35
      %p149 = pneg %p32
      %p150 = pneg %p56
      %p151 = pneg %p53
      %p152 = pneg %p77
      %p153 = pneg %p74
      %p154 = pneg %p103
      %p155 = pneg %p100
      %p156 = scmp.lt.s32.totalorder %s14, 1
      %s157 = scalar_select %p156, %s14, 1
      %s158 = smul.addr %s157, 2
      %s159 = smul.addr %s158, 8
      %s160 = scalar_lea.vmem %s3, %s159
      %p161 = scmp.lt.s32.totalorder %s14, 1
      %s162 = scalar_select %p161, %s14, 1
      %s163 = smul.addr %s162, 2
      %s164 = smul.addr %s163, 8
      %s165 = scalar_lea.vmem %s0, %s164
      %p166 = scmp.lt.s32.totalorder %s14, 1
      %s167 = scalar_select %p166, %s14, 1
      %s168 = smul.addr %s167, 2
      %s169 = smul.addr %s168, 8
      %s170 = scalar_lea.vmem %s3, %s169
      %v171 = vld [vmem:[%s165] sm:$0xff]
      %v172 = vld [vmem:[%s165 + $0x8] sm:$0xff]
      %v173 = vld [vmem:[%s1] sm:$0x1]
      %v175 = vlaneseq
      %v176 = vshrl.u32 %v175, 7
      %v177 = vsub.s32 0, %v176
      %v178 = vrot.slane %v173, %v177
      %v180 = vmul.f32 %v171, %v178
      %v181 = vmul.f32 %v172, %v178
      %v182 = vld [vmem:[%s2] sm:$0x1]
      %v184 = vlaneseq
      %v185 = vshrl.u32 %v184, 7
      %v186 = vsub.s32 0, %v185
      %v187 = vrot.slane %v182, %v186
      %v189 = vadd.f32 %v180, %v187
      %v190 = vadd.f32 %v181, %v187
      %v191 = vmax.f32 %v189, 0.0
      %v192 = vmax.f32 %v190, 0.0
      %193 = vst [vmem:[%s170] sm:$0xff] %v191
      %194 = vst [vmem:[%s170 + $0x8] sm:$0xff] %v192
      %p195 = scmp.lt.s32.totalorder %s14, 1
      %s196 = scalar_select %p195, %s14, 1
      %s197 = smul.addr %s196, 2
      %s198 = smul.addr %s197, 8
      %s199 = scalar_lea.vmem %s3, %s198
      // Predicated region
      $region33: #{generator_forward.17} parent=31 // pred_check
        %p200 = pneg %p100
      $region34: #{generator_forward.17} parent=31 // pred_check_branch
        %202 = sbr.rel (%p200) target = $region36
      $region35: #{generator_forward.17} parent=31 // pred_region
        _
      $region36: #{generator_forward.17} parent=31 // pred_fallthru
        _
    $region32: #{generator_forward.17} parent=5 // pred_fallthru
      _
    %p203 = scmp.le.s32.totalorder 2, %s9
    // Predicated region
    $region37: #{generator_forward.17} parent=5 // pred_check
      %p204 = pneg %p203
    $region38: #{generator_forward.17} parent=5 // pred_check_branch
      %206 = sbr.rel (%p204) target = $region40
    $region39: #{generator_forward.17} parent=5 // pred_region
      %s207 = ssub.s32 %s9, 2
      // Predicated region
      $region41: #{generator_forward.17} parent=39 // pred_check
        %p208 = pneg %p106
      $region42: #{generator_forward.17} parent=39 // pred_check_branch
        %210 = sbr.rel (%p208) target = $region44
      $region43: #{generator_forward.17} parent=39 // pred_region
        %p211 = scmp.lt.s32.totalorder %s15, 1
        %s212 = scalar_select %p211, %s15, 1
        %s213 = smul.addr %s212, 2
        %s214 = smul.addr %s213, 8
        %s215 = scalar_lea.vmem %s3, %s214
      $region44: #{generator_forward.17} parent=39 // pred_fallthru
        _
    $region40: #{generator_forward.17} parent=5 // pred_fallthru
      _
  $region6: #{generator_forward.17} parent=0 // loop_footer
    %s13 = sadd.s32 1, %s9
  $region7: #{generator_forward.17} parent=0 // loop_footer_branch
    %8 = sbr.rel target = $region3
  $region8: #{generator_forward.17} parent=0 // loop_exit
    _

// kernel: generator_forward.16
$region0: #{generator_forward.16}
  #allocation0 [shape = 'u32[]', space=smem, size = 0x4, offset = 0x4, fixed_abs, tag = 'smem constant byte address 0x4 - core index']
  #allocation1 [shape = 'u32[144,128]{1,0:T(1,128)}', space=vmem, size = 0x12000, scoped, tag = 'internal scratch']
  %s0 = inlined_call_operand.vmem [shape: f32[2,22,88], index: 0, kind: input, shape index: {}]
  %s1 = inlined_call_operand.vmem [shape: bf16[7,88,128], index: 1, kind: input, shape index: {}]
  %s2 = inlined_call_operand.vmem [shape: f32[2,16,128], index: 2, kind: output, shape index: {0}]
  %s3 = inlined_call_operand.vmem [shape: f32[2,2,128], index: 3, kind: output, shape index: {1}]
  %4 = xla_tuple %s2, %s3
  %s5 = sld [smem:[#allocation0]]
  $region49: #{generator_forward.16} parent=0
    _
  %s7 = ssub.s32 1, %s5
  %s8 = scalar_select 0, %s7, %s5
  loop: start=0, step=1, limit=4
  $region2: #{generator_forward.16} parent=0 // loop_pre_header
    _
  $region3: #{generator_forward.16} parent=0 // loop_header
    %s10 = sphi 0, %s14
    %p11 = scmp.ge.s32.totalorder %s10, 4
    %s20 = sphi 0, %s22
    %s23 = sphi 0, %s20
    %s24 = sphi 0, %s23
    %s40 = sphi 0, %s24
    %s44 = sphi 0, %s44
    %s46 = sphi 0, %s44
    %s47 = sphi 0, %s46
    %s61 = sphi 0, %s47
    %s67 = sphi 0, %s69
    %s70 = sphi 0, %s67
    %s71 = sphi 0, %s70
    %s87 = sphi 0, %s71
    %s93 = sphi 0, %s95
    %s96 = sphi 0, %s93
    %s97 = sphi 0, %s96
    %s113 = sphi 0, %s97
  $region4: #{generator_forward.16} parent=0 // loop_header_branch
    %13 = sbr.rel (%p11) target = $region8
  $region5: #{generator_forward.16} parent=0 // loop_body
    %s15 = ssub.s32 %s10, 1
    %s16 = ssub.s32 %s10, 2
    %s17 = sadd.s32 %s10, 1
    %s18 = ssub.s32 %s10, %s17
    %p19 = scmp.eq.s32.totalorder %s18, 0
    %s21 = sadd.s32 %s20, 1
    %s22 = scalar_select %p19, %s20, %s21
    %p25 = pneg %p19
    %p26 = scmp.eq.s32.totalorder %s10, 1
    %p27 = por %p25, %p26
    %p28 = scmp.ne.s32.totalorder %s20, %s23
    %p29 = scmp.eq.s32.totalorder %s10, 0
    %p30 = por %p28, %p29
    %p31 = scmp.ne.s32.totalorder %s20, %s23
    %p32 = scmp.eq.s32.totalorder %s15, 1
    %p33 = por %p31, %p32
    %p34 = scmp.ne.s32.totalorder %s23, %s24
    %p35 = scmp.eq.s32.totalorder %s15, 0
    %p36 = por %p34, %p35
    %p37 = scmp.ne.s32.totalorder %s23, %s24
    %p38 = scmp.eq.s32.totalorder %s16, 1
    %p39 = por %p37, %p38
    %p41 = scmp.ne.s32.totalorder %s24, %s40
    %p42 = scmp.eq.s32.totalorder %s16, 0
    %p43 = por %p41, %p42
    %s45 = sadd.s32 %s44, 1
    %p48 = scmp.eq.s32.totalorder %s10, 1
    %p49 = scmp.ne.s32.totalorder %s44, %s46
    %p50 = scmp.eq.s32.totalorder %s10, 0
    %p51 = por %p49, %p50
    %p52 = scmp.ne.s32.totalorder %s44, %s46
    %p53 = scmp.eq.s32.totalorder %s15, 1
    %p54 = por %p52, %p53
    %p55 = scmp.ne.s32.totalorder %s46, %s47
    %p56 = scmp.eq.s32.totalorder %s15, 0
    %p57 = por %p55, %p56
    %p58 = scmp.ne.s32.totalorder %s46, %s47
    %p59 = scmp.eq.s32.totalorder %s16, 1
    %p60 = por %p58, %p59
    %p62 = scmp.ne.s32.totalorder %s47, %s61
    %p63 = scmp.eq.s32.totalorder %s16, 0
    %p64 = por %p62, %p63
    %s65 = ssub.s32 %s10, %s17
    %p66 = scmp.eq.s32.totalorder %s65, 0
    %s68 = sadd.s32 %s67, 1
    %s69 = scalar_select %p66, %s67, %s68
    %p72 = pneg %p66
    %p73 = scmp.eq.s32.totalorder %s10, 1
    %p74 = por %p72, %p73
    %p75 = scmp.ne.s32.totalorder %s67, %s70
    %p76 = scmp.eq.s32.totalorder %s10, 0
    %p77 = por %p75, %p76
    %p78 = scmp.ne.s32.totalorder %s67, %s70
    %p79 = scmp.eq.s32.totalorder %s15, 1
    %p80 = por %p78, %p79
    %p81 = scmp.ne.s32.totalorder %s70, %s71
    %p82 = scmp.eq.s32.totalorder %s15, 0
    %p83 = por %p81, %p82
    %p84 = scmp.ne.s32.totalorder %s70, %s71
    %p85 = scmp.eq.s32.totalorder %s16, 1
    %p86 = por %p84, %p85
    %p88 = scmp.ne.s32.totalorder %s71, %s87
    %p89 = scmp.eq.s32.totalorder %s16, 0
    %p90 = por %p88, %p89
    %s91 = ssub.s32 %s10, %s17
    %p92 = scmp.eq.s32.totalorder %s91, 0
    %s94 = sadd.s32 %s93, 1
    %s95 = scalar_select %p92, %s93, %s94
    %p98 = pneg %p92
    %p99 = scmp.eq.s32.totalorder %s10, 1
    %p100 = por %p98, %p99
    %p101 = scmp.ne.s32.totalorder %s93, %s96
    %p102 = scmp.eq.s32.totalorder %s10, 0
    %p103 = por %p101, %p102
    %p104 = scmp.ne.s32.totalorder %s93, %s96
    %p105 = scmp.eq.s32.totalorder %s15, 1
    %p106 = por %p104, %p105
    %p107 = scmp.ne.s32.totalorder %s96, %s97
    %p108 = scmp.eq.s32.totalorder %s15, 0
    %p109 = por %p107, %p108
    %p110 = scmp.ne.s32.totalorder %s96, %s97
    %p111 = scmp.eq.s32.totalorder %s16, 1
    %p112 = por %p110, %p111
    %p114 = scmp.ne.s32.totalorder %s97, %s113
    %p115 = scmp.eq.s32.totalorder %s16, 0
    %p116 = por %p114, %p115
    %p117 = scmp.le.s32.totalorder 1, %s10
    %p118 = scmp.lt.s32.totalorder %s10, 3
    %p119 = pnand %p117, %p118
    %p120 = pneg %p119
    // Predicated region
    $region9: #{generator_forward.16} parent=5 // pred_check
      _
    $region10: #{generator_forward.16} parent=5 // pred_check_branch
      %122 = sbr.rel (%p119) target = $region12
    $region11: #{generator_forward.16} parent=5 // pred_region
      %s123 = ssub.s32 %s10, 1
      // Predicated region
      $region13: #{generator_forward.16} parent=11 // pred_check
        %p124 = pneg %p57
      $region14: #{generator_forward.16} parent=11 // pred_check_branch
        %126 = sbr.rel (%p124) target = $region16
      $region15: #{generator_forward.16} parent=11 // pred_region
        _
      $region16: #{generator_forward.16} parent=11 // pred_fallthru
        _
    $region12: #{generator_forward.16} parent=5 // pred_fallthru
      _
    %p127 = scmp.lt.s32.totalorder %s10, 2
    // Predicated region
    $region17: #{generator_forward.16} parent=5 // pred_check
      %p128 = pneg %p127
    $region18: #{generator_forward.16} parent=5 // pred_check_branch
      %130 = sbr.rel (%p128) target = $region20
    $region19: #{generator_forward.16} parent=5 // pred_region
      // Predicated region
      $region21: #{generator_forward.16} parent=19 // pred_check
        %p131 = pneg %p30
      $region22: #{generator_forward.16} parent=19 // pred_check_branch
        %133 = sbr.rel (%p131) target = $region24
      $region23: #{generator_forward.16} parent=19 // pred_region
        %p134 = scmp.lt.s32.totalorder %s10, 1
        %s135 = scalar_select %p134, %s10, 1
        %s136 = smul.addr %s135, 3
        %s137 = smul.addr %s136, 8
        %s138 = scalar_lea.vmem %s0, %s137
      $region24: #{generator_forward.16} parent=19 // pred_fallthru
        _
    $region20: #{generator_forward.16} parent=5 // pred_fallthru
      _
    %p139 = scmp.le.s32.totalorder 1, %s10
    %p140 = scmp.lt.s32.totalorder %s10, 3
    %p141 = pnand %p139, %p140
    %p142 = pneg %p141
    // Predicated region
    $region25: #{generator_forward.16} parent=5 // pred_check
      _
    $region26: #{generator_forward.16} parent=5 // pred_check_branch
      %144 = sbr.rel (%p141) target = $region28
    $region27: #{generator_forward.16} parent=5 // pred_region
      %s145 = ssub.s32 %s10, 1
      %p146 = scmp.lt.s32.totalorder %s15, 1
      %s147 = scalar_select %p146, %s15, 1
      %s148 = smul.addr %s147, 3
      %s149 = smul.addr %s148, 8
      %s150 = scalar_lea.vmem %s0, %s149
      %p151 = pneg %p36
      %p152 = pneg %p33
      %p153 = pneg %p57
      %p154 = pneg %p54
      %p155 = pneg %p83
      %p156 = pneg %p80
      %p157 = scmp.lt.s32.totalorder %s15, 1
      %s158 = scalar_select %p157, %s15, 1
      %s159 = smul.addr %s158, 2
      %s160 = smul.addr %s159, 8
      %s161 = scalar_lea.vmem %s2, %s160
      %p162 = pneg %p109
      %p163 = pneg %p106
      %p164 = scmp.lt.s32.totalorder %s15, 1
      %s165 = scalar_select %p164, %s15, 1
      %s166 = smul.addr %s165, 2
      %s167 = scalar_lea.vmem %s3, %s166
      %p168 = scmp.lt.s32.totalorder %s15, 1
      %s169 = scalar_select %p168, %s15, 1
      %s170 = smul.addr %s169, 3
      %s171 = smul.addr %s170, 8
      %s172 = scalar_lea.vmem %s0, %s171
      %p173 = scmp.lt.s32.totalorder %s15, 1
      %s174 = scalar_select %p173, %s15, 1
      %s175 = smul.addr %s174, 2
      %s176 = smul.addr %s175, 8
      %s177 = scalar_lea.vmem %s2, %s176
      %p178 = scmp.lt.s32.totalorder %s15, 1
      %s179 = scalar_select %p178, %s15, 1
      %s180 = smul.addr %s179, 2
      %s181 = scalar_lea.vmem %s3, %s180
      %v183 = vld [vmem:[%s172] sm:$0xff]
      %v184 = vld [vmem:[%s172 + $0x8] sm:$0xff]
      %v185 = vld [vmem:[%s172 + $0x10] sm:$0x3f]
      %v186 = vpack.c.bf16 %v184, %v183
      %v187 = vld [vmem:[%s1] sm:$0xf]
      %v188 = vld [vmem:[%s1 + $0x4] sm:$0xf]
      %v189 = vld [vmem:[%s1 + $0x8] sm:$0xf]
      %v190 = vld [vmem:[%s1 + $0xc] sm:$0xf]
      %v191 = vld [vmem:[%s1 + $0x10] sm:$0xf]
      %v192 = vld [vmem:[%s1 + $0x14] sm:$0xf]
      %v193 = vld [vmem:[%s1 + $0x18] sm:$0xf]
      %v194 = vld [vmem:[%s1 + $0x1c] sm:$0xf]
      %v195 = vld [vmem:[%s1 + $0x20] sm:$0xf]
      %v196 = vld [vmem:[%s1 + $0x24] sm:$0xf]
      %v197 = vld [vmem:[%s1 + $0x28] sm:$0xf]
      %v198 = vpack.c.bf16 %v185, %v185
      %s199 = scalar_lea.vmem %s1, 44
      %v200 = vld [vmem:[%s199] sm:$0xf]
      %v201 = vld [vmem:[%s199 + $0x4] sm:$0xf]
      %v202 = vld [vmem:[%s199 + $0x8] sm:$0xf]
      %v203 = vld [vmem:[%s199 + $0xc] sm:$0xf]
      %v204 = vld [vmem:[%s199 + $0x10] sm:$0xf]
      %v205 = vld [vmem:[%s199 + $0x14] sm:$0xf]
      %v206 = vld [vmem:[%s199 + $0x18] sm:$0xf]
      %v207 = vld [vmem:[%s199 + $0x1c] sm:$0xf]
      %v208 = vld [vmem:[%s199 + $0x20] sm:$0xf]
      %v209 = vld [vmem:[%s199 + $0x24] sm:$0xf]
      %v210 = vld [vmem:[%s199 + $0x28] sm:$0xf]
      %vm211 = vsmask.f32 7424
      %v213 = vshrl.u32 %v186, 16
      %v215 = vshll.u32 %v186, 16
      %v217 = vrot.slane %v215, 1
      %v218 = vor.u32 %v213, %v217
      %v220 = vshll.u32 %v198, 16
      %v222 = vrot.slane %v220, 1
      %v223 = vsel %vm211, %v218, %v222
      %v235 = vunpack.c.l.b16 %v200
      %v236 = vunpack.c.l.b16 %v201
      %v237 = vunpack.c.l.b16 %v202
      %v238 = vunpack.c.l.b16 %v203
      %v239 = vunpack.c.l.b16 %v204
      %v240 = vunpack.c.l.b16 %v205
      %v241 = vunpack.c.l.b16 %v206
      %v242 = vunpack.c.l.b16 %v207
      %v243 = vunpack.c.l.b16 %v208
      %v244 = vunpack.c.l.b16 %v209
      %v245 = vunpack.c.l.b16 %v210
      %v246 = vpack.c.b16 %v236, %v235
      %v247 = vpack.c.b16 %v238, %v237
      %v248 = vpack.c.b16 %v240, %v239
      %v249 = vpack.c.b16 %v242, %v241
      %v250 = vpack.c.b16 %v244, %v243
      %v251 = vpack.c.b16 %v245, %v245
      %vm257 = vcmask 719872
      %v259 = vsel %vm257, %v223, 0
      %vm261 = vcmask 1043456
      %v263 = vsel %vm261, %v251, 0
      %265 = vmatprep.subr.bf16.mxu0 0
      %266 = vmatpush1.bf16.msra.mxu0 %v246
      %267 = vmatprep.subr.bf16.mxu0 0
      %268 = vmatpush1.bf16.msra.mxu0 %v247
      %269 = vmatprep.subr.bf16.mxu0 0
      %270 = vmatpush1.bf16.msra.mxu0 %v248
      %271 = vmatprep.subr.bf16.mxu0 0
      %272 = vmatpush1.bf16.msra.mxu0 %v249
      %273 = vmatprep.subr.bf16.mxu0 0
      %274 = vmatpush1.bf16.msra.mxu0 %v250
      %275 = vmatprep.subr.bf16.mxu0 0
      %276 = vmatpush1.bf16.msra.mxu0 %v263
      %277 = vmatprep.subr.bf16.mxu0 0
      %278 = vmatpush1.bf16.msra.mxu0 0
      %279 = vmatprep.subr.bf16.mxu0 0
      %280 = vmatpush1.bf16.msra.mxu0 0
      %281 = vmatprep.subr.bf16.mxu0 0
      %282 = vmatpush1.bf16.msra.mxu0 0
      %283 = vmatprep.subr.bf16.mxu0 0
      %284 = vmatpush1.bf16.msra.mxu0 0
      %285 = vmatprep.subr.bf16.mxu0 0
      %286 = vmatpush1.bf16.msra.mxu0 0
      %287 = vmatprep.subr.bf16.mxu0 0
      %288 = vmatpush1.bf16.msra.mxu0 0
      %289 = vmatprep.subr.bf16.mxu0 0
      %290 = vmatpush1.bf16.msra.mxu0 0
      %291 = vmatprep.subr.bf16.mxu0 0
      %292 = vmatpush1.bf16.msra.mxu0 0
      %293 = vmatprep.subr.bf16.mxu0 0
      %294 = vmatpush1.bf16.msra.mxu0 0
      %295 = vmatprep.subr.bf16.mxu0 0
      %296 = vmatpush1.bf16.msra.mxu0 0
      %297 = vmatprep.mubr.bf16.mxu0 0
      %298 = vmatmul.mubr.bf16.gmra.mrb[0].mxu0 %v259
      %v299 = vpop.f32.mrb[0].mxu0
      %v300 = vadd.f32 0.0, %v299
      %v301 = vpop.f32.mrb[0].mxu0
      %v302 = vpop.f32.mrb[0].mxu0
      %v303 = vadd.f32 0.0, %v302
      %v304 = vpop.f32.mrb[0].mxu0
      %305 = vdwg.mxu0
      %v317 = vunpack.c.l.b16 %v187
      %v318 = vunpack.c.l.b16 %v188
      %v319 = vunpack.c.l.b16 %v189
      %v320 = vunpack.c.l.b16 %v190
      %v321 = vunpack.c.l.b16 %v191
      %v322 = vunpack.c.l.b16 %v192
      %v323 = vunpack.c.l.b16 %v193
      %v324 = vunpack.c.l.b16 %v194
      %v325 = vunpack.c.l.b16 %v195
      %v326 = vunpack.c.l.b16 %v196
      %v327 = vunpack.c.l.b16 %v197
      %v328 = vpack.c.b16 %v318, %v317
      %v329 = vpack.c.b16 %v320, %v319
      %v330 = vpack.c.b16 %v322, %v321
      %v331 = vpack.c.b16 %v324, %v323
      %v332 = vpack.c.b16 %v326, %v325
      %v333 = vpack.c.b16 %v327, %v327
      %v339 = vsel %vm257, %v186, 0
      %v342 = vsel %vm261, %v333, 0
      %344 = vmatprep.subr.bf16.mxu0 0
      %345 = vmatpush1.bf16.msra.mxu0 %v328
      %346 = vmatprep.subr.bf16.mxu0 0
      %347 = vmatpush1.bf16.msra.mxu0 %v329
      %348 = vmatprep.subr.bf16.mxu0 0
      %349 = vmatpush1.bf16.msra.mxu0 %v330
      %350 = vmatprep.subr.bf16.mxu0 0
      %351 = vmatpush1.bf16.msra.mxu0 %v331
      %352 = vmatprep.subr.bf16.mxu0 0
      %353 = vmatpush1.bf16.msra.mxu0 %v332
      %354 = vmatprep.subr.bf16.mxu0 0
      %355 = vmatpush1.bf16.msra.mxu0 %v342
      %356 = vmatprep.subr.bf16.mxu0 0
      %357 = vmatpush1.bf16.msra.mxu0 0
      %358 = vmatprep.subr.bf16.mxu0 0
      %359 = vmatpush1.bf16.msra.mxu0 0
      %360 = vmatprep.subr.bf16.mxu0 0
      %361 = vmatpush1.bf16.msra.mxu0 0
      %362 = vmatprep.subr.bf16.mxu0 0
      %363 = vmatpush1.bf16.msra.mxu0 0
      %364 = vmatprep.subr.bf16.mxu0 0
      %365 = vmatpush1.bf16.msra.mxu0 0
      %366 = vmatprep.subr.bf16.mxu0 0
      %367 = vmatpush1.bf16.msra.mxu0 0
      %368 = vmatprep.subr.bf16.mxu0 0
      %369 = vmatpush1.bf16.msra.mxu0 0
      %370 = vmatprep.subr.bf16.mxu0 0
      %371 = vmatpush1.bf16.msra.mxu0 0
      %372 = vmatprep.subr.bf16.mxu0 0
      %373 = vmatpush1.bf16.msra.mxu0 0
      %374 = vmatprep.subr.bf16.mxu0 0
      %375 = vmatpush1.bf16.msra.mxu0 0
      %376 = vmatprep.mubr.bf16.mxu0 0
      %377 = vmatmul.mubr.bf16.gmra.mrb[0].mxu0 %v339
      %v378 = vpop.f32.mrb[0].mxu0
      %v379 = vadd.f32 %v300, %v378
      %v380 = vpop.f32.mrb[0].mxu0
      %v381 = vpop.f32.mrb[0].mxu0
      %v382 = vadd.f32 %v303, %v381
      %v383 = vpop.f32.mrb[0].mxu0
      %384 = vdwg.mxu0
      %s385 = scalar_lea.vmem %s1, 88
      %v386 = vld [vmem:[%s385] sm:$0xf]
      %v387 = vld [vmem:[%s385 + $0x4] sm:$0xf]
      %v388 = vld [vmem:[%s385 + $0x8] sm:$0xf]
      %v389 = vld [vmem:[%s385 + $0xc] sm:$0xf]
      %v390 = vld [vmem:[%s385 + $0x10] sm:$0xf]
      %v391 = vld [vmem:[%s385 + $0x14] sm:$0xf]
      %v392 = vld [vmem:[%s385 + $0x18] sm:$0xf]
      %v393 = vld [vmem:[%s385 + $0x1c] sm:$0xf]
      %v394 = vld [vmem:[%s385 + $0x20] sm:$0xf]
      %v395 = vld [vmem:[%s385 + $0x24] sm:$0xf]
      %v396 = vld [vmem:[%s385 + $0x28] sm:$0xf]
      %vm399 = vcmask 1046528
      %v400 = vrot.slane %v186, 1
      %v401 = vrot.slane %v198, 1
      %v402 = vsel %vm399, %v400, %v401
      %v414 = vunpack.c.l.b16 %v386
      %v415 = vunpack.c.l.b16 %v387
      %v416 = vunpack.c.l.b16 %v388
      %v417 = vunpack.c.l.b16 %v389
      %v418 = vunpack.c.l.b16 %v390
      %v419 = vunpack.c.l.b16 %v391
      %v420 = vunpack.c.l.b16 %v392
      %v421 = vunpack.c.l.b16 %v393
      %v422 = vunpack.c.l.b16 %v394
      %v423 = vunpack.c.l.b16 %v395
      %v424 = vunpack.c.l.b16 %v396
      %v425 = vpack.c.b16 %v415, %v414
      %v426 = vpack.c.b16 %v417, %v416
      %v427 = vpack.c.b16 %v419, %v418
      %v428 = vpack.c.b16 %v421, %v420
      %v429 = vpack.c.b16 %v423, %v422
      %v430 = vpack.c.b16 %v424, %v424
      %v437 = vsel %vm257, %v402, 0
      %v440 = vsel %vm261, %v430, 0
      %442 = vmatprep.subr.bf16.mxu0 0
      %443 = vmatpush1.bf16.msra.mxu0 %v425
      %444 = vmatprep.subr.bf16.mxu0 0
      %445 = vmatpush1.bf16.msra.mxu0 %v426
      %446 = vmatprep.subr.bf16.mxu0 0
      %447 = vmatpush1.bf16.msra.mxu0 %v427
      %448 = vmatprep.subr.bf16.mxu0 0
      %449 = vmatpush1.bf16.msra.mxu0 %v428
      %450 = vmatprep.subr.bf16.mxu0 0
      %451 = vmatpush1.bf16.msra.mxu0 %v429
      %452 = vmatprep.subr.bf16.mxu0 0
      %453 = vmatpush1.bf16.msra.mxu0 %v440
      %454 = vmatprep.subr.bf16.mxu0 0
      %455 = vmatpush1.bf16.msra.mxu0 0
      %456 = vmatprep.subr.bf16.mxu0 0
      %457 = vmatpush1.bf16.msra.mxu0 0
      %458 = vmatprep.subr.bf16.mxu0 0
      %459 = vmatpush1.bf16.msra.mxu0 0
      %460 = vmatprep.subr.bf16.mxu0 0
      %461 = vmatpush1.bf16.msra.mxu0 0
      %462 = vmatprep.subr.bf16.mxu0 0
      %463 = vmatpush1.bf16.msra.mxu0 0
      %464 = vmatprep.subr.bf16.mxu0 0
      %465 = vmatpush1.bf16.msra.mxu0 0
      %466 = vmatprep.subr.bf16.mxu0 0
      %467 = vmatpush1.bf16.msra.mxu0 0
      %468 = vmatprep.subr.bf16.mxu0 0
      %469 = vmatpush1.bf16.msra.mxu0 0
      %470 = vmatprep.subr.bf16.mxu0 0
      %471 = vmatpush1.bf16.msra.mxu0 0
      %472 = vmatprep.subr.bf16.mxu0 0
      %473 = vmatpush1.bf16.msra.mxu0 0
      %474 = vmatprep.mubr.bf16.mxu0 0
      %475 = vmatmul.mubr.bf16.gmra.mrb[0].mxu0 %v437
      %v476 = vpop.f32.mrb[0].mxu0
      %v477 = vadd.f32 0.0, %v476
      %v478 = vpop.f32.mrb[0].mxu0
      %v479 = vpop.f32.mrb[0].mxu0
      %v480 = vadd.f32 0.0, %v479
      %v481 = vpop.f32.mrb[0].mxu0
      %482 = vdwg.mxu0
      %v483 = vadd.f32 %v379, %v477
      %v484 = vadd.f32 %v382, %v480
      %s485 = scalar_lea.vmem %s1, 132
      %v486 = vld [vmem:[%s485] sm:$0xf]
      %v487 = vld [vmem:[%s485 + $0x4] sm:$0xf]
      %v488 = vld [vmem:[%s485 + $0x8] sm:$0xf]
      %v489 = vld [vmem:[%s485 + $0xc] sm:$0xf]
      %v490 = vld [vmem:[%s485 + $0x10] sm:$0xf]
      %v491 = vld [vmem:[%s485 + $0x14] sm:$0xf]
      %v492 = vld [vmem:[%s485 + $0x18] sm:$0xf]
      %v493 = vld [vmem:[%s485 + $0x1c] sm:$0xf]
      %v494 = vld [vmem:[%s485 + $0x20] sm:$0xf]
      %v495 = vld [vmem:[%s485 + $0x24] sm:$0xf]
      %v496 = vld [vmem:[%s485 + $0x28] sm:$0xf]
      %vm497 = vsmask.f32 6400
      %v498 = vrot.slane %v213, 1
      %v499 = vrot.slane %v215, 2
      %v500 = vor.u32 %v498, %v499
      %v501 = vshrl.u32 %v198, 16
      %v503 = vrot.slane %v501, 1
      %v504 = vrot.slane %v220, 2
      %v505 = vor.u32 %v503, %v504
      %v506 = vsel %vm497, %v500, %v505
      %v518 = vunpack.c.l.b16 %v486
      %v519 = vunpack.c.l.b16 %v487
      %v520 = vunpack.c.l.b16 %v488
      %v521 = vunpack.c.l.b16 %v489
      %v522 = vunpack.c.l.b16 %v490
      %v523 = vunpack.c.l.b16 %v491
      %v524 = vunpack.c.l.b16 %v492
      %v525 = vunpack.c.l.b16 %v493
      %v526 = vunpack.c.l.b16 %v494
      %v527 = vunpack.c.l.b16 %v495
      %v528 = vunpack.c.l.b16 %v496
      %v529 = vpack.c.b16 %v519, %v518
      %v530 = vpack.c.b16 %v521, %v520
      %v531 = vpack.c.b16 %v523, %v522
      %v532 = vpack.c.b16 %v525, %v524
      %v533 = vpack.c.b16 %v527, %v526
      %v534 = vpack.c.b16 %v528, %v528
      %v541 = vsel %vm257, %v506, 0
      %v544 = vsel %vm261, %v534, 0
      %546 = vmatprep.subr.bf16.mxu0 0
      %547 = vmatpush1.bf16.msra.mxu0 %v529
      %548 = vmatprep.subr.bf16.mxu0 0
      %549 = vmatpush1.bf16.msra.mxu0 %v530
      %550 = vmatprep.subr.bf16.mxu0 0
      %551 = vmatpush1.bf16.msra.mxu0 %v531
      %552 = vmatprep.subr.bf16.mxu0 0
      %553 = vmatpush1.bf16.msra.mxu0 %v532
      %554 = vmatprep.subr.bf16.mxu0 0
      %555 = vmatpush1.bf16.msra.mxu0 %v533
      %556 = vmatprep.subr.bf16.mxu0 0
      %557 = vmatpush1.bf16.msra.mxu0 %v544
      %558 = vmatprep.subr.bf16.mxu0 0
      %559 = vmatpush1.bf16.msra.mxu0 0
      %560 = vmatprep.subr.bf16.mxu0 0
      %561 = vmatpush1.bf16.msra.mxu0 0
      %562 = vmatprep.subr.bf16.mxu0 0
      %563 = vmatpush1.bf16.msra.mxu0 0
      %564 = vmatprep.subr.bf16.mxu0 0
      %565 = vmatpush1.bf16.msra.mxu0 0
      %566 = vmatprep.subr.bf16.mxu0 0
      %567 = vmatpush1.bf16.msra.mxu0 0
      %568 = vmatprep.subr.bf16.mxu0 0
      %569 = vmatpush1.bf16.msra.mxu0 0
      %570 = vmatprep.subr.bf16.mxu0 0
      %571 = vmatpush1.bf16.msra.mxu0 0
      %572 = vmatprep.subr.bf16.mxu0 0
      %573 = vmatpush1.bf16.msra.mxu0 0
      %574 = vmatprep.subr.bf16.mxu0 0
      %575 = vmatpush1.bf16.msra.mxu0 0
      %576 = vmatprep.subr.bf16.mxu0 0
      %577 = vmatpush1.bf16.msra.mxu0 0
      %578 = vmatprep.mubr.bf16.mxu0 0
      %579 = vmatmul.mubr.bf16.gmra.mrb[0].mxu0 %v541
      %v580 = vpop.f32.mrb[0].mxu0
      %v581 = vadd.f32 0.0, %v580
      %v582 = vpop.f32.mrb[0].mxu0
      %v583 = vpop.f32.mrb[0].mxu0
      %v584 = vadd.f32 0.0, %v583
      %v585 = vpop.f32.mrb[0].mxu0
      %586 = vdwg.mxu0
      %v587 = vadd.f32 %v483, %v581
      %v588 = vadd.f32 %v484, %v584
      %s589 = scalar_lea.vmem %s1, 176
      %v590 = vld [vmem:[%s589] sm:$0xf]
      %v591 = vld [vmem:[%s589 + $0x4] sm:$0xf]
      %v592 = vld [vmem:[%s589 + $0x8] sm:$0xf]
      %v593 = vld [vmem:[%s589 + $0xc] sm:$0xf]
      %v594 = vld [vmem:[%s589 + $0x10] sm:$0xf]
      %v595 = vld [vmem:[%s589 + $0x14] sm:$0xf]
      %v596 = vld [vmem:[%s589 + $0x18] sm:$0xf]
      %v597 = vld [vmem:[%s589 + $0x1c] sm:$0xf]
      %v598 = vld [vmem:[%s589 + $0x20] sm:$0xf]
      %v599 = vld [vmem:[%s589 + $0x24] sm:$0xf]
      %v600 = vld [vmem:[%s589 + $0x28] sm:$0xf]
      %vm601 = vcmask 1045504
      %v602 = vrot.slane %v186, 2
      %v603 = vrot.slane %v198, 2
      %v604 = vsel %vm601, %v602, %v603
      %v616 = vunpack.c.l.b16 %v590
      %v617 = vunpack.c.l.b16 %v591
      %v618 = vunpack.c.l.b16 %v592
      %v619 = vunpack.c.l.b16 %v593
      %v620 = vunpack.c.l.b16 %v594
      %v621 = vunpack.c.l.b16 %v595
      %v622 = vunpack.c.l.b16 %v596
      %v623 = vunpack.c.l.b16 %v597
      %v624 = vunpack.c.l.b16 %v598
      %v625 = vunpack.c.l.b16 %v599
      %v626 = vunpack.c.l.b16 %v600
      %v627 = vpack.c.b16 %v617, %v616
      %v628 = vpack.c.b16 %v619, %v618
      %v629 = vpack.c.b16 %v621, %v620
      %v630 = vpack.c.b16 %v623, %v622
      %v631 = vpack.c.b16 %v625, %v624
      %v632 = vpack.c.b16 %v626, %v626
      %v639 = vsel %vm257, %v604, 0
      %v642 = vsel %vm261, %v632, 0
      %644 = vmatprep.subr.bf16.mxu0 0
      %645 = vmatpush1.bf16.msra.mxu0 %v627
      %646 = vmatprep.subr.bf16.mxu0 0
      %647 = vmatpush1.bf16.msra.mxu0 %v628
      %648 = vmatprep.subr.bf16.mxu0 0
      %649 = vmatpush1.bf16.msra.mxu0 %v629
      %650 = vmatprep.subr.bf16.mxu0 0
      %651 = vmatpush1.bf16.msra.mxu0 %v630
      %652 = vmatprep.subr.bf16.mxu0 0
      %653 = vmatpush1.bf16.msra.mxu0 %v631
      %654 = vmatprep.subr.bf16.mxu0 0
      %655 = vmatpush1.bf16.msra.mxu0 %v642
      %656 = vmatprep.subr.bf16.mxu0 0
      %657 = vmatpush1.bf16.msra.mxu0 0
      %658 = vmatprep.subr.bf16.mxu0 0
      %659 = vmatpush1.bf16.msra.mxu0 0
      %660 = vmatprep.subr.bf16.mxu0 0
      %661 = vmatpush1.bf16.msra.mxu0 0
      %662 = vmatprep.subr.bf16.mxu0 0
      %663 = vmatpush1.bf16.msra.mxu0 0
      %664 = vmatprep.subr.bf16.mxu0 0
      %665 = vmatpush1.bf16.msra.mxu0 0
      %666 = vmatprep.subr.bf16.mxu0 0
      %667 = vmatpush1.bf16.msra.mxu0 0
      %668 = vmatprep.subr.bf16.mxu0 0
      %669 = vmatpush1.bf16.msra.mxu0 0
      %670 = vmatprep.subr.bf16.mxu0 0
      %671 = vmatpush1.bf16.msra.mxu0 0
      %672 = vmatprep.subr.bf16.mxu0 0
      %673 = vmatpush1.bf16.msra.mxu0 0
      %674 = vmatprep.subr.bf16.mxu0 0
      %675 = vmatpush1.bf16.msra.mxu0 0
      %676 = vmatprep.mubr.bf16.mxu0 0
      %677 = vmatmul.mubr.bf16.gmra.mrb[0].mxu0 %v639
      %v678 = vpop.f32.mrb[0].mxu0
      %v679 = vadd.f32 0.0, %v678
      %v680 = vpop.f32.mrb[0].mxu0
      %v681 = vpop.f32.mrb[0].mxu0
      %v682 = vadd.f32 0.0, %v681
      %v683 = vpop.f32.mrb[0].mxu0
      %684 = vdwg.mxu0
      %v685 = vadd.f32 %v587, %v679
      %v686 = vadd.f32 %v588, %v682
      %s687 = scalar_lea.vmem %s1, 220
      %v688 = vld [vmem:[%s687] sm:$0xf]
      %v689 = vld [vmem:[%s687 + $0x4] sm:$0xf]
      %v690 = vld [vmem:[%s687 + $0x8] sm:$0xf]
      %v691 = vld [vmem:[%s687 + $0xc] sm:$0xf]
      %v692 = vld [vmem:[%s687 + $0x10] sm:$0xf]
      %v693 = vld [vmem:[%s687 + $0x14] sm:$0xf]
      %v694 = vld [vmem:[%s687 + $0x18] sm:$0xf]
      %v695 = vld [vmem:[%s687 + $0x1c] sm:$0xf]
      %v696 = vld [vmem:[%s687 + $0x20] sm:$0xf]
      %v697 = vld [vmem:[%s687 + $0x24] sm:$0xf]
      %v698 = vld [vmem:[%s687 + $0x28] sm:$0xf]
      %vm699 = vsmask.f32 5376
      %v700 = vrot.slane %v213, 2
      %v701 = vrot.slane %v215, 3
      %v702 = vor.u32 %v700, %v701
      %v703 = vrot.slane %v501, 2
      %v704 = vrot.slane %v220, 3
      %v705 = vor.u32 %v703, %v704
      %v706 = vsel %vm699, %v702, %v705
      %v718 = vunpack.c.l.b16 %v688
      %v719 = vunpack.c.l.b16 %v689
      %v720 = vunpack.c.l.b16 %v690
      %v721 = vunpack.c.l.b16 %v691
      %v722 = vunpack.c.l.b16 %v692
      %v723 = vunpack.c.l.b16 %v693
      %v724 = vunpack.c.l.b16 %v694
      %v725 = vunpack.c.l.b16 %v695
      %v726 = vunpack.c.l.b16 %v696
      %v727 = vunpack.c.l.b16 %v697
      %v728 = vunpack.c.l.b16 %v698
      %v729 = vpack.c.b16 %v719, %v718
      %v730 = vpack.c.b16 %v721, %v720
      %v731 = vpack.c.b16 %v723, %v722
      %v732 = vpack.c.b16 %v725, %v724
      %v733 = vpack.c.b16 %v727, %v726
      %v734 = vpack.c.b16 %v728, %v728
      %v741 = vsel %vm257, %v706, 0
      %v744 = vsel %vm261, %v734, 0
      %746 = vmatprep.subr.bf16.mxu0 0
      %747 = vmatpush1.bf16.msra.mxu0 %v729
      %748 = vmatprep.subr.bf16.mxu0 0
      %749 = vmatpush1.bf16.msra.mxu0 %v730
      %750 = vmatprep.subr.bf16.mxu0 0
      %751 = vmatpush1.bf16.msra.mxu0 %v731
      %752 = vmatprep.subr.bf16.mxu0 0
      %753 = vmatpush1.bf16.msra.mxu0 %v732
      %754 = vmatprep.subr.bf16.mxu0 0
      %755 = vmatpush1.bf16.msra.mxu0 %v733
      %756 = vmatprep.subr.bf16.mxu0 0
      %757 = vmatpush1.bf16.msra.mxu0 %v744
      %758 = vmatprep.subr.bf16.mxu0 0
      %759 = vmatpush1.bf16.msra.mxu0 0
      %760 = vmatprep.subr.bf16.mxu0 0
      %761 = vmatpush1.bf16.msra.mxu0 0
      %762 = vmatprep.subr.bf16.mxu0 0
      %763 = vmatpush1.bf16.msra.mxu0 0
      %764 = vmatprep.subr.bf16.mxu0 0
      %765 = vmatpush1.bf16.msra.mxu0 0
      %766 = vmatprep.subr.bf16.mxu0 0
      %767 = vmatpush1.bf16.msra.mxu0 0
      %768 = vmatprep.subr.bf16.mxu0 0
      %769 = vmatpush1.bf16.msra.mxu0 0
      %770 = vmatprep.subr.bf16.mxu0 0
      %771 = vmatpush1.bf16.msra.mxu0 0
      %772 = vmatprep.subr.bf16.mxu0 0
      %773 = vmatpush1.bf16.msra.mxu0 0
      %774 = vmatprep.subr.bf16.mxu0 0
      %775 = vmatpush1.bf16.msra.mxu0 0
      %776 = vmatprep.subr.bf16.mxu0 0
      %777 = vmatpush1.bf16.msra.mxu0 0
      %778 = vmatprep.mubr.bf16.mxu0 0
      %779 = vmatmul.mubr.bf16.gmra.mrb[0].mxu0 %v741
      %v780 = vpop.f32.mrb[0].mxu0
      %v781 = vadd.f32 0.0, %v780
      %v782 = vpop.f32.mrb[0].mxu0
      %v783 = vpop.f32.mrb[0].mxu0
      %v784 = vadd.f32 0.0, %v783
      %v785 = vpop.f32.mrb[0].mxu0
      %786 = vdwg.mxu0
      %v787 = vadd.f32 %v685, %v781
      %v788 = vadd.f32 %v686, %v784
      %s789 = scalar_lea.vmem %s1, 264
      %v790 = vld [vmem:[%s789] sm:$0xf]
      %v791 = vld [vmem:[%s789 + $0x4] sm:$0xf]
      %v792 = vld [vmem:[%s789 + $0x8] sm:$0xf]
      %v793 = vld [vmem:[%s789 + $0xc] sm:$0xf]
      %v794 = vld [vmem:[%s789 + $0x10] sm:$0xf]
      %v795 = vld [vmem:[%s789 + $0x14] sm:$0xf]
      %v796 = vld [vmem:[%s789 + $0x18] sm:$0xf]
      %v797 = vld [vmem:[%s789 + $0x1c] sm:$0xf]
      %v798 = vld [vmem:[%s789 + $0x20] sm:$0xf]
      %v799 = vld [vmem:[%s789 + $0x24] sm:$0xf]
      %v800 = vld [vmem:[%s789 + $0x28] sm:$0xf]
      %vm801 = vcmask 1044480
      %v802 = vrot.slane %v186, 3
      %v803 = vrot.slane %v198, 3
      %v804 = vsel %vm801, %v802, %v803
      %v816 = vunpack.c.l.b16 %v790
      %v817 = vunpack.c.l.b16 %v791
      %v818 = vunpack.c.l.b16 %v792
      %v819 = vunpack.c.l.b16 %v793
      %v820 = vunpack.c.l.b16 %v794
      %v821 = vunpack.c.l.b16 %v795
      %v822 = vunpack.c.l.b16 %v796
      %v823 = vunpack.c.l.b16 %v797
      %v824 = vunpack.c.l.b16 %v798
      %v825 = vunpack.c.l.b16 %v799
      %v826 = vunpack.c.l.b16 %v800
      %v827 = vpack.c.b16 %v817, %v816
      %v828 = vpack.c.b16 %v819, %v818
      %v829 = vpack.c.b16 %v821, %v820
      %v830 = vpack.c.b16 %v823, %v822
      %v831 = vpack.c.b16 %v825, %v824
      %v832 = vpack.c.b16 %v826, %v826
      %v839 = vsel %vm257, %v804, 0
      %v842 = vsel %vm261, %v832, 0
      %844 = vmatprep.subr.bf16.mxu0 0
      %845 = vmatpush1.bf16.msra.mxu0 %v827
      %846 = vmatprep.subr.bf16.mxu0 0
      %847 = vmatpush1.bf16.msra.mxu0 %v828
      %848 = vmatprep.subr.bf16.mxu0 0
      %849 = vmatpush1.bf16.msra.mxu0 %v829
      %850 = vmatprep.subr.bf16.mxu0 0
      %851 = vmatpush1.bf16.msra.mxu0 %v830
      %852 = vmatprep.subr.bf16.mxu0 0
      %853 = vmatpush1.bf16.msra.mxu0 %v831
      %854 = vmatprep.subr.bf16.mxu0 0
      %855 = vmatpush1.bf16.msra.mxu0 %v842
      %856 = vmatprep.subr.bf16.mxu0 0
      %857 = vmatpush1.bf16.msra.mxu0 0
      %858 = vmatprep.subr.bf16.mxu0 0
      %859 = vmatpush1.bf16.msra.mxu0 0
      %860 = vmatprep.subr.bf16.mxu0 0
      %861 = vmatpush1.bf16.msra.mxu0 0
      %862 = vmatprep.subr.bf16.mxu0 0
      %863 = vmatpush1.bf16.msra.mxu0 0
      %864 = vmatprep.subr.bf16.mxu0 0
      %865 = vmatpush1.bf16.msra.mxu0 0
      %866 = vmatprep.subr.bf16.mxu0 0
      %867 = vmatpush1.bf16.msra.mxu0 0
      %868 = vmatprep.subr.bf16.mxu0 0
      %869 = vmatpush1.bf16.msra.mxu0 0
      %870 = vmatprep.subr.bf16.mxu0 0
      %871 = vmatpush1.bf16.msra.mxu0 0
      %872 = vmatprep.subr.bf16.mxu0 0
      %873 = vmatpush1.bf16.msra.mxu0 0
      %874 = vmatprep.subr.bf16.mxu0 0
      %875 = vmatpush1.bf16.msra.mxu0 0
      %876 = vmatprep.mubr.bf16.mxu0 0
      %877 = vmatmul.mubr.bf16.gmra.mrb[0].mxu0 %v839
      %v878 = vpop.f32.mrb[0].mxu0
      %v879 = vadd.f32 0.0, %v878
      %v880 = vpop.f32.mrb[0].mxu0
      %v881 = vpop.f32.mrb[0].mxu0
      %v882 = vadd.f32 0.0, %v881
      %v883 = vpop.f32.mrb[0].mxu0
      %884 = vdwg.mxu0
      %v885 = vadd.f32 %v787, %v879
      %v886 = vadd.f32 %v788, %v882
      %887 = vst [vmem:[%s177] sm:$0xff] %v885
      %888 = vst [vmem:[%s177 + $0x8] sm:$0xff] %v886
      %v889 = vadd.f32 %v885, %v886
      %v890 = vrot.slane %v889, 4
      %v891 = vadd.f32 %v889, %v890
      %v892 = vrot.slane %v891, 2
      %v893 = vadd.f32 %v891, %v892
      %v894 = vrot.slane %v893, 1
      %v895 = vadd.f32 %v893, %v894
      %v896 = vmul.f32 %v885, %v885
      %v897 = vmul.f32 %v886, %v886
      %v898 = vadd.f32 %v896, %v897
      %v899 = vrot.slane %v898, 4
      %v900 = vadd.f32 %v898, %v899
      %v901 = vrot.slane %v900, 2
      %v902 = vadd.f32 %v900, %v901
      %v903 = vrot.slane %v902, 1
      %v904 = vadd.f32 %v902, %v903
      %vm905 = vcmask 1040384
      %v906 = vsel %vm905, %v895, %v904
      %907 = vst [vmem:[%s181] sm:$0x3] %v906
      %p908 = scmp.lt.s32.totalorder %s15, 1
      %s909 = scalar_select %p908, %s15, 1
      %s910 = smul.addr %s909, 2
      %s911 = smul.addr %s910, 8
      %s912 = scalar_lea.vmem %s2, %s911
      %p913 = scmp.lt.s32.totalorder %s15, 1
      %s914 = scalar_select %p913, %s15, 1
      %s915 = smul.addr %s914, 2
      %s916 = scalar_lea.vmem %s3, %s915
      // Predicated region
      $region29: #{generator_forward.16} parent=27 // pred_check
        %p917 = pneg %p80
      $region30: #{generator_forward.16} parent=27 // pred_check_branch
        %919 = sbr.rel (%p917) target = $region32
      $region31: #{generator_forward.16} parent=27 // pred_region
        _
      $region32: #{generator_forward.16} parent=27 // pred_fallthru
        _
      // Predicated region
      $region33: #{generator_forward.16} parent=27 // pred_check
        %p920 = pneg %p106
      $region34: #{generator_forward.16} parent=27 // pred_check_branch
        %922 = sbr.rel (%p920) target = $region36
      $region35: #{generator_forward.16} parent=27 // pred_region
        _
      $region36: #{generator_forward.16} parent=27 // pred_fallthru
        _
    $region28: #{generator_forward.16} parent=5 // pred_fallthru
      _
    %p923 = scmp.le.s32.totalorder 2, %s10
    // Predicated region
    $region37: #{generator_forward.16} parent=5 // pred_check
      %p924 = pneg %p923
    $region38: #{generator_forward.16} parent=5 // pred_check_branch
      %926 = sbr.rel (%p924) target = $region40
    $region39: #{generator_forward.16} parent=5 // pred_region
      %s927 = ssub.s32 %s10, 2
      // Predicated region
      $region41: #{generator_forward.16} parent=39 // pred_check
        %p928 = pneg %p86
      $region42: #{generator_forward.16} parent=39 // pred_check_branch
        %930 = sbr.rel (%p928) target = $region44
      $region43: #{generator_forward.16} parent=39 // pred_region
        %p931 = scmp.lt.s32.totalorder %s16, 1
        %s932 = scalar_select %p931, %s16, 1
        %s933 = smul.addr %s932, 2
        %s934 = smul.addr %s933, 8
        %s935 = scalar_lea.vmem %s2, %s934
      $region44: #{generator_forward.16} parent=39 // pred_fallthru
        _
      // Predicated region
      $region45: #{generator_forward.16} parent=39 // pred_check
        %p936 = pneg %p112
      $region46: #{generator_forward.16} parent=39 // pred_check_branch
        %938 = sbr.rel (%p936) target = $region48
      $region47: #{generator_forward.16} parent=39 // pred_region
        %p939 = scmp.lt.s32.totalorder %s16, 1
        %s940 = scalar_select %p939, %s16, 1
        %s941 = smul.addr %s940, 2
        %s942 = scalar_lea.vmem %s3, %s941
      $region48: #{generator_forward.16} parent=39 // pred_fallthru
        _
    $region40: #{generator_forward.16} parent=5 // pred_fallthru
      _
  $region6: #{generator_forward.16} parent=0 // loop_footer
    %s14 = sadd.s32 1, %s10
  $region7: #{generator_forward.16} parent=0 // loop_footer_branch
    %9 = sbr.rel target = $region3
  $region8: #{generator_forward.16} parent=0 // loop_exit
    _

// kernel: tile.116
$region0: #{tile.116}
  #allocation0 [shape = 's32[1]{0}', space=sflag, size = 0x4, scoped, tag = 'scoped memory for tile.116']
  %s0 = inlined_call_operand.vmem [shape: f32[16], index: 0, kind: input, shape index: {}]
  %s1 = inlined_call_operand.vmem [shape: f32[8,16], index: 1, kind: output, shape index: {}]
  // Predicated region
  $region2: #{tile.116} parent=0 // pred_check
    _
  $region3: #{tile.116} parent=0 // pred_check_branch
    %3 = sbr.rel (0) target = $region5
  $region4: #{tile.116} parent=0 // pred_region
    _
  $region5: #{tile.116} parent=0 // pred_fallthru
    _
  %v4 = vld [vmem:[%s0] ss:$0 sm:$0xff]
  %5 = vst [vmem:[%s1] sm:$0xff] %v4

// kernel: tile.117
$region0: #{tile.117}
  %s0 = inlined_call_operand.vmem [shape: f32[8,16], index: 0, kind: input, shape index: {}]
  %s1 = inlined_call_operand.vmem [shape: f32[1,128], index: 1, kind: output, shape index: {}]
  $region1: #{tile.117} parent=0
    #allocation0 [shape = 'u8[4096]{0}', space=vmem, size = 0x1000, scoped, tag = 'scoped mem for output reshape']
    %v2 = vld [vmem:[%s0] sm:$0x1]
    %vm3 = vcmask 130048
    %4 = vst.msk [vmem:[#allocation0] sm:$0x1] %vm3, %v2
    %s5 = scalar_lea.vmem %s0, 7
    %v6 = vld [vmem:[%s5] sm:$0x1]
    %7 = vrot.lane.b32.xlu0 %v6, 112
    %v8 = vpop.permute.xlu0 %7
    %vm9 = vcmask 1048448
    %10 = vst.msk [vmem:[#allocation0] sm:$0x1] %vm9, %v8
    %s11 = scalar_lea.vmem %s0, 6
    %v12 = vld [vmem:[%s11] sm:$0x1]
    %13 = vrot.lane.b32.xlu0 %v12, 96
    %v14 = vpop.permute.xlu0 %13
    %vm15 = vcmask 917248
    %16 = vst.msk [vmem:[#allocation0] sm:$0x1] %vm15, %v14
    %s17 = scalar_lea.vmem %s0, 5
    %v18 = vld [vmem:[%s17] sm:$0x1]
    %19 = vrot.lane.b32.xlu0 %v18, 80
    %v20 = vpop.permute.xlu0 %19
    %vm21 = vcmask 786048
    %22 = vst.msk [vmem:[#allocation0] sm:$0x1] %vm21, %v20
    %s23 = scalar_lea.vmem %s0, 4
    %v24 = vld [vmem:[%s23] sm:$0x1]
    %25 = vrot.lane.b32.xlu0 %v24, 64
    %v26 = vpop.permute.xlu0 %25
    %vm27 = vcmask 654848
    %28 = vst.msk [vmem:[#allocation0] sm:$0x1] %vm27, %v26
    %s29 = scalar_lea.vmem %s0, 3
    %v30 = vld [vmem:[%s29] sm:$0x1]
    %31 = vrot.lane.b32.xlu0 %v30, 48
    %v32 = vpop.permute.xlu0 %31
    %vm33 = vcmask 523648
    %34 = vst.msk [vmem:[#allocation0] sm:$0x1] %vm33, %v32
    %s35 = scalar_lea.vmem %s0, 2
    %v36 = vld [vmem:[%s35] sm:$0x1]
    %37 = vrot.lane.b32.xlu0 %v36, 32
    %v38 = vpop.permute.xlu0 %37
    %vm39 = vcmask 392448
    %40 = vst.msk [vmem:[#allocation0] sm:$0x1] %vm39, %v38
    %s41 = scalar_lea.vmem %s0, 1
    %v42 = vld [vmem:[%s41] sm:$0x1]
    %43 = vrot.lane.b32.xlu0 %v42, 16
    %v44 = vpop.permute.xlu0 %43
    %vm45 = vcmask 261248
    %46 = vst.msk [vmem:[#allocation0] sm:$0x1] %vm45, %v44
    %s48 = sshllo.u32 0, 1
    %v50 = vld [vmem:[#allocation0] sm:%s48]
    %s51 = sshllo.u32 0, 1
    %52 = vst [vmem:[%s1] sm:%s51] %v50

// kernel: generator_forward.18
$region0: #{generator_forward.18}
  #allocation0 [shape = 'u32[]', space=smem, size = 0x4, offset = 0x4, fixed_abs, tag = 'smem constant byte address 0x4 - core index']
  #allocation1 [shape = 'u32[144,128]{1,0:T(1,128)}', space=vmem, size = 0x12000, scoped, tag = 'internal scratch']
  %s0 = inlined_call_operand.vmem [shape: f32[2,9,288], index: 0, kind: input, shape index: {}]
  %s1 = inlined_call_operand.vmem [shape: bf16[2,288,128], index: 1, kind: input, shape index: {}]
  %s2 = inlined_call_operand.vmem [shape: f32[2,8,128], index: 2, kind: output, shape index: {0}]
  %s3 = inlined_call_operand.vmem [shape: f32[2,2,128], index: 3, kind: output, shape index: {1}]
  %4 = xla_tuple %s2, %s3
  %s5 = sld [smem:[#allocation0]]
  $region49: #{generator_forward.18} parent=0
    _
  %s7 = ssub.s32 1, %s5
  %s8 = scalar_select 0, %s7, %s5
  loop: start=0, step=1, limit=4
  $region2: #{generator_forward.18} parent=0 // loop_pre_header
    _
  $region3: #{generator_forward.18} parent=0 // loop_header
    %s10 = sphi 0, %s14
    %p11 = scmp.ge.s32.totalorder %s10, 4
    %s20 = sphi 0, %s22
    %s23 = sphi 0, %s20
    %s24 = sphi 0, %s23
    %s40 = sphi 0, %s24
    %s44 = sphi 0, %s44
    %s46 = sphi 0, %s44
    %s47 = sphi 0, %s46
    %s61 = sphi 0, %s47
    %s67 = sphi 0, %s69
    %s70 = sphi 0, %s67
    %s71 = sphi 0, %s70
    %s87 = sphi 0, %s71
    %s93 = sphi 0, %s95
    %s96 = sphi 0, %s93
    %s97 = sphi 0, %s96
    %s113 = sphi 0, %s97
  $region4: #{generator_forward.18} parent=0 // loop_header_branch
    %13 = sbr.rel (%p11) target = $region8
  $region5: #{generator_forward.18} parent=0 // loop_body
    %s15 = ssub.s32 %s10, 1
    %s16 = ssub.s32 %s10, 2
    %s17 = sadd.s32 %s10, 1
    %s18 = ssub.s32 %s10, %s17
    %p19 = scmp.eq.s32.totalorder %s18, 0
    %s21 = sadd.s32 %s20, 1
    %s22 = scalar_select %p19, %s20, %s21
    %p25 = pneg %p19
    %p26 = scmp.eq.s32.totalorder %s10, 1
    %p27 = por %p25, %p26
    %p28 = scmp.ne.s32.totalorder %s20, %s23
    %p29 = scmp.eq.s32.totalorder %s10, 0
    %p30 = por %p28, %p29
    %p31 = scmp.ne.s32.totalorder %s20, %s23
    %p32 = scmp.eq.s32.totalorder %s15, 1
    %p33 = por %p31, %p32
    %p34 = scmp.ne.s32.totalorder %s23, %s24
    %p35 = scmp.eq.s32.totalorder %s15, 0
    %p36 = por %p34, %p35
    %p37 = scmp.ne.s32.totalorder %s23, %s24
    %p38 = scmp.eq.s32.totalorder %s16, 1
    %p39 = por %p37, %p38
    %p41 = scmp.ne.s32.totalorder %s24, %s40
    %p42 = scmp.eq.s32.totalorder %s16, 0
    %p43 = por %p41, %p42
    %s45 = sadd.s32 %s44, 1
    %p48 = scmp.eq.s32.totalorder %s10, 1
    %p49 = scmp.ne.s32.totalorder %s44, %s46
    %p50 = scmp.eq.s32.totalorder %s10, 0
    %p51 = por %p49, %p50
    %p52 = scmp.ne.s32.totalorder %s44, %s46
    %p53 = scmp.eq.s32.totalorder %s15, 1
    %p54 = por %p52, %p53
    %p55 = scmp.ne.s32.totalorder %s46, %s47
    %p56 = scmp.eq.s32.totalorder %s15, 0
    %p57 = por %p55, %p56
    %p58 = scmp.ne.s32.totalorder %s46, %s47
    %p59 = scmp.eq.s32.totalorder %s16, 1
    %p60 = por %p58, %p59
    %p62 = scmp.ne.s32.totalorder %s47, %s61
    %p63 = scmp.eq.s32.totalorder %s16, 0
    %p64 = por %p62, %p63
    %s65 = ssub.s32 %s10, %s17
    %p66 = scmp.eq.s32.totalorder %s65, 0
    %s68 = sadd.s32 %s67, 1
    %s69 = scalar_select %p66, %s67, %s68
    %p72 = pneg %p66
    %p73 = scmp.eq.s32.totalorder %s10, 1
    %p74 = por %p72, %p73
    %p75 = scmp.ne.s32.totalorder %s67, %s70
    %p76 = scmp.eq.s32.totalorder %s10, 0
    %p77 = por %p75, %p76
    %p78 = scmp.ne.s32.totalorder %s67, %s70
    %p79 = scmp.eq.s32.totalorder %s15, 1
    %p80 = por %p78, %p79
    %p81 = scmp.ne.s32.totalorder %s70, %s71
    %p82 = scmp.eq.s32.totalorder %s15, 0
    %p83 = por %p81, %p82
    %p84 = scmp.ne.s32.totalorder %s70, %s71
    %p85 = scmp.eq.s32.totalorder %s16, 1
    %p86 = por %p84, %p85
    %p88 = scmp.ne.s32.totalorder %s71, %s87
    %p89 = scmp.eq.s32.totalorder %s16, 0
    %p90 = por %p88, %p89
    %s91 = ssub.s32 %s10, %s17
    %p92 = scmp.eq.s32.totalorder %s91, 0
    %s94 = sadd.s32 %s93, 1
    %s95 = scalar_select %p92, %s93, %s94
    %p98 = pneg %p92
    %p99 = scmp.eq.s32.totalorder %s10, 1
    %p100 = por %p98, %p99
    %p101 = scmp.ne.s32.totalorder %s93, %s96
    %p102 = scmp.eq.s32.totalorder %s10, 0
    %p103 = por %p101, %p102
    %p104 = scmp.ne.s32.totalorder %s93, %s96
    %p105 = scmp.eq.s32.totalorder %s15, 1
    %p106 = por %p104, %p105
    %p107 = scmp.ne.s32.totalorder %s96, %s97
    %p108 = scmp.eq.s32.totalorder %s15, 0
    %p109 = por %p107, %p108
    %p110 = scmp.ne.s32.totalorder %s96, %s97
    %p111 = scmp.eq.s32.totalorder %s16, 1
    %p112 = por %p110, %p111
    %p114 = scmp.ne.s32.totalorder %s97, %s113
    %p115 = scmp.eq.s32.totalorder %s16, 0
    %p116 = por %p114, %p115
    %p117 = scmp.le.s32.totalorder 1, %s10
    %p118 = scmp.lt.s32.totalorder %s10, 3
    %p119 = pnand %p117, %p118
    %p120 = pneg %p119
    // Predicated region
    $region9: #{generator_forward.18} parent=5 // pred_check
      _
    $region10: #{generator_forward.18} parent=5 // pred_check_branch
      %122 = sbr.rel (%p119) target = $region12
    $region11: #{generator_forward.18} parent=5 // pred_region
      %s123 = ssub.s32 %s10, 1
      // Predicated region
      $region13: #{generator_forward.18} parent=11 // pred_check
        %p124 = pneg %p57
      $region14: #{generator_forward.18} parent=11 // pred_check_branch
        %126 = sbr.rel (%p124) target = $region16
      $region15: #{generator_forward.18} parent=11 // pred_region
        _
      $region16: #{generator_forward.18} parent=11 // pred_fallthru
        _
    $region12: #{generator_forward.18} parent=5 // pred_fallthru
      _
    %p127 = scmp.lt.s32.totalorder %s10, 2
    // Predicated region
    $region17: #{generator_forward.18} parent=5 // pred_check
      %p128 = pneg %p127
    $region18: #{generator_forward.18} parent=5 // pred_check_branch
      %130 = sbr.rel (%p128) target = $region20
    $region19: #{generator_forward.18} parent=5 // pred_region
      // Predicated region
      $region21: #{generator_forward.18} parent=19 // pred_check
        %p131 = pneg %p30
      $region22: #{generator_forward.18} parent=19 // pred_check_branch
        %133 = sbr.rel (%p131) target = $region24
      $region23: #{generator_forward.18} parent=19 // pred_region
        %p134 = scmp.lt.s32.totalorder %s10, 1
        %s135 = scalar_select %p134, %s10, 1
        %s136 = smul.addr %s135, 6
        %s137 = smul.addr %s136, 8
        %s138 = scalar_lea.vmem %s0, %s137
      $region24: #{generator_forward.18} parent=19 // pred_fallthru
        _
    $region20: #{generator_forward.18} parent=5 // pred_fallthru
      _
    %p139 = scmp.le.s32.totalorder 1, %s10
    %p140 = scmp.lt.s32.totalorder %s10, 3
    %p141 = pnand %p139, %p140
    %p142 = pneg %p141
    // Predicated region
    $region25: #{generator_forward.18} parent=5 // pred_check
      _
    $region26: #{generator_forward.18} parent=5 // pred_check_branch
      %144 = sbr.rel (%p141) target = $region28
    $region27: #{generator_forward.18} parent=5 // pred_region
      %s145 = ssub.s32 %s10, 1
      %p146 = scmp.lt.s32.totalorder %s15, 1
      %s147 = scalar_select %p146, %s15, 1
      %s148 = smul.addr %s147, 6
      %s149 = smul.addr %s148, 8
      %s150 = scalar_lea.vmem %s0, %s149
      %p151 = pneg %p36
      %p152 = pneg %p33
      %p153 = pneg %p57
      %p154 = pneg %p54
      %p155 = pneg %p83
      %p156 = pneg %p80
      %p157 = scmp.lt.s32.totalorder %s15, 1
      %s158 = scalar_select %p157, %s15, 1
      %s159 = smul.addr %s158, 8
      %s160 = scalar_lea.vmem %s2, %s159
      %p161 = pneg %p109
      %p162 = pneg %p106
      %p163 = scmp.lt.s32.totalorder %s15, 1
      %s164 = scalar_select %p163, %s15, 1
      %s165 = smul.addr %s164, 2
      %s166 = scalar_lea.vmem %s3, %s165
      %p167 = scmp.lt.s32.totalorder %s15, 1
      %s168 = scalar_select %p167, %s15, 1
      %s169 = smul.addr %s168, 6
      %s170 = smul.addr %s169, 8
      %s171 = scalar_lea.vmem %s0, %s170
      %p172 = scmp.lt.s32.totalorder %s15, 1
      %s173 = scalar_select %p172, %s15, 1
      %s174 = smul.addr %s173, 8
      %s175 = scalar_lea.vmem %s2, %s174
      %p176 = scmp.lt.s32.totalorder %s15, 1
      %s177 = scalar_select %p176, %s15, 1
      %s178 = smul.addr %s177, 2
      %s179 = scalar_lea.vmem %s3, %s178
      %v181 = vld [vmem:[%s171] sm:$0xff]
      %v182 = vld [vmem:[%s171 + $0x8] sm:$0xff]
      %v183 = vld [vmem:[%s171 + $0x10] sm:$0xff]
      %v184 = vld [vmem:[%s171 + $0x18] sm:$0x1]
      %v185 = vld [vmem:[%s171 + $0x20] sm:$0x1]
      %v186 = vld [vmem:[%s171 + $0x28] sm:$0x1]
      %v187 = vpack.c.bf16 %v181, %v181
      %v188 = vpack.c.bf16 %v182, %v182
      %v189 = vpack.c.bf16 %v183, %v183
      %v190 = vld [vmem:[%s1] sm:$0xf]
      %v191 = vld [vmem:[%s1 + $0x4] sm:$0xf]
      %v192 = vld [vmem:[%s1 + $0x8] sm:$0xf]
      %v193 = vld [vmem:[%s1 + $0xc] sm:$0xf]
      %v194 = vld [vmem:[%s1 + $0x10] sm:$0xf]
      %v195 = vld [vmem:[%s1 + $0x14] sm:$0xf]
      %v196 = vld [vmem:[%s1 + $0x18] sm:$0xf]
      %v197 = vld [vmem:[%s1 + $0x1c] sm:$0xf]
      %v198 = vld [vmem:[%s1 + $0x20] sm:$0xf]
      %v199 = vld [vmem:[%s1 + $0x24] sm:$0xf]
      %v200 = vld [vmem:[%s1 + $0x28] sm:$0xf]
      %v201 = vld [vmem:[%s1 + $0x2c] sm:$0xf]
      %v202 = vld [vmem:[%s1 + $0x30] sm:$0xf]
      %v203 = vld [vmem:[%s1 + $0x34] sm:$0xf]
      %v204 = vld [vmem:[%s1 + $0x38] sm:$0xf]
      %v205 = vld [vmem:[%s1 + $0x3c] sm:$0xf]
      %v206 = vld [vmem:[%s1 + $0x40] sm:$0xf]
      %v207 = vld [vmem:[%s1 + $0x44] sm:$0xf]
      %v208 = vld [vmem:[%s1 + $0x48] sm:$0xf]
      %v209 = vld [vmem:[%s1 + $0x4c] sm:$0xf]
      %v210 = vld [vmem:[%s1 + $0x50] sm:$0xf]
      %v211 = vld [vmem:[%s1 + $0x54] sm:$0xf]
      %v212 = vld [vmem:[%s1 + $0x58] sm:$0xf]
      %v213 = vld [vmem:[%s1 + $0x5c] sm:$0xf]
      %v214 = vld [vmem:[%s1 + $0x60] sm:$0xf]
      %v215 = vld [vmem:[%s1 + $0x64] sm:$0xf]
      %v216 = vld [vmem:[%s1 + $0x68] sm:$0xf]
      %v217 = vld [vmem:[%s1 + $0x6c] sm:$0xf]
      %v218 = vld [vmem:[%s1 + $0x70] sm:$0xf]
      %v219 = vld [vmem:[%s1 + $0x74] sm:$0xf]
      %v220 = vld [vmem:[%s1 + $0x78] sm:$0xf]
      %v221 = vld [vmem:[%s1 + $0x7c] sm:$0xf]
      %v222 = vld [vmem:[%s1 + $0x80] sm:$0xf]
      %v223 = vld [vmem:[%s1 + $0x84] sm:$0xf]
      %v224 = vld [vmem:[%s1 + $0x88] sm:$0xf]
      %v225 = vld [vmem:[%s1 + $0x8c] sm:$0xf]
      %v226 = vpack.c.bf16 %v184, %v181
      %v227 = vpack.c.bf16 %v185, %v182
      %v228 = vpack.c.bf16 %v186, %v183
      %s229 = scalar_lea.vmem %s1, 144
      %v230 = vld [vmem:[%s229] sm:$0xf]
      %v231 = vld [vmem:[%s229 + $0x4] sm:$0xf]
      %v232 = vld [vmem:[%s229 + $0x8] sm:$0xf]
      %v233 = vld [vmem:[%s229 + $0xc] sm:$0xf]
      %v234 = vld [vmem:[%s229 + $0x10] sm:$0xf]
      %v235 = vld [vmem:[%s229 + $0x14] sm:$0xf]
      %v236 = vld [vmem:[%s229 + $0x18] sm:$0xf]
      %v237 = vld [vmem:[%s229 + $0x1c] sm:$0xf]
      %v238 = vld [vmem:[%s229 + $0x20] sm:$0xf]
      %v239 = vld [vmem:[%s229 + $0x24] sm:$0xf]
      %v240 = vld [vmem:[%s229 + $0x28] sm:$0xf]
      %v241 = vld [vmem:[%s229 + $0x2c] sm:$0xf]
      %v242 = vld [vmem:[%s229 + $0x30] sm:$0xf]
      %v243 = vld [vmem:[%s229 + $0x34] sm:$0xf]
      %v244 = vld [vmem:[%s229 + $0x38] sm:$0xf]
      %v245 = vld [vmem:[%s229 + $0x3c] sm:$0xf]
      %v246 = vld [vmem:[%s229 + $0x40] sm:$0xf]
      %v247 = vld [vmem:[%s229 + $0x44] sm:$0xf]
      %v248 = vld [vmem:[%s229 + $0x48] sm:$0xf]
      %v249 = vld [vmem:[%s229 + $0x4c] sm:$0xf]
      %v250 = vld [vmem:[%s229 + $0x50] sm:$0xf]
      %v251 = vld [vmem:[%s229 + $0x54] sm:$0xf]
      %v252 = vld [vmem:[%s229 + $0x58] sm:$0xf]
      %v253 = vld [vmem:[%s229 + $0x5c] sm:$0xf]
      %v254 = vld [vmem:[%s229 + $0x60] sm:$0xf]
      %v255 = vld [vmem:[%s229 + $0x64] sm:$0xf]
      %v256 = vld [vmem:[%s229 + $0x68] sm:$0xf]
      %v257 = vld [vmem:[%s229 + $0x6c] sm:$0xf]
      %v258 = vld [vmem:[%s229 + $0x70] sm:$0xf]
      %v259 = vld [vmem:[%s229 + $0x74] sm:$0xf]
      %v260 = vld [vmem:[%s229 + $0x78] sm:$0xf]
      %v261 = vld [vmem:[%s229 + $0x7c] sm:$0xf]
      %v262 = vld [vmem:[%s229 + $0x80] sm:$0xf]
      %v263 = vld [vmem:[%s229 + $0x84] sm:$0xf]
      %v264 = vld [vmem:[%s229 + $0x88] sm:$0xf]
      %v265 = vld [vmem:[%s229 + $0x8c] sm:$0xf]
      %v267 = vshrl.u32 %v226, 16
      %v269 = vshll.u32 %v226, 16
      %v271 = vrot.slane %v269, 1
      %v272 = vor.u32 %v267, %v271
      %v274 = vshrl.u32 %v227, 16
      %v276 = vshll.u32 %v227, 16
      %v278 = vrot.slane %v276, 1
      %v279 = vor.u32 %v274, %v278
      %v281 = vshrl.u32 %v228, 16
      %v283 = vshll.u32 %v228, 16
      %v285 = vrot.slane %v283, 1
      %v286 = vor.u32 %v281, %v285
      %v325 = vunpack.c.l.b16 %v230
      %v326 = vunpack.c.l.b16 %v231
      %v327 = vunpack.c.l.b16 %v232
      %v328 = vunpack.c.l.b16 %v233
      %v329 = vunpack.c.l.b16 %v234
      %v330 = vunpack.c.l.b16 %v235
      %v331 = vunpack.c.l.b16 %v236
      %v332 = vunpack.c.l.b16 %v237
      %v333 = vunpack.c.l.b16 %v238
      %v334 = vunpack.c.l.b16 %v239
      %v335 = vunpack.c.l.b16 %v240
      %v336 = vunpack.c.l.b16 %v241
      %v337 = vunpack.c.l.b16 %v242
      %v338 = vunpack.c.l.b16 %v243
      %v339 = vunpack.c.l.b16 %v244
      %v340 = vunpack.c.l.b16 %v245
      %v341 = vunpack.c.l.b16 %v246
      %v342 = vunpack.c.l.b16 %v247
      %v343 = vunpack.c.l.b16 %v248
      %v344 = vunpack.c.l.b16 %v249
      %v345 = vunpack.c.l.b16 %v250
      %v346 = vunpack.c.l.b16 %v251
      %v347 = vunpack.c.l.b16 %v252
      %v348 = vunpack.c.l.b16 %v253
      %v349 = vunpack.c.l.b16 %v254
      %v350 = vunpack.c.l.b16 %v255
      %v351 = vunpack.c.l.b16 %v256
      %v352 = vunpack.c.l.b16 %v257
      %v353 = vunpack.c.l.b16 %v258
      %v354 = vunpack.c.l.b16 %v259
      %v355 = vunpack.c.l.b16 %v260
      %v356 = vunpack.c.l.b16 %v261
      %v357 = vunpack.c.l.b16 %v262
      %v358 = vunpack.c.l.b16 %v263
      %v359 = vunpack.c.l.b16 %v264
      %v360 = vunpack.c.l.b16 %v265
      %v361 = vpack.c.b16 %v326, %v325
      %v362 = vpack.c.b16 %v328, %v327
      %v363 = vpack.c.b16 %v330, %v329
      %v364 = vpack.c.b16 %v332, %v331
      %v365 = vpack.c.b16 %v334, %v333
      %v366 = vpack.c.b16 %v336, %v335
      %v367 = vpack.c.b16 %v338, %v337
      %v368 = vpack.c.b16 %v340, %v339
      %v369 = vpack.c.b16 %v342, %v341
      %v370 = vpack.c.b16 %v344, %v343
      %v371 = vpack.c.b16 %v346, %v345
      %v372 = vpack.c.b16 %v348, %v347
      %v373 = vpack.c.b16 %v350, %v349
      %v374 = vpack.c.b16 %v352, %v351
      %v375 = vpack.c.b16 %v354, %v353
      %v376 = vpack.c.b16 %v356, %v355
      %v377 = vpack.c.b16 %v358, %v357
      %v378 = vpack.c.b16 %v360, %v359
      %vm397 = vcmask 261120
      %v399 = vsel %vm397, %v286, 0
      %401 = vmatprep.subr.bf16.mxu0 0
      %402 = vmatpush1.bf16.msra.mxu0 %v361
      %403 = vmatprep.subr.bf16.mxu0 0
      %404 = vmatpush1.bf16.msra.mxu0 %v362
      %405 = vmatprep.subr.bf16.mxu0 0
      %406 = vmatpush1.bf16.msra.mxu0 %v363
      %407 = vmatprep.subr.bf16.mxu0 0
      %408 = vmatpush1.bf16.msra.mxu0 %v364
      %409 = vmatprep.subr.bf16.mxu0 0
      %410 = vmatpush1.bf16.msra.mxu0 %v365
      %411 = vmatprep.subr.bf16.mxu0 0
      %412 = vmatpush1.bf16.msra.mxu0 %v366
      %413 = vmatprep.subr.bf16.mxu0 0
      %414 = vmatpush1.bf16.msra.mxu0 %v367
      %415 = vmatprep.subr.bf16.mxu0 0
      %416 = vmatpush1.bf16.msra.mxu0 %v368
      %417 = vmatprep.subr.bf16.mxu0 0
      %418 = vmatpush1.bf16.msra.mxu0 %v369
      %419 = vmatprep.subr.bf16.mxu0 0
      %420 = vmatpush1.bf16.msra.mxu0 %v370
      %421 = vmatprep.subr.bf16.mxu0 0
      %422 = vmatpush1.bf16.msra.mxu0 %v371
      %423 = vmatprep.subr.bf16.mxu0 0
      %424 = vmatpush1.bf16.msra.mxu0 %v372
      %425 = vmatprep.subr.bf16.mxu0 0
      %426 = vmatpush1.bf16.msra.mxu0 %v373
      %427 = vmatprep.subr.bf16.mxu0 0
      %428 = vmatpush1.bf16.msra.mxu0 %v374
      %429 = vmatprep.subr.bf16.mxu0 0
      %430 = vmatpush1.bf16.msra.mxu0 %v375
      %431 = vmatprep.subr.bf16.mxu0 0
      %432 = vmatpush1.bf16.msra.mxu0 %v376
      %433 = vmatprep.mubr.bf16.mxu0 %v279
      %434 = vmatmul.mubr.bf16.gmra.mrb[0].mxu0 %v272
      %v435 = vpop.f32.mrb[0].mxu0
      %v436 = vadd.f32 0.0, %v435
      %v437 = vpop.f32.mrb[0].mxu0
      %v438 = vpop.f32.mrb[0].mxu0
      %v439 = vpop.f32.mrb[0].mxu0
      %440 = vdwg.mxu0
      %441 = vmatprep.subr.bf16.mxu0 0
      %442 = vmatpush1.bf16.msra.mxu0 %v377
      %443 = vmatprep.subr.bf16.mxu0 0
      %444 = vmatpush1.bf16.msra.mxu0 %v378
      %445 = vmatprep.subr.bf16.mxu0 0
      %446 = vmatpush1.bf16.msra.mxu0 0
      %447 = vmatprep.subr.bf16.mxu0 0
      %448 = vmatpush1.bf16.msra.mxu0 0
      %449 = vmatprep.subr.bf16.mxu0 0
      %450 = vmatpush1.bf16.msra.mxu0 0
      %451 = vmatprep.subr.bf16.mxu0 0
      %452 = vmatpush1.bf16.msra.mxu0 0
      %453 = vmatprep.subr.bf16.mxu0 0
      %454 = vmatpush1.bf16.msra.mxu0 0
      %455 = vmatprep.subr.bf16.mxu0 0
      %456 = vmatpush1.bf16.msra.mxu0 0
      %457 = vmatprep.subr.bf16.mxu0 0
      %458 = vmatpush1.bf16.msra.mxu0 0
      %459 = vmatprep.subr.bf16.mxu0 0
      %460 = vmatpush1.bf16.msra.mxu0 0
      %461 = vmatprep.subr.bf16.mxu0 0
      %462 = vmatpush1.bf16.msra.mxu0 0
      %463 = vmatprep.subr.bf16.mxu0 0
      %464 = vmatpush1.bf16.msra.mxu0 0
      %465 = vmatprep.subr.bf16.mxu0 0
      %466 = vmatpush1.bf16.msra.mxu0 0
      %467 = vmatprep.subr.bf16.mxu0 0
      %468 = vmatpush1.bf16.msra.mxu0 0
      %469 = vmatprep.subr.bf16.mxu0 0
      %470 = vmatpush1.bf16.msra.mxu0 0
      %471 = vmatprep.subr.bf16.mxu0 0
      %472 = vmatpush1.bf16.msra.mxu0 0
      %473 = vmatprep.mubr.bf16.mxu0 0
      %474 = vmatmul.mubr.bf16.gmra.mrb[0].mxu0 %v399
      %v475 = vpop.f32.mrb[0].mxu0
      %v476 = vadd.f32 %v436, %v475
      %v477 = vpop.f32.mrb[0].mxu0
      %v478 = vpop.f32.mrb[0].mxu0
      %v479 = vpop.f32.mrb[0].mxu0
      %480 = vdwg.mxu0
      %v517 = vunpack.c.l.b16 %v190
      %v518 = vunpack.c.l.b16 %v191
      %v519 = vunpack.c.l.b16 %v192
      %v520 = vunpack.c.l.b16 %v193
      %v521 = vunpack.c.l.b16 %v194
      %v522 = vunpack.c.l.b16 %v195
      %v523 = vunpack.c.l.b16 %v196
      %v524 = vunpack.c.l.b16 %v197
      %v525 = vunpack.c.l.b16 %v198
      %v526 = vunpack.c.l.b16 %v199
      %v527 = vunpack.c.l.b16 %v200
      %v528 = vunpack.c.l.b16 %v201
      %v529 = vunpack.c.l.b16 %v202
      %v530 = vunpack.c.l.b16 %v203
      %v531 = vunpack.c.l.b16 %v204
      %v532 = vunpack.c.l.b16 %v205
      %v533 = vunpack.c.l.b16 %v206
      %v534 = vunpack.c.l.b16 %v207
      %v535 = vunpack.c.l.b16 %v208
      %v536 = vunpack.c.l.b16 %v209
      %v537 = vunpack.c.l.b16 %v210
      %v538 = vunpack.c.l.b16 %v211
      %v539 = vunpack.c.l.b16 %v212
      %v540 = vunpack.c.l.b16 %v213
      %v541 = vunpack.c.l.b16 %v214
      %v542 = vunpack.c.l.b16 %v215
      %v543 = vunpack.c.l.b16 %v216
      %v544 = vunpack.c.l.b16 %v217
      %v545 = vunpack.c.l.b16 %v218
      %v546 = vunpack.c.l.b16 %v219
      %v547 = vunpack.c.l.b16 %v220
      %v548 = vunpack.c.l.b16 %v221
      %v549 = vunpack.c.l.b16 %v222
      %v550 = vunpack.c.l.b16 %v223
      %v551 = vunpack.c.l.b16 %v224
      %v552 = vunpack.c.l.b16 %v225
      %v553 = vpack.c.b16 %v518, %v517
      %v554 = vpack.c.b16 %v520, %v519
      %v555 = vpack.c.b16 %v522, %v521
      %v556 = vpack.c.b16 %v524, %v523
      %v557 = vpack.c.b16 %v526, %v525
      %v558 = vpack.c.b16 %v528, %v527
      %v559 = vpack.c.b16 %v530, %v529
      %v560 = vpack.c.b16 %v532, %v531
      %v561 = vpack.c.b16 %v534, %v533
      %v562 = vpack.c.b16 %v536, %v535
      %v563 = vpack.c.b16 %v538, %v537
      %v564 = vpack.c.b16 %v540, %v539
      %v565 = vpack.c.b16 %v542, %v541
      %v566 = vpack.c.b16 %v544, %v543
      %v567 = vpack.c.b16 %v546, %v545
      %v568 = vpack.c.b16 %v548, %v547
      %v569 = vpack.c.b16 %v550, %v549
      %v570 = vpack.c.b16 %v552, %v551
      %v590 = vsel %vm397, %v189, 0
      %592 = vmatprep.subr.bf16.mxu0 0
      %593 = vmatpush1.bf16.msra.mxu0 %v553
      %594 = vmatprep.subr.bf16.mxu0 0
      %595 = vmatpush1.bf16.msra.mxu0 %v554
      %596 = vmatprep.subr.bf16.mxu0 0
      %597 = vmatpush1.bf16.msra.mxu0 %v555
      %598 = vmatprep.subr.bf16.mxu0 0
      %599 = vmatpush1.bf16.msra.mxu0 %v556
      %600 = vmatprep.subr.bf16.mxu0 0
      %601 = vmatpush1.bf16.msra.mxu0 %v557
      %602 = vmatprep.subr.bf16.mxu0 0
      %603 = vmatpush1.bf16.msra.mxu0 %v558
      %604 = vmatprep.subr.bf16.mxu0 0
      %605 = vmatpush1.bf16.msra.mxu0 %v559
      %606 = vmatprep.subr.bf16.mxu0 0
      %607 = vmatpush1.bf16.msra.mxu0 %v560
      %608 = vmatprep.subr.bf16.mxu0 0
      %609 = vmatpush1.bf16.msra.mxu0 %v561
      %610 = vmatprep.subr.bf16.mxu0 0
      %611 = vmatpush1.bf16.msra.mxu0 %v562
      %612 = vmatprep.subr.bf16.mxu0 0
      %613 = vmatpush1.bf16.msra.mxu0 %v563
      %614 = vmatprep.subr.bf16.mxu0 0
      %615 = vmatpush1.bf16.msra.mxu0 %v564
      %616 = vmatprep.subr.bf16.mxu0 0
      %617 = vmatpush1.bf16.msra.mxu0 %v565
      %618 = vmatprep.subr.bf16.mxu0 0
      %619 = vmatpush1.bf16.msra.mxu0 %v566
      %620 = vmatprep.subr.bf16.mxu0 0
      %621 = vmatpush1.bf16.msra.mxu0 %v567
      %622 = vmatprep.subr.bf16.mxu0 0
      %623 = vmatpush1.bf16.msra.mxu0 %v568
      %624 = vmatprep.mubr.bf16.mxu0 %v188
      %625 = vmatmul.mubr.bf16.gmra.mrb[0].mxu0 %v187
      %v626 = vpop.f32.mrb[0].mxu0
      %v627 = vadd.f32 %v476, %v626
      %v628 = vpop.f32.mrb[0].mxu0
      %v629 = vpop.f32.mrb[0].mxu0
      %v630 = vpop.f32.mrb[0].mxu0
      %631 = vdwg.mxu0
      %632 = vmatprep.subr.bf16.mxu0 0
      %633 = vmatpush1.bf16.msra.mxu0 %v569
      %634 = vmatprep.subr.bf16.mxu0 0
      %635 = vmatpush1.bf16.msra.mxu0 %v570
      %636 = vmatprep.subr.bf16.mxu0 0
      %637 = vmatpush1.bf16.msra.mxu0 0
      %638 = vmatprep.subr.bf16.mxu0 0
      %639 = vmatpush1.bf16.msra.mxu0 0
      %640 = vmatprep.subr.bf16.mxu0 0
      %641 = vmatpush1.bf16.msra.mxu0 0
      %642 = vmatprep.subr.bf16.mxu0 0
      %643 = vmatpush1.bf16.msra.mxu0 0
      %644 = vmatprep.subr.bf16.mxu0 0
      %645 = vmatpush1.bf16.msra.mxu0 0
      %646 = vmatprep.subr.bf16.mxu0 0
      %647 = vmatpush1.bf16.msra.mxu0 0
      %648 = vmatprep.subr.bf16.mxu0 0
      %649 = vmatpush1.bf16.msra.mxu0 0
      %650 = vmatprep.subr.bf16.mxu0 0
      %651 = vmatpush1.bf16.msra.mxu0 0
      %652 = vmatprep.subr.bf16.mxu0 0
      %653 = vmatpush1.bf16.msra.mxu0 0
      %654 = vmatprep.subr.bf16.mxu0 0
      %655 = vmatpush1.bf16.msra.mxu0 0
      %656 = vmatprep.subr.bf16.mxu0 0
      %657 = vmatpush1.bf16.msra.mxu0 0
      %658 = vmatprep.subr.bf16.mxu0 0
      %659 = vmatpush1.bf16.msra.mxu0 0
      %660 = vmatprep.subr.bf16.mxu0 0
      %661 = vmatpush1.bf16.msra.mxu0 0
      %662 = vmatprep.subr.bf16.mxu0 0
      %663 = vmatpush1.bf16.msra.mxu0 0
      %664 = vmatprep.mubr.bf16.mxu0 0
      %665 = vmatmul.mubr.bf16.gmra.mrb[0].mxu0 %v590
      %v666 = vpop.f32.mrb[0].mxu0
      %v667 = vadd.f32 %v627, %v666
      %v668 = vpop.f32.mrb[0].mxu0
      %v669 = vpop.f32.mrb[0].mxu0
      %v670 = vpop.f32.mrb[0].mxu0
      %671 = vdwg.mxu0
      %672 = vst [vmem:[%s175] sm:$0xff] %v667
      %v673 = vrot.slane %v667, 4
      %v674 = vadd.f32 %v667, %v673
      %v675 = vrot.slane %v674, 2
      %v676 = vadd.f32 %v674, %v675
      %v677 = vrot.slane %v676, 1
      %v678 = vadd.f32 %v676, %v677
      %v679 = vmul.f32 %v667, %v667
      %v680 = vrot.slane %v679, 4
      %v681 = vadd.f32 %v679, %v680
      %v682 = vrot.slane %v681, 2
      %v683 = vadd.f32 %v681, %v682
      %v684 = vrot.slane %v683, 1
      %v685 = vadd.f32 %v683, %v684
      %vm686 = vcmask 1040384
      %v687 = vsel %vm686, %v678, %v685
      %688 = vst [vmem:[%s179] sm:$0x3] %v687
      %p689 = scmp.lt.s32.totalorder %s15, 1
      %s690 = scalar_select %p689, %s15, 1
      %s691 = smul.addr %s690, 8
      %s692 = scalar_lea.vmem %s2, %s691
      %p693 = scmp.lt.s32.totalorder %s15, 1
      %s694 = scalar_select %p693, %s15, 1
      %s695 = smul.addr %s694, 2
      %s696 = scalar_lea.vmem %s3, %s695
      // Predicated region
      $region29: #{generator_forward.18} parent=27 // pred_check
        %p697 = pneg %p80
      $region30: #{generator_forward.18} parent=27 // pred_check_branch
        %699 = sbr.rel (%p697) target = $region32
      $region31: #{generator_forward.18} parent=27 // pred_region
        _
      $region32: #{generator_forward.18} parent=27 // pred_fallthru
        _
      // Predicated region
      $region33: #{generator_forward.18} parent=27 // pred_check
        %p700 = pneg %p106
      $region34: #{generator_forward.18} parent=27 // pred_check_branch
        %702 = sbr.rel (%p700) target = $region36
      $region35: #{generator_forward.18} parent=27 // pred_region
        _
      $region36: #{generator_forward.18} parent=27 // pred_fallthru
        _
    $region28: #{generator_forward.18} parent=5 // pred_fallthru
      _
    %p703 = scmp.le.s32.totalorder 2, %s10
    // Predicated region
    $region37: #{generator_forward.18} parent=5 // pred_check
      %p704 = pneg %p703
    $region38: #{generator_forward.18} parent=5 // pred_check_branch
      %706 = sbr.rel (%p704) target = $region40
    $region39: #{generator_forward.18} parent=5 // pred_region
      %s707 = ssub.s32 %s10, 2
      // Predicated region
      $region41: #{generator_forward.18} parent=39 // pred_check
        %p708 = pneg %p86
      $region42: #{generator_forward.18} parent=39 // pred_check_branch
        %710 = sbr.rel (%p708) target = $region44
      $region43: #{generator_forward.18} parent=39 // pred_region
        %p711 = scmp.lt.s32.totalorder %s16, 1
        %s712 = scalar_select %p711, %s16, 1
        %s713 = smul.addr %s712, 8
        %s714 = scalar_lea.vmem %s2, %s713
      $region44: #{generator_forward.18} parent=39 // pred_fallthru
        _
      // Predicated region
      $region45: #{generator_forward.18} parent=39 // pred_check
        %p715 = pneg %p112
      $region46: #{generator_forward.18} parent=39 // pred_check_branch
        %717 = sbr.rel (%p715) target = $region48
      $region47: #{generator_forward.18} parent=39 // pred_region
        %p718 = scmp.lt.s32.totalorder %s16, 1
        %s719 = scalar_select %p718, %s16, 1
        %s720 = smul.addr %s719, 2
        %s721 = scalar_lea.vmem %s3, %s720
      $region48: #{generator_forward.18} parent=39 // pred_fallthru
        _
    $region40: #{generator_forward.18} parent=5 // pred_fallthru
      _
  $region6: #{generator_forward.18} parent=0 // loop_footer
    %s14 = sadd.s32 1, %s10
  $region7: #{generator_forward.18} parent=0 // loop_footer_branch
    %9 = sbr.rel target = $region3
  $region8: #{generator_forward.18} parent=0 // loop_exit
    _

// kernel: generator_forward.19
$region0: #{generator_forward.19}
  #allocation0 [shape = 'u32[]', space=smem, size = 0x4, offset = 0x4, fixed_abs, tag = 'smem constant byte address 0x4 - core index']
  #allocation1 [shape = 'u32[144,128]{1,0:T(1,128)}', space=vmem, size = 0x12000, scoped, tag = 'internal scratch']
  %s0 = inlined_call_operand.vmem [shape: f32[2,8,128], index: 0, kind: input, shape index: {}]
  %s1 = inlined_call_operand.vmem [shape: f32[1,128], index: 1, kind: input, shape index: {}]
  %s2 = inlined_call_operand.vmem [shape: f32[1,128], index: 2, kind: input, shape index: {}]
  %s3 = inlined_call_operand.vmem [shape: f32[2,8,128], index: 3, kind: output, shape index: {}]
  %s4 = sld [smem:[#allocation0]]
  $region45: #{generator_forward.19} parent=0
    _
  %s6 = ssub.s32 1, %s4
  %s7 = scalar_select 0, %s6, %s4
  loop: start=0, step=1, limit=4
  $region2: #{generator_forward.19} parent=0 // loop_pre_header
    _
  $region3: #{generator_forward.19} parent=0 // loop_header
    %s9 = sphi 0, %s13
    %p10 = scmp.ge.s32.totalorder %s9, 4
    %s19 = sphi 0, %s21
    %s22 = sphi 0, %s19
    %s23 = sphi 0, %s22
    %s39 = sphi 0, %s23
    %s43 = sphi 0, %s43
    %s45 = sphi 0, %s43
    %s46 = sphi 0, %s45
    %s60 = sphi 0, %s46
    %s64 = sphi 0, %s64
    %s66 = sphi 0, %s64
    %s67 = sphi 0, %s66
    %s81 = sphi 0, %s67
    %s87 = sphi 0, %s89
    %s90 = sphi 0, %s87
    %s91 = sphi 0, %s90
    %s107 = sphi 0, %s91
  $region4: #{generator_forward.19} parent=0 // loop_header_branch
    %12 = sbr.rel (%p10) target = $region8
  $region5: #{generator_forward.19} parent=0 // loop_body
    %s14 = ssub.s32 %s9, 1
    %s15 = ssub.s32 %s9, 2
    %s16 = sadd.s32 %s9, 1
    %s17 = ssub.s32 %s9, %s16
    %p18 = scmp.eq.s32.totalorder %s17, 0
    %s20 = sadd.s32 %s19, 1
    %s21 = scalar_select %p18, %s19, %s20
    %p24 = pneg %p18
    %p25 = scmp.eq.s32.totalorder %s9, 1
    %p26 = por %p24, %p25
    %p27 = scmp.ne.s32.totalorder %s19, %s22
    %p28 = scmp.eq.s32.totalorder %s9, 0
    %p29 = por %p27, %p28
    %p30 = scmp.ne.s32.totalorder %s19, %s22
    %p31 = scmp.eq.s32.totalorder %s14, 1
    %p32 = por %p30, %p31
    %p33 = scmp.ne.s32.totalorder %s22, %s23
    %p34 = scmp.eq.s32.totalorder %s14, 0
    %p35 = por %p33, %p34
    %p36 = scmp.ne.s32.totalorder %s22, %s23
    %p37 = scmp.eq.s32.totalorder %s15, 1
    %p38 = por %p36, %p37
    %p40 = scmp.ne.s32.totalorder %s23, %s39
    %p41 = scmp.eq.s32.totalorder %s15, 0
    %p42 = por %p40, %p41
    %s44 = sadd.s32 %s43, 1
    %p47 = scmp.eq.s32.totalorder %s9, 1
    %p48 = scmp.ne.s32.totalorder %s43, %s45
    %p49 = scmp.eq.s32.totalorder %s9, 0
    %p50 = por %p48, %p49
    %p51 = scmp.ne.s32.totalorder %s43, %s45
    %p52 = scmp.eq.s32.totalorder %s14, 1
    %p53 = por %p51, %p52
    %p54 = scmp.ne.s32.totalorder %s45, %s46
    %p55 = scmp.eq.s32.totalorder %s14, 0
    %p56 = por %p54, %p55
    %p57 = scmp.ne.s32.totalorder %s45, %s46
    %p58 = scmp.eq.s32.totalorder %s15, 1
    %p59 = por %p57, %p58
    %p61 = scmp.ne.s32.totalorder %s46, %s60
    %p62 = scmp.eq.s32.totalorder %s15, 0
    %p63 = por %p61, %p62
    %s65 = sadd.s32 %s64, 1
    %p68 = scmp.eq.s32.totalorder %s9, 1
    %p69 = scmp.ne.s32.totalorder %s64, %s66
    %p70 = scmp.eq.s32.totalorder %s9, 0
    %p71 = por %p69, %p70
    %p72 = scmp.ne.s32.totalorder %s64, %s66
    %p73 = scmp.eq.s32.totalorder %s14, 1
    %p74 = por %p72, %p73
    %p75 = scmp.ne.s32.totalorder %s66, %s67
    %p76 = scmp.eq.s32.totalorder %s14, 0
    %p77 = por %p75, %p76
    %p78 = scmp.ne.s32.totalorder %s66, %s67
    %p79 = scmp.eq.s32.totalorder %s15, 1
    %p80 = por %p78, %p79
    %p82 = scmp.ne.s32.totalorder %s67, %s81
    %p83 = scmp.eq.s32.totalorder %s15, 0
    %p84 = por %p82, %p83
    %s85 = ssub.s32 %s9, %s16
    %p86 = scmp.eq.s32.totalorder %s85, 0
    %s88 = sadd.s32 %s87, 1
    %s89 = scalar_select %p86, %s87, %s88
    %p92 = pneg %p86
    %p93 = scmp.eq.s32.totalorder %s9, 1
    %p94 = por %p92, %p93
    %p95 = scmp.ne.s32.totalorder %s87, %s90
    %p96 = scmp.eq.s32.totalorder %s9, 0
    %p97 = por %p95, %p96
    %p98 = scmp.ne.s32.totalorder %s87, %s90
    %p99 = scmp.eq.s32.totalorder %s14, 1
    %p100 = por %p98, %p99
    %p101 = scmp.ne.s32.totalorder %s90, %s91
    %p102 = scmp.eq.s32.totalorder %s14, 0
    %p103 = por %p101, %p102
    %p104 = scmp.ne.s32.totalorder %s90, %s91
    %p105 = scmp.eq.s32.totalorder %s15, 1
    %p106 = por %p104, %p105
    %p108 = scmp.ne.s32.totalorder %s91, %s107
    %p109 = scmp.eq.s32.totalorder %s15, 0
    %p110 = por %p108, %p109
    %p111 = scmp.le.s32.totalorder 1, %s9
    %p112 = scmp.lt.s32.totalorder %s9, 3
    %p113 = pnand %p111, %p112
    %p114 = pneg %p113
    // Predicated region
    $region9: #{generator_forward.19} parent=5 // pred_check
      _
    $region10: #{generator_forward.19} parent=5 // pred_check_branch
      %116 = sbr.rel (%p113) target = $region12
    $region11: #{generator_forward.19} parent=5 // pred_region
      %s117 = ssub.s32 %s9, 1
      // Predicated region
      $region13: #{generator_forward.19} parent=11 // pred_check
        %p118 = pneg %p56
      $region14: #{generator_forward.19} parent=11 // pred_check_branch
        %120 = sbr.rel (%p118) target = $region16
      $region15: #{generator_forward.19} parent=11 // pred_region
        _
      $region16: #{generator_forward.19} parent=11 // pred_fallthru
        _
      // Predicated region
      $region17: #{generator_forward.19} parent=11 // pred_check
        %p121 = pneg %p77
      $region18: #{generator_forward.19} parent=11 // pred_check_branch
        %123 = sbr.rel (%p121) target = $region20
      $region19: #{generator_forward.19} parent=11 // pred_region
        _
      $region20: #{generator_forward.19} parent=11 // pred_fallthru
        _
    $region12: #{generator_forward.19} parent=5 // pred_fallthru
      _
    %p124 = scmp.lt.s32.totalorder %s9, 2
    // Predicated region
    $region21: #{generator_forward.19} parent=5 // pred_check
      %p125 = pneg %p124
    $region22: #{generator_forward.19} parent=5 // pred_check_branch
      %127 = sbr.rel (%p125) target = $region24
    $region23: #{generator_forward.19} parent=5 // pred_region
      // Predicated region
      $region25: #{generator_forward.19} parent=23 // pred_check
        %p128 = pneg %p29
      $region26: #{generator_forward.19} parent=23 // pred_check_branch
        %130 = sbr.rel (%p128) target = $region28
      $region27: #{generator_forward.19} parent=23 // pred_region
        %p131 = scmp.lt.s32.totalorder %s9, 1
        %s132 = scalar_select %p131, %s9, 1
        %s133 = smul.addr %s132, 8
        %s134 = scalar_lea.vmem %s0, %s133
      $region28: #{generator_forward.19} parent=23 // pred_fallthru
        _
    $region24: #{generator_forward.19} parent=5 // pred_fallthru
      _
    %p135 = scmp.le.s32.totalorder 1, %s9
    %p136 = scmp.lt.s32.totalorder %s9, 3
    %p137 = pnand %p135, %p136
    %p138 = pneg %p137
    // Predicated region
    $region29: #{generator_forward.19} parent=5 // pred_check
      _
    $region30: #{generator_forward.19} parent=5 // pred_check_branch
      %140 = sbr.rel (%p137) target = $region32
    $region31: #{generator_forward.19} parent=5 // pred_region
      %s141 = ssub.s32 %s9, 1
      %p142 = scmp.lt.s32.totalorder %s14, 1
      %s143 = scalar_select %p142, %s14, 1
      %s144 = smul.addr %s143, 8
      %s145 = scalar_lea.vmem %s0, %s144
      %p146 = pneg %p35
      %p147 = pneg %p32
      %p148 = pneg %p56
      %p149 = pneg %p53
      %p150 = pneg %p77
      %p151 = pneg %p74
      %p152 = pneg %p103
      %p153 = pneg %p100
      %p154 = scmp.lt.s32.totalorder %s14, 1
      %s155 = scalar_select %p154, %s14, 1
      %s156 = smul.addr %s155, 8
      %s157 = scalar_lea.vmem %s3, %s156
      %p158 = scmp.lt.s32.totalorder %s14, 1
      %s159 = scalar_select %p158, %s14, 1
      %s160 = smul.addr %s159, 8
      %s161 = scalar_lea.vmem %s0, %s160
      %p162 = scmp.lt.s32.totalorder %s14, 1
      %s163 = scalar_select %p162, %s14, 1
      %s164 = smul.addr %s163, 8
      %s165 = scalar_lea.vmem %s3, %s164
      %v166 = vld [vmem:[%s161] sm:$0xff]
      %v167 = vld [vmem:[%s1] sm:$0x1]
      %v169 = vlaneseq
      %v170 = vshrl.u32 %v169, 7
      %v171 = vsub.s32 0, %v170
      %v172 = vrot.slane %v167, %v171
      %v174 = vmul.f32 %v166, %v172
      %v175 = vld [vmem:[%s2] sm:$0x1]
      %v177 = vlaneseq
      %v178 = vshrl.u32 %v177, 7
      %v179 = vsub.s32 0, %v178
      %v180 = vrot.slane %v175, %v179
      %v182 = vadd.f32 %v174, %v180
      %v183 = vmax.f32 %v182, 0.0
      %184 = vst [vmem:[%s165] sm:$0xff] %v183
      %p185 = scmp.lt.s32.totalorder %s14, 1
      %s186 = scalar_select %p185, %s14, 1
      %s187 = smul.addr %s186, 8
      %s188 = scalar_lea.vmem %s3, %s187
      // Predicated region
      $region33: #{generator_forward.19} parent=31 // pred_check
        %p189 = pneg %p100
      $region34: #{generator_forward.19} parent=31 // pred_check_branch
        %191 = sbr.rel (%p189) target = $region36
      $region35: #{generator_forward.19} parent=31 // pred_region
        _
      $region36: #{generator_forward.19} parent=31 // pred_fallthru
        _
    $region32: #{generator_forward.19} parent=5 // pred_fallthru
      _
    %p192 = scmp.le.s32.totalorder 2, %s9
    // Predicated region
    $region37: #{generator_forward.19} parent=5 // pred_check
      %p193 = pneg %p192
    $region38: #{generator_forward.19} parent=5 // pred_check_branch
      %195 = sbr.rel (%p193) target = $region40
    $region39: #{generator_forward.19} parent=5 // pred_region
      %s196 = ssub.s32 %s9, 2
      // Predicated region
      $region41: #{generator_forward.19} parent=39 // pred_check
        %p197 = pneg %p106
      $region42: #{generator_forward.19} parent=39 // pred_check_branch
        %199 = sbr.rel (%p197) target = $region44
      $region43: #{generator_forward.19} parent=39 // pred_region
        %p200 = scmp.lt.s32.totalorder %s15, 1
        %s201 = scalar_select %p200, %s15, 1
        %s202 = smul.addr %s201, 8
        %s203 = scalar_lea.vmem %s3, %s202
      $region44: #{generator_forward.19} parent=39 // pred_fallthru
        _
    $region40: #{generator_forward.19} parent=5 // pred_fallthru
      _
  $region6: #{generator_forward.19} parent=0 // loop_footer
    %s13 = sadd.s32 1, %s9
  $region7: #{generator_forward.19} parent=0 // loop_footer_branch
    %8 = sbr.rel target = $region3
  $region8: #{generator_forward.19} parent=0 // loop_exit
    _

// kernel: generator_forward.20
$region0: #{generator_forward.20}
  #allocation0 [shape = 'u32[]', space=smem, size = 0x4, offset = 0x4, fixed_abs, tag = 'smem constant byte address 0x4 - core index']
  #allocation1 [shape = 'u32[144,128]{1,0:T(1,128)}', space=vmem, size = 0x12000, scoped, tag = 'internal scratch']
  %s0 = inlined_call_operand.vmem [shape: f32[2,5,320], index: 0, kind: input, shape index: {}]
  %s1 = inlined_call_operand.vmem [shape: bf16[2,320,128], index: 1, kind: input, shape index: {}]
  %s2 = inlined_call_operand.vmem [shape: f32[2,4,128], index: 2, kind: output, shape index: {0}]
  %s3 = inlined_call_operand.vmem [shape: f32[2,2,128], index: 3, kind: output, shape index: {1}]
  %4 = xla_tuple %s2, %s3
  %s5 = sld [smem:[#allocation0]]
  $region49: #{generator_forward.20} parent=0
    _
  %s7 = ssub.s32 1, %s5
  %s8 = scalar_select 0, %s7, %s5
  loop: start=0, step=1, limit=4
  $region2: #{generator_forward.20} parent=0 // loop_pre_header
    _
  $region3: #{generator_forward.20} parent=0 // loop_header
    %s10 = sphi 0, %s14
    %p11 = scmp.ge.s32.totalorder %s10, 4
    %s20 = sphi 0, %s22
    %s23 = sphi 0, %s20
    %s24 = sphi 0, %s23
    %s40 = sphi 0, %s24
    %s44 = sphi 0, %s44
    %s46 = sphi 0, %s44
    %s47 = sphi 0, %s46
    %s61 = sphi 0, %s47
    %s67 = sphi 0, %s69
    %s70 = sphi 0, %s67
    %s71 = sphi 0, %s70
    %s87 = sphi 0, %s71
    %s93 = sphi 0, %s95
    %s96 = sphi 0, %s93
    %s97 = sphi 0, %s96
    %s113 = sphi 0, %s97
  $region4: #{generator_forward.20} parent=0 // loop_header_branch
    %13 = sbr.rel (%p11) target = $region8
  $region5: #{generator_forward.20} parent=0 // loop_body
    %s15 = ssub.s32 %s10, 1
    %s16 = ssub.s32 %s10, 2
    %s17 = sadd.s32 %s10, 1
    %s18 = ssub.s32 %s10, %s17
    %p19 = scmp.eq.s32.totalorder %s18, 0
    %s21 = sadd.s32 %s20, 1
    %s22 = scalar_select %p19, %s20, %s21
    %p25 = pneg %p19
    %p26 = scmp.eq.s32.totalorder %s10, 1
    %p27 = por %p25, %p26
    %p28 = scmp.ne.s32.totalorder %s20, %s23
    %p29 = scmp.eq.s32.totalorder %s10, 0
    %p30 = por %p28, %p29
    %p31 = scmp.ne.s32.totalorder %s20, %s23
    %p32 = scmp.eq.s32.totalorder %s15, 1
    %p33 = por %p31, %p32
    %p34 = scmp.ne.s32.totalorder %s23, %s24
    %p35 = scmp.eq.s32.totalorder %s15, 0
    %p36 = por %p34, %p35
    %p37 = scmp.ne.s32.totalorder %s23, %s24
    %p38 = scmp.eq.s32.totalorder %s16, 1
    %p39 = por %p37, %p38
    %p41 = scmp.ne.s32.totalorder %s24, %s40
    %p42 = scmp.eq.s32.totalorder %s16, 0
    %p43 = por %p41, %p42
    %s45 = sadd.s32 %s44, 1
    %p48 = scmp.eq.s32.totalorder %s10, 1
    %p49 = scmp.ne.s32.totalorder %s44, %s46
    %p50 = scmp.eq.s32.totalorder %s10, 0
    %p51 = por %p49, %p50
    %p52 = scmp.ne.s32.totalorder %s44, %s46
    %p53 = scmp.eq.s32.totalorder %s15, 1
    %p54 = por %p52, %p53
    %p55 = scmp.ne.s32.totalorder %s46, %s47
    %p56 = scmp.eq.s32.totalorder %s15, 0
    %p57 = por %p55, %p56
    %p58 = scmp.ne.s32.totalorder %s46, %s47
    %p59 = scmp.eq.s32.totalorder %s16, 1
    %p60 = por %p58, %p59
    %p62 = scmp.ne.s32.totalorder %s47, %s61
    %p63 = scmp.eq.s32.totalorder %s16, 0
    %p64 = por %p62, %p63
    %s65 = ssub.s32 %s10, %s17
    %p66 = scmp.eq.s32.totalorder %s65, 0
    %s68 = sadd.s32 %s67, 1
    %s69 = scalar_select %p66, %s67, %s68
    %p72 = pneg %p66
    %p73 = scmp.eq.s32.totalorder %s10, 1
    %p74 = por %p72, %p73
    %p75 = scmp.ne.s32.totalorder %s67, %s70
    %p76 = scmp.eq.s32.totalorder %s10, 0
    %p77 = por %p75, %p76
    %p78 = scmp.ne.s32.totalorder %s67, %s70
    %p79 = scmp.eq.s32.totalorder %s15, 1
    %p80 = por %p78, %p79
    %p81 = scmp.ne.s32.totalorder %s70, %s71
    %p82 = scmp.eq.s32.totalorder %s15, 0
    %p83 = por %p81, %p82
    %p84 = scmp.ne.s32.totalorder %s70, %s71
    %p85 = scmp.eq.s32.totalorder %s16, 1
    %p86 = por %p84, %p85
    %p88 = scmp.ne.s32.totalorder %s71, %s87
    %p89 = scmp.eq.s32.totalorder %s16, 0
    %p90 = por %p88, %p89
    %s91 = ssub.s32 %s10, %s17
    %p92 = scmp.eq.s32.totalorder %s91, 0
    %s94 = sadd.s32 %s93, 1
    %s95 = scalar_select %p92, %s93, %s94
    %p98 = pneg %p92
    %p99 = scmp.eq.s32.totalorder %s10, 1
    %p100 = por %p98, %p99
    %p101 = scmp.ne.s32.totalorder %s93, %s96
    %p102 = scmp.eq.s32.totalorder %s10, 0
    %p103 = por %p101, %p102
    %p104 = scmp.ne.s32.totalorder %s93, %s96
    %p105 = scmp.eq.s32.totalorder %s15, 1
    %p106 = por %p104, %p105
    %p107 = scmp.ne.s32.totalorder %s96, %s97
    %p108 = scmp.eq.s32.totalorder %s15, 0
    %p109 = por %p107, %p108
    %p110 = scmp.ne.s32.totalorder %s96, %s97
    %p111 = scmp.eq.s32.totalorder %s16, 1
    %p112 = por %p110, %p111
    %p114 = scmp.ne.s32.totalorder %s97, %s113
    %p115 = scmp.eq.s32.totalorder %s16, 0
    %p116 = por %p114, %p115
    %p117 = scmp.le.s32.totalorder 1, %s10
    %p118 = scmp.lt.s32.totalorder %s10, 3
    %p119 = pnand %p117, %p118
    %p120 = pneg %p119
    // Predicated region
    $region9: #{generator_forward.20} parent=5 // pred_check
      _
    $region10: #{generator_forward.20} parent=5 // pred_check_branch
      %122 = sbr.rel (%p119) target = $region12
    $region11: #{generator_forward.20} parent=5 // pred_region
      %s123 = ssub.s32 %s10, 1
      // Predicated region
      $region13: #{generator_forward.20} parent=11 // pred_check
        %p124 = pneg %p57
      $region14: #{generator_forward.20} parent=11 // pred_check_branch
        %126 = sbr.rel (%p124) target = $region16
      $region15: #{generator_forward.20} parent=11 // pred_region
        _
      $region16: #{generator_forward.20} parent=11 // pred_fallthru
        _
    $region12: #{generator_forward.20} parent=5 // pred_fallthru
      _
    %p127 = scmp.lt.s32.totalorder %s10, 2
    // Predicated region
    $region17: #{generator_forward.20} parent=5 // pred_check
      %p128 = pneg %p127
    $region18: #{generator_forward.20} parent=5 // pred_check_branch
      %130 = sbr.rel (%p128) target = $region20
    $region19: #{generator_forward.20} parent=5 // pred_region
      // Predicated region
      $region21: #{generator_forward.20} parent=19 // pred_check
        %p131 = pneg %p30
      $region22: #{generator_forward.20} parent=19 // pred_check_branch
        %133 = sbr.rel (%p131) target = $region24
      $region23: #{generator_forward.20} parent=19 // pred_region
        %p134 = scmp.lt.s32.totalorder %s10, 1
        %s135 = scalar_select %p134, %s10, 1
        %s136 = smul.addr %s135, 3
        %s137 = smul.addr %s136, 8
        %s138 = scalar_lea.vmem %s0, %s137
      $region24: #{generator_forward.20} parent=19 // pred_fallthru
        _
    $region20: #{generator_forward.20} parent=5 // pred_fallthru
      _
    %p139 = scmp.le.s32.totalorder 1, %s10
    %p140 = scmp.lt.s32.totalorder %s10, 3
    %p141 = pnand %p139, %p140
    %p142 = pneg %p141
    // Predicated region
    $region25: #{generator_forward.20} parent=5 // pred_check
      _
    $region26: #{generator_forward.20} parent=5 // pred_check_branch
      %144 = sbr.rel (%p141) target = $region28
    $region27: #{generator_forward.20} parent=5 // pred_region
      %s145 = ssub.s32 %s10, 1
      %p146 = scmp.lt.s32.totalorder %s15, 1
      %s147 = scalar_select %p146, %s15, 1
      %s148 = smul.addr %s147, 3
      %s149 = smul.addr %s148, 8
      %s150 = scalar_lea.vmem %s0, %s149
      %p151 = pneg %p36
      %p152 = pneg %p33
      %p153 = pneg %p57
      %p154 = pneg %p54
      %p155 = pneg %p83
      %p156 = pneg %p80
      %p157 = scmp.lt.s32.totalorder %s15, 1
      %s158 = scalar_select %p157, %s15, 1
      %s159 = smul.addr %s158, 4
      %s160 = scalar_lea.vmem %s2, %s159
      %p161 = pneg %p109
      %p162 = pneg %p106
      %p163 = scmp.lt.s32.totalorder %s15, 1
      %s164 = scalar_select %p163, %s15, 1
      %s165 = smul.addr %s164, 2
      %s166 = scalar_lea.vmem %s3, %s165
      %p167 = scmp.lt.s32.totalorder %s15, 1
      %s168 = scalar_select %p167, %s15, 1
      %s169 = smul.addr %s168, 3
      %s170 = smul.addr %s169, 8
      %s171 = scalar_lea.vmem %s0, %s170
      %p172 = scmp.lt.s32.totalorder %s15, 1
      %s173 = scalar_select %p172, %s15, 1
      %s174 = smul.addr %s173, 4
      %s175 = scalar_lea.vmem %s2, %s174
      %p176 = scmp.lt.s32.totalorder %s15, 1
      %s177 = scalar_select %p176, %s15, 1
      %s178 = smul.addr %s177, 2
      %s179 = scalar_lea.vmem %s3, %s178
      %v181 = vld [vmem:[%s171] sm:$0x1f]
      %v182 = vld [vmem:[%s171 + $0x8] sm:$0x1f]
      %v183 = vld [vmem:[%s171 + $0x10] sm:$0x1f]
      %v184 = vpack.c.bf16 %v181, %v181
      %v185 = vpack.c.bf16 %v182, %v182
      %v186 = vpack.c.bf16 %v183, %v183
      %v187 = vld [vmem:[%s1] sm:$0xf]
      %v188 = vld [vmem:[%s1 + $0x4] sm:$0xf]
      %v189 = vld [vmem:[%s1 + $0x8] sm:$0xf]
      %v190 = vld [vmem:[%s1 + $0xc] sm:$0xf]
      %v191 = vld [vmem:[%s1 + $0x10] sm:$0xf]
      %v192 = vld [vmem:[%s1 + $0x14] sm:$0xf]
      %v193 = vld [vmem:[%s1 + $0x18] sm:$0xf]
      %v194 = vld [vmem:[%s1 + $0x1c] sm:$0xf]
      %v195 = vld [vmem:[%s1 + $0x20] sm:$0xf]
      %v196 = vld [vmem:[%s1 + $0x24] sm:$0xf]
      %v197 = vld [vmem:[%s1 + $0x28] sm:$0xf]
      %v198 = vld [vmem:[%s1 + $0x2c] sm:$0xf]
      %v199 = vld [vmem:[%s1 + $0x30] sm:$0xf]
      %v200 = vld [vmem:[%s1 + $0x34] sm:$0xf]
      %v201 = vld [vmem:[%s1 + $0x38] sm:$0xf]
      %v202 = vld [vmem:[%s1 + $0x3c] sm:$0xf]
      %v203 = vld [vmem:[%s1 + $0x40] sm:$0xf]
      %v204 = vld [vmem:[%s1 + $0x44] sm:$0xf]
      %v205 = vld [vmem:[%s1 + $0x48] sm:$0xf]
      %v206 = vld [vmem:[%s1 + $0x4c] sm:$0xf]
      %v207 = vld [vmem:[%s1 + $0x50] sm:$0xf]
      %v208 = vld [vmem:[%s1 + $0x54] sm:$0xf]
      %v209 = vld [vmem:[%s1 + $0x58] sm:$0xf]
      %v210 = vld [vmem:[%s1 + $0x5c] sm:$0xf]
      %v211 = vld [vmem:[%s1 + $0x60] sm:$0xf]
      %v212 = vld [vmem:[%s1 + $0x64] sm:$0xf]
      %v213 = vld [vmem:[%s1 + $0x68] sm:$0xf]
      %v214 = vld [vmem:[%s1 + $0x6c] sm:$0xf]
      %v215 = vld [vmem:[%s1 + $0x70] sm:$0xf]
      %v216 = vld [vmem:[%s1 + $0x74] sm:$0xf]
      %v217 = vld [vmem:[%s1 + $0x78] sm:$0xf]
      %v218 = vld [vmem:[%s1 + $0x7c] sm:$0xf]
      %v219 = vld [vmem:[%s1 + $0x80] sm:$0xf]
      %v220 = vld [vmem:[%s1 + $0x84] sm:$0xf]
      %v221 = vld [vmem:[%s1 + $0x88] sm:$0xf]
      %v222 = vld [vmem:[%s1 + $0x8c] sm:$0xf]
      %v223 = vld [vmem:[%s1 + $0x90] sm:$0xf]
      %v224 = vld [vmem:[%s1 + $0x94] sm:$0xf]
      %v225 = vld [vmem:[%s1 + $0x98] sm:$0xf]
      %v226 = vld [vmem:[%s1 + $0x9c] sm:$0xf]
      %s227 = scalar_lea.vmem %s1, 160
      %v228 = vld [vmem:[%s227] sm:$0xf]
      %v229 = vld [vmem:[%s227 + $0x4] sm:$0xf]
      %v230 = vld [vmem:[%s227 + $0x8] sm:$0xf]
      %v231 = vld [vmem:[%s227 + $0xc] sm:$0xf]
      %v232 = vld [vmem:[%s227 + $0x10] sm:$0xf]
      %v233 = vld [vmem:[%s227 + $0x14] sm:$0xf]
      %v234 = vld [vmem:[%s227 + $0x18] sm:$0xf]
      %v235 = vld [vmem:[%s227 + $0x1c] sm:$0xf]
      %v236 = vld [vmem:[%s227 + $0x20] sm:$0xf]
      %v237 = vld [vmem:[%s227 + $0x24] sm:$0xf]
      %v238 = vld [vmem:[%s227 + $0x28] sm:$0xf]
      %v239 = vld [vmem:[%s227 + $0x2c] sm:$0xf]
      %v240 = vld [vmem:[%s227 + $0x30] sm:$0xf]
      %v241 = vld [vmem:[%s227 + $0x34] sm:$0xf]
      %v242 = vld [vmem:[%s227 + $0x38] sm:$0xf]
      %v243 = vld [vmem:[%s227 + $0x3c] sm:$0xf]
      %v244 = vld [vmem:[%s227 + $0x40] sm:$0xf]
      %v245 = vld [vmem:[%s227 + $0x44] sm:$0xf]
      %v246 = vld [vmem:[%s227 + $0x48] sm:$0xf]
      %v247 = vld [vmem:[%s227 + $0x4c] sm:$0xf]
      %v248 = vld [vmem:[%s227 + $0x50] sm:$0xf]
      %v249 = vld [vmem:[%s227 + $0x54] sm:$0xf]
      %v250 = vld [vmem:[%s227 + $0x58] sm:$0xf]
      %v251 = vld [vmem:[%s227 + $0x5c] sm:$0xf]
      %v252 = vld [vmem:[%s227 + $0x60] sm:$0xf]
      %v253 = vld [vmem:[%s227 + $0x64] sm:$0xf]
      %v254 = vld [vmem:[%s227 + $0x68] sm:$0xf]
      %v255 = vld [vmem:[%s227 + $0x6c] sm:$0xf]
      %v256 = vld [vmem:[%s227 + $0x70] sm:$0xf]
      %v257 = vld [vmem:[%s227 + $0x74] sm:$0xf]
      %v258 = vld [vmem:[%s227 + $0x78] sm:$0xf]
      %v259 = vld [vmem:[%s227 + $0x7c] sm:$0xf]
      %v260 = vld [vmem:[%s227 + $0x80] sm:$0xf]
      %v261 = vld [vmem:[%s227 + $0x84] sm:$0xf]
      %v262 = vld [vmem:[%s227 + $0x88] sm:$0xf]
      %v263 = vld [vmem:[%s227 + $0x8c] sm:$0xf]
      %v264 = vld [vmem:[%s227 + $0x90] sm:$0xf]
      %v265 = vld [vmem:[%s227 + $0x94] sm:$0xf]
      %v266 = vld [vmem:[%s227 + $0x98] sm:$0xf]
      %v267 = vld [vmem:[%s227 + $0x9c] sm:$0xf]
      %v269 = vshrl.u32 %v184, 16
      %v271 = vshll.u32 %v184, 16
      %v273 = vrot.slane %v271, 1
      %v274 = vor.u32 %v269, %v273
      %v276 = vshrl.u32 %v185, 16
      %v278 = vshll.u32 %v185, 16
      %v280 = vrot.slane %v278, 1
      %v281 = vor.u32 %v276, %v280
      %v283 = vshrl.u32 %v186, 16
      %v285 = vshll.u32 %v186, 16
      %v287 = vrot.slane %v285, 1
      %v288 = vor.u32 %v283, %v287
      %v331 = vunpack.c.l.b16 %v228
      %v332 = vunpack.c.l.b16 %v229
      %v333 = vunpack.c.l.b16 %v230
      %v334 = vunpack.c.l.b16 %v231
      %v335 = vunpack.c.l.b16 %v232
      %v336 = vunpack.c.l.b16 %v233
      %v337 = vunpack.c.l.b16 %v234
      %v338 = vunpack.c.l.b16 %v235
      %v339 = vunpack.c.l.b16 %v236
      %v340 = vunpack.c.l.b16 %v237
      %v341 = vunpack.c.l.b16 %v238
      %v342 = vunpack.c.l.b16 %v239
      %v343 = vunpack.c.l.b16 %v240
      %v344 = vunpack.c.l.b16 %v241
      %v345 = vunpack.c.l.b16 %v242
      %v346 = vunpack.c.l.b16 %v243
      %v347 = vunpack.c.l.b16 %v244
      %v348 = vunpack.c.l.b16 %v245
      %v349 = vunpack.c.l.b16 %v246
      %v350 = vunpack.c.l.b16 %v247
      %v351 = vunpack.c.l.b16 %v248
      %v352 = vunpack.c.l.b16 %v249
      %v353 = vunpack.c.l.b16 %v250
      %v354 = vunpack.c.l.b16 %v251
      %v355 = vunpack.c.l.b16 %v252
      %v356 = vunpack.c.l.b16 %v253
      %v357 = vunpack.c.l.b16 %v254
      %v358 = vunpack.c.l.b16 %v255
      %v359 = vunpack.c.l.b16 %v256
      %v360 = vunpack.c.l.b16 %v257
      %v361 = vunpack.c.l.b16 %v258
      %v362 = vunpack.c.l.b16 %v259
      %v363 = vunpack.c.l.b16 %v260
      %v364 = vunpack.c.l.b16 %v261
      %v365 = vunpack.c.l.b16 %v262
      %v366 = vunpack.c.l.b16 %v263
      %v367 = vunpack.c.l.b16 %v264
      %v368 = vunpack.c.l.b16 %v265
      %v369 = vunpack.c.l.b16 %v266
      %v370 = vunpack.c.l.b16 %v267
      %v371 = vpack.c.b16 %v332, %v331
      %v372 = vpack.c.b16 %v334, %v333
      %v373 = vpack.c.b16 %v336, %v335
      %v374 = vpack.c.b16 %v338, %v337
      %v375 = vpack.c.b16 %v340, %v339
      %v376 = vpack.c.b16 %v342, %v341
      %v377 = vpack.c.b16 %v344, %v343
      %v378 = vpack.c.b16 %v346, %v345
      %v379 = vpack.c.b16 %v348, %v347
      %v380 = vpack.c.b16 %v350, %v349
      %v381 = vpack.c.b16 %v352, %v351
      %v382 = vpack.c.b16 %v354, %v353
      %v383 = vpack.c.b16 %v356, %v355
      %v384 = vpack.c.b16 %v358, %v357
      %v385 = vpack.c.b16 %v360, %v359
      %v386 = vpack.c.b16 %v362, %v361
      %v387 = vpack.c.b16 %v364, %v363
      %v388 = vpack.c.b16 %v366, %v365
      %v389 = vpack.c.b16 %v368, %v367
      %v390 = vpack.c.b16 %v370, %v369
      %vm411 = vcmask 523264
      %v413 = vsel %vm411, %v288, 0
      %415 = vmatprep.subr.bf16.mxu0 0
      %416 = vmatpush1.bf16.msra.mxu0 %v371
      %417 = vmatprep.subr.bf16.mxu0 0
      %418 = vmatpush1.bf16.msra.mxu0 %v372
      %419 = vmatprep.subr.bf16.mxu0 0
      %420 = vmatpush1.bf16.msra.mxu0 %v373
      %421 = vmatprep.subr.bf16.mxu0 0
      %422 = vmatpush1.bf16.msra.mxu0 %v374
      %423 = vmatprep.subr.bf16.mxu0 0
      %424 = vmatpush1.bf16.msra.mxu0 %v375
      %425 = vmatprep.subr.bf16.mxu0 0
      %426 = vmatpush1.bf16.msra.mxu0 %v376
      %427 = vmatprep.subr.bf16.mxu0 0
      %428 = vmatpush1.bf16.msra.mxu0 %v377
      %429 = vmatprep.subr.bf16.mxu0 0
      %430 = vmatpush1.bf16.msra.mxu0 %v378
      %431 = vmatprep.subr.bf16.mxu0 0
      %432 = vmatpush1.bf16.msra.mxu0 %v379
      %433 = vmatprep.subr.bf16.mxu0 0
      %434 = vmatpush1.bf16.msra.mxu0 %v380
      %435 = vmatprep.subr.bf16.mxu0 0
      %436 = vmatpush1.bf16.msra.mxu0 %v381
      %437 = vmatprep.subr.bf16.mxu0 0
      %438 = vmatpush1.bf16.msra.mxu0 %v382
      %439 = vmatprep.subr.bf16.mxu0 0
      %440 = vmatpush1.bf16.msra.mxu0 %v383
      %441 = vmatprep.subr.bf16.mxu0 0
      %442 = vmatpush1.bf16.msra.mxu0 %v384
      %443 = vmatprep.subr.bf16.mxu0 0
      %444 = vmatpush1.bf16.msra.mxu0 %v385
      %445 = vmatprep.subr.bf16.mxu0 0
      %446 = vmatpush1.bf16.msra.mxu0 %v386
      %447 = vmatprep.mubr.bf16.mxu0 %v281
      %448 = vmatmul.mubr.bf16.gmra.mrb[0].mxu0 %v274
      %v449 = vpop.f32.mrb[0].mxu0
      %v450 = vadd.f32 0.0, %v449
      %v451 = vpop.f32.mrb[0].mxu0
      %v452 = vpop.f32.mrb[0].mxu0
      %v453 = vpop.f32.mrb[0].mxu0
      %454 = vdwg.mxu0
      %455 = vmatprep.subr.bf16.mxu0 0
      %456 = vmatpush1.bf16.msra.mxu0 %v387
      %457 = vmatprep.subr.bf16.mxu0 0
      %458 = vmatpush1.bf16.msra.mxu0 %v388
      %459 = vmatprep.subr.bf16.mxu0 0
      %460 = vmatpush1.bf16.msra.mxu0 %v389
      %461 = vmatprep.subr.bf16.mxu0 0
      %462 = vmatpush1.bf16.msra.mxu0 %v390
      %463 = vmatprep.subr.bf16.mxu0 0
      %464 = vmatpush1.bf16.msra.mxu0 0
      %465 = vmatprep.subr.bf16.mxu0 0
      %466 = vmatpush1.bf16.msra.mxu0 0
      %467 = vmatprep.subr.bf16.mxu0 0
      %468 = vmatpush1.bf16.msra.mxu0 0
      %469 = vmatprep.subr.bf16.mxu0 0
      %470 = vmatpush1.bf16.msra.mxu0 0
      %471 = vmatprep.subr.bf16.mxu0 0
      %472 = vmatpush1.bf16.msra.mxu0 0
      %473 = vmatprep.subr.bf16.mxu0 0
      %474 = vmatpush1.bf16.msra.mxu0 0
      %475 = vmatprep.subr.bf16.mxu0 0
      %476 = vmatpush1.bf16.msra.mxu0 0
      %477 = vmatprep.subr.bf16.mxu0 0
      %478 = vmatpush1.bf16.msra.mxu0 0
      %479 = vmatprep.subr.bf16.mxu0 0
      %480 = vmatpush1.bf16.msra.mxu0 0
      %481 = vmatprep.subr.bf16.mxu0 0
      %482 = vmatpush1.bf16.msra.mxu0 0
      %483 = vmatprep.subr.bf16.mxu0 0
      %484 = vmatpush1.bf16.msra.mxu0 0
      %485 = vmatprep.subr.bf16.mxu0 0
      %486 = vmatpush1.bf16.msra.mxu0 0
      %487 = vmatprep.mubr.bf16.mxu0 0
      %488 = vmatmul.mubr.bf16.gmra.mrb[0].mxu0 %v413
      %v489 = vpop.f32.mrb[0].mxu0
      %v490 = vadd.f32 %v450, %v489
      %v491 = vpop.f32.mrb[0].mxu0
      %v492 = vpop.f32.mrb[0].mxu0
      %v493 = vpop.f32.mrb[0].mxu0
      %494 = vdwg.mxu0
      %v535 = vunpack.c.l.b16 %v187
      %v536 = vunpack.c.l.b16 %v188
      %v537 = vunpack.c.l.b16 %v189
      %v538 = vunpack.c.l.b16 %v190
      %v539 = vunpack.c.l.b16 %v191
      %v540 = vunpack.c.l.b16 %v192
      %v541 = vunpack.c.l.b16 %v193
      %v542 = vunpack.c.l.b16 %v194
      %v543 = vunpack.c.l.b16 %v195
      %v544 = vunpack.c.l.b16 %v196
      %v545 = vunpack.c.l.b16 %v197
      %v546 = vunpack.c.l.b16 %v198
      %v547 = vunpack.c.l.b16 %v199
      %v548 = vunpack.c.l.b16 %v200
      %v549 = vunpack.c.l.b16 %v201
      %v550 = vunpack.c.l.b16 %v202
      %v551 = vunpack.c.l.b16 %v203
      %v552 = vunpack.c.l.b16 %v204
      %v553 = vunpack.c.l.b16 %v205
      %v554 = vunpack.c.l.b16 %v206
      %v555 = vunpack.c.l.b16 %v207
      %v556 = vunpack.c.l.b16 %v208
      %v557 = vunpack.c.l.b16 %v209
      %v558 = vunpack.c.l.b16 %v210
      %v559 = vunpack.c.l.b16 %v211
      %v560 = vunpack.c.l.b16 %v212
      %v561 = vunpack.c.l.b16 %v213
      %v562 = vunpack.c.l.b16 %v214
      %v563 = vunpack.c.l.b16 %v215
      %v564 = vunpack.c.l.b16 %v216
      %v565 = vunpack.c.l.b16 %v217
      %v566 = vunpack.c.l.b16 %v218
      %v567 = vunpack.c.l.b16 %v219
      %v568 = vunpack.c.l.b16 %v220
      %v569 = vunpack.c.l.b16 %v221
      %v570 = vunpack.c.l.b16 %v222
      %v571 = vunpack.c.l.b16 %v223
      %v572 = vunpack.c.l.b16 %v224
      %v573 = vunpack.c.l.b16 %v225
      %v574 = vunpack.c.l.b16 %v226
      %v575 = vpack.c.b16 %v536, %v535
      %v576 = vpack.c.b16 %v538, %v537
      %v577 = vpack.c.b16 %v540, %v539
      %v578 = vpack.c.b16 %v542, %v541
      %v579 = vpack.c.b16 %v544, %v543
      %v580 = vpack.c.b16 %v546, %v545
      %v581 = vpack.c.b16 %v548, %v547
      %v582 = vpack.c.b16 %v550, %v549
      %v583 = vpack.c.b16 %v552, %v551
      %v584 = vpack.c.b16 %v554, %v553
      %v585 = vpack.c.b16 %v556, %v555
      %v586 = vpack.c.b16 %v558, %v557
      %v587 = vpack.c.b16 %v560, %v559
      %v588 = vpack.c.b16 %v562, %v561
      %v589 = vpack.c.b16 %v564, %v563
      %v590 = vpack.c.b16 %v566, %v565
      %v591 = vpack.c.b16 %v568, %v567
      %v592 = vpack.c.b16 %v570, %v569
      %v593 = vpack.c.b16 %v572, %v571
      %v594 = vpack.c.b16 %v574, %v573
      %v615 = vsel %vm411, %v186, 0
      %617 = vmatprep.subr.bf16.mxu0 0
      %618 = vmatpush1.bf16.msra.mxu0 %v575
      %619 = vmatprep.subr.bf16.mxu0 0
      %620 = vmatpush1.bf16.msra.mxu0 %v576
      %621 = vmatprep.subr.bf16.mxu0 0
      %622 = vmatpush1.bf16.msra.mxu0 %v577
      %623 = vmatprep.subr.bf16.mxu0 0
      %624 = vmatpush1.bf16.msra.mxu0 %v578
      %625 = vmatprep.subr.bf16.mxu0 0
      %626 = vmatpush1.bf16.msra.mxu0 %v579
      %627 = vmatprep.subr.bf16.mxu0 0
      %628 = vmatpush1.bf16.msra.mxu0 %v580
      %629 = vmatprep.subr.bf16.mxu0 0
      %630 = vmatpush1.bf16.msra.mxu0 %v581
      %631 = vmatprep.subr.bf16.mxu0 0
      %632 = vmatpush1.bf16.msra.mxu0 %v582
      %633 = vmatprep.subr.bf16.mxu0 0
      %634 = vmatpush1.bf16.msra.mxu0 %v583
      %635 = vmatprep.subr.bf16.mxu0 0
      %636 = vmatpush1.bf16.msra.mxu0 %v584
      %637 = vmatprep.subr.bf16.mxu0 0
      %638 = vmatpush1.bf16.msra.mxu0 %v585
      %639 = vmatprep.subr.bf16.mxu0 0
      %640 = vmatpush1.bf16.msra.mxu0 %v586
      %641 = vmatprep.subr.bf16.mxu0 0
      %642 = vmatpush1.bf16.msra.mxu0 %v587
      %643 = vmatprep.subr.bf16.mxu0 0
      %644 = vmatpush1.bf16.msra.mxu0 %v588
      %645 = vmatprep.subr.bf16.mxu0 0
      %646 = vmatpush1.bf16.msra.mxu0 %v589
      %647 = vmatprep.subr.bf16.mxu0 0
      %648 = vmatpush1.bf16.msra.mxu0 %v590
      %649 = vmatprep.mubr.bf16.mxu0 %v185
      %650 = vmatmul.mubr.bf16.gmra.mrb[0].mxu0 %v184
      %v651 = vpop.f32.mrb[0].mxu0
      %v652 = vadd.f32 %v490, %v651
      %v653 = vpop.f32.mrb[0].mxu0
      %v654 = vpop.f32.mrb[0].mxu0
      %v655 = vpop.f32.mrb[0].mxu0
      %656 = vdwg.mxu0
      %657 = vmatprep.subr.bf16.mxu0 0
      %658 = vmatpush1.bf16.msra.mxu0 %v591
      %659 = vmatprep.subr.bf16.mxu0 0
      %660 = vmatpush1.bf16.msra.mxu0 %v592
      %661 = vmatprep.subr.bf16.mxu0 0
      %662 = vmatpush1.bf16.msra.mxu0 %v593
      %663 = vmatprep.subr.bf16.mxu0 0
      %664 = vmatpush1.bf16.msra.mxu0 %v594
      %665 = vmatprep.subr.bf16.mxu0 0
      %666 = vmatpush1.bf16.msra.mxu0 0
      %667 = vmatprep.subr.bf16.mxu0 0
      %668 = vmatpush1.bf16.msra.mxu0 0
      %669 = vmatprep.subr.bf16.mxu0 0
      %670 = vmatpush1.bf16.msra.mxu0 0
      %671 = vmatprep.subr.bf16.mxu0 0
      %672 = vmatpush1.bf16.msra.mxu0 0
      %673 = vmatprep.subr.bf16.mxu0 0
      %674 = vmatpush1.bf16.msra.mxu0 0
      %675 = vmatprep.subr.bf16.mxu0 0
      %676 = vmatpush1.bf16.msra.mxu0 0
      %677 = vmatprep.subr.bf16.mxu0 0
      %678 = vmatpush1.bf16.msra.mxu0 0
      %679 = vmatprep.subr.bf16.mxu0 0
      %680 = vmatpush1.bf16.msra.mxu0 0
      %681 = vmatprep.subr.bf16.mxu0 0
      %682 = vmatpush1.bf16.msra.mxu0 0
      %683 = vmatprep.subr.bf16.mxu0 0
      %684 = vmatpush1.bf16.msra.mxu0 0
      %685 = vmatprep.subr.bf16.mxu0 0
      %686 = vmatpush1.bf16.msra.mxu0 0
      %687 = vmatprep.subr.bf16.mxu0 0
      %688 = vmatpush1.bf16.msra.mxu0 0
      %689 = vmatprep.mubr.bf16.mxu0 0
      %690 = vmatmul.mubr.bf16.gmra.mrb[0].mxu0 %v615
      %v691 = vpop.f32.mrb[0].mxu0
      %v692 = vadd.f32 %v652, %v691
      %v693 = vpop.f32.mrb[0].mxu0
      %v694 = vpop.f32.mrb[0].mxu0
      %v695 = vpop.f32.mrb[0].mxu0
      %696 = vdwg.mxu0
      %697 = vst [vmem:[%s175] sm:$0xf] %v692
      %vm698 = vcmask 1043456
      %v699 = vsel %vm698, %v692, 0.0
      %v700 = vrot.slane %v699, 4
      %v701 = vadd.f32 %v699, %v700
      %v702 = vrot.slane %v701, 2
      %v703 = vadd.f32 %v701, %v702
      %v704 = vrot.slane %v703, 1
      %v705 = vadd.f32 %v703, %v704
      %v706 = vmul.f32 %v692, %v692
      %v707 = vsel %vm698, %v706, 0.0
      %v708 = vrot.slane %v707, 4
      %v709 = vadd.f32 %v707, %v708
      %v710 = vrot.slane %v709, 2
      %v711 = vadd.f32 %v709, %v710
      %v712 = vrot.slane %v711, 1
      %v713 = vadd.f32 %v711, %v712
      %vm714 = vcmask 1040384
      %v715 = vsel %vm714, %v705, %v713
      %716 = vst [vmem:[%s179] sm:$0x3] %v715
      %p717 = scmp.lt.s32.totalorder %s15, 1
      %s718 = scalar_select %p717, %s15, 1
      %s719 = smul.addr %s718, 4
      %s720 = scalar_lea.vmem %s2, %s719
      %p721 = scmp.lt.s32.totalorder %s15, 1
      %s722 = scalar_select %p721, %s15, 1
      %s723 = smul.addr %s722, 2
      %s724 = scalar_lea.vmem %s3, %s723
      // Predicated region
      $region29: #{generator_forward.20} parent=27 // pred_check
        %p725 = pneg %p80
      $region30: #{generator_forward.20} parent=27 // pred_check_branch
        %727 = sbr.rel (%p725) target = $region32
      $region31: #{generator_forward.20} parent=27 // pred_region
        _
      $region32: #{generator_forward.20} parent=27 // pred_fallthru
        _
      // Predicated region
      $region33: #{generator_forward.20} parent=27 // pred_check
        %p728 = pneg %p106
      $region34: #{generator_forward.20} parent=27 // pred_check_branch
        %730 = sbr.rel (%p728) target = $region36
      $region35: #{generator_forward.20} parent=27 // pred_region
        _
      $region36: #{generator_forward.20} parent=27 // pred_fallthru
        _
    $region28: #{generator_forward.20} parent=5 // pred_fallthru
      _
    %p731 = scmp.le.s32.totalorder 2, %s10
    // Predicated region
    $region37: #{generator_forward.20} parent=5 // pred_check
      %p732 = pneg %p731
    $region38: #{generator_forward.20} parent=5 // pred_check_branch
      %734 = sbr.rel (%p732) target = $region40
    $region39: #{generator_forward.20} parent=5 // pred_region
      %s735 = ssub.s32 %s10, 2
      // Predicated region
      $region41: #{generator_forward.20} parent=39 // pred_check
        %p736 = pneg %p86
      $region42: #{generator_forward.20} parent=39 // pred_check_branch
        %738 = sbr.rel (%p736) target = $region44
      $region43: #{generator_forward.20} parent=39 // pred_region
        %p739 = scmp.lt.s32.totalorder %s16, 1
        %s740 = scalar_select %p739, %s16, 1
        %s741 = smul.addr %s740, 4
        %s742 = scalar_lea.vmem %s2, %s741
      $region44: #{generator_forward.20} parent=39 // pred_fallthru
        _
      // Predicated region
      $region45: #{generator_forward.20} parent=39 // pred_check
        %p743 = pneg %p112
      $region46: #{generator_forward.20} parent=39 // pred_check_branch
        %745 = sbr.rel (%p743) target = $region48
      $region47: #{generator_forward.20} parent=39 // pred_region
        %p746 = scmp.lt.s32.totalorder %s16, 1
        %s747 = scalar_select %p746, %s16, 1
        %s748 = smul.addr %s747, 2
        %s749 = scalar_lea.vmem %s3, %s748
      $region48: #{generator_forward.20} parent=39 // pred_fallthru
        _
    $region40: #{generator_forward.20} parent=5 // pred_fallthru
      _
  $region6: #{generator_forward.20} parent=0 // loop_footer
    %s14 = sadd.s32 1, %s10
  $region7: #{generator_forward.20} parent=0 // loop_footer_branch
    %9 = sbr.rel target = $region3
  $region8: #{generator_forward.20} parent=0 // loop_exit
    _

// kernel: tile.126
$region0: #{tile.126}
  #allocation0 [shape = 's32[1]{0}', space=sflag, size = 0x4, scoped, tag = 'scoped memory for tile.126']
  %s0 = inlined_call_operand.vmem [shape: f32[32], index: 0, kind: input, shape index: {}]
  %s1 = inlined_call_operand.vmem [shape: f32[4,32], index: 1, kind: output, shape index: {}]
  // Predicated region
  $region2: #{tile.126} parent=0 // pred_check
    _
  $region3: #{tile.126} parent=0 // pred_check_branch
    %3 = sbr.rel (0) target = $region5
  $region4: #{tile.126} parent=0 // pred_region
    _
  $region5: #{tile.126} parent=0 // pred_fallthru
    _
  %v4 = vld [vmem:[%s0] ss:$0 sm:$0xff]
  %5 = vst [vmem:[%s1] sm:$0xf] %v4

// kernel: tile.127
$region0: #{tile.127}
  %s0 = inlined_call_operand.vmem [shape: f32[4,32], index: 0, kind: input, shape index: {}]
  %s1 = inlined_call_operand.vmem [shape: f32[1,128], index: 1, kind: output, shape index: {}]
  $region1: #{tile.127} parent=0
    #allocation0 [shape = 'u8[4096]{0}', space=vmem, size = 0x1000, scoped, tag = 'scoped mem for output reshape']
    #allocation1 [shape = 'u8[4096]{0}', space=vmem, size = 0x1000, scoped, tag = 'scoped mem for input reshape']
    %s3 = sshllo.u32 0, 4
    %v4 = vld [vmem:[%s0] sm:%s3]
    %5 = vst [vmem:[#allocation1] sm:%s3] %v4
    %v6 = vld [vmem:[#allocation1] sm:$0x1]
    %vm7 = vcmask 261120
    %8 = vst.msk [vmem:[#allocation0] sm:$0x1] %vm7, %v6
    %s9 = scalar_lea.vmem [#allocation1], 3
    %v10 = vld [vmem:[%s9] sm:$0x1]
    %11 = vrot.lane.b32.xlu0 %v10, 96
    %v12 = vpop.permute.xlu0 %11
    %vm13 = vcmask 1048320
    %14 = vst.msk [vmem:[#allocation0] sm:$0x1] %vm13, %v12
    %s15 = scalar_lea.vmem [#allocation1], 2
    %v16 = vld [vmem:[%s15] sm:$0x1]
    %17 = vrot.lane.b32.xlu0 %v16, 64
    %v18 = vpop.permute.xlu0 %17
    %vm19 = vcmask 785920
    %20 = vst.msk [vmem:[#allocation0] sm:$0x1] %vm19, %v18
    %s21 = scalar_lea.vmem [#allocation1], 1
    %v22 = vld [vmem:[%s21] sm:$0x1]
    %23 = vrot.lane.b32.xlu0 %v22, 32
    %v24 = vpop.permute.xlu0 %23
    %vm25 = vcmask 523520
    %26 = vst.msk [vmem:[#allocation0] sm:$0x1] %vm25, %v24
    %s28 = sshllo.u32 0, 1
    %v30 = vld [vmem:[#allocation0] sm:%s28]
    %s31 = sshllo.u32 0, 1
    %32 = vst [vmem:[%s1] sm:%s31] %v30

// kernel: generator_forward.21
$region0: #{generator_forward.21}
  #allocation0 [shape = 'u32[]', space=smem, size = 0x4, offset = 0x4, fixed_abs, tag = 'smem constant byte address 0x4 - core index']
  #allocation1 [shape = 'u32[144,128]{1,0:T(1,128)}', space=vmem, size = 0x12000, scoped, tag = 'internal scratch']
  %s0 = inlined_call_operand.vmem [shape: f32[2,4,128], index: 0, kind: input, shape index: {}]
  %s1 = inlined_call_operand.vmem [shape: f32[1,128], index: 1, kind: input, shape index: {}]
  %s2 = inlined_call_operand.vmem [shape: f32[1,128], index: 2, kind: input, shape index: {}]
  %s3 = inlined_call_operand.vmem [shape: f32[2,4,128], index: 3, kind: output, shape index: {}]
  %s4 = sld [smem:[#allocation0]]
  $region45: #{generator_forward.21} parent=0
    _
  %s6 = ssub.s32 1, %s4
  %s7 = scalar_select 0, %s6, %s4
  loop: start=0, step=1, limit=4
  $region2: #{generator_forward.21} parent=0 // loop_pre_header
    _
  $region3: #{generator_forward.21} parent=0 // loop_header
    %s9 = sphi 0, %s13
    %p10 = scmp.ge.s32.totalorder %s9, 4
    %s19 = sphi 0, %s21
    %s22 = sphi 0, %s19
    %s23 = sphi 0, %s22
    %s39 = sphi 0, %s23
    %s43 = sphi 0, %s43
    %s45 = sphi 0, %s43
    %s46 = sphi 0, %s45
    %s60 = sphi 0, %s46
    %s64 = sphi 0, %s64
    %s66 = sphi 0, %s64
    %s67 = sphi 0, %s66
    %s81 = sphi 0, %s67
    %s87 = sphi 0, %s89
    %s90 = sphi 0, %s87
    %s91 = sphi 0, %s90
    %s107 = sphi 0, %s91
  $region4: #{generator_forward.21} parent=0 // loop_header_branch
    %12 = sbr.rel (%p10) target = $region8
  $region5: #{generator_forward.21} parent=0 // loop_body
    %s14 = ssub.s32 %s9, 1
    %s15 = ssub.s32 %s9, 2
    %s16 = sadd.s32 %s9, 1
    %s17 = ssub.s32 %s9, %s16
    %p18 = scmp.eq.s32.totalorder %s17, 0
    %s20 = sadd.s32 %s19, 1
    %s21 = scalar_select %p18, %s19, %s20
    %p24 = pneg %p18
    %p25 = scmp.eq.s32.totalorder %s9, 1
    %p26 = por %p24, %p25
    %p27 = scmp.ne.s32.totalorder %s19, %s22
    %p28 = scmp.eq.s32.totalorder %s9, 0
    %p29 = por %p27, %p28
    %p30 = scmp.ne.s32.totalorder %s19, %s22
    %p31 = scmp.eq.s32.totalorder %s14, 1
    %p32 = por %p30, %p31
    %p33 = scmp.ne.s32.totalorder %s22, %s23
    %p34 = scmp.eq.s32.totalorder %s14, 0
    %p35 = por %p33, %p34
    %p36 = scmp.ne.s32.totalorder %s22, %s23
    %p37 = scmp.eq.s32.totalorder %s15, 1
    %p38 = por %p36, %p37
    %p40 = scmp.ne.s32.totalorder %s23, %s39
    %p41 = scmp.eq.s32.totalorder %s15, 0
    %p42 = por %p40, %p41
    %s44 = sadd.s32 %s43, 1
    %p47 = scmp.eq.s32.totalorder %s9, 1
    %p48 = scmp.ne.s32.totalorder %s43, %s45
    %p49 = scmp.eq.s32.totalorder %s9, 0
    %p50 = por %p48, %p49
    %p51 = scmp.ne.s32.totalorder %s43, %s45
    %p52 = scmp.eq.s32.totalorder %s14, 1
    %p53 = por %p51, %p52
    %p54 = scmp.ne.s32.totalorder %s45, %s46
    %p55 = scmp.eq.s32.totalorder %s14, 0
    %p56 = por %p54, %p55
    %p57 = scmp.ne.s32.totalorder %s45, %s46
    %p58 = scmp.eq.s32.totalorder %s15, 1
    %p59 = por %p57, %p58
    %p61 = scmp.ne.s32.totalorder %s46, %s60
    %p62 = scmp.eq.s32.totalorder %s15, 0
    %p63 = por %p61, %p62
    %s65 = sadd.s32 %s64, 1
    %p68 = scmp.eq.s32.totalorder %s9, 1
    %p69 = scmp.ne.s32.totalorder %s64, %s66
    %p70 = scmp.eq.s32.totalorder %s9, 0
    %p71 = por %p69, %p70
    %p72 = scmp.ne.s32.totalorder %s64, %s66
    %p73 = scmp.eq.s32.totalorder %s14, 1
    %p74 = por %p72, %p73
    %p75 = scmp.ne.s32.totalorder %s66, %s67
    %p76 = scmp.eq.s32.totalorder %s14, 0
    %p77 = por %p75, %p76
    %p78 = scmp.ne.s32.totalorder %s66, %s67
    %p79 = scmp.eq.s32.totalorder %s15, 1
    %p80 = por %p78, %p79
    %p82 = scmp.ne.s32.totalorder %s67, %s81
    %p83 = scmp.eq.s32.totalorder %s15, 0
    %p84 = por %p82, %p83
    %s85 = ssub.s32 %s9, %s16
    %p86 = scmp.eq.s32.totalorder %s85, 0
    %s88 = sadd.s32 %s87, 1
    %s89 = scalar_select %p86, %s87, %s88
    %p92 = pneg %p86
    %p93 = scmp.eq.s32.totalorder %s9, 1
    %p94 = por %p92, %p93
    %p95 = scmp.ne.s32.totalorder %s87, %s90
    %p96 = scmp.eq.s32.totalorder %s9, 0
    %p97 = por %p95, %p96
    %p98 = scmp.ne.s32.totalorder %s87, %s90
    %p99 = scmp.eq.s32.totalorder %s14, 1
    %p100 = por %p98, %p99
    %p101 = scmp.ne.s32.totalorder %s90, %s91
    %p102 = scmp.eq.s32.totalorder %s14, 0
    %p103 = por %p101, %p102
    %p104 = scmp.ne.s32.totalorder %s90, %s91
    %p105 = scmp.eq.s32.totalorder %s15, 1
    %p106 = por %p104, %p105
    %p108 = scmp.ne.s32.totalorder %s91, %s107
    %p109 = scmp.eq.s32.totalorder %s15, 0
    %p110 = por %p108, %p109
    %p111 = scmp.le.s32.totalorder 1, %s9
    %p112 = scmp.lt.s32.totalorder %s9, 3
    %p113 = pnand %p111, %p112
    %p114 = pneg %p113
    // Predicated region
    $region9: #{generator_forward.21} parent=5 // pred_check
      _
    $region10: #{generator_forward.21} parent=5 // pred_check_branch
      %116 = sbr.rel (%p113) target = $region12
    $region11: #{generator_forward.21} parent=5 // pred_region
      %s117 = ssub.s32 %s9, 1
      // Predicated region
      $region13: #{generator_forward.21} parent=11 // pred_check
        %p118 = pneg %p56
      $region14: #{generator_forward.21} parent=11 // pred_check_branch
        %120 = sbr.rel (%p118) target = $region16
      $region15: #{generator_forward.21} parent=11 // pred_region
        _
      $region16: #{generator_forward.21} parent=11 // pred_fallthru
        _
      // Predicated region
      $region17: #{generator_forward.21} parent=11 // pred_check
        %p121 = pneg %p77
      $region18: #{generator_forward.21} parent=11 // pred_check_branch
        %123 = sbr.rel (%p121) target = $region20
      $region19: #{generator_forward.21} parent=11 // pred_region
        _
      $region20: #{generator_forward.21} parent=11 // pred_fallthru
        _
    $region12: #{generator_forward.21} parent=5 // pred_fallthru
      _
    %p124 = scmp.lt.s32.totalorder %s9, 2
    // Predicated region
    $region21: #{generator_forward.21} parent=5 // pred_check
      %p125 = pneg %p124
    $region22: #{generator_forward.21} parent=5 // pred_check_branch
      %127 = sbr.rel (%p125) target = $region24
    $region23: #{generator_forward.21} parent=5 // pred_region
      // Predicated region
      $region25: #{generator_forward.21} parent=23 // pred_check
        %p128 = pneg %p29
      $region26: #{generator_forward.21} parent=23 // pred_check_branch
        %130 = sbr.rel (%p128) target = $region28
      $region27: #{generator_forward.21} parent=23 // pred_region
        %p131 = scmp.lt.s32.totalorder %s9, 1
        %s132 = scalar_select %p131, %s9, 1
        %s133 = smul.addr %s132, 4
        %s134 = scalar_lea.vmem %s0, %s133
      $region28: #{generator_forward.21} parent=23 // pred_fallthru
        _
    $region24: #{generator_forward.21} parent=5 // pred_fallthru
      _
    %p135 = scmp.le.s32.totalorder 1, %s9
    %p136 = scmp.lt.s32.totalorder %s9, 3
    %p137 = pnand %p135, %p136
    %p138 = pneg %p137
    // Predicated region
    $region29: #{generator_forward.21} parent=5 // pred_check
      _
    $region30: #{generator_forward.21} parent=5 // pred_check_branch
      %140 = sbr.rel (%p137) target = $region32
    $region31: #{generator_forward.21} parent=5 // pred_region
      %s141 = ssub.s32 %s9, 1
      %p142 = scmp.lt.s32.totalorder %s14, 1
      %s143 = scalar_select %p142, %s14, 1
      %s144 = smul.addr %s143, 4
      %s145 = scalar_lea.vmem %s0, %s144
      %p146 = pneg %p35
      %p147 = pneg %p32
      %p148 = pneg %p56
      %p149 = pneg %p53
      %p150 = pneg %p77
      %p151 = pneg %p74
      %p152 = pneg %p103
      %p153 = pneg %p100
      %p154 = scmp.lt.s32.totalorder %s14, 1
      %s155 = scalar_select %p154, %s14, 1
      %s156 = smul.addr %s155, 4
      %s157 = scalar_lea.vmem %s3, %s156
      %p158 = scmp.lt.s32.totalorder %s14, 1
      %s159 = scalar_select %p158, %s14, 1
      %s160 = smul.addr %s159, 4
      %s161 = scalar_lea.vmem %s0, %s160
      %p162 = scmp.lt.s32.totalorder %s14, 1
      %s163 = scalar_select %p162, %s14, 1
      %s164 = smul.addr %s163, 4
      %s165 = scalar_lea.vmem %s3, %s164
      %v166 = vld [vmem:[%s161] sm:$0xf]
      %v167 = vld [vmem:[%s1] sm:$0x1]
      %v169 = vlaneseq
      %v170 = vshrl.u32 %v169, 7
      %v171 = vsub.s32 0, %v170
      %v172 = vrot.slane %v167, %v171
      %v174 = vmul.f32 %v166, %v172
      %v175 = vld [vmem:[%s2] sm:$0x1]
      %v177 = vlaneseq
      %v178 = vshrl.u32 %v177, 7
      %v179 = vsub.s32 0, %v178
      %v180 = vrot.slane %v175, %v179
      %v182 = vadd.f32 %v174, %v180
      %v183 = vmax.f32 %v182, 0.0
      %184 = vst [vmem:[%s165] sm:$0xf] %v183
      %p185 = scmp.lt.s32.totalorder %s14, 1
      %s186 = scalar_select %p185, %s14, 1
      %s187 = smul.addr %s186, 4
      %s188 = scalar_lea.vmem %s3, %s187
      // Predicated region
      $region33: #{generator_forward.21} parent=31 // pred_check
        %p189 = pneg %p100
      $region34: #{generator_forward.21} parent=31 // pred_check_branch
        %191 = sbr.rel (%p189) target = $region36
      $region35: #{generator_forward.21} parent=31 // pred_region
        _
      $region36: #{generator_forward.21} parent=31 // pred_fallthru
        _
    $region32: #{generator_forward.21} parent=5 // pred_fallthru
      _
    %p192 = scmp.le.s32.totalorder 2, %s9
    // Predicated region
    $region37: #{generator_forward.21} parent=5 // pred_check
      %p193 = pneg %p192
    $region38: #{generator_forward.21} parent=5 // pred_check_branch
      %195 = sbr.rel (%p193) target = $region40
    $region39: #{generator_forward.21} parent=5 // pred_region
      %s196 = ssub.s32 %s9, 2
      // Predicated region
      $region41: #{generator_forward.21} parent=39 // pred_check
        %p197 = pneg %p106
      $region42: #{generator_forward.21} parent=39 // pred_check_branch
        %199 = sbr.rel (%p197) target = $region44
      $region43: #{generator_forward.21} parent=39 // pred_region
        %p200 = scmp.lt.s32.totalorder %s15, 1
        %s201 = scalar_select %p200, %s15, 1
        %s202 = smul.addr %s201, 4
        %s203 = scalar_lea.vmem %s3, %s202
      $region44: #{generator_forward.21} parent=39 // pred_fallthru
        _
    $region40: #{generator_forward.21} parent=5 // pred_fallthru
      _
  $region6: #{generator_forward.21} parent=0 // loop_footer
    %s13 = sadd.s32 1, %s9
  $region7: #{generator_forward.21} parent=0 // loop_footer_branch
    %8 = sbr.rel target = $region3
  $region8: #{generator_forward.21} parent=0 // loop_exit
    _

// kernel: generator_forward.22
$region0: #{generator_forward.22}
  #allocation0 [shape = 'u32[]', space=smem, size = 0x4, offset = 0x4, fixed_abs, tag = 'smem constant byte address 0x4 - core index']
  #allocation1 [shape = 'u32[144,128]{1,0:T(1,128)}', space=vmem, size = 0x12000, scoped, tag = 'internal scratch']
  %s0 = inlined_call_operand.vmem [shape: f32[2,6,192], index: 0, kind: input, shape index: {}]
  %s1 = inlined_call_operand.vmem [shape: bf16[3,192,128], index: 1, kind: input, shape index: {}]
  %s2 = inlined_call_operand.vmem [shape: f32[2,4,128], index: 2, kind: output, shape index: {0}]
  %s3 = inlined_call_operand.vmem [shape: f32[2,2,128], index: 3, kind: output, shape index: {1}]
  %4 = xla_tuple %s2, %s3
  %s5 = sld [smem:[#allocation0]]
  $region49: #{generator_forward.22} parent=0
    _
  %s7 = ssub.s32 1, %s5
  %s8 = scalar_select 0, %s7, %s5
  loop: start=0, step=1, limit=4
  $region2: #{generator_forward.22} parent=0 // loop_pre_header
    _
  $region3: #{generator_forward.22} parent=0 // loop_header
    %s10 = sphi 0, %s14
    %p11 = scmp.ge.s32.totalorder %s10, 4
    %s20 = sphi 0, %s22
    %s23 = sphi 0, %s20
    %s24 = sphi 0, %s23
    %s40 = sphi 0, %s24
    %s44 = sphi 0, %s44
    %s46 = sphi 0, %s44
    %s47 = sphi 0, %s46
    %s61 = sphi 0, %s47
    %s67 = sphi 0, %s69
    %s70 = sphi 0, %s67
    %s71 = sphi 0, %s70
    %s87 = sphi 0, %s71
    %s93 = sphi 0, %s95
    %s96 = sphi 0, %s93
    %s97 = sphi 0, %s96
    %s113 = sphi 0, %s97
  $region4: #{generator_forward.22} parent=0 // loop_header_branch
    %13 = sbr.rel (%p11) target = $region8
  $region5: #{generator_forward.22} parent=0 // loop_body
    %s15 = ssub.s32 %s10, 1
    %s16 = ssub.s32 %s10, 2
    %s17 = sadd.s32 %s10, 1
    %s18 = ssub.s32 %s10, %s17
    %p19 = scmp.eq.s32.totalorder %s18, 0
    %s21 = sadd.s32 %s20, 1
    %s22 = scalar_select %p19, %s20, %s21
    %p25 = pneg %p19
    %p26 = scmp.eq.s32.totalorder %s10, 1
    %p27 = por %p25, %p26
    %p28 = scmp.ne.s32.totalorder %s20, %s23
    %p29 = scmp.eq.s32.totalorder %s10, 0
    %p30 = por %p28, %p29
    %p31 = scmp.ne.s32.totalorder %s20, %s23
    %p32 = scmp.eq.s32.totalorder %s15, 1
    %p33 = por %p31, %p32
    %p34 = scmp.ne.s32.totalorder %s23, %s24
    %p35 = scmp.eq.s32.totalorder %s15, 0
    %p36 = por %p34, %p35
    %p37 = scmp.ne.s32.totalorder %s23, %s24
    %p38 = scmp.eq.s32.totalorder %s16, 1
    %p39 = por %p37, %p38
    %p41 = scmp.ne.s32.totalorder %s24, %s40
    %p42 = scmp.eq.s32.totalorder %s16, 0
    %p43 = por %p41, %p42
    %s45 = sadd.s32 %s44, 1
    %p48 = scmp.eq.s32.totalorder %s10, 1
    %p49 = scmp.ne.s32.totalorder %s44, %s46
    %p50 = scmp.eq.s32.totalorder %s10, 0
    %p51 = por %p49, %p50
    %p52 = scmp.ne.s32.totalorder %s44, %s46
    %p53 = scmp.eq.s32.totalorder %s15, 1
    %p54 = por %p52, %p53
    %p55 = scmp.ne.s32.totalorder %s46, %s47
    %p56 = scmp.eq.s32.totalorder %s15, 0
    %p57 = por %p55, %p56
    %p58 = scmp.ne.s32.totalorder %s46, %s47
    %p59 = scmp.eq.s32.totalorder %s16, 1
    %p60 = por %p58, %p59
    %p62 = scmp.ne.s32.totalorder %s47, %s61
    %p63 = scmp.eq.s32.totalorder %s16, 0
    %p64 = por %p62, %p63
    %s65 = ssub.s32 %s10, %s17
    %p66 = scmp.eq.s32.totalorder %s65, 0
    %s68 = sadd.s32 %s67, 1
    %s69 = scalar_select %p66, %s67, %s68
    %p72 = pneg %p66
    %p73 = scmp.eq.s32.totalorder %s10, 1
    %p74 = por %p72, %p73
    %p75 = scmp.ne.s32.totalorder %s67, %s70
    %p76 = scmp.eq.s32.totalorder %s10, 0
    %p77 = por %p75, %p76
    %p78 = scmp.ne.s32.totalorder %s67, %s70
    %p79 = scmp.eq.s32.totalorder %s15, 1
    %p80 = por %p78, %p79
    %p81 = scmp.ne.s32.totalorder %s70, %s71
    %p82 = scmp.eq.s32.totalorder %s15, 0
    %p83 = por %p81, %p82
    %p84 = scmp.ne.s32.totalorder %s70, %s71
    %p85 = scmp.eq.s32.totalorder %s16, 1
    %p86 = por %p84, %p85
    %p88 = scmp.ne.s32.totalorder %s71, %s87
    %p89 = scmp.eq.s32.totalorder %s16, 0
    %p90 = por %p88, %p89
    %s91 = ssub.s32 %s10, %s17
    %p92 = scmp.eq.s32.totalorder %s91, 0
    %s94 = sadd.s32 %s93, 1
    %s95 = scalar_select %p92, %s93, %s94
    %p98 = pneg %p92
    %p99 = scmp.eq.s32.totalorder %s10, 1
    %p100 = por %p98, %p99
    %p101 = scmp.ne.s32.totalorder %s93, %s96
    %p102 = scmp.eq.s32.totalorder %s10, 0
    %p103 = por %p101, %p102
    %p104 = scmp.ne.s32.totalorder %s93, %s96
    %p105 = scmp.eq.s32.totalorder %s15, 1
    %p106 = por %p104, %p105
    %p107 = scmp.ne.s32.totalorder %s96, %s97
    %p108 = scmp.eq.s32.totalorder %s15, 0
    %p109 = por %p107, %p108
    %p110 = scmp.ne.s32.totalorder %s96, %s97
    %p111 = scmp.eq.s32.totalorder %s16, 1
    %p112 = por %p110, %p111
    %p114 = scmp.ne.s32.totalorder %s97, %s113
    %p115 = scmp.eq.s32.totalorder %s16, 0
    %p116 = por %p114, %p115
    %p117 = scmp.le.s32.totalorder 1, %s10
    %p118 = scmp.lt.s32.totalorder %s10, 3
    %p119 = pnand %p117, %p118
    %p120 = pneg %p119
    // Predicated region
    $region9: #{generator_forward.22} parent=5 // pred_check
      _
    $region10: #{generator_forward.22} parent=5 // pred_check_branch
      %122 = sbr.rel (%p119) target = $region12
    $region11: #{generator_forward.22} parent=5 // pred_region
      %s123 = ssub.s32 %s10, 1
      // Predicated region
      $region13: #{generator_forward.22} parent=11 // pred_check
        %p124 = pneg %p57
      $region14: #{generator_forward.22} parent=11 // pred_check_branch
        %126 = sbr.rel (%p124) target = $region16
      $region15: #{generator_forward.22} parent=11 // pred_region
        _
      $region16: #{generator_forward.22} parent=11 // pred_fallthru
        _
    $region12: #{generator_forward.22} parent=5 // pred_fallthru
      _
    %p127 = scmp.lt.s32.totalorder %s10, 2
    // Predicated region
    $region17: #{generator_forward.22} parent=5 // pred_check
      %p128 = pneg %p127
    $region18: #{generator_forward.22} parent=5 // pred_check_branch
      %130 = sbr.rel (%p128) target = $region20
    $region19: #{generator_forward.22} parent=5 // pred_region
      // Predicated region
      $region21: #{generator_forward.22} parent=19 // pred_check
        %p131 = pneg %p30
      $region22: #{generator_forward.22} parent=19 // pred_check_branch
        %133 = sbr.rel (%p131) target = $region24
      $region23: #{generator_forward.22} parent=19 // pred_region
        %p134 = scmp.lt.s32.totalorder %s10, 1
        %s135 = scalar_select %p134, %s10, 1
        %s136 = smul.addr %s135, 2
        %s137 = smul.addr %s136, 8
        %s138 = scalar_lea.vmem %s0, %s137
      $region24: #{generator_forward.22} parent=19 // pred_fallthru
        _
    $region20: #{generator_forward.22} parent=5 // pred_fallthru
      _
    %p139 = scmp.le.s32.totalorder 1, %s10
    %p140 = scmp.lt.s32.totalorder %s10, 3
    %p141 = pnand %p139, %p140
    %p142 = pneg %p141
    // Predicated region
    $region25: #{generator_forward.22} parent=5 // pred_check
      _
    $region26: #{generator_forward.22} parent=5 // pred_check_branch
      %144 = sbr.rel (%p141) target = $region28
    $region27: #{generator_forward.22} parent=5 // pred_region
      %s145 = ssub.s32 %s10, 1
      %p146 = scmp.lt.s32.totalorder %s15, 1
      %s147 = scalar_select %p146, %s15, 1
      %s148 = smul.addr %s147, 2
      %s149 = smul.addr %s148, 8
      %s150 = scalar_lea.vmem %s0, %s149
      %p151 = pneg %p36
      %p152 = pneg %p33
      %p153 = pneg %p57
      %p154 = pneg %p54
      %p155 = pneg %p83
      %p156 = pneg %p80
      %p157 = scmp.lt.s32.totalorder %s15, 1
      %s158 = scalar_select %p157, %s15, 1
      %s159 = smul.addr %s158, 4
      %s160 = scalar_lea.vmem %s2, %s159
      %p161 = pneg %p109
      %p162 = pneg %p106
      %p163 = scmp.lt.s32.totalorder %s15, 1
      %s164 = scalar_select %p163, %s15, 1
      %s165 = smul.addr %s164, 2
      %s166 = scalar_lea.vmem %s3, %s165
      %p167 = scmp.lt.s32.totalorder %s15, 1
      %s168 = scalar_select %p167, %s15, 1
      %s169 = smul.addr %s168, 2
      %s170 = smul.addr %s169, 8
      %s171 = scalar_lea.vmem %s0, %s170
      %p172 = scmp.lt.s32.totalorder %s15, 1
      %s173 = scalar_select %p172, %s15, 1
      %s174 = smul.addr %s173, 4
      %s175 = scalar_lea.vmem %s2, %s174
      %p176 = scmp.lt.s32.totalorder %s15, 1
      %s177 = scalar_select %p176, %s15, 1
      %s178 = smul.addr %s177, 2
      %s179 = scalar_lea.vmem %s3, %s178
      %v181 = vld [vmem:[%s171] sm:$0x3f]
      %v182 = vld [vmem:[%s171 + $0x8] sm:$0x3f]
      %v183 = vpack.c.bf16 %v181, %v181
      %v184 = vpack.c.bf16 %v182, %v182
      %v185 = vld [vmem:[%s1] sm:$0xf]
      %v186 = vld [vmem:[%s1 + $0x4] sm:$0xf]
      %v187 = vld [vmem:[%s1 + $0x8] sm:$0xf]
      %v188 = vld [vmem:[%s1 + $0xc] sm:$0xf]
      %v189 = vld [vmem:[%s1 + $0x10] sm:$0xf]
      %v190 = vld [vmem:[%s1 + $0x14] sm:$0xf]
      %v191 = vld [vmem:[%s1 + $0x18] sm:$0xf]
      %v192 = vld [vmem:[%s1 + $0x1c] sm:$0xf]
      %v193 = vld [vmem:[%s1 + $0x20] sm:$0xf]
      %v194 = vld [vmem:[%s1 + $0x24] sm:$0xf]
      %v195 = vld [vmem:[%s1 + $0x28] sm:$0xf]
      %v196 = vld [vmem:[%s1 + $0x2c] sm:$0xf]
      %v197 = vld [vmem:[%s1 + $0x30] sm:$0xf]
      %v198 = vld [vmem:[%s1 + $0x34] sm:$0xf]
      %v199 = vld [vmem:[%s1 + $0x38] sm:$0xf]
      %v200 = vld [vmem:[%s1 + $0x3c] sm:$0xf]
      %v201 = vld [vmem:[%s1 + $0x40] sm:$0xf]
      %v202 = vld [vmem:[%s1 + $0x44] sm:$0xf]
      %v203 = vld [vmem:[%s1 + $0x48] sm:$0xf]
      %v204 = vld [vmem:[%s1 + $0x4c] sm:$0xf]
      %v205 = vld [vmem:[%s1 + $0x50] sm:$0xf]
      %v206 = vld [vmem:[%s1 + $0x54] sm:$0xf]
      %v207 = vld [vmem:[%s1 + $0x58] sm:$0xf]
      %v208 = vld [vmem:[%s1 + $0x5c] sm:$0xf]
      %s209 = scalar_lea.vmem %s1, 96
      %v210 = vld [vmem:[%s209] sm:$0xf]
      %v211 = vld [vmem:[%s209 + $0x4] sm:$0xf]
      %v212 = vld [vmem:[%s209 + $0x8] sm:$0xf]
      %v213 = vld [vmem:[%s209 + $0xc] sm:$0xf]
      %v214 = vld [vmem:[%s209 + $0x10] sm:$0xf]
      %v215 = vld [vmem:[%s209 + $0x14] sm:$0xf]
      %v216 = vld [vmem:[%s209 + $0x18] sm:$0xf]
      %v217 = vld [vmem:[%s209 + $0x1c] sm:$0xf]
      %v218 = vld [vmem:[%s209 + $0x20] sm:$0xf]
      %v219 = vld [vmem:[%s209 + $0x24] sm:$0xf]
      %v220 = vld [vmem:[%s209 + $0x28] sm:$0xf]
      %v221 = vld [vmem:[%s209 + $0x2c] sm:$0xf]
      %v222 = vld [vmem:[%s209 + $0x30] sm:$0xf]
      %v223 = vld [vmem:[%s209 + $0x34] sm:$0xf]
      %v224 = vld [vmem:[%s209 + $0x38] sm:$0xf]
      %v225 = vld [vmem:[%s209 + $0x3c] sm:$0xf]
      %v226 = vld [vmem:[%s209 + $0x40] sm:$0xf]
      %v227 = vld [vmem:[%s209 + $0x44] sm:$0xf]
      %v228 = vld [vmem:[%s209 + $0x48] sm:$0xf]
      %v229 = vld [vmem:[%s209 + $0x4c] sm:$0xf]
      %v230 = vld [vmem:[%s209 + $0x50] sm:$0xf]
      %v231 = vld [vmem:[%s209 + $0x54] sm:$0xf]
      %v232 = vld [vmem:[%s209 + $0x58] sm:$0xf]
      %v233 = vld [vmem:[%s209 + $0x5c] sm:$0xf]
      %v235 = vshrl.u32 %v183, 16
      %v237 = vshll.u32 %v183, 16
      %v239 = vrot.slane %v237, 1
      %v240 = vor.u32 %v235, %v239
      %v242 = vshrl.u32 %v184, 16
      %v244 = vshll.u32 %v184, 16
      %v246 = vrot.slane %v244, 1
      %v247 = vor.u32 %v242, %v246
      %v273 = vunpack.c.l.b16 %v210
      %v274 = vunpack.c.l.b16 %v211
      %v275 = vunpack.c.l.b16 %v212
      %v276 = vunpack.c.l.b16 %v213
      %v277 = vunpack.c.l.b16 %v214
      %v278 = vunpack.c.l.b16 %v215
      %v279 = vunpack.c.l.b16 %v216
      %v280 = vunpack.c.l.b16 %v217
      %v281 = vunpack.c.l.b16 %v218
      %v282 = vunpack.c.l.b16 %v219
      %v283 = vunpack.c.l.b16 %v220
      %v284 = vunpack.c.l.b16 %v221
      %v285 = vunpack.c.l.b16 %v222
      %v286 = vunpack.c.l.b16 %v223
      %v287 = vunpack.c.l.b16 %v224
      %v288 = vunpack.c.l.b16 %v225
      %v289 = vunpack.c.l.b16 %v226
      %v290 = vunpack.c.l.b16 %v227
      %v291 = vunpack.c.l.b16 %v228
      %v292 = vunpack.c.l.b16 %v229
      %v293 = vunpack.c.l.b16 %v230
      %v294 = vunpack.c.l.b16 %v231
      %v295 = vunpack.c.l.b16 %v232
      %v296 = vunpack.c.l.b16 %v233
      %v297 = vpack.c.b16 %v274, %v273
      %v298 = vpack.c.b16 %v276, %v275
      %v299 = vpack.c.b16 %v278, %v277
      %v300 = vpack.c.b16 %v280, %v279
      %v301 = vpack.c.b16 %v282, %v281
      %v302 = vpack.c.b16 %v284, %v283
      %v303 = vpack.c.b16 %v286, %v285
      %v304 = vpack.c.b16 %v288, %v287
      %v305 = vpack.c.b16 %v290, %v289
      %v306 = vpack.c.b16 %v292, %v291
      %v307 = vpack.c.b16 %v294, %v293
      %v308 = vpack.c.b16 %v296, %v295
      %vm321 = vcmask 523264
      %v323 = vsel %vm321, %v247, 0
      %325 = vmatprep.subr.bf16.mxu0 0
      %326 = vmatpush1.bf16.msra.mxu0 %v297
      %327 = vmatprep.subr.bf16.mxu0 0
      %328 = vmatpush1.bf16.msra.mxu0 %v298
      %329 = vmatprep.subr.bf16.mxu0 0
      %330 = vmatpush1.bf16.msra.mxu0 %v299
      %331 = vmatprep.subr.bf16.mxu0 0
      %332 = vmatpush1.bf16.msra.mxu0 %v300
      %333 = vmatprep.subr.bf16.mxu0 0
      %334 = vmatpush1.bf16.msra.mxu0 %v301
      %335 = vmatprep.subr.bf16.mxu0 0
      %336 = vmatpush1.bf16.msra.mxu0 %v302
      %337 = vmatprep.subr.bf16.mxu0 0
      %338 = vmatpush1.bf16.msra.mxu0 %v303
      %339 = vmatprep.subr.bf16.mxu0 0
      %340 = vmatpush1.bf16.msra.mxu0 %v304
      %341 = vmatprep.subr.bf16.mxu0 0
      %342 = vmatpush1.bf16.msra.mxu0 %v305
      %343 = vmatprep.subr.bf16.mxu0 0
      %344 = vmatpush1.bf16.msra.mxu0 %v306
      %345 = vmatprep.subr.bf16.mxu0 0
      %346 = vmatpush1.bf16.msra.mxu0 %v307
      %347 = vmatprep.subr.bf16.mxu0 0
      %348 = vmatpush1.bf16.msra.mxu0 %v308
      %349 = vmatprep.subr.bf16.mxu0 0
      %350 = vmatpush1.bf16.msra.mxu0 0
      %351 = vmatprep.subr.bf16.mxu0 0
      %352 = vmatpush1.bf16.msra.mxu0 0
      %353 = vmatprep.subr.bf16.mxu0 0
      %354 = vmatpush1.bf16.msra.mxu0 0
      %355 = vmatprep.subr.bf16.mxu0 0
      %356 = vmatpush1.bf16.msra.mxu0 0
      %357 = vmatprep.mubr.bf16.mxu0 %v323
      %358 = vmatmul.mubr.bf16.gmra.mrb[0].mxu0 %v240
      %v359 = vpop.f32.mrb[0].mxu0
      %v360 = vadd.f32 0.0, %v359
      %v361 = vpop.f32.mrb[0].mxu0
      %v362 = vpop.f32.mrb[0].mxu0
      %v363 = vpop.f32.mrb[0].mxu0
      %364 = vdwg.mxu0
      %v389 = vunpack.c.l.b16 %v185
      %v390 = vunpack.c.l.b16 %v186
      %v391 = vunpack.c.l.b16 %v187
      %v392 = vunpack.c.l.b16 %v188
      %v393 = vunpack.c.l.b16 %v189
      %v394 = vunpack.c.l.b16 %v190
      %v395 = vunpack.c.l.b16 %v191
      %v396 = vunpack.c.l.b16 %v192
      %v397 = vunpack.c.l.b16 %v193
      %v398 = vunpack.c.l.b16 %v194
      %v399 = vunpack.c.l.b16 %v195
      %v400 = vunpack.c.l.b16 %v196
      %v401 = vunpack.c.l.b16 %v197
      %v402 = vunpack.c.l.b16 %v198
      %v403 = vunpack.c.l.b16 %v199
      %v404 = vunpack.c.l.b16 %v200
      %v405 = vunpack.c.l.b16 %v201
      %v406 = vunpack.c.l.b16 %v202
      %v407 = vunpack.c.l.b16 %v203
      %v408 = vunpack.c.l.b16 %v204
      %v409 = vunpack.c.l.b16 %v205
      %v410 = vunpack.c.l.b16 %v206
      %v411 = vunpack.c.l.b16 %v207
      %v412 = vunpack.c.l.b16 %v208
      %v413 = vpack.c.b16 %v390, %v389
      %v414 = vpack.c.b16 %v392, %v391
      %v415 = vpack.c.b16 %v394, %v393
      %v416 = vpack.c.b16 %v396, %v395
      %v417 = vpack.c.b16 %v398, %v397
      %v418 = vpack.c.b16 %v400, %v399
      %v419 = vpack.c.b16 %v402, %v401
      %v420 = vpack.c.b16 %v404, %v403
      %v421 = vpack.c.b16 %v406, %v405
      %v422 = vpack.c.b16 %v408, %v407
      %v423 = vpack.c.b16 %v410, %v409
      %v424 = vpack.c.b16 %v412, %v411
      %v437 = vsel %vm321, %v184, 0
      %439 = vmatprep.subr.bf16.mxu0 0
      %440 = vmatpush1.bf16.msra.mxu0 %v413
      %441 = vmatprep.subr.bf16.mxu0 0
      %442 = vmatpush1.bf16.msra.mxu0 %v414
      %443 = vmatprep.subr.bf16.mxu0 0
      %444 = vmatpush1.bf16.msra.mxu0 %v415
      %445 = vmatprep.subr.bf16.mxu0 0
      %446 = vmatpush1.bf16.msra.mxu0 %v416
      %447 = vmatprep.subr.bf16.mxu0 0
      %448 = vmatpush1.bf16.msra.mxu0 %v417
      %449 = vmatprep.subr.bf16.mxu0 0
      %450 = vmatpush1.bf16.msra.mxu0 %v418
      %451 = vmatprep.subr.bf16.mxu0 0
      %452 = vmatpush1.bf16.msra.mxu0 %v419
      %453 = vmatprep.subr.bf16.mxu0 0
      %454 = vmatpush1.bf16.msra.mxu0 %v420
      %455 = vmatprep.subr.bf16.mxu0 0
      %456 = vmatpush1.bf16.msra.mxu0 %v421
      %457 = vmatprep.subr.bf16.mxu0 0
      %458 = vmatpush1.bf16.msra.mxu0 %v422
      %459 = vmatprep.subr.bf16.mxu0 0
      %460 = vmatpush1.bf16.msra.mxu0 %v423
      %461 = vmatprep.subr.bf16.mxu0 0
      %462 = vmatpush1.bf16.msra.mxu0 %v424
      %463 = vmatprep.subr.bf16.mxu0 0
      %464 = vmatpush1.bf16.msra.mxu0 0
      %465 = vmatprep.subr.bf16.mxu0 0
      %466 = vmatpush1.bf16.msra.mxu0 0
      %467 = vmatprep.subr.bf16.mxu0 0
      %468 = vmatpush1.bf16.msra.mxu0 0
      %469 = vmatprep.subr.bf16.mxu0 0
      %470 = vmatpush1.bf16.msra.mxu0 0
      %471 = vmatprep.mubr.bf16.mxu0 %v437
      %472 = vmatmul.mubr.bf16.gmra.mrb[0].mxu0 %v183
      %v473 = vpop.f32.mrb[0].mxu0
      %v474 = vadd.f32 %v360, %v473
      %v475 = vpop.f32.mrb[0].mxu0
      %v476 = vpop.f32.mrb[0].mxu0
      %v477 = vpop.f32.mrb[0].mxu0
      %478 = vdwg.mxu0
      %s479 = scalar_lea.vmem %s1, 192
      %v480 = vld [vmem:[%s479] sm:$0xf]
      %v481 = vld [vmem:[%s479 + $0x4] sm:$0xf]
      %v482 = vld [vmem:[%s479 + $0x8] sm:$0xf]
      %v483 = vld [vmem:[%s479 + $0xc] sm:$0xf]
      %v484 = vld [vmem:[%s479 + $0x10] sm:$0xf]
      %v485 = vld [vmem:[%s479 + $0x14] sm:$0xf]
      %v486 = vld [vmem:[%s479 + $0x18] sm:$0xf]
      %v487 = vld [vmem:[%s479 + $0x1c] sm:$0xf]
      %v488 = vld [vmem:[%s479 + $0x20] sm:$0xf]
      %v489 = vld [vmem:[%s479 + $0x24] sm:$0xf]
      %v490 = vld [vmem:[%s479 + $0x28] sm:$0xf]
      %v491 = vld [vmem:[%s479 + $0x2c] sm:$0xf]
      %v492 = vld [vmem:[%s479 + $0x30] sm:$0xf]
      %v493 = vld [vmem:[%s479 + $0x34] sm:$0xf]
      %v494 = vld [vmem:[%s479 + $0x38] sm:$0xf]
      %v495 = vld [vmem:[%s479 + $0x3c] sm:$0xf]
      %v496 = vld [vmem:[%s479 + $0x40] sm:$0xf]
      %v497 = vld [vmem:[%s479 + $0x44] sm:$0xf]
      %v498 = vld [vmem:[%s479 + $0x48] sm:$0xf]
      %v499 = vld [vmem:[%s479 + $0x4c] sm:$0xf]
      %v500 = vld [vmem:[%s479 + $0x50] sm:$0xf]
      %v501 = vld [vmem:[%s479 + $0x54] sm:$0xf]
      %v502 = vld [vmem:[%s479 + $0x58] sm:$0xf]
      %v503 = vld [vmem:[%s479 + $0x5c] sm:$0xf]
      %v506 = vrot.slane %v183, 1
      %v507 = vrot.slane %v184, 1
      %v533 = vunpack.c.l.b16 %v480
      %v534 = vunpack.c.l.b16 %v481
      %v535 = vunpack.c.l.b16 %v482
      %v536 = vunpack.c.l.b16 %v483
      %v537 = vunpack.c.l.b16 %v484
      %v538 = vunpack.c.l.b16 %v485
      %v539 = vunpack.c.l.b16 %v486
      %v540 = vunpack.c.l.b16 %v487
      %v541 = vunpack.c.l.b16 %v488
      %v542 = vunpack.c.l.b16 %v489
      %v543 = vunpack.c.l.b16 %v490
      %v544 = vunpack.c.l.b16 %v491
      %v545 = vunpack.c.l.b16 %v492
      %v546 = vunpack.c.l.b16 %v493
      %v547 = vunpack.c.l.b16 %v494
      %v548 = vunpack.c.l.b16 %v495
      %v549 = vunpack.c.l.b16 %v496
      %v550 = vunpack.c.l.b16 %v497
      %v551 = vunpack.c.l.b16 %v498
      %v552 = vunpack.c.l.b16 %v499
      %v553 = vunpack.c.l.b16 %v500
      %v554 = vunpack.c.l.b16 %v501
      %v555 = vunpack.c.l.b16 %v502
      %v556 = vunpack.c.l.b16 %v503
      %v557 = vpack.c.b16 %v534, %v533
      %v558 = vpack.c.b16 %v536, %v535
      %v559 = vpack.c.b16 %v538, %v537
      %v560 = vpack.c.b16 %v540, %v539
      %v561 = vpack.c.b16 %v542, %v541
      %v562 = vpack.c.b16 %v544, %v543
      %v563 = vpack.c.b16 %v546, %v545
      %v564 = vpack.c.b16 %v548, %v547
      %v565 = vpack.c.b16 %v550, %v549
      %v566 = vpack.c.b16 %v552, %v551
      %v567 = vpack.c.b16 %v554, %v553
      %v568 = vpack.c.b16 %v556, %v555
      %v582 = vsel %vm321, %v507, 0
      %584 = vmatprep.subr.bf16.mxu0 0
      %585 = vmatpush1.bf16.msra.mxu0 %v557
      %586 = vmatprep.subr.bf16.mxu0 0
      %587 = vmatpush1.bf16.msra.mxu0 %v558
      %588 = vmatprep.subr.bf16.mxu0 0
      %589 = vmatpush1.bf16.msra.mxu0 %v559
      %590 = vmatprep.subr.bf16.mxu0 0
      %591 = vmatpush1.bf16.msra.mxu0 %v560
      %592 = vmatprep.subr.bf16.mxu0 0
      %593 = vmatpush1.bf16.msra.mxu0 %v561
      %594 = vmatprep.subr.bf16.mxu0 0
      %595 = vmatpush1.bf16.msra.mxu0 %v562
      %596 = vmatprep.subr.bf16.mxu0 0
      %597 = vmatpush1.bf16.msra.mxu0 %v563
      %598 = vmatprep.subr.bf16.mxu0 0
      %599 = vmatpush1.bf16.msra.mxu0 %v564
      %600 = vmatprep.subr.bf16.mxu0 0
      %601 = vmatpush1.bf16.msra.mxu0 %v565
      %602 = vmatprep.subr.bf16.mxu0 0
      %603 = vmatpush1.bf16.msra.mxu0 %v566
      %604 = vmatprep.subr.bf16.mxu0 0
      %605 = vmatpush1.bf16.msra.mxu0 %v567
      %606 = vmatprep.subr.bf16.mxu0 0
      %607 = vmatpush1.bf16.msra.mxu0 %v568
      %608 = vmatprep.subr.bf16.mxu0 0
      %609 = vmatpush1.bf16.msra.mxu0 0
      %610 = vmatprep.subr.bf16.mxu0 0
      %611 = vmatpush1.bf16.msra.mxu0 0
      %612 = vmatprep.subr.bf16.mxu0 0
      %613 = vmatpush1.bf16.msra.mxu0 0
      %614 = vmatprep.subr.bf16.mxu0 0
      %615 = vmatpush1.bf16.msra.mxu0 0
      %616 = vmatprep.mubr.bf16.mxu0 %v582
      %617 = vmatmul.mubr.bf16.gmra.mrb[0].mxu0 %v506
      %v618 = vpop.f32.mrb[0].mxu0
      %v619 = vadd.f32 0.0, %v618
      %v620 = vpop.f32.mrb[0].mxu0
      %v621 = vpop.f32.mrb[0].mxu0
      %v622 = vpop.f32.mrb[0].mxu0
      %623 = vdwg.mxu0
      %v624 = vadd.f32 %v474, %v619
      %625 = vst [vmem:[%s175] sm:$0xf] %v624
      %vm626 = vcmask 1043456
      %v627 = vsel %vm626, %v624, 0.0
      %v628 = vrot.slane %v627, 4
      %v629 = vadd.f32 %v627, %v628
      %v630 = vrot.slane %v629, 2
      %v631 = vadd.f32 %v629, %v630
      %v632 = vrot.slane %v631, 1
      %v633 = vadd.f32 %v631, %v632
      %v634 = vmul.f32 %v624, %v624
      %v635 = vsel %vm626, %v634, 0.0
      %v636 = vrot.slane %v635, 4
      %v637 = vadd.f32 %v635, %v636
      %v638 = vrot.slane %v637, 2
      %v639 = vadd.f32 %v637, %v638
      %v640 = vrot.slane %v639, 1
      %v641 = vadd.f32 %v639, %v640
      %vm642 = vcmask 1040384
      %v643 = vsel %vm642, %v633, %v641
      %644 = vst [vmem:[%s179] sm:$0x3] %v643
      %p645 = scmp.lt.s32.totalorder %s15, 1
      %s646 = scalar_select %p645, %s15, 1
      %s647 = smul.addr %s646, 4
      %s648 = scalar_lea.vmem %s2, %s647
      %p649 = scmp.lt.s32.totalorder %s15, 1
      %s650 = scalar_select %p649, %s15, 1
      %s651 = smul.addr %s650, 2
      %s652 = scalar_lea.vmem %s3, %s651
      // Predicated region
      $region29: #{generator_forward.22} parent=27 // pred_check
        %p653 = pneg %p80
      $region30: #{generator_forward.22} parent=27 // pred_check_branch
        %655 = sbr.rel (%p653) target = $region32
      $region31: #{generator_forward.22} parent=27 // pred_region
        _
      $region32: #{generator_forward.22} parent=27 // pred_fallthru
        _
      // Predicated region
      $region33: #{generator_forward.22} parent=27 // pred_check
        %p656 = pneg %p106
      $region34: #{generator_forward.22} parent=27 // pred_check_branch
        %658 = sbr.rel (%p656) target = $region36
      $region35: #{generator_forward.22} parent=27 // pred_region
        _
      $region36: #{generator_forward.22} parent=27 // pred_fallthru
        _
    $region28: #{generator_forward.22} parent=5 // pred_fallthru
      _
    %p659 = scmp.le.s32.totalorder 2, %s10
    // Predicated region
    $region37: #{generator_forward.22} parent=5 // pred_check
      %p660 = pneg %p659
    $region38: #{generator_forward.22} parent=5 // pred_check_branch
      %662 = sbr.rel (%p660) target = $region40
    $region39: #{generator_forward.22} parent=5 // pred_region
      %s663 = ssub.s32 %s10, 2
      // Predicated region
      $region41: #{generator_forward.22} parent=39 // pred_check
        %p664 = pneg %p86
      $region42: #{generator_forward.22} parent=39 // pred_check_branch
        %666 = sbr.rel (%p664) target = $region44
      $region43: #{generator_forward.22} parent=39 // pred_region
        %p667 = scmp.lt.s32.totalorder %s16, 1
        %s668 = scalar_select %p667, %s16, 1
        %s669 = smul.addr %s668, 4
        %s670 = scalar_lea.vmem %s2, %s669
      $region44: #{generator_forward.22} parent=39 // pred_fallthru
        _
      // Predicated region
      $region45: #{generator_forward.22} parent=39 // pred_check
        %p671 = pneg %p112
      $region46: #{generator_forward.22} parent=39 // pred_check_branch
        %673 = sbr.rel (%p671) target = $region48
      $region47: #{generator_forward.22} parent=39 // pred_region
        %p674 = scmp.lt.s32.totalorder %s16, 1
        %s675 = scalar_select %p674, %s16, 1
        %s676 = smul.addr %s675, 2
        %s677 = scalar_lea.vmem %s3, %s676
      $region48: #{generator_forward.22} parent=39 // pred_fallthru
        _
    $region40: #{generator_forward.22} parent=5 // pred_fallthru
      _
  $region6: #{generator_forward.22} parent=0 // loop_footer
    %s14 = sadd.s32 1, %s10
  $region7: #{generator_forward.22} parent=0 // loop_footer_branch
    %9 = sbr.rel target = $region3
  $region8: #{generator_forward.22} parent=0 // loop_exit
    _

// kernel: tile.136
$region0: #{tile.136}
  #allocation0 [shape = 's32[1]{0}', space=sflag, size = 0x4, scoped, tag = 'scoped memory for tile.136']
  %s0 = inlined_call_operand.vmem [shape: f32[32], index: 0, kind: input, shape index: {}]
  %s1 = inlined_call_operand.vmem [shape: f32[6,32], index: 1, kind: output, shape index: {}]
  // Predicated region
  $region2: #{tile.136} parent=0 // pred_check
    _
  $region3: #{tile.136} parent=0 // pred_check_branch
    %3 = sbr.rel (0) target = $region5
  $region4: #{tile.136} parent=0 // pred_region
    _
  $region5: #{tile.136} parent=0 // pred_fallthru
    _
  %v4 = vld [vmem:[%s0] ss:$0 sm:$0xff]
  %5 = vst [vmem:[%s1] sm:$0xff] %v4

// kernel: tile.137
$region0: #{tile.137}
  %s0 = inlined_call_operand.vmem [shape: f32[6,32], index: 0, kind: input, shape index: {}]
  %s1 = inlined_call_operand.vmem [shape: f32[1,192], index: 1, kind: output, shape index: {}]
  $region1: #{tile.137} parent=0
    #allocation0 [shape = 'u8[8192]{0}', space=vmem, size = 0x2000, scoped, tag = 'scoped mem for output reshape']
    %s2 = smov 3
    %v3 = vld [vmem:[%s0] ss:$4 sm:%s2]
    %vm4 = vcmask 261120
    %5 = vst.msk [vmem:[#allocation0] ss:$8 sm:$0x3] %vm4, %v3
    %s6 = scalar_lea.vmem %s0, 3
    %v7 = vld [vmem:[%s6] sm:$0x1]
    %8 = vrot.lane.b32.xlu0 %v7, 96
    %v9 = vpop.permute.xlu0 %8
    %vm10 = vcmask 1048320
    %11 = vst.msk [vmem:[#allocation0] sm:$0x1] %vm10, %v9
    %s12 = scalar_lea.vmem %s0, 2
    %v13 = vld [vmem:[%s12] sm:$0x1]
    %14 = vrot.lane.b32.xlu0 %v13, 64
    %v15 = vpop.permute.xlu0 %14
    %vm16 = vcmask 785920
    %17 = vst.msk [vmem:[#allocation0] sm:$0x1] %vm16, %v15
    %s18 = scalar_lea.vmem %s0, 1
    %s19 = smov 3
    %v20 = vld [vmem:[%s18] ss:$4 sm:%s19]
    %21 = vrot.lane.b32.xlu0 %v20, 32
    %v22 = vpop.permute.xlu0 %21
    %vm23 = vcmask 523520
    %24 = vst.msk [vmem:[#allocation0] ss:$8 sm:$0x3] %vm23, %v22
    %s26 = sshllo.u32 0, 1
    %v28 = vld [vmem:[#allocation0] sm:%s26]
    %s29 = sshllo.u32 0, 1
    %30 = vst [vmem:[%s1] sm:%s29] %v28
    %s31 = scalar_lea.vmem [#allocation0], 8
    %v32 = vld [vmem:[%s31] sm:%s26]
    %s33 = sshllo.u32 0, 1
    %s34 = scalar_lea.vmem %s1, 1
    %35 = vst [vmem:[%s34] sm:%s33] %v32

// kernel: generator_forward.23
$region0: #{generator_forward.23}
  #allocation0 [shape = 'u32[]', space=smem, size = 0x4, offset = 0x4, fixed_abs, tag = 'smem constant byte address 0x4 - core index']
  #allocation1 [shape = 'u32[144,128]{1,0:T(1,128)}', space=vmem, size = 0x12000, scoped, tag = 'internal scratch']
  %s0 = inlined_call_operand.vmem [shape: f32[2,6,192], index: 0, kind: input, shape index: {}]
  %s1 = inlined_call_operand.vmem [shape: f32[1,192], index: 1, kind: input, shape index: {}]
  %s2 = inlined_call_operand.vmem [shape: f32[1,192], index: 2, kind: input, shape index: {}]
  %s3 = inlined_call_operand.vmem [shape: bf16[3,192,128], index: 3, kind: input, shape index: {}]
  %s4 = inlined_call_operand.vmem [shape: f32[2,4,128], index: 4, kind: output, shape index: {0}]
  %s5 = inlined_call_operand.vmem [shape: f32[2,2,128], index: 5, kind: output, shape index: {1}]
  %6 = xla_tuple %s4, %s5
  %s7 = sld [smem:[#allocation0]]
  $region57: #{generator_forward.23} parent=0
    _
  %s9 = ssub.s32 1, %s7
  %s10 = scalar_select 0, %s9, %s7
  loop: start=0, step=1, limit=4
  $region2: #{generator_forward.23} parent=0 // loop_pre_header
    _
  $region3: #{generator_forward.23} parent=0 // loop_header
    %s12 = sphi 0, %s16
    %p13 = scmp.ge.s32.totalorder %s12, 4
    %s22 = sphi 0, %s24
    %s25 = sphi 0, %s22
    %s26 = sphi 0, %s25
    %s42 = sphi 0, %s26
    %s46 = sphi 0, %s46
    %s48 = sphi 0, %s46
    %s49 = sphi 0, %s48
    %s63 = sphi 0, %s49
    %s67 = sphi 0, %s67
    %s69 = sphi 0, %s67
    %s70 = sphi 0, %s69
    %s84 = sphi 0, %s70
    %s88 = sphi 0, %s88
    %s90 = sphi 0, %s88
    %s91 = sphi 0, %s90
    %s105 = sphi 0, %s91
    %s111 = sphi 0, %s113
    %s114 = sphi 0, %s111
    %s115 = sphi 0, %s114
    %s131 = sphi 0, %s115
    %s137 = sphi 0, %s139
    %s140 = sphi 0, %s137
    %s141 = sphi 0, %s140
    %s157 = sphi 0, %s141
  $region4: #{generator_forward.23} parent=0 // loop_header_branch
    %15 = sbr.rel (%p13) target = $region8
  $region5: #{generator_forward.23} parent=0 // loop_body
    %s17 = ssub.s32 %s12, 1
    %s18 = ssub.s32 %s12, 2
    %s19 = sadd.s32 %s12, 1
    %s20 = ssub.s32 %s12, %s19
    %p21 = scmp.eq.s32.totalorder %s20, 0
    %s23 = sadd.s32 %s22, 1
    %s24 = scalar_select %p21, %s22, %s23
    %p27 = pneg %p21
    %p28 = scmp.eq.s32.totalorder %s12, 1
    %p29 = por %p27, %p28
    %p30 = scmp.ne.s32.totalorder %s22, %s25
    %p31 = scmp.eq.s32.totalorder %s12, 0
    %p32 = por %p30, %p31
    %p33 = scmp.ne.s32.totalorder %s22, %s25
    %p34 = scmp.eq.s32.totalorder %s17, 1
    %p35 = por %p33, %p34
    %p36 = scmp.ne.s32.totalorder %s25, %s26
    %p37 = scmp.eq.s32.totalorder %s17, 0
    %p38 = por %p36, %p37
    %p39 = scmp.ne.s32.totalorder %s25, %s26
    %p40 = scmp.eq.s32.totalorder %s18, 1
    %p41 = por %p39, %p40
    %p43 = scmp.ne.s32.totalorder %s26, %s42
    %p44 = scmp.eq.s32.totalorder %s18, 0
    %p45 = por %p43, %p44
    %s47 = sadd.s32 %s46, 1
    %p50 = scmp.eq.s32.totalorder %s12, 1
    %p51 = scmp.ne.s32.totalorder %s46, %s48
    %p52 = scmp.eq.s32.totalorder %s12, 0
    %p53 = por %p51, %p52
    %p54 = scmp.ne.s32.totalorder %s46, %s48
    %p55 = scmp.eq.s32.totalorder %s17, 1
    %p56 = por %p54, %p55
    %p57 = scmp.ne.s32.totalorder %s48, %s49
    %p58 = scmp.eq.s32.totalorder %s17, 0
    %p59 = por %p57, %p58
    %p60 = scmp.ne.s32.totalorder %s48, %s49
    %p61 = scmp.eq.s32.totalorder %s18, 1
    %p62 = por %p60, %p61
    %p64 = scmp.ne.s32.totalorder %s49, %s63
    %p65 = scmp.eq.s32.totalorder %s18, 0
    %p66 = por %p64, %p65
    %s68 = sadd.s32 %s67, 1
    %p71 = scmp.eq.s32.totalorder %s12, 1
    %p72 = scmp.ne.s32.totalorder %s67, %s69
    %p73 = scmp.eq.s32.totalorder %s12, 0
    %p74 = por %p72, %p73
    %p75 = scmp.ne.s32.totalorder %s67, %s69
    %p76 = scmp.eq.s32.totalorder %s17, 1
    %p77 = por %p75, %p76
    %p78 = scmp.ne.s32.totalorder %s69, %s70
    %p79 = scmp.eq.s32.totalorder %s17, 0
    %p80 = por %p78, %p79
    %p81 = scmp.ne.s32.totalorder %s69, %s70
    %p82 = scmp.eq.s32.totalorder %s18, 1
    %p83 = por %p81, %p82
    %p85 = scmp.ne.s32.totalorder %s70, %s84
    %p86 = scmp.eq.s32.totalorder %s18, 0
    %p87 = por %p85, %p86
    %s89 = sadd.s32 %s88, 1
    %p92 = scmp.eq.s32.totalorder %s12, 1
    %p93 = scmp.ne.s32.totalorder %s88, %s90
    %p94 = scmp.eq.s32.totalorder %s12, 0
    %p95 = por %p93, %p94
    %p96 = scmp.ne.s32.totalorder %s88, %s90
    %p97 = scmp.eq.s32.totalorder %s17, 1
    %p98 = por %p96, %p97
    %p99 = scmp.ne.s32.totalorder %s90, %s91
    %p100 = scmp.eq.s32.totalorder %s17, 0
    %p101 = por %p99, %p100
    %p102 = scmp.ne.s32.totalorder %s90, %s91
    %p103 = scmp.eq.s32.totalorder %s18, 1
    %p104 = por %p102, %p103
    %p106 = scmp.ne.s32.totalorder %s91, %s105
    %p107 = scmp.eq.s32.totalorder %s18, 0
    %p108 = por %p106, %p107
    %s109 = ssub.s32 %s12, %s19
    %p110 = scmp.eq.s32.totalorder %s109, 0
    %s112 = sadd.s32 %s111, 1
    %s113 = scalar_select %p110, %s111, %s112
    %p116 = pneg %p110
    %p117 = scmp.eq.s32.totalorder %s12, 1
    %p118 = por %p116, %p117
    %p119 = scmp.ne.s32.totalorder %s111, %s114
    %p120 = scmp.eq.s32.totalorder %s12, 0
    %p121 = por %p119, %p120
    %p122 = scmp.ne.s32.totalorder %s111, %s114
    %p123 = scmp.eq.s32.totalorder %s17, 1
    %p124 = por %p122, %p123
    %p125 = scmp.ne.s32.totalorder %s114, %s115
    %p126 = scmp.eq.s32.totalorder %s17, 0
    %p127 = por %p125, %p126
    %p128 = scmp.ne.s32.totalorder %s114, %s115
    %p129 = scmp.eq.s32.totalorder %s18, 1
    %p130 = por %p128, %p129
    %p132 = scmp.ne.s32.totalorder %s115, %s131
    %p133 = scmp.eq.s32.totalorder %s18, 0
    %p134 = por %p132, %p133
    %s135 = ssub.s32 %s12, %s19
    %p136 = scmp.eq.s32.totalorder %s135, 0
    %s138 = sadd.s32 %s137, 1
    %s139 = scalar_select %p136, %s137, %s138
    %p142 = pneg %p136
    %p143 = scmp.eq.s32.totalorder %s12, 1
    %p144 = por %p142, %p143
    %p145 = scmp.ne.s32.totalorder %s137, %s140
    %p146 = scmp.eq.s32.totalorder %s12, 0
    %p147 = por %p145, %p146
    %p148 = scmp.ne.s32.totalorder %s137, %s140
    %p149 = scmp.eq.s32.totalorder %s17, 1
    %p150 = por %p148, %p149
    %p151 = scmp.ne.s32.totalorder %s140, %s141
    %p152 = scmp.eq.s32.totalorder %s17, 0
    %p153 = por %p151, %p152
    %p154 = scmp.ne.s32.totalorder %s140, %s141
    %p155 = scmp.eq.s32.totalorder %s18, 1
    %p156 = por %p154, %p155
    %p158 = scmp.ne.s32.totalorder %s141, %s157
    %p159 = scmp.eq.s32.totalorder %s18, 0
    %p160 = por %p158, %p159
    %p161 = scmp.le.s32.totalorder 1, %s12
    %p162 = scmp.lt.s32.totalorder %s12, 3
    %p163 = pnand %p161, %p162
    %p164 = pneg %p163
    // Predicated region
    $region9: #{generator_forward.23} parent=5 // pred_check
      _
    $region10: #{generator_forward.23} parent=5 // pred_check_branch
      %166 = sbr.rel (%p163) target = $region12
    $region11: #{generator_forward.23} parent=5 // pred_region
      %s167 = ssub.s32 %s12, 1
      // Predicated region
      $region13: #{generator_forward.23} parent=11 // pred_check
        %p168 = pneg %p59
      $region14: #{generator_forward.23} parent=11 // pred_check_branch
        %170 = sbr.rel (%p168) target = $region16
      $region15: #{generator_forward.23} parent=11 // pred_region
        _
      $region16: #{generator_forward.23} parent=11 // pred_fallthru
        _
      // Predicated region
      $region17: #{generator_forward.23} parent=11 // pred_check
        %p171 = pneg %p80
      $region18: #{generator_forward.23} parent=11 // pred_check_branch
        %173 = sbr.rel (%p171) target = $region20
      $region19: #{generator_forward.23} parent=11 // pred_region
        _
      $region20: #{generator_forward.23} parent=11 // pred_fallthru
        _
      // Predicated region
      $region21: #{generator_forward.23} parent=11 // pred_check
        %p174 = pneg %p101
      $region22: #{generator_forward.23} parent=11 // pred_check_branch
        %176 = sbr.rel (%p174) target = $region24
      $region23: #{generator_forward.23} parent=11 // pred_region
        _
      $region24: #{generator_forward.23} parent=11 // pred_fallthru
        _
    $region12: #{generator_forward.23} parent=5 // pred_fallthru
      _
    %p177 = scmp.lt.s32.totalorder %s12, 2
    // Predicated region
    $region25: #{generator_forward.23} parent=5 // pred_check
      %p178 = pneg %p177
    $region26: #{generator_forward.23} parent=5 // pred_check_branch
      %180 = sbr.rel (%p178) target = $region28
    $region27: #{generator_forward.23} parent=5 // pred_region
      // Predicated region
      $region29: #{generator_forward.23} parent=27 // pred_check
        %p181 = pneg %p32
      $region30: #{generator_forward.23} parent=27 // pred_check_branch
        %183 = sbr.rel (%p181) target = $region32
      $region31: #{generator_forward.23} parent=27 // pred_region
        %p184 = scmp.lt.s32.totalorder %s12, 1
        %s185 = scalar_select %p184, %s12, 1
        %s186 = smul.addr %s185, 2
        %s187 = smul.addr %s186, 8
        %s188 = scalar_lea.vmem %s0, %s187
      $region32: #{generator_forward.23} parent=27 // pred_fallthru
        _
    $region28: #{generator_forward.23} parent=5 // pred_fallthru
      _
    %p189 = scmp.le.s32.totalorder 1, %s12
    %p190 = scmp.lt.s32.totalorder %s12, 3
    %p191 = pnand %p189, %p190
    %p192 = pneg %p191
    // Predicated region
    $region33: #{generator_forward.23} parent=5 // pred_check
      _
    $region34: #{generator_forward.23} parent=5 // pred_check_branch
      %194 = sbr.rel (%p191) target = $region36
    $region35: #{generator_forward.23} parent=5 // pred_region
      %s195 = ssub.s32 %s12, 1
      %p196 = scmp.lt.s32.totalorder %s17, 1
      %s197 = scalar_select %p196, %s17, 1
      %s198 = smul.addr %s197, 2
      %s199 = smul.addr %s198, 8
      %s200 = scalar_lea.vmem %s0, %s199
      %p201 = pneg %p38
      %p202 = pneg %p35
      %p203 = pneg %p59
      %p204 = pneg %p56
      %p205 = pneg %p80
      %p206 = pneg %p77
      %p207 = pneg %p101
      %p208 = pneg %p98
      %p209 = pneg %p127
      %p210 = pneg %p124
      %p211 = scmp.lt.s32.totalorder %s17, 1
      %s212 = scalar_select %p211, %s17, 1
      %s213 = smul.addr %s212, 4
      %s214 = scalar_lea.vmem %s4, %s213
      %p215 = pneg %p153
      %p216 = pneg %p150
      %p217 = scmp.lt.s32.totalorder %s17, 1
      %s218 = scalar_select %p217, %s17, 1
      %s219 = smul.addr %s218, 2
      %s220 = scalar_lea.vmem %s5, %s219
      %p221 = scmp.lt.s32.totalorder %s17, 1
      %s222 = scalar_select %p221, %s17, 1
      %s223 = smul.addr %s222, 2
      %s224 = smul.addr %s223, 8
      %s225 = scalar_lea.vmem %s0, %s224
      %p226 = scmp.lt.s32.totalorder %s17, 1
      %s227 = scalar_select %p226, %s17, 1
      %s228 = smul.addr %s227, 4
      %s229 = scalar_lea.vmem %s4, %s228
      %p230 = scmp.lt.s32.totalorder %s17, 1
      %s231 = scalar_select %p230, %s17, 1
      %s232 = smul.addr %s231, 2
      %s233 = scalar_lea.vmem %s5, %s232
      %v235 = vld [vmem:[%s225] sm:$0x3f]
      %v236 = vld [vmem:[%s225 + $0x8] sm:$0x3f]
      %v237 = vld [vmem:[%s1] sm:$0x3]
      %v239 = vlaneseq
      %v240 = vshrl.u32 %v239, 7
      %v241 = vsub.s32 0, %v240
      %v242 = vrot.slane %v237, %v241
      %v243 = vlaneseq
      %v244 = vshrl.u32 %v243, 7
      %v245 = vsub.s32 1, %v244
      %v246 = vrot.slane %v237, %v245
      %v249 = vmul.f32 %v235, %v242
      %v250 = vmul.f32 %v236, %v246
      %v251 = vld [vmem:[%s2] sm:$0x3]
      %v253 = vlaneseq
      %v254 = vshrl.u32 %v253, 7
      %v255 = vsub.s32 0, %v254
      %v256 = vrot.slane %v251, %v255
      %v257 = vlaneseq
      %v258 = vshrl.u32 %v257, 7
      %v259 = vsub.s32 1, %v258
      %v260 = vrot.slane %v251, %v259
      %v263 = vadd.f32 %v249, %v256
      %v264 = vadd.f32 %v250, %v260
      %v265 = vmax.f32 %v263, 0.0
      %v266 = vmax.f32 %v264, 0.0
      %v267 = vpack.c.bf16 %v265, %v265
      %v268 = vpack.c.bf16 %v266, %v266
      %v269 = vld [vmem:[%s3] sm:$0xf]
      %v270 = vld [vmem:[%s3 + $0x4] sm:$0xf]
      %v271 = vld [vmem:[%s3 + $0x8] sm:$0xf]
      %v272 = vld [vmem:[%s3 + $0xc] sm:$0xf]
      %v273 = vld [vmem:[%s3 + $0x10] sm:$0xf]
      %v274 = vld [vmem:[%s3 + $0x14] sm:$0xf]
      %v275 = vld [vmem:[%s3 + $0x18] sm:$0xf]
      %v276 = vld [vmem:[%s3 + $0x1c] sm:$0xf]
      %v277 = vld [vmem:[%s3 + $0x20] sm:$0xf]
      %v278 = vld [vmem:[%s3 + $0x24] sm:$0xf]
      %v279 = vld [vmem:[%s3 + $0x28] sm:$0xf]
      %v280 = vld [vmem:[%s3 + $0x2c] sm:$0xf]
      %v281 = vld [vmem:[%s3 + $0x30] sm:$0xf]
      %v282 = vld [vmem:[%s3 + $0x34] sm:$0xf]
      %v283 = vld [vmem:[%s3 + $0x38] sm:$0xf]
      %v284 = vld [vmem:[%s3 + $0x3c] sm:$0xf]
      %v285 = vld [vmem:[%s3 + $0x40] sm:$0xf]
      %v286 = vld [vmem:[%s3 + $0x44] sm:$0xf]
      %v287 = vld [vmem:[%s3 + $0x48] sm:$0xf]
      %v288 = vld [vmem:[%s3 + $0x4c] sm:$0xf]
      %v289 = vld [vmem:[%s3 + $0x50] sm:$0xf]
      %v290 = vld [vmem:[%s3 + $0x54] sm:$0xf]
      %v291 = vld [vmem:[%s3 + $0x58] sm:$0xf]
      %v292 = vld [vmem:[%s3 + $0x5c] sm:$0xf]
      %s293 = scalar_lea.vmem %s3, 96
      %v294 = vld [vmem:[%s293] sm:$0xf]
      %v295 = vld [vmem:[%s293 + $0x4] sm:$0xf]
      %v296 = vld [vmem:[%s293 + $0x8] sm:$0xf]
      %v297 = vld [vmem:[%s293 + $0xc] sm:$0xf]
      %v298 = vld [vmem:[%s293 + $0x10] sm:$0xf]
      %v299 = vld [vmem:[%s293 + $0x14] sm:$0xf]
      %v300 = vld [vmem:[%s293 + $0x18] sm:$0xf]
      %v301 = vld [vmem:[%s293 + $0x1c] sm:$0xf]
      %v302 = vld [vmem:[%s293 + $0x20] sm:$0xf]
      %v303 = vld [vmem:[%s293 + $0x24] sm:$0xf]
      %v304 = vld [vmem:[%s293 + $0x28] sm:$0xf]
      %v305 = vld [vmem:[%s293 + $0x2c] sm:$0xf]
      %v306 = vld [vmem:[%s293 + $0x30] sm:$0xf]
      %v307 = vld [vmem:[%s293 + $0x34] sm:$0xf]
      %v308 = vld [vmem:[%s293 + $0x38] sm:$0xf]
      %v309 = vld [vmem:[%s293 + $0x3c] sm:$0xf]
      %v310 = vld [vmem:[%s293 + $0x40] sm:$0xf]
      %v311 = vld [vmem:[%s293 + $0x44] sm:$0xf]
      %v312 = vld [vmem:[%s293 + $0x48] sm:$0xf]
      %v313 = vld [vmem:[%s293 + $0x4c] sm:$0xf]
      %v314 = vld [vmem:[%s293 + $0x50] sm:$0xf]
      %v315 = vld [vmem:[%s293 + $0x54] sm:$0xf]
      %v316 = vld [vmem:[%s293 + $0x58] sm:$0xf]
      %v317 = vld [vmem:[%s293 + $0x5c] sm:$0xf]
      %v319 = vshrl.u32 %v267, 16
      %v321 = vshll.u32 %v267, 16
      %v323 = vrot.slane %v321, 1
      %v324 = vor.u32 %v319, %v323
      %v326 = vshrl.u32 %v268, 16
      %v328 = vshll.u32 %v268, 16
      %v330 = vrot.slane %v328, 1
      %v331 = vor.u32 %v326, %v330
      %v357 = vunpack.c.l.b16 %v294
      %v358 = vunpack.c.l.b16 %v295
      %v359 = vunpack.c.l.b16 %v296
      %v360 = vunpack.c.l.b16 %v297
      %v361 = vunpack.c.l.b16 %v298
      %v362 = vunpack.c.l.b16 %v299
      %v363 = vunpack.c.l.b16 %v300
      %v364 = vunpack.c.l.b16 %v301
      %v365 = vunpack.c.l.b16 %v302
      %v366 = vunpack.c.l.b16 %v303
      %v367 = vunpack.c.l.b16 %v304
      %v368 = vunpack.c.l.b16 %v305
      %v369 = vunpack.c.l.b16 %v306
      %v370 = vunpack.c.l.b16 %v307
      %v371 = vunpack.c.l.b16 %v308
      %v372 = vunpack.c.l.b16 %v309
      %v373 = vunpack.c.l.b16 %v310
      %v374 = vunpack.c.l.b16 %v311
      %v375 = vunpack.c.l.b16 %v312
      %v376 = vunpack.c.l.b16 %v313
      %v377 = vunpack.c.l.b16 %v314
      %v378 = vunpack.c.l.b16 %v315
      %v379 = vunpack.c.l.b16 %v316
      %v380 = vunpack.c.l.b16 %v317
      %v381 = vpack.c.b16 %v358, %v357
      %v382 = vpack.c.b16 %v360, %v359
      %v383 = vpack.c.b16 %v362, %v361
      %v384 = vpack.c.b16 %v364, %v363
      %v385 = vpack.c.b16 %v366, %v365
      %v386 = vpack.c.b16 %v368, %v367
      %v387 = vpack.c.b16 %v370, %v369
      %v388 = vpack.c.b16 %v372, %v371
      %v389 = vpack.c.b16 %v374, %v373
      %v390 = vpack.c.b16 %v376, %v375
      %v391 = vpack.c.b16 %v378, %v377
      %v392 = vpack.c.b16 %v380, %v379
      %vm405 = vcmask 523264
      %v407 = vsel %vm405, %v331, 0
      %409 = vmatprep.subr.bf16.mxu0 0
      %410 = vmatpush1.bf16.msra.mxu0 %v381
      %411 = vmatprep.subr.bf16.mxu0 0
      %412 = vmatpush1.bf16.msra.mxu0 %v382
      %413 = vmatprep.subr.bf16.mxu0 0
      %414 = vmatpush1.bf16.msra.mxu0 %v383
      %415 = vmatprep.subr.bf16.mxu0 0
      %416 = vmatpush1.bf16.msra.mxu0 %v384
      %417 = vmatprep.subr.bf16.mxu0 0
      %418 = vmatpush1.bf16.msra.mxu0 %v385
      %419 = vmatprep.subr.bf16.mxu0 0
      %420 = vmatpush1.bf16.msra.mxu0 %v386
      %421 = vmatprep.subr.bf16.mxu0 0
      %422 = vmatpush1.bf16.msra.mxu0 %v387
      %423 = vmatprep.subr.bf16.mxu0 0
      %424 = vmatpush1.bf16.msra.mxu0 %v388
      %425 = vmatprep.subr.bf16.mxu0 0
      %426 = vmatpush1.bf16.msra.mxu0 %v389
      %427 = vmatprep.subr.bf16.mxu0 0
      %428 = vmatpush1.bf16.msra.mxu0 %v390
      %429 = vmatprep.subr.bf16.mxu0 0
      %430 = vmatpush1.bf16.msra.mxu0 %v391
      %431 = vmatprep.subr.bf16.mxu0 0
      %432 = vmatpush1.bf16.msra.mxu0 %v392
      %433 = vmatprep.subr.bf16.mxu0 0
      %434 = vmatpush1.bf16.msra.mxu0 0
      %435 = vmatprep.subr.bf16.mxu0 0
      %436 = vmatpush1.bf16.msra.mxu0 0
      %437 = vmatprep.subr.bf16.mxu0 0
      %438 = vmatpush1.bf16.msra.mxu0 0
      %439 = vmatprep.subr.bf16.mxu0 0
      %440 = vmatpush1.bf16.msra.mxu0 0
      %441 = vmatprep.mubr.bf16.mxu0 %v407
      %442 = vmatmul.mubr.bf16.gmra.mrb[0].mxu0 %v324
      %v443 = vpop.f32.mrb[0].mxu0
      %v444 = vadd.f32 0.0, %v443
      %v445 = vpop.f32.mrb[0].mxu0
      %v446 = vpop.f32.mrb[0].mxu0
      %v447 = vpop.f32.mrb[0].mxu0
      %448 = vdwg.mxu0
      %v473 = vunpack.c.l.b16 %v269
      %v474 = vunpack.c.l.b16 %v270
      %v475 = vunpack.c.l.b16 %v271
      %v476 = vunpack.c.l.b16 %v272
      %v477 = vunpack.c.l.b16 %v273
      %v478 = vunpack.c.l.b16 %v274
      %v479 = vunpack.c.l.b16 %v275
      %v480 = vunpack.c.l.b16 %v276
      %v481 = vunpack.c.l.b16 %v277
      %v482 = vunpack.c.l.b16 %v278
      %v483 = vunpack.c.l.b16 %v279
      %v484 = vunpack.c.l.b16 %v280
      %v485 = vunpack.c.l.b16 %v281
      %v486 = vunpack.c.l.b16 %v282
      %v487 = vunpack.c.l.b16 %v283
      %v488 = vunpack.c.l.b16 %v284
      %v489 = vunpack.c.l.b16 %v285
      %v490 = vunpack.c.l.b16 %v286
      %v491 = vunpack.c.l.b16 %v287
      %v492 = vunpack.c.l.b16 %v288
      %v493 = vunpack.c.l.b16 %v289
      %v494 = vunpack.c.l.b16 %v290
      %v495 = vunpack.c.l.b16 %v291
      %v496 = vunpack.c.l.b16 %v292
      %v497 = vpack.c.b16 %v474, %v473
      %v498 = vpack.c.b16 %v476, %v475
      %v499 = vpack.c.b16 %v478, %v477
      %v500 = vpack.c.b16 %v480, %v479
      %v501 = vpack.c.b16 %v482, %v481
      %v502 = vpack.c.b16 %v484, %v483
      %v503 = vpack.c.b16 %v486, %v485
      %v504 = vpack.c.b16 %v488, %v487
      %v505 = vpack.c.b16 %v490, %v489
      %v506 = vpack.c.b16 %v492, %v491
      %v507 = vpack.c.b16 %v494, %v493
      %v508 = vpack.c.b16 %v496, %v495
      %v521 = vsel %vm405, %v268, 0
      %523 = vmatprep.subr.bf16.mxu0 0
      %524 = vmatpush1.bf16.msra.mxu0 %v497
      %525 = vmatprep.subr.bf16.mxu0 0
      %526 = vmatpush1.bf16.msra.mxu0 %v498
      %527 = vmatprep.subr.bf16.mxu0 0
      %528 = vmatpush1.bf16.msra.mxu0 %v499
      %529 = vmatprep.subr.bf16.mxu0 0
      %530 = vmatpush1.bf16.msra.mxu0 %v500
      %531 = vmatprep.subr.bf16.mxu0 0
      %532 = vmatpush1.bf16.msra.mxu0 %v501
      %533 = vmatprep.subr.bf16.mxu0 0
      %534 = vmatpush1.bf16.msra.mxu0 %v502
      %535 = vmatprep.subr.bf16.mxu0 0
      %536 = vmatpush1.bf16.msra.mxu0 %v503
      %537 = vmatprep.subr.bf16.mxu0 0
      %538 = vmatpush1.bf16.msra.mxu0 %v504
      %539 = vmatprep.subr.bf16.mxu0 0
      %540 = vmatpush1.bf16.msra.mxu0 %v505
      %541 = vmatprep.subr.bf16.mxu0 0
      %542 = vmatpush1.bf16.msra.mxu0 %v506
      %543 = vmatprep.subr.bf16.mxu0 0
      %544 = vmatpush1.bf16.msra.mxu0 %v507
      %545 = vmatprep.subr.bf16.mxu0 0
      %546 = vmatpush1.bf16.msra.mxu0 %v508
      %547 = vmatprep.subr.bf16.mxu0 0
      %548 = vmatpush1.bf16.msra.mxu0 0
      %549 = vmatprep.subr.bf16.mxu0 0
      %550 = vmatpush1.bf16.msra.mxu0 0
      %551 = vmatprep.subr.bf16.mxu0 0
      %552 = vmatpush1.bf16.msra.mxu0 0
      %553 = vmatprep.subr.bf16.mxu0 0
      %554 = vmatpush1.bf16.msra.mxu0 0
      %555 = vmatprep.mubr.bf16.mxu0 %v521
      %556 = vmatmul.mubr.bf16.gmra.mrb[0].mxu0 %v267
      %v557 = vpop.f32.mrb[0].mxu0
      %v558 = vadd.f32 %v444, %v557
      %v559 = vpop.f32.mrb[0].mxu0
      %v560 = vpop.f32.mrb[0].mxu0
      %v561 = vpop.f32.mrb[0].mxu0
      %562 = vdwg.mxu0
      %s563 = scalar_lea.vmem %s3, 192
      %v564 = vld [vmem:[%s563] sm:$0xf]
      %v565 = vld [vmem:[%s563 + $0x4] sm:$0xf]
      %v566 = vld [vmem:[%s563 + $0x8] sm:$0xf]
      %v567 = vld [vmem:[%s563 + $0xc] sm:$0xf]
      %v568 = vld [vmem:[%s563 + $0x10] sm:$0xf]
      %v569 = vld [vmem:[%s563 + $0x14] sm:$0xf]
      %v570 = vld [vmem:[%s563 + $0x18] sm:$0xf]
      %v571 = vld [vmem:[%s563 + $0x1c] sm:$0xf]
      %v572 = vld [vmem:[%s563 + $0x20] sm:$0xf]
      %v573 = vld [vmem:[%s563 + $0x24] sm:$0xf]
      %v574 = vld [vmem:[%s563 + $0x28] sm:$0xf]
      %v575 = vld [vmem:[%s563 + $0x2c] sm:$0xf]
      %v576 = vld [vmem:[%s563 + $0x30] sm:$0xf]
      %v577 = vld [vmem:[%s563 + $0x34] sm:$0xf]
      %v578 = vld [vmem:[%s563 + $0x38] sm:$0xf]
      %v579 = vld [vmem:[%s563 + $0x3c] sm:$0xf]
      %v580 = vld [vmem:[%s563 + $0x40] sm:$0xf]
      %v581 = vld [vmem:[%s563 + $0x44] sm:$0xf]
      %v582 = vld [vmem:[%s563 + $0x48] sm:$0xf]
      %v583 = vld [vmem:[%s563 + $0x4c] sm:$0xf]
      %v584 = vld [vmem:[%s563 + $0x50] sm:$0xf]
      %v585 = vld [vmem:[%s563 + $0x54] sm:$0xf]
      %v586 = vld [vmem:[%s563 + $0x58] sm:$0xf]
      %v587 = vld [vmem:[%s563 + $0x5c] sm:$0xf]
      %v590 = vrot.slane %v267, 1
      %v591 = vrot.slane %v268, 1
      %v617 = vunpack.c.l.b16 %v564
      %v618 = vunpack.c.l.b16 %v565
      %v619 = vunpack.c.l.b16 %v566
      %v620 = vunpack.c.l.b16 %v567
      %v621 = vunpack.c.l.b16 %v568
      %v622 = vunpack.c.l.b16 %v569
      %v623 = vunpack.c.l.b16 %v570
      %v624 = vunpack.c.l.b16 %v571
      %v625 = vunpack.c.l.b16 %v572
      %v626 = vunpack.c.l.b16 %v573
      %v627 = vunpack.c.l.b16 %v574
      %v628 = vunpack.c.l.b16 %v575
      %v629 = vunpack.c.l.b16 %v576
      %v630 = vunpack.c.l.b16 %v577
      %v631 = vunpack.c.l.b16 %v578
      %v632 = vunpack.c.l.b16 %v579
      %v633 = vunpack.c.l.b16 %v580
      %v634 = vunpack.c.l.b16 %v581
      %v635 = vunpack.c.l.b16 %v582
      %v636 = vunpack.c.l.b16 %v583
      %v637 = vunpack.c.l.b16 %v584
      %v638 = vunpack.c.l.b16 %v585
      %v639 = vunpack.c.l.b16 %v586
      %v640 = vunpack.c.l.b16 %v587
      %v641 = vpack.c.b16 %v618, %v617
      %v642 = vpack.c.b16 %v620, %v619
      %v643 = vpack.c.b16 %v622, %v621
      %v644 = vpack.c.b16 %v624, %v623
      %v645 = vpack.c.b16 %v626, %v625
      %v646 = vpack.c.b16 %v628, %v627
      %v647 = vpack.c.b16 %v630, %v629
      %v648 = vpack.c.b16 %v632, %v631
      %v649 = vpack.c.b16 %v634, %v633
      %v650 = vpack.c.b16 %v636, %v635
      %v651 = vpack.c.b16 %v638, %v637
      %v652 = vpack.c.b16 %v640, %v639
      %v666 = vsel %vm405, %v591, 0
      %668 = vmatprep.subr.bf16.mxu0 0
      %669 = vmatpush1.bf16.msra.mxu0 %v641
      %670 = vmatprep.subr.bf16.mxu0 0
      %671 = vmatpush1.bf16.msra.mxu0 %v642
      %672 = vmatprep.subr.bf16.mxu0 0
      %673 = vmatpush1.bf16.msra.mxu0 %v643
      %674 = vmatprep.subr.bf16.mxu0 0
      %675 = vmatpush1.bf16.msra.mxu0 %v644
      %676 = vmatprep.subr.bf16.mxu0 0
      %677 = vmatpush1.bf16.msra.mxu0 %v645
      %678 = vmatprep.subr.bf16.mxu0 0
      %679 = vmatpush1.bf16.msra.mxu0 %v646
      %680 = vmatprep.subr.bf16.mxu0 0
      %681 = vmatpush1.bf16.msra.mxu0 %v647
      %682 = vmatprep.subr.bf16.mxu0 0
      %683 = vmatpush1.bf16.msra.mxu0 %v648
      %684 = vmatprep.subr.bf16.mxu0 0
      %685 = vmatpush1.bf16.msra.mxu0 %v649
      %686 = vmatprep.subr.bf16.mxu0 0
      %687 = vmatpush1.bf16.msra.mxu0 %v650
      %688 = vmatprep.subr.bf16.mxu0 0
      %689 = vmatpush1.bf16.msra.mxu0 %v651
      %690 = vmatprep.subr.bf16.mxu0 0
      %691 = vmatpush1.bf16.msra.mxu0 %v652
      %692 = vmatprep.subr.bf16.mxu0 0
      %693 = vmatpush1.bf16.msra.mxu0 0
      %694 = vmatprep.subr.bf16.mxu0 0
      %695 = vmatpush1.bf16.msra.mxu0 0
      %696 = vmatprep.subr.bf16.mxu0 0
      %697 = vmatpush1.bf16.msra.mxu0 0
      %698 = vmatprep.subr.bf16.mxu0 0
      %699 = vmatpush1.bf16.msra.mxu0 0
      %700 = vmatprep.mubr.bf16.mxu0 %v666
      %701 = vmatmul.mubr.bf16.gmra.mrb[0].mxu0 %v590
      %v702 = vpop.f32.mrb[0].mxu0
      %v703 = vadd.f32 0.0, %v702
      %v704 = vpop.f32.mrb[0].mxu0
      %v705 = vpop.f32.mrb[0].mxu0
      %v706 = vpop.f32.mrb[0].mxu0
      %707 = vdwg.mxu0
      %v708 = vadd.f32 %v558, %v703
      %709 = vst [vmem:[%s229] sm:$0xf] %v708
      %vm710 = vcmask 1043456
      %v711 = vsel %vm710, %v708, 0.0
      %v712 = vrot.slane %v711, 4
      %v713 = vadd.f32 %v711, %v712
      %v714 = vrot.slane %v713, 2
      %v715 = vadd.f32 %v713, %v714
      %v716 = vrot.slane %v715, 1
      %v717 = vadd.f32 %v715, %v716
      %v718 = vmul.f32 %v708, %v708
      %v719 = vsel %vm710, %v718, 0.0
      %v720 = vrot.slane %v719, 4
      %v721 = vadd.f32 %v719, %v720
      %v722 = vrot.slane %v721, 2
      %v723 = vadd.f32 %v721, %v722
      %v724 = vrot.slane %v723, 1
      %v725 = vadd.f32 %v723, %v724
      %vm726 = vcmask 1040384
      %v727 = vsel %vm726, %v717, %v725
      %728 = vst [vmem:[%s233] sm:$0x3] %v727
      %p729 = scmp.lt.s32.totalorder %s17, 1
      %s730 = scalar_select %p729, %s17, 1
      %s731 = smul.addr %s730, 4
      %s732 = scalar_lea.vmem %s4, %s731
      %p733 = scmp.lt.s32.totalorder %s17, 1
      %s734 = scalar_select %p733, %s17, 1
      %s735 = smul.addr %s734, 2
      %s736 = scalar_lea.vmem %s5, %s735
      // Predicated region
      $region37: #{generator_forward.23} parent=35 // pred_check
        %p737 = pneg %p124
      $region38: #{generator_forward.23} parent=35 // pred_check_branch
        %739 = sbr.rel (%p737) target = $region40
      $region39: #{generator_forward.23} parent=35 // pred_region
        _
      $region40: #{generator_forward.23} parent=35 // pred_fallthru
        _
      // Predicated region
      $region41: #{generator_forward.23} parent=35 // pred_check
        %p740 = pneg %p150
      $region42: #{generator_forward.23} parent=35 // pred_check_branch
        %742 = sbr.rel (%p740) target = $region44
      $region43: #{generator_forward.23} parent=35 // pred_region
        _
      $region44: #{generator_forward.23} parent=35 // pred_fallthru
        _
    $region36: #{generator_forward.23} parent=5 // pred_fallthru
      _
    %p743 = scmp.le.s32.totalorder 2, %s12
    // Predicated region
    $region45: #{generator_forward.23} parent=5 // pred_check
      %p744 = pneg %p743
    $region46: #{generator_forward.23} parent=5 // pred_check_branch
      %746 = sbr.rel (%p744) target = $region48
    $region47: #{generator_forward.23} parent=5 // pred_region
      %s747 = ssub.s32 %s12, 2
      // Predicated region
      $region49: #{generator_forward.23} parent=47 // pred_check
        %p748 = pneg %p130
      $region50: #{generator_forward.23} parent=47 // pred_check_branch
        %750 = sbr.rel (%p748) target = $region52
      $region51: #{generator_forward.23} parent=47 // pred_region
        %p751 = scmp.lt.s32.totalorder %s18, 1
        %s752 = scalar_select %p751, %s18, 1
        %s753 = smul.addr %s752, 4
        %s754 = scalar_lea.vmem %s4, %s753
      $region52: #{generator_forward.23} parent=47 // pred_fallthru
        _
      // Predicated region
      $region53: #{generator_forward.23} parent=47 // pred_check
        %p755 = pneg %p156
      $region54: #{generator_forward.23} parent=47 // pred_check_branch
        %757 = sbr.rel (%p755) target = $region56
      $region55: #{generator_forward.23} parent=47 // pred_region
        %p758 = scmp.lt.s32.totalorder %s18, 1
        %s759 = scalar_select %p758, %s18, 1
        %s760 = smul.addr %s759, 2
        %s761 = scalar_lea.vmem %s5, %s760
      $region56: #{generator_forward.23} parent=47 // pred_fallthru
        _
    $region48: #{generator_forward.23} parent=5 // pred_fallthru
      _
  $region6: #{generator_forward.23} parent=0 // loop_footer
    %s16 = sadd.s32 1, %s12
  $region7: #{generator_forward.23} parent=0 // loop_footer_branch
    %11 = sbr.rel target = $region3
  $region8: #{generator_forward.23} parent=0 // loop_exit
    _

// kernel: generator_forward.24
$region0: #{generator_forward.24}
  #allocation0 [shape = 'u32[]', space=smem, size = 0x4, offset = 0x4, fixed_abs, tag = 'smem constant byte address 0x4 - core index']
  #allocation1 [shape = 'u32[144,128]{1,0:T(1,128)}', space=vmem, size = 0x12000, scoped, tag = 'internal scratch']
  %s0 = inlined_call_operand.vmem [shape: f32[2,4,128], index: 0, kind: input, shape index: {}]
  %s1 = inlined_call_operand.vmem [shape: f32[1,128], index: 1, kind: input, shape index: {}]
  %s2 = inlined_call_operand.vmem [shape: f32[1,128], index: 2, kind: input, shape index: {}]
  %s3 = inlined_call_operand.vmem [shape: f32[2,4,128], index: 3, kind: input, shape index: {}]
  %s4 = inlined_call_operand.vmem [shape: f32[2,4,128], index: 4, kind: output, shape index: {}]
  %s5 = sld [smem:[#allocation0]]
  $region49: #{generator_forward.24} parent=0
    _
  %s7 = ssub.s32 1, %s5
  %s8 = scalar_select 0, %s7, %s5
  loop: start=0, step=1, limit=4
  $region2: #{generator_forward.24} parent=0 // loop_pre_header
    _
  $region3: #{generator_forward.24} parent=0 // loop_header
    %s10 = sphi 0, %s14
    %p11 = scmp.ge.s32.totalorder %s10, 4
    %s20 = sphi 0, %s22
    %s23 = sphi 0, %s20
    %s24 = sphi 0, %s23
    %s40 = sphi 0, %s24
    %s44 = sphi 0, %s44
    %s46 = sphi 0, %s44
    %s47 = sphi 0, %s46
    %s61 = sphi 0, %s47
    %s65 = sphi 0, %s65
    %s67 = sphi 0, %s65
    %s68 = sphi 0, %s67
    %s82 = sphi 0, %s68
    %s88 = sphi 0, %s90
    %s91 = sphi 0, %s88
    %s92 = sphi 0, %s91
    %s108 = sphi 0, %s92
    %s114 = sphi 0, %s116
    %s117 = sphi 0, %s114
    %s118 = sphi 0, %s117
    %s134 = sphi 0, %s118
  $region4: #{generator_forward.24} parent=0 // loop_header_branch
    %13 = sbr.rel (%p11) target = $region8
  $region5: #{generator_forward.24} parent=0 // loop_body
    %s15 = ssub.s32 %s10, 1
    %s16 = ssub.s32 %s10, 2
    %s17 = sadd.s32 %s10, 1
    %s18 = ssub.s32 %s10, %s17
    %p19 = scmp.eq.s32.totalorder %s18, 0
    %s21 = sadd.s32 %s20, 1
    %s22 = scalar_select %p19, %s20, %s21
    %p25 = pneg %p19
    %p26 = scmp.eq.s32.totalorder %s10, 1
    %p27 = por %p25, %p26
    %p28 = scmp.ne.s32.totalorder %s20, %s23
    %p29 = scmp.eq.s32.totalorder %s10, 0
    %p30 = por %p28, %p29
    %p31 = scmp.ne.s32.totalorder %s20, %s23
    %p32 = scmp.eq.s32.totalorder %s15, 1
    %p33 = por %p31, %p32
    %p34 = scmp.ne.s32.totalorder %s23, %s24
    %p35 = scmp.eq.s32.totalorder %s15, 0
    %p36 = por %p34, %p35
    %p37 = scmp.ne.s32.totalorder %s23, %s24
    %p38 = scmp.eq.s32.totalorder %s16, 1
    %p39 = por %p37, %p38
    %p41 = scmp.ne.s32.totalorder %s24, %s40
    %p42 = scmp.eq.s32.totalorder %s16, 0
    %p43 = por %p41, %p42
    %s45 = sadd.s32 %s44, 1
    %p48 = scmp.eq.s32.totalorder %s10, 1
    %p49 = scmp.ne.s32.totalorder %s44, %s46
    %p50 = scmp.eq.s32.totalorder %s10, 0
    %p51 = por %p49, %p50
    %p52 = scmp.ne.s32.totalorder %s44, %s46
    %p53 = scmp.eq.s32.totalorder %s15, 1
    %p54 = por %p52, %p53
    %p55 = scmp.ne.s32.totalorder %s46, %s47
    %p56 = scmp.eq.s32.totalorder %s15, 0
    %p57 = por %p55, %p56
    %p58 = scmp.ne.s32.totalorder %s46, %s47
    %p59 = scmp.eq.s32.totalorder %s16, 1
    %p60 = por %p58, %p59
    %p62 = scmp.ne.s32.totalorder %s47, %s61
    %p63 = scmp.eq.s32.totalorder %s16, 0
    %p64 = por %p62, %p63
    %s66 = sadd.s32 %s65, 1
    %p69 = scmp.eq.s32.totalorder %s10, 1
    %p70 = scmp.ne.s32.totalorder %s65, %s67
    %p71 = scmp.eq.s32.totalorder %s10, 0
    %p72 = por %p70, %p71
    %p73 = scmp.ne.s32.totalorder %s65, %s67
    %p74 = scmp.eq.s32.totalorder %s15, 1
    %p75 = por %p73, %p74
    %p76 = scmp.ne.s32.totalorder %s67, %s68
    %p77 = scmp.eq.s32.totalorder %s15, 0
    %p78 = por %p76, %p77
    %p79 = scmp.ne.s32.totalorder %s67, %s68
    %p80 = scmp.eq.s32.totalorder %s16, 1
    %p81 = por %p79, %p80
    %p83 = scmp.ne.s32.totalorder %s68, %s82
    %p84 = scmp.eq.s32.totalorder %s16, 0
    %p85 = por %p83, %p84
    %s86 = ssub.s32 %s10, %s17
    %p87 = scmp.eq.s32.totalorder %s86, 0
    %s89 = sadd.s32 %s88, 1
    %s90 = scalar_select %p87, %s88, %s89
    %p93 = pneg %p87
    %p94 = scmp.eq.s32.totalorder %s10, 1
    %p95 = por %p93, %p94
    %p96 = scmp.ne.s32.totalorder %s88, %s91
    %p97 = scmp.eq.s32.totalorder %s10, 0
    %p98 = por %p96, %p97
    %p99 = scmp.ne.s32.totalorder %s88, %s91
    %p100 = scmp.eq.s32.totalorder %s15, 1
    %p101 = por %p99, %p100
    %p102 = scmp.ne.s32.totalorder %s91, %s92
    %p103 = scmp.eq.s32.totalorder %s15, 0
    %p104 = por %p102, %p103
    %p105 = scmp.ne.s32.totalorder %s91, %s92
    %p106 = scmp.eq.s32.totalorder %s16, 1
    %p107 = por %p105, %p106
    %p109 = scmp.ne.s32.totalorder %s92, %s108
    %p110 = scmp.eq.s32.totalorder %s16, 0
    %p111 = por %p109, %p110
    %s112 = ssub.s32 %s10, %s17
    %p113 = scmp.eq.s32.totalorder %s112, 0
    %s115 = sadd.s32 %s114, 1
    %s116 = scalar_select %p113, %s114, %s115
    %p119 = pneg %p113
    %p120 = scmp.eq.s32.totalorder %s10, 1
    %p121 = por %p119, %p120
    %p122 = scmp.ne.s32.totalorder %s114, %s117
    %p123 = scmp.eq.s32.totalorder %s10, 0
    %p124 = por %p122, %p123
    %p125 = scmp.ne.s32.totalorder %s114, %s117
    %p126 = scmp.eq.s32.totalorder %s15, 1
    %p127 = por %p125, %p126
    %p128 = scmp.ne.s32.totalorder %s117, %s118
    %p129 = scmp.eq.s32.totalorder %s15, 0
    %p130 = por %p128, %p129
    %p131 = scmp.ne.s32.totalorder %s117, %s118
    %p132 = scmp.eq.s32.totalorder %s16, 1
    %p133 = por %p131, %p132
    %p135 = scmp.ne.s32.totalorder %s118, %s134
    %p136 = scmp.eq.s32.totalorder %s16, 0
    %p137 = por %p135, %p136
    %p138 = scmp.le.s32.totalorder 1, %s10
    %p139 = scmp.lt.s32.totalorder %s10, 3
    %p140 = pnand %p138, %p139
    %p141 = pneg %p140
    // Predicated region
    $region9: #{generator_forward.24} parent=5 // pred_check
      _
    $region10: #{generator_forward.24} parent=5 // pred_check_branch
      %143 = sbr.rel (%p140) target = $region12
    $region11: #{generator_forward.24} parent=5 // pred_region
      %s144 = ssub.s32 %s10, 1
      // Predicated region
      $region13: #{generator_forward.24} parent=11 // pred_check
        %p145 = pneg %p57
      $region14: #{generator_forward.24} parent=11 // pred_check_branch
        %147 = sbr.rel (%p145) target = $region16
      $region15: #{generator_forward.24} parent=11 // pred_region
        _
      $region16: #{generator_forward.24} parent=11 // pred_fallthru
        _
      // Predicated region
      $region17: #{generator_forward.24} parent=11 // pred_check
        %p148 = pneg %p78
      $region18: #{generator_forward.24} parent=11 // pred_check_branch
        %150 = sbr.rel (%p148) target = $region20
      $region19: #{generator_forward.24} parent=11 // pred_region
        _
      $region20: #{generator_forward.24} parent=11 // pred_fallthru
        _
    $region12: #{generator_forward.24} parent=5 // pred_fallthru
      _
    %p151 = scmp.lt.s32.totalorder %s10, 2
    // Predicated region
    $region21: #{generator_forward.24} parent=5 // pred_check
      %p152 = pneg %p151
    $region22: #{generator_forward.24} parent=5 // pred_check_branch
      %154 = sbr.rel (%p152) target = $region24
    $region23: #{generator_forward.24} parent=5 // pred_region
      // Predicated region
      $region25: #{generator_forward.24} parent=23 // pred_check
        %p155 = pneg %p30
      $region26: #{generator_forward.24} parent=23 // pred_check_branch
        %157 = sbr.rel (%p155) target = $region28
      $region27: #{generator_forward.24} parent=23 // pred_region
        %p158 = scmp.lt.s32.totalorder %s10, 1
        %s159 = scalar_select %p158, %s10, 1
        %s160 = smul.addr %s159, 4
        %s161 = scalar_lea.vmem %s0, %s160
      $region28: #{generator_forward.24} parent=23 // pred_fallthru
        _
      // Predicated region
      $region29: #{generator_forward.24} parent=23 // pred_check
        %p162 = pneg %p98
      $region30: #{generator_forward.24} parent=23 // pred_check_branch
        %164 = sbr.rel (%p162) target = $region32
      $region31: #{generator_forward.24} parent=23 // pred_region
        %p165 = scmp.lt.s32.totalorder %s10, 1
        %s166 = scalar_select %p165, %s10, 1
        %s167 = smul.addr %s166, 4
        %s168 = scalar_lea.vmem %s3, %s167
      $region32: #{generator_forward.24} parent=23 // pred_fallthru
        _
    $region24: #{generator_forward.24} parent=5 // pred_fallthru
      _
    %p169 = scmp.le.s32.totalorder 1, %s10
    %p170 = scmp.lt.s32.totalorder %s10, 3
    %p171 = pnand %p169, %p170
    %p172 = pneg %p171
    // Predicated region
    $region33: #{generator_forward.24} parent=5 // pred_check
      _
    $region34: #{generator_forward.24} parent=5 // pred_check_branch
      %174 = sbr.rel (%p171) target = $region36
    $region35: #{generator_forward.24} parent=5 // pred_region
      %s175 = ssub.s32 %s10, 1
      %p176 = scmp.lt.s32.totalorder %s15, 1
      %s177 = scalar_select %p176, %s15, 1
      %s178 = smul.addr %s177, 4
      %s179 = scalar_lea.vmem %s0, %s178
      %p180 = pneg %p36
      %p181 = pneg %p33
      %p182 = pneg %p57
      %p183 = pneg %p54
      %p184 = pneg %p78
      %p185 = pneg %p75
      %p186 = scmp.lt.s32.totalorder %s15, 1
      %s187 = scalar_select %p186, %s15, 1
      %s188 = smul.addr %s187, 4
      %s189 = scalar_lea.vmem %s3, %s188
      %p190 = pneg %p104
      %p191 = pneg %p101
      %p192 = pneg %p130
      %p193 = pneg %p127
      %p194 = scmp.lt.s32.totalorder %s15, 1
      %s195 = scalar_select %p194, %s15, 1
      %s196 = smul.addr %s195, 4
      %s197 = scalar_lea.vmem %s4, %s196
      %p198 = scmp.lt.s32.totalorder %s15, 1
      %s199 = scalar_select %p198, %s15, 1
      %s200 = smul.addr %s199, 4
      %s201 = scalar_lea.vmem %s0, %s200
      %p202 = scmp.lt.s32.totalorder %s15, 1
      %s203 = scalar_select %p202, %s15, 1
      %s204 = smul.addr %s203, 4
      %s205 = scalar_lea.vmem %s3, %s204
      %p206 = scmp.lt.s32.totalorder %s15, 1
      %s207 = scalar_select %p206, %s15, 1
      %s208 = smul.addr %s207, 4
      %s209 = scalar_lea.vmem %s4, %s208
      %v210 = vld [vmem:[%s201] sm:$0xf]
      %v211 = vld [vmem:[%s1] sm:$0x1]
      %v213 = vlaneseq
      %v214 = vshrl.u32 %v213, 7
      %v215 = vsub.s32 0, %v214
      %v216 = vrot.slane %v211, %v215
      %v218 = vmul.f32 %v210, %v216
      %v219 = vld [vmem:[%s2] sm:$0x1]
      %v221 = vlaneseq
      %v222 = vshrl.u32 %v221, 7
      %v223 = vsub.s32 0, %v222
      %v224 = vrot.slane %v219, %v223
      %v226 = vadd.f32 %v218, %v224
      %v227 = vld [vmem:[%s205] sm:$0xf]
      %v228 = vadd.f32 %v226, %v227
      %229 = vst [vmem:[%s209] sm:$0xf] %v228
      %p230 = scmp.lt.s32.totalorder %s15, 1
      %s231 = scalar_select %p230, %s15, 1
      %s232 = smul.addr %s231, 4
      %s233 = scalar_lea.vmem %s4, %s232
      // Predicated region
      $region37: #{generator_forward.24} parent=35 // pred_check
        %p234 = pneg %p127
      $region38: #{generator_forward.24} parent=35 // pred_check_branch
        %236 = sbr.rel (%p234) target = $region40
      $region39: #{generator_forward.24} parent=35 // pred_region
        _
      $region40: #{generator_forward.24} parent=35 // pred_fallthru
        _
    $region36: #{generator_forward.24} parent=5 // pred_fallthru
      _
    %p237 = scmp.le.s32.totalorder 2, %s10
    // Predicated region
    $region41: #{generator_forward.24} parent=5 // pred_check
      %p238 = pneg %p237
    $region42: #{generator_forward.24} parent=5 // pred_check_branch
      %240 = sbr.rel (%p238) target = $region44
    $region43: #{generator_forward.24} parent=5 // pred_region
      %s241 = ssub.s32 %s10, 2
      // Predicated region
      $region45: #{generator_forward.24} parent=43 // pred_check
        %p242 = pneg %p133
      $region46: #{generator_forward.24} parent=43 // pred_check_branch
        %244 = sbr.rel (%p242) target = $region48
      $region47: #{generator_forward.24} parent=43 // pred_region
        %p245 = scmp.lt.s32.totalorder %s16, 1
        %s246 = scalar_select %p245, %s16, 1
        %s247 = smul.addr %s246, 4
        %s248 = scalar_lea.vmem %s4, %s247
      $region48: #{generator_forward.24} parent=43 // pred_fallthru
        _
    $region44: #{generator_forward.24} parent=5 // pred_fallthru
      _
  $region6: #{generator_forward.24} parent=0 // loop_footer
    %s14 = sadd.s32 1, %s10
  $region7: #{generator_forward.24} parent=0 // loop_footer_branch
    %9 = sbr.rel target = $region3
  $region8: #{generator_forward.24} parent=0 // loop_exit
    _

// kernel: generator_forward.28
$region0: #{generator_forward.28}
  #allocation0 [shape = 'u32[]', space=smem, size = 0x4, offset = 0x4, fixed_abs, tag = 'smem constant byte address 0x4 - core index']
  #allocation1 [shape = 'u32[144,128]{1,0:T(1,128)}', space=vmem, size = 0x12000, scoped, tag = 'internal scratch']
  %s0 = inlined_call_operand.vmem [shape: f32[2,5,160], index: 0, kind: input, shape index: {}]
  %s1 = inlined_call_operand.vmem [shape: bf16[2,160,256], index: 1, kind: input, shape index: {}]
  %s2 = inlined_call_operand.vmem [shape: f32[2,4,256], index: 2, kind: output, shape index: {0}]
  %s3 = inlined_call_operand.vmem [shape: f32[2,2,256], index: 3, kind: output, shape index: {1}]
  %4 = xla_tuple %s2, %s3
  %s5 = sld [smem:[#allocation0]]
  $region49: #{generator_forward.28} parent=0
    _
  %s7 = ssub.s32 1, %s5
  %s8 = scalar_select 0, %s7, %s5
  loop: start=0, step=1, limit=4
  $region2: #{generator_forward.28} parent=0 // loop_pre_header
    _
  $region3: #{generator_forward.28} parent=0 // loop_header
    %s10 = sphi 0, %s14
    %p11 = scmp.ge.s32.totalorder %s10, 4
    %s20 = sphi 0, %s22
    %s23 = sphi 0, %s20
    %s24 = sphi 0, %s23
    %s40 = sphi 0, %s24
    %s44 = sphi 0, %s44
    %s46 = sphi 0, %s44
    %s47 = sphi 0, %s46
    %s61 = sphi 0, %s47
    %s67 = sphi 0, %s69
    %s70 = sphi 0, %s67
    %s71 = sphi 0, %s70
    %s87 = sphi 0, %s71
    %s93 = sphi 0, %s95
    %s96 = sphi 0, %s93
    %s97 = sphi 0, %s96
    %s113 = sphi 0, %s97
  $region4: #{generator_forward.28} parent=0 // loop_header_branch
    %13 = sbr.rel (%p11) target = $region8
  $region5: #{generator_forward.28} parent=0 // loop_body
    %s15 = ssub.s32 %s10, 1
    %s16 = ssub.s32 %s10, 2
    %s17 = sadd.s32 %s10, 1
    %s18 = ssub.s32 %s10, %s17
    %p19 = scmp.eq.s32.totalorder %s18, 0
    %s21 = sadd.s32 %s20, 1
    %s22 = scalar_select %p19, %s20, %s21
    %p25 = pneg %p19
    %p26 = scmp.eq.s32.totalorder %s10, 1
    %p27 = por %p25, %p26
    %p28 = scmp.ne.s32.totalorder %s20, %s23
    %p29 = scmp.eq.s32.totalorder %s10, 0
    %p30 = por %p28, %p29
    %p31 = scmp.ne.s32.totalorder %s20, %s23
    %p32 = scmp.eq.s32.totalorder %s15, 1
    %p33 = por %p31, %p32
    %p34 = scmp.ne.s32.totalorder %s23, %s24
    %p35 = scmp.eq.s32.totalorder %s15, 0
    %p36 = por %p34, %p35
    %p37 = scmp.ne.s32.totalorder %s23, %s24
    %p38 = scmp.eq.s32.totalorder %s16, 1
    %p39 = por %p37, %p38
    %p41 = scmp.ne.s32.totalorder %s24, %s40
    %p42 = scmp.eq.s32.totalorder %s16, 0
    %p43 = por %p41, %p42
    %s45 = sadd.s32 %s44, 1
    %p48 = scmp.eq.s32.totalorder %s10, 1
    %p49 = scmp.ne.s32.totalorder %s44, %s46
    %p50 = scmp.eq.s32.totalorder %s10, 0
    %p51 = por %p49, %p50
    %p52 = scmp.ne.s32.totalorder %s44, %s46
    %p53 = scmp.eq.s32.totalorder %s15, 1
    %p54 = por %p52, %p53
    %p55 = scmp.ne.s32.totalorder %s46, %s47
    %p56 = scmp.eq.s32.totalorder %s15, 0
    %p57 = por %p55, %p56
    %p58 = scmp.ne.s32.totalorder %s46, %s47
    %p59 = scmp.eq.s32.totalorder %s16, 1
    %p60 = por %p58, %p59
    %p62 = scmp.ne.s32.totalorder %s47, %s61
    %p63 = scmp.eq.s32.totalorder %s16, 0
    %p64 = por %p62, %p63
    %s65 = ssub.s32 %s10, %s17
    %p66 = scmp.eq.s32.totalorder %s65, 0
    %s68 = sadd.s32 %s67, 1
    %s69 = scalar_select %p66, %s67, %s68
    %p72 = pneg %p66
    %p73 = scmp.eq.s32.totalorder %s10, 1
    %p74 = por %p72, %p73
    %p75 = scmp.ne.s32.totalorder %s67, %s70
    %p76 = scmp.eq.s32.totalorder %s10, 0
    %p77 = por %p75, %p76
    %p78 = scmp.ne.s32.totalorder %s67, %s70
    %p79 = scmp.eq.s32.totalorder %s15, 1
    %p80 = por %p78, %p79
    %p81 = scmp.ne.s32.totalorder %s70, %s71
    %p82 = scmp.eq.s32.totalorder %s15, 0
    %p83 = por %p81, %p82
    %p84 = scmp.ne.s32.totalorder %s70, %s71
    %p85 = scmp.eq.s32.totalorder %s16, 1
    %p86 = por %p84, %p85
    %p88 = scmp.ne.s32.totalorder %s71, %s87
    %p89 = scmp.eq.s32.totalorder %s16, 0
    %p90 = por %p88, %p89
    %s91 = ssub.s32 %s10, %s17
    %p92 = scmp.eq.s32.totalorder %s91, 0
    %s94 = sadd.s32 %s93, 1
    %s95 = scalar_select %p92, %s93, %s94
    %p98 = pneg %p92
    %p99 = scmp.eq.s32.totalorder %s10, 1
    %p100 = por %p98, %p99
    %p101 = scmp.ne.s32.totalorder %s93, %s96
    %p102 = scmp.eq.s32.totalorder %s10, 0
    %p103 = por %p101, %p102
    %p104 = scmp.ne.s32.totalorder %s93, %s96
    %p105 = scmp.eq.s32.totalorder %s15, 1
    %p106 = por %p104, %p105
    %p107 = scmp.ne.s32.totalorder %s96, %s97
    %p108 = scmp.eq.s32.totalorder %s15, 0
    %p109 = por %p107, %p108
    %p110 = scmp.ne.s32.totalorder %s96, %s97
    %p111 = scmp.eq.s32.totalorder %s16, 1
    %p112 = por %p110, %p111
    %p114 = scmp.ne.s32.totalorder %s97, %s113
    %p115 = scmp.eq.s32.totalorder %s16, 0
    %p116 = por %p114, %p115
    %p117 = scmp.le.s32.totalorder 1, %s10
    %p118 = scmp.lt.s32.totalorder %s10, 3
    %p119 = pnand %p117, %p118
    %p120 = pneg %p119
    // Predicated region
    $region9: #{generator_forward.28} parent=5 // pred_check
      _
    $region10: #{generator_forward.28} parent=5 // pred_check_branch
      %122 = sbr.rel (%p119) target = $region12
    $region11: #{generator_forward.28} parent=5 // pred_region
      %s123 = ssub.s32 %s10, 1
      // Predicated region
      $region13: #{generator_forward.28} parent=11 // pred_check
        %p124 = pneg %p57
      $region14: #{generator_forward.28} parent=11 // pred_check_branch
        %126 = sbr.rel (%p124) target = $region16
      $region15: #{generator_forward.28} parent=11 // pred_region
        _
      $region16: #{generator_forward.28} parent=11 // pred_fallthru
        _
    $region12: #{generator_forward.28} parent=5 // pred_fallthru
      _
    %p127 = scmp.lt.s32.totalorder %s10, 2
    // Predicated region
    $region17: #{generator_forward.28} parent=5 // pred_check
      %p128 = pneg %p127
    $region18: #{generator_forward.28} parent=5 // pred_check_branch
      %130 = sbr.rel (%p128) target = $region20
    $region19: #{generator_forward.28} parent=5 // pred_region
      // Predicated region
      $region21: #{generator_forward.28} parent=19 // pred_check
        %p131 = pneg %p30
      $region22: #{generator_forward.28} parent=19 // pred_check_branch
        %133 = sbr.rel (%p131) target = $region24
      $region23: #{generator_forward.28} parent=19 // pred_region
        %p134 = scmp.lt.s32.totalorder %s10, 1
        %s135 = scalar_select %p134, %s10, 1
        %s136 = smul.addr %s135, 2
        %s137 = smul.addr %s136, 8
        %s138 = scalar_lea.vmem %s0, %s137
      $region24: #{generator_forward.28} parent=19 // pred_fallthru
        _
    $region20: #{generator_forward.28} parent=5 // pred_fallthru
      _
    %p139 = scmp.le.s32.totalorder 1, %s10
    %p140 = scmp.lt.s32.totalorder %s10, 3
    %p141 = pnand %p139, %p140
    %p142 = pneg %p141
    // Predicated region
    $region25: #{generator_forward.28} parent=5 // pred_check
      _
    $region26: #{generator_forward.28} parent=5 // pred_check_branch
      %144 = sbr.rel (%p141) target = $region28
    $region27: #{generator_forward.28} parent=5 // pred_region
      %s145 = ssub.s32 %s10, 1
      %p146 = scmp.lt.s32.totalorder %s15, 1
      %s147 = scalar_select %p146, %s15, 1
      %s148 = smul.addr %s147, 2
      %s149 = smul.addr %s148, 8
      %s150 = scalar_lea.vmem %s0, %s149
      %p151 = pneg %p36
      %p152 = pneg %p33
      %p153 = pneg %p57
      %p154 = pneg %p54
      %p155 = pneg %p83
      %p156 = pneg %p80
      %p157 = scmp.lt.s32.totalorder %s15, 1
      %s158 = scalar_select %p157, %s15, 1
      %s159 = smul.addr %s158, 2
      %s160 = smul.addr %s159, 4
      %s161 = scalar_lea.vmem %s2, %s160
      %p162 = pneg %p109
      %p163 = pneg %p106
      %p164 = scmp.lt.s32.totalorder %s15, 1
      %s165 = scalar_select %p164, %s15, 1
      %s166 = smul.addr %s165, 2
      %s167 = smul.addr %s166, 2
      %s168 = scalar_lea.vmem %s3, %s167
      %p169 = scmp.lt.s32.totalorder %s15, 1
      %s170 = scalar_select %p169, %s15, 1
      %s171 = smul.addr %s170, 2
      %s172 = smul.addr %s171, 8
      %s173 = scalar_lea.vmem %s0, %s172
      %p174 = scmp.lt.s32.totalorder %s15, 1
      %s175 = scalar_select %p174, %s15, 1
      %s176 = smul.addr %s175, 2
      %s177 = smul.addr %s176, 4
      %s178 = scalar_lea.vmem %s2, %s177
      %p179 = scmp.lt.s32.totalorder %s15, 1
      %s180 = scalar_select %p179, %s15, 1
      %s181 = smul.addr %s180, 2
      %s182 = smul.addr %s181, 2
      %s183 = scalar_lea.vmem %s3, %s182
      %v185 = vld [vmem:[%s173] sm:$0x1f]
      %v186 = vld [vmem:[%s173 + $0x8] sm:$0x1f]
      %v187 = vpack.c.bf16 %v185, %v185
      %v188 = vpack.c.bf16 %v186, %v186
      %v189 = vld [vmem:[%s1] sm:$0xff]
      %v190 = vld [vmem:[%s1 + $0x8] sm:$0xff]
      %v191 = vld [vmem:[%s1 + $0x10] sm:$0xff]
      %v192 = vld [vmem:[%s1 + $0x18] sm:$0xff]
      %v193 = vld [vmem:[%s1 + $0x20] sm:$0xff]
      %v194 = vld [vmem:[%s1 + $0x28] sm:$0xff]
      %v195 = vld [vmem:[%s1 + $0x30] sm:$0xff]
      %v196 = vld [vmem:[%s1 + $0x38] sm:$0xff]
      %v197 = vld [vmem:[%s1 + $0x40] sm:$0xff]
      %v198 = vld [vmem:[%s1 + $0x48] sm:$0xff]
      %v199 = vld [vmem:[%s1 + $0x50] sm:$0xff]
      %v200 = vld [vmem:[%s1 + $0x58] sm:$0xff]
      %v201 = vld [vmem:[%s1 + $0x60] sm:$0xff]
      %v202 = vld [vmem:[%s1 + $0x68] sm:$0xff]
      %v203 = vld [vmem:[%s1 + $0x70] sm:$0xff]
      %v204 = vld [vmem:[%s1 + $0x78] sm:$0xff]
      %v205 = vld [vmem:[%s1 + $0x80] sm:$0xff]
      %v206 = vld [vmem:[%s1 + $0x88] sm:$0xff]
      %v207 = vld [vmem:[%s1 + $0x90] sm:$0xff]
      %v208 = vld [vmem:[%s1 + $0x98] sm:$0xff]
      %s209 = scalar_lea.vmem %s1, 160
      %v210 = vld [vmem:[%s209] sm:$0xff]
      %v211 = vld [vmem:[%s209 + $0x8] sm:$0xff]
      %v212 = vld [vmem:[%s209 + $0x10] sm:$0xff]
      %v213 = vld [vmem:[%s209 + $0x18] sm:$0xff]
      %v214 = vld [vmem:[%s209 + $0x20] sm:$0xff]
      %v215 = vld [vmem:[%s209 + $0x28] sm:$0xff]
      %v216 = vld [vmem:[%s209 + $0x30] sm:$0xff]
      %v217 = vld [vmem:[%s209 + $0x38] sm:$0xff]
      %v218 = vld [vmem:[%s209 + $0x40] sm:$0xff]
      %v219 = vld [vmem:[%s209 + $0x48] sm:$0xff]
      %v220 = vld [vmem:[%s209 + $0x50] sm:$0xff]
      %v221 = vld [vmem:[%s209 + $0x58] sm:$0xff]
      %v222 = vld [vmem:[%s209 + $0x60] sm:$0xff]
      %v223 = vld [vmem:[%s209 + $0x68] sm:$0xff]
      %v224 = vld [vmem:[%s209 + $0x70] sm:$0xff]
      %v225 = vld [vmem:[%s209 + $0x78] sm:$0xff]
      %v226 = vld [vmem:[%s209 + $0x80] sm:$0xff]
      %v227 = vld [vmem:[%s209 + $0x88] sm:$0xff]
      %v228 = vld [vmem:[%s209 + $0x90] sm:$0xff]
      %v229 = vld [vmem:[%s209 + $0x98] sm:$0xff]
      %v231 = vshrl.u32 %v187, 16
      %v233 = vshll.u32 %v187, 16
      %v235 = vrot.slane %v233, 1
      %v236 = vor.u32 %v231, %v235
      %v238 = vshrl.u32 %v188, 16
      %v240 = vshll.u32 %v188, 16
      %v242 = vrot.slane %v240, 1
      %v243 = vor.u32 %v238, %v242
      %v265 = vunpack.c.l.b16 %v210
      %v266 = vunpack.c.h.b16 %v210
      %v267 = vunpack.c.l.b16 %v211
      %v268 = vunpack.c.h.b16 %v211
      %v269 = vunpack.c.l.b16 %v212
      %v270 = vunpack.c.h.b16 %v212
      %v271 = vunpack.c.l.b16 %v213
      %v272 = vunpack.c.h.b16 %v213
      %v273 = vunpack.c.l.b16 %v214
      %v274 = vunpack.c.h.b16 %v214
      %v275 = vunpack.c.l.b16 %v215
      %v276 = vunpack.c.h.b16 %v215
      %v277 = vunpack.c.l.b16 %v216
      %v278 = vunpack.c.h.b16 %v216
      %v279 = vunpack.c.l.b16 %v217
      %v280 = vunpack.c.h.b16 %v217
      %v281 = vunpack.c.l.b16 %v218
      %v282 = vunpack.c.h.b16 %v218
      %v283 = vunpack.c.l.b16 %v219
      %v284 = vunpack.c.h.b16 %v219
      %v285 = vunpack.c.l.b16 %v220
      %v286 = vunpack.c.h.b16 %v220
      %v287 = vunpack.c.l.b16 %v221
      %v288 = vunpack.c.h.b16 %v221
      %v289 = vunpack.c.l.b16 %v222
      %v290 = vunpack.c.h.b16 %v222
      %v291 = vunpack.c.l.b16 %v223
      %v292 = vunpack.c.h.b16 %v223
      %v293 = vunpack.c.l.b16 %v224
      %v294 = vunpack.c.h.b16 %v224
      %v295 = vunpack.c.l.b16 %v225
      %v296 = vunpack.c.h.b16 %v225
      %v297 = vunpack.c.l.b16 %v226
      %v298 = vunpack.c.h.b16 %v226
      %v299 = vunpack.c.l.b16 %v227
      %v300 = vunpack.c.h.b16 %v227
      %v301 = vunpack.c.l.b16 %v228
      %v302 = vunpack.c.h.b16 %v228
      %v303 = vunpack.c.l.b16 %v229
      %v304 = vunpack.c.h.b16 %v229
      %v305 = vpack.c.b16 %v267, %v265
      %v306 = vpack.c.b16 %v268, %v266
      %v307 = vpack.c.b16 %v271, %v269
      %v308 = vpack.c.b16 %v272, %v270
      %v309 = vpack.c.b16 %v275, %v273
      %v310 = vpack.c.b16 %v276, %v274
      %v311 = vpack.c.b16 %v279, %v277
      %v312 = vpack.c.b16 %v280, %v278
      %v313 = vpack.c.b16 %v283, %v281
      %v314 = vpack.c.b16 %v284, %v282
      %v315 = vpack.c.b16 %v287, %v285
      %v316 = vpack.c.b16 %v288, %v286
      %v317 = vpack.c.b16 %v291, %v289
      %v318 = vpack.c.b16 %v292, %v290
      %v319 = vpack.c.b16 %v295, %v293
      %v320 = vpack.c.b16 %v296, %v294
      %v321 = vpack.c.b16 %v299, %v297
      %v322 = vpack.c.b16 %v300, %v298
      %v323 = vpack.c.b16 %v303, %v301
      %v324 = vpack.c.b16 %v304, %v302
      %vm345 = vcmask 261120
      %v347 = vsel %vm345, %v243, 0
      %349 = vmatprep.subr.bf16.mxu0 %v306
      %350 = vmatpush1.bf16.msra.mxu0 %v305
      %351 = vmatprep.subr.bf16.mxu0 %v308
      %352 = vmatpush1.bf16.msra.mxu0 %v307
      %353 = vmatprep.subr.bf16.mxu0 %v310
      %354 = vmatpush1.bf16.msra.mxu0 %v309
      %355 = vmatprep.subr.bf16.mxu0 %v312
      %356 = vmatpush1.bf16.msra.mxu0 %v311
      %357 = vmatprep.subr.bf16.mxu0 %v314
      %358 = vmatpush1.bf16.msra.mxu0 %v313
      %359 = vmatprep.subr.bf16.mxu0 %v316
      %360 = vmatpush1.bf16.msra.mxu0 %v315
      %361 = vmatprep.subr.bf16.mxu0 %v318
      %362 = vmatpush1.bf16.msra.mxu0 %v317
      %363 = vmatprep.subr.bf16.mxu0 %v320
      %364 = vmatpush1.bf16.msra.mxu0 %v319
      %365 = vmatprep.subr.bf16.mxu0 %v322
      %366 = vmatpush1.bf16.msra.mxu0 %v321
      %367 = vmatprep.subr.bf16.mxu0 %v324
      %368 = vmatpush1.bf16.msra.mxu0 %v323
      %369 = vmatprep.subr.bf16.mxu0 0
      %370 = vmatpush1.bf16.msra.mxu0 0
      %371 = vmatprep.subr.bf16.mxu0 0
      %372 = vmatpush1.bf16.msra.mxu0 0
      %373 = vmatprep.subr.bf16.mxu0 0
      %374 = vmatpush1.bf16.msra.mxu0 0
      %375 = vmatprep.subr.bf16.mxu0 0
      %376 = vmatpush1.bf16.msra.mxu0 0
      %377 = vmatprep.subr.bf16.mxu0 0
      %378 = vmatpush1.bf16.msra.mxu0 0
      %379 = vmatprep.subr.bf16.mxu0 0
      %380 = vmatpush1.bf16.msra.mxu0 0
      %381 = vmatprep.mubr.bf16.mxu0 %v347
      %382 = vmatmul.mubr.bf16.gmra.mrb[0].mxu0 %v236
      %v383 = vpop.f32.mrb[0].mxu0
      %v384 = vadd.f32 0.0, %v383
      %v385 = vpop.f32.mrb[0].mxu0
      %v386 = vadd.f32 0.0, %v385
      %v387 = vpop.f32.mrb[0].mxu0
      %v388 = vpop.f32.mrb[0].mxu0
      %389 = vdwg.mxu0
      %v410 = vunpack.c.l.b16 %v189
      %v411 = vunpack.c.h.b16 %v189
      %v412 = vunpack.c.l.b16 %v190
      %v413 = vunpack.c.h.b16 %v190
      %v414 = vunpack.c.l.b16 %v191
      %v415 = vunpack.c.h.b16 %v191
      %v416 = vunpack.c.l.b16 %v192
      %v417 = vunpack.c.h.b16 %v192
      %v418 = vunpack.c.l.b16 %v193
      %v419 = vunpack.c.h.b16 %v193
      %v420 = vunpack.c.l.b16 %v194
      %v421 = vunpack.c.h.b16 %v194
      %v422 = vunpack.c.l.b16 %v195
      %v423 = vunpack.c.h.b16 %v195
      %v424 = vunpack.c.l.b16 %v196
      %v425 = vunpack.c.h.b16 %v196
      %v426 = vunpack.c.l.b16 %v197
      %v427 = vunpack.c.h.b16 %v197
      %v428 = vunpack.c.l.b16 %v198
      %v429 = vunpack.c.h.b16 %v198
      %v430 = vunpack.c.l.b16 %v199
      %v431 = vunpack.c.h.b16 %v199
      %v432 = vunpack.c.l.b16 %v200
      %v433 = vunpack.c.h.b16 %v200
      %v434 = vunpack.c.l.b16 %v201
      %v435 = vunpack.c.h.b16 %v201
      %v436 = vunpack.c.l.b16 %v202
      %v437 = vunpack.c.h.b16 %v202
      %v438 = vunpack.c.l.b16 %v203
      %v439 = vunpack.c.h.b16 %v203
      %v440 = vunpack.c.l.b16 %v204
      %v441 = vunpack.c.h.b16 %v204
      %v442 = vunpack.c.l.b16 %v205
      %v443 = vunpack.c.h.b16 %v205
      %v444 = vunpack.c.l.b16 %v206
      %v445 = vunpack.c.h.b16 %v206
      %v446 = vunpack.c.l.b16 %v207
      %v447 = vunpack.c.h.b16 %v207
      %v448 = vunpack.c.l.b16 %v208
      %v449 = vunpack.c.h.b16 %v208
      %v450 = vpack.c.b16 %v412, %v410
      %v451 = vpack.c.b16 %v413, %v411
      %v452 = vpack.c.b16 %v416, %v414
      %v453 = vpack.c.b16 %v417, %v415
      %v454 = vpack.c.b16 %v420, %v418
      %v455 = vpack.c.b16 %v421, %v419
      %v456 = vpack.c.b16 %v424, %v422
      %v457 = vpack.c.b16 %v425, %v423
      %v458 = vpack.c.b16 %v428, %v426
      %v459 = vpack.c.b16 %v429, %v427
      %v460 = vpack.c.b16 %v432, %v430
      %v461 = vpack.c.b16 %v433, %v431
      %v462 = vpack.c.b16 %v436, %v434
      %v463 = vpack.c.b16 %v437, %v435
      %v464 = vpack.c.b16 %v440, %v438
      %v465 = vpack.c.b16 %v441, %v439
      %v466 = vpack.c.b16 %v444, %v442
      %v467 = vpack.c.b16 %v445, %v443
      %v468 = vpack.c.b16 %v448, %v446
      %v469 = vpack.c.b16 %v449, %v447
      %v490 = vsel %vm345, %v188, 0
      %492 = vmatprep.subr.bf16.mxu0 %v451
      %493 = vmatpush1.bf16.msra.mxu0 %v450
      %494 = vmatprep.subr.bf16.mxu0 %v453
      %495 = vmatpush1.bf16.msra.mxu0 %v452
      %496 = vmatprep.subr.bf16.mxu0 %v455
      %497 = vmatpush1.bf16.msra.mxu0 %v454
      %498 = vmatprep.subr.bf16.mxu0 %v457
      %499 = vmatpush1.bf16.msra.mxu0 %v456
      %500 = vmatprep.subr.bf16.mxu0 %v459
      %501 = vmatpush1.bf16.msra.mxu0 %v458
      %502 = vmatprep.subr.bf16.mxu0 %v461
      %503 = vmatpush1.bf16.msra.mxu0 %v460
      %504 = vmatprep.subr.bf16.mxu0 %v463
      %505 = vmatpush1.bf16.msra.mxu0 %v462
      %506 = vmatprep.subr.bf16.mxu0 %v465
      %507 = vmatpush1.bf16.msra.mxu0 %v464
      %508 = vmatprep.subr.bf16.mxu0 %v467
      %509 = vmatpush1.bf16.msra.mxu0 %v466
      %510 = vmatprep.subr.bf16.mxu0 %v469
      %511 = vmatpush1.bf16.msra.mxu0 %v468
      %512 = vmatprep.subr.bf16.mxu0 0
      %513 = vmatpush1.bf16.msra.mxu0 0
      %514 = vmatprep.subr.bf16.mxu0 0
      %515 = vmatpush1.bf16.msra.mxu0 0
      %516 = vmatprep.subr.bf16.mxu0 0
      %517 = vmatpush1.bf16.msra.mxu0 0
      %518 = vmatprep.subr.bf16.mxu0 0
      %519 = vmatpush1.bf16.msra.mxu0 0
      %520 = vmatprep.subr.bf16.mxu0 0
      %521 = vmatpush1.bf16.msra.mxu0 0
      %522 = vmatprep.subr.bf16.mxu0 0
      %523 = vmatpush1.bf16.msra.mxu0 0
      %524 = vmatprep.mubr.bf16.mxu0 %v490
      %525 = vmatmul.mubr.bf16.gmra.mrb[0].mxu0 %v187
      %v526 = vpop.f32.mrb[0].mxu0
      %v527 = vadd.f32 %v384, %v526
      %v528 = vpop.f32.mrb[0].mxu0
      %v529 = vadd.f32 %v386, %v528
      %v530 = vpop.f32.mrb[0].mxu0
      %v531 = vpop.f32.mrb[0].mxu0
      %532 = vdwg.mxu0
      %v535 = vcombine.low %v527, %v529
      %537 = vst [vmem:[%s178] sm:$0xff] %v535
      %vm538 = vcmask 1043456
      %v539 = vsel %vm538, %v527, 0.0
      %v540 = vrot.slane %v539, 4
      %v541 = vadd.f32 %v539, %v540
      %v542 = vrot.slane %v541, 2
      %v543 = vadd.f32 %v541, %v542
      %v544 = vrot.slane %v543, 1
      %v545 = vadd.f32 %v543, %v544
      %v546 = vsel %vm538, %v529, 0.0
      %v547 = vrot.slane %v546, 4
      %v548 = vadd.f32 %v546, %v547
      %v549 = vrot.slane %v548, 2
      %v550 = vadd.f32 %v548, %v549
      %v551 = vrot.slane %v550, 1
      %v552 = vadd.f32 %v550, %v551
      %v553 = vmul.f32 %v527, %v527
      %v554 = vmul.f32 %v529, %v529
      %v555 = vsel %vm538, %v553, 0.0
      %v556 = vrot.slane %v555, 4
      %v557 = vadd.f32 %v555, %v556
      %v558 = vrot.slane %v557, 2
      %v559 = vadd.f32 %v557, %v558
      %v560 = vrot.slane %v559, 1
      %v561 = vadd.f32 %v559, %v560
      %v562 = vsel %vm538, %v554, 0.0
      %v563 = vrot.slane %v562, 4
      %v564 = vadd.f32 %v562, %v563
      %v565 = vrot.slane %v564, 2
      %v566 = vadd.f32 %v564, %v565
      %v567 = vrot.slane %v566, 1
      %v568 = vadd.f32 %v566, %v567
      %vm569 = vcmask 1040384
      %v570 = vsel %vm569, %v545, %v561
      %v571 = vsel %vm569, %v552, %v568
      %v574 = vcombine.low %v570, %v571
      %v576 = vunpack.c.l.s4 1983009808
      %v577 = vunpack.c.0.s8 %v576
      %v578 = vlaneseq
      %v579 = vshrl.u32 %v578, 7
      %v580 = vsub.s32 %v577, %v579
      %v581 = vrot.slane %v574, %v580
      %583 = vst [vmem:[%s183] sm:$0xf] %v581
      %p584 = scmp.lt.s32.totalorder %s15, 1
      %s585 = scalar_select %p584, %s15, 1
      %s586 = smul.addr %s585, 2
      %s587 = smul.addr %s586, 4
      %s588 = scalar_lea.vmem %s2, %s587
      %p589 = scmp.lt.s32.totalorder %s15, 1
      %s590 = scalar_select %p589, %s15, 1
      %s591 = smul.addr %s590, 2
      %s592 = smul.addr %s591, 2
      %s593 = scalar_lea.vmem %s3, %s592
      // Predicated region
      $region29: #{generator_forward.28} parent=27 // pred_check
        %p594 = pneg %p80
      $region30: #{generator_forward.28} parent=27 // pred_check_branch
        %596 = sbr.rel (%p594) target = $region32
      $region31: #{generator_forward.28} parent=27 // pred_region
        _
      $region32: #{generator_forward.28} parent=27 // pred_fallthru
        _
      // Predicated region
      $region33: #{generator_forward.28} parent=27 // pred_check
        %p597 = pneg %p106
      $region34: #{generator_forward.28} parent=27 // pred_check_branch
        %599 = sbr.rel (%p597) target = $region36
      $region35: #{generator_forward.28} parent=27 // pred_region
        _
      $region36: #{generator_forward.28} parent=27 // pred_fallthru
        _
    $region28: #{generator_forward.28} parent=5 // pred_fallthru
      _
    %p600 = scmp.le.s32.totalorder 2, %s10
    // Predicated region
    $region37: #{generator_forward.28} parent=5 // pred_check
      %p601 = pneg %p600
    $region38: #{generator_forward.28} parent=5 // pred_check_branch
      %603 = sbr.rel (%p601) target = $region40
    $region39: #{generator_forward.28} parent=5 // pred_region
      %s604 = ssub.s32 %s10, 2
      // Predicated region
      $region41: #{generator_forward.28} parent=39 // pred_check
        %p605 = pneg %p86
      $region42: #{generator_forward.28} parent=39 // pred_check_branch
        %607 = sbr.rel (%p605) target = $region44
      $region43: #{generator_forward.28} parent=39 // pred_region
        %p608 = scmp.lt.s32.totalorder %s16, 1
        %s609 = scalar_select %p608, %s16, 1
        %s610 = smul.addr %s609, 2
        %s611 = smul.addr %s610, 4
        %s612 = scalar_lea.vmem %s2, %s611
      $region44: #{generator_forward.28} parent=39 // pred_fallthru
        _
      // Predicated region
      $region45: #{generator_forward.28} parent=39 // pred_check
        %p613 = pneg %p112
      $region46: #{generator_forward.28} parent=39 // pred_check_branch
        %615 = sbr.rel (%p613) target = $region48
      $region47: #{generator_forward.28} parent=39 // pred_region
        %p616 = scmp.lt.s32.totalorder %s16, 1
        %s617 = scalar_select %p616, %s16, 1
        %s618 = smul.addr %s617, 2
        %s619 = smul.addr %s618, 2
        %s620 = scalar_lea.vmem %s3, %s619
      $region48: #{generator_forward.28} parent=39 // pred_fallthru
        _
    $region40: #{generator_forward.28} parent=5 // pred_fallthru
      _
  $region6: #{generator_forward.28} parent=0 // loop_footer
    %s14 = sadd.s32 1, %s10
  $region7: #{generator_forward.28} parent=0 // loop_footer_branch
    %9 = sbr.rel target = $region3
  $region8: #{generator_forward.28} parent=0 // loop_exit
    _

// kernel: tile.176
$region0: #{tile.176}
  #allocation0 [shape = 's32[1]{0}', space=sflag, size = 0x4, scoped, tag = 'scoped memory for tile.176']
  %s0 = inlined_call_operand.vmem [shape: f32[16], index: 0, kind: input, shape index: {}]
  %s1 = inlined_call_operand.vmem [shape: f32[4,16], index: 1, kind: output, shape index: {}]
  // Predicated region
  $region2: #{tile.176} parent=0 // pred_check
    _
  $region3: #{tile.176} parent=0 // pred_check_branch
    %3 = sbr.rel (0) target = $region5
  $region4: #{tile.176} parent=0 // pred_region
    _
  $region5: #{tile.176} parent=0 // pred_fallthru
    _
  %v4 = vld [vmem:[%s0] ss:$0 sm:$0xff]
  %5 = vst [vmem:[%s1] sm:$0xf] %v4

// kernel: tile.183
$region0: #{tile.183}
  %s0 = inlined_call_operand.vmem [shape: f32[4,16], index: 0, kind: input, shape index: {}]
  %s1 = inlined_call_operand.vmem [shape: f32[64], index: 1, kind: output, shape index: {}]
  $region1: #{tile.183} parent=0
    #allocation0 [shape = 'u8[4096]{0}', space=vmem, size = 0x1000, scoped, tag = 'scoped mem for output reshape']
    #allocation1 [shape = 'u8[4096]{0}', space=vmem, size = 0x1000, scoped, tag = 'scoped mem for input reshape']
    %s3 = sshllo.u32 0, 4
    %v4 = vld [vmem:[%s0] sm:%s3]
    %5 = vst [vmem:[#allocation1] sm:%s3] %v4
    %v6 = vld [vmem:[#allocation1] sm:$0x1]
    %vm7 = vcmask 130048
    %8 = vst.msk [vmem:[#allocation0] sm:$0x1] %vm7, %v6
    %s9 = scalar_lea.vmem [#allocation1], 3
    %v10 = vld [vmem:[%s9] sm:$0x1]
    %11 = vrot.lane.b32.xlu0 %v10, 48
    %v12 = vpop.permute.xlu0 %11
    %vm13 = vcmask 523648
    %14 = vst.msk [vmem:[#allocation0] sm:$0x1] %vm13, %v12
    %s15 = scalar_lea.vmem [#allocation1], 2
    %v16 = vld [vmem:[%s15] sm:$0x1]
    %17 = vrot.lane.b32.xlu0 %v16, 32
    %v18 = vpop.permute.xlu0 %17
    %vm19 = vcmask 392448
    %20 = vst.msk [vmem:[#allocation0] sm:$0x1] %vm19, %v18
    %s21 = scalar_lea.vmem [#allocation1], 1
    %v22 = vld [vmem:[%s21] sm:$0x1]
    %23 = vrot.lane.b32.xlu0 %v22, 16
    %v24 = vpop.permute.xlu0 %23
    %vm25 = vcmask 261248
    %26 = vst.msk [vmem:[#allocation0] sm:$0x1] %vm25, %v24
    %s28 = sshllo.u32 0, 1
    %v30 = vld [vmem:[#allocation0] sm:%s28]
    %s31 = sshllo.u32 0, 1
    %32 = vst [vmem:[%s1] sm:%s31] %v30

// kernel: tile.184
$region0: #{tile.184}
  #allocation0 [shape = 's32[1]{0}', space=sflag, size = 0x4, scoped, tag = 'scoped memory for tile.184']
  %s0 = inlined_call_operand.vmem [shape: f32[64], index: 0, kind: input, shape index: {}]
  %s1 = inlined_call_operand.vmem [shape: f32[4,64], index: 1, kind: output, shape index: {}]
  // Predicated region
  $region2: #{tile.184} parent=0 // pred_check
    _
  $region3: #{tile.184} parent=0 // pred_check_branch
    %3 = sbr.rel (0) target = $region5
  $region4: #{tile.184} parent=0 // pred_region
    _
  $region5: #{tile.184} parent=0 // pred_fallthru
    _
  %v4 = vld [vmem:[%s0] ss:$0 sm:$0xff]
  %5 = vst [vmem:[%s1] sm:$0xf] %v4

// kernel: tile.185
$region0: #{tile.185}
  %s0 = inlined_call_operand.vmem [shape: f32[4,64], index: 0, kind: input, shape index: {}]
  %s1 = inlined_call_operand.vmem [shape: f32[1,256], index: 1, kind: output, shape index: {}]
  $region1: #{tile.185} parent=0
    #allocation0 [shape = 'u8[8192]{0}', space=vmem, size = 0x2000, scoped, tag = 'scoped mem for output reshape']
    #allocation1 [shape = 'u8[4096]{0}', space=vmem, size = 0x1000, scoped, tag = 'scoped mem for input reshape']
    %s3 = sshllo.u32 0, 4
    %v4 = vld [vmem:[%s0] sm:%s3]
    %5 = vst [vmem:[#allocation1] sm:%s3] %v4
    %s6 = smov 3
    %v7 = vld [vmem:[#allocation1] ss:$2 sm:%s6]
    %vm8 = vcmask 523264
    %9 = vst.msk [vmem:[#allocation0] ss:$8 sm:$0x3] %vm8, %v7
    %s10 = scalar_lea.vmem [#allocation1], 1
    %s11 = smov 3
    %v12 = vld [vmem:[%s10] ss:$2 sm:%s11]
    %13 = vrot.lane.b32.xlu0 %v12, 64
    %v14 = vpop.permute.xlu0 %13
    %vm15 = vcmask 1048064
    %16 = vst.msk [vmem:[#allocation0] ss:$8 sm:$0x3] %vm15, %v14
    %s18 = sshllo.u32 0, 1
    %v20 = vld [vmem:[#allocation0] sm:%s18]
    %s21 = sshllo.u32 0, 1
    %22 = vst [vmem:[%s1] sm:%s21] %v20
    %s23 = scalar_lea.vmem [#allocation0], 8
    %v24 = vld [vmem:[%s23] sm:%s18]
    %s25 = sshllo.u32 0, 1
    %s26 = scalar_lea.vmem %s1, 1
    %27 = vst [vmem:[%s26] sm:%s25] %v24

// kernel: generator_forward.29
$region0: #{generator_forward.29}
  #allocation0 [shape = 'u32[]', space=smem, size = 0x4, offset = 0x4, fixed_abs, tag = 'smem constant byte address 0x4 - core index']
  #allocation1 [shape = 'u32[144,128]{1,0:T(1,128)}', space=vmem, size = 0x12000, scoped, tag = 'internal scratch']
  %s0 = inlined_call_operand.vmem [shape: f32[2,4,256], index: 0, kind: input, shape index: {}]
  %s1 = inlined_call_operand.vmem [shape: f32[1,256], index: 1, kind: input, shape index: {}]
  %s2 = inlined_call_operand.vmem [shape: f32[1,256], index: 2, kind: input, shape index: {}]
  %s3 = inlined_call_operand.vmem [shape: f32[2,4,256], index: 3, kind: output, shape index: {}]
  %s4 = sld [smem:[#allocation0]]
  $region45: #{generator_forward.29} parent=0
    _
  %s6 = ssub.s32 1, %s4
  %s7 = scalar_select 0, %s6, %s4
  loop: start=0, step=1, limit=4
  $region2: #{generator_forward.29} parent=0 // loop_pre_header
    _
  $region3: #{generator_forward.29} parent=0 // loop_header
    %s9 = sphi 0, %s13
    %p10 = scmp.ge.s32.totalorder %s9, 4
    %s19 = sphi 0, %s21
    %s22 = sphi 0, %s19
    %s23 = sphi 0, %s22
    %s39 = sphi 0, %s23
    %s43 = sphi 0, %s43
    %s45 = sphi 0, %s43
    %s46 = sphi 0, %s45
    %s60 = sphi 0, %s46
    %s64 = sphi 0, %s64
    %s66 = sphi 0, %s64
    %s67 = sphi 0, %s66
    %s81 = sphi 0, %s67
    %s87 = sphi 0, %s89
    %s90 = sphi 0, %s87
    %s91 = sphi 0, %s90
    %s107 = sphi 0, %s91
  $region4: #{generator_forward.29} parent=0 // loop_header_branch
    %12 = sbr.rel (%p10) target = $region8
  $region5: #{generator_forward.29} parent=0 // loop_body
    %s14 = ssub.s32 %s9, 1
    %s15 = ssub.s32 %s9, 2
    %s16 = sadd.s32 %s9, 1
    %s17 = ssub.s32 %s9, %s16
    %p18 = scmp.eq.s32.totalorder %s17, 0
    %s20 = sadd.s32 %s19, 1
    %s21 = scalar_select %p18, %s19, %s20
    %p24 = pneg %p18
    %p25 = scmp.eq.s32.totalorder %s9, 1
    %p26 = por %p24, %p25
    %p27 = scmp.ne.s32.totalorder %s19, %s22
    %p28 = scmp.eq.s32.totalorder %s9, 0
    %p29 = por %p27, %p28
    %p30 = scmp.ne.s32.totalorder %s19, %s22
    %p31 = scmp.eq.s32.totalorder %s14, 1
    %p32 = por %p30, %p31
    %p33 = scmp.ne.s32.totalorder %s22, %s23
    %p34 = scmp.eq.s32.totalorder %s14, 0
    %p35 = por %p33, %p34
    %p36 = scmp.ne.s32.totalorder %s22, %s23
    %p37 = scmp.eq.s32.totalorder %s15, 1
    %p38 = por %p36, %p37
    %p40 = scmp.ne.s32.totalorder %s23, %s39
    %p41 = scmp.eq.s32.totalorder %s15, 0
    %p42 = por %p40, %p41
    %s44 = sadd.s32 %s43, 1
    %p47 = scmp.eq.s32.totalorder %s9, 1
    %p48 = scmp.ne.s32.totalorder %s43, %s45
    %p49 = scmp.eq.s32.totalorder %s9, 0
    %p50 = por %p48, %p49
    %p51 = scmp.ne.s32.totalorder %s43, %s45
    %p52 = scmp.eq.s32.totalorder %s14, 1
    %p53 = por %p51, %p52
    %p54 = scmp.ne.s32.totalorder %s45, %s46
    %p55 = scmp.eq.s32.totalorder %s14, 0
    %p56 = por %p54, %p55
    %p57 = scmp.ne.s32.totalorder %s45, %s46
    %p58 = scmp.eq.s32.totalorder %s15, 1
    %p59 = por %p57, %p58
    %p61 = scmp.ne.s32.totalorder %s46, %s60
    %p62 = scmp.eq.s32.totalorder %s15, 0
    %p63 = por %p61, %p62
    %s65 = sadd.s32 %s64, 1
    %p68 = scmp.eq.s32.totalorder %s9, 1
    %p69 = scmp.ne.s32.totalorder %s64, %s66
    %p70 = scmp.eq.s32.totalorder %s9, 0
    %p71 = por %p69, %p70
    %p72 = scmp.ne.s32.totalorder %s64, %s66
    %p73 = scmp.eq.s32.totalorder %s14, 1
    %p74 = por %p72, %p73
    %p75 = scmp.ne.s32.totalorder %s66, %s67
    %p76 = scmp.eq.s32.totalorder %s14, 0
    %p77 = por %p75, %p76
    %p78 = scmp.ne.s32.totalorder %s66, %s67
    %p79 = scmp.eq.s32.totalorder %s15, 1
    %p80 = por %p78, %p79
    %p82 = scmp.ne.s32.totalorder %s67, %s81
    %p83 = scmp.eq.s32.totalorder %s15, 0
    %p84 = por %p82, %p83
    %s85 = ssub.s32 %s9, %s16
    %p86 = scmp.eq.s32.totalorder %s85, 0
    %s88 = sadd.s32 %s87, 1
    %s89 = scalar_select %p86, %s87, %s88
    %p92 = pneg %p86
    %p93 = scmp.eq.s32.totalorder %s9, 1
    %p94 = por %p92, %p93
    %p95 = scmp.ne.s32.totalorder %s87, %s90
    %p96 = scmp.eq.s32.totalorder %s9, 0
    %p97 = por %p95, %p96
    %p98 = scmp.ne.s32.totalorder %s87, %s90
    %p99 = scmp.eq.s32.totalorder %s14, 1
    %p100 = por %p98, %p99
    %p101 = scmp.ne.s32.totalorder %s90, %s91
    %p102 = scmp.eq.s32.totalorder %s14, 0
    %p103 = por %p101, %p102
    %p104 = scmp.ne.s32.totalorder %s90, %s91
    %p105 = scmp.eq.s32.totalorder %s15, 1
    %p106 = por %p104, %p105
    %p108 = scmp.ne.s32.totalorder %s91, %s107
    %p109 = scmp.eq.s32.totalorder %s15, 0
    %p110 = por %p108, %p109
    %p111 = scmp.le.s32.totalorder 1, %s9
    %p112 = scmp.lt.s32.totalorder %s9, 3
    %p113 = pnand %p111, %p112
    %p114 = pneg %p113
    // Predicated region
    $region9: #{generator_forward.29} parent=5 // pred_check
      _
    $region10: #{generator_forward.29} parent=5 // pred_check_branch
      %116 = sbr.rel (%p113) target = $region12
    $region11: #{generator_forward.29} parent=5 // pred_region
      %s117 = ssub.s32 %s9, 1
      // Predicated region
      $region13: #{generator_forward.29} parent=11 // pred_check
        %p118 = pneg %p56
      $region14: #{generator_forward.29} parent=11 // pred_check_branch
        %120 = sbr.rel (%p118) target = $region16
      $region15: #{generator_forward.29} parent=11 // pred_region
        _
      $region16: #{generator_forward.29} parent=11 // pred_fallthru
        _
      // Predicated region
      $region17: #{generator_forward.29} parent=11 // pred_check
        %p121 = pneg %p77
      $region18: #{generator_forward.29} parent=11 // pred_check_branch
        %123 = sbr.rel (%p121) target = $region20
      $region19: #{generator_forward.29} parent=11 // pred_region
        _
      $region20: #{generator_forward.29} parent=11 // pred_fallthru
        _
    $region12: #{generator_forward.29} parent=5 // pred_fallthru
      _
    %p124 = scmp.lt.s32.totalorder %s9, 2
    // Predicated region
    $region21: #{generator_forward.29} parent=5 // pred_check
      %p125 = pneg %p124
    $region22: #{generator_forward.29} parent=5 // pred_check_branch
      %127 = sbr.rel (%p125) target = $region24
    $region23: #{generator_forward.29} parent=5 // pred_region
      // Predicated region
      $region25: #{generator_forward.29} parent=23 // pred_check
        %p128 = pneg %p29
      $region26: #{generator_forward.29} parent=23 // pred_check_branch
        %130 = sbr.rel (%p128) target = $region28
      $region27: #{generator_forward.29} parent=23 // pred_region
        %p131 = scmp.lt.s32.totalorder %s9, 1
        %s132 = scalar_select %p131, %s9, 1
        %s133 = smul.addr %s132, 2
        %s134 = smul.addr %s133, 4
        %s135 = scalar_lea.vmem %s0, %s134
      $region28: #{generator_forward.29} parent=23 // pred_fallthru
        _
    $region24: #{generator_forward.29} parent=5 // pred_fallthru
      _
    %p136 = scmp.le.s32.totalorder 1, %s9
    %p137 = scmp.lt.s32.totalorder %s9, 3
    %p138 = pnand %p136, %p137
    %p139 = pneg %p138
    // Predicated region
    $region29: #{generator_forward.29} parent=5 // pred_check
      _
    $region30: #{generator_forward.29} parent=5 // pred_check_branch
      %141 = sbr.rel (%p138) target = $region32
    $region31: #{generator_forward.29} parent=5 // pred_region
      %s142 = ssub.s32 %s9, 1
      %p143 = scmp.lt.s32.totalorder %s14, 1
      %s144 = scalar_select %p143, %s14, 1
      %s145 = smul.addr %s144, 2
      %s146 = smul.addr %s145, 4
      %s147 = scalar_lea.vmem %s0, %s146
      %p148 = pneg %p35
      %p149 = pneg %p32
      %p150 = pneg %p56
      %p151 = pneg %p53
      %p152 = pneg %p77
      %p153 = pneg %p74
      %p154 = pneg %p103
      %p155 = pneg %p100
      %p156 = scmp.lt.s32.totalorder %s14, 1
      %s157 = scalar_select %p156, %s14, 1
      %s158 = smul.addr %s157, 2
      %s159 = smul.addr %s158, 4
      %s160 = scalar_lea.vmem %s3, %s159
      %p161 = scmp.lt.s32.totalorder %s14, 1
      %s162 = scalar_select %p161, %s14, 1
      %s163 = smul.addr %s162, 2
      %s164 = smul.addr %s163, 4
      %s165 = scalar_lea.vmem %s0, %s164
      %p166 = scmp.lt.s32.totalorder %s14, 1
      %s167 = scalar_select %p166, %s14, 1
      %s168 = smul.addr %s167, 2
      %s169 = smul.addr %s168, 4
      %s170 = scalar_lea.vmem %s3, %s169
      %v171 = vld [vmem:[%s165] sm:$0xff]
      %v172 = vld [vmem:[%s1] sm:$0x3]
      %v174 = vlaneseq
      %v175 = vshrl.u32 %v174, 7
      %v176 = vsub.s32 0, %v175
      %v177 = vrot.slane %v172, %v176
      %v178 = vlaneseq
      %v179 = vshrl.u32 %v178, 7
      %v180 = vsub.s32 1, %v179
      %v181 = vrot.slane %v172, %v180
      %v182 = vcombine.low %v177, %v181
      %v184 = vmul.f32 %v171, %v182
      %v185 = vld [vmem:[%s2] sm:$0x3]
      %v187 = vlaneseq
      %v188 = vshrl.u32 %v187, 7
      %v189 = vsub.s32 0, %v188
      %v190 = vrot.slane %v185, %v189
      %v191 = vlaneseq
      %v192 = vshrl.u32 %v191, 7
      %v193 = vsub.s32 1, %v192
      %v194 = vrot.slane %v185, %v193
      %v195 = vcombine.low %v190, %v194
      %v197 = vadd.f32 %v184, %v195
      %v198 = vmax.f32 %v197, 0.0
      %199 = vst [vmem:[%s170] sm:$0xff] %v198
      %p200 = scmp.lt.s32.totalorder %s14, 1
      %s201 = scalar_select %p200, %s14, 1
      %s202 = smul.addr %s201, 2
      %s203 = smul.addr %s202, 4
      %s204 = scalar_lea.vmem %s3, %s203
      // Predicated region
      $region33: #{generator_forward.29} parent=31 // pred_check
        %p205 = pneg %p100
      $region34: #{generator_forward.29} parent=31 // pred_check_branch
        %207 = sbr.rel (%p205) target = $region36
      $region35: #{generator_forward.29} parent=31 // pred_region
        _
      $region36: #{generator_forward.29} parent=31 // pred_fallthru
        _
    $region32: #{generator_forward.29} parent=5 // pred_fallthru
      _
    %p208 = scmp.le.s32.totalorder 2, %s9
    // Predicated region
    $region37: #{generator_forward.29} parent=5 // pred_check
      %p209 = pneg %p208
    $region38: #{generator_forward.29} parent=5 // pred_check_branch
      %211 = sbr.rel (%p209) target = $region40
    $region39: #{generator_forward.29} parent=5 // pred_region
      %s212 = ssub.s32 %s9, 2
      // Predicated region
      $region41: #{generator_forward.29} parent=39 // pred_check
        %p213 = pneg %p106
      $region42: #{generator_forward.29} parent=39 // pred_check_branch
        %215 = sbr.rel (%p213) target = $region44
      $region43: #{generator_forward.29} parent=39 // pred_region
        %p216 = scmp.lt.s32.totalorder %s15, 1
        %s217 = scalar_select %p216, %s15, 1
        %s218 = smul.addr %s217, 2
        %s219 = smul.addr %s218, 4
        %s220 = scalar_lea.vmem %s3, %s219
      $region44: #{generator_forward.29} parent=39 // pred_fallthru
        _
    $region40: #{generator_forward.29} parent=5 // pred_fallthru
      _
  $region6: #{generator_forward.29} parent=0 // loop_footer
    %s13 = sadd.s32 1, %s9
  $region7: #{generator_forward.29} parent=0 // loop_footer_branch
    %8 = sbr.rel target = $region3
  $region8: #{generator_forward.29} parent=0 // loop_exit
    _

// kernel: generator_forward.30
$region0: #{generator_forward.30}
  #allocation0 [shape = 'u32[]', space=smem, size = 0x4, offset = 0x4, fixed_abs, tag = 'smem constant byte address 0x4 - core index']
  #allocation1 [shape = 'u32[144,128]{1,0:T(1,128)}', space=vmem, size = 0x12000, scoped, tag = 'internal scratch']
  %s0 = inlined_call_operand.vmem [shape: f32[2,9,144], index: 0, kind: input, shape index: {}]
  %s1 = inlined_call_operand.vmem [shape: bf16[2,144,256], index: 1, kind: input, shape index: {}]
  %s2 = inlined_call_operand.vmem [shape: f32[2,8,256], index: 2, kind: output, shape index: {0}]
  %s3 = inlined_call_operand.vmem [shape: f32[2,2,256], index: 3, kind: output, shape index: {1}]
  %4 = xla_tuple %s2, %s3
  %s5 = sld [smem:[#allocation0]]
  $region49: #{generator_forward.30} parent=0
    _
  %s7 = ssub.s32 1, %s5
  %s8 = scalar_select 0, %s7, %s5
  loop: start=0, step=1, limit=4
  $region2: #{generator_forward.30} parent=0 // loop_pre_header
    _
  $region3: #{generator_forward.30} parent=0 // loop_header
    %s10 = sphi 0, %s14
    %p11 = scmp.ge.s32.totalorder %s10, 4
    %s20 = sphi 0, %s22
    %s23 = sphi 0, %s20
    %s24 = sphi 0, %s23
    %s40 = sphi 0, %s24
    %s44 = sphi 0, %s44
    %s46 = sphi 0, %s44
    %s47 = sphi 0, %s46
    %s61 = sphi 0, %s47
    %s67 = sphi 0, %s69
    %s70 = sphi 0, %s67
    %s71 = sphi 0, %s70
    %s87 = sphi 0, %s71
    %s93 = sphi 0, %s95
    %s96 = sphi 0, %s93
    %s97 = sphi 0, %s96
    %s113 = sphi 0, %s97
  $region4: #{generator_forward.30} parent=0 // loop_header_branch
    %13 = sbr.rel (%p11) target = $region8
  $region5: #{generator_forward.30} parent=0 // loop_body
    %s15 = ssub.s32 %s10, 1
    %s16 = ssub.s32 %s10, 2
    %s17 = sadd.s32 %s10, 1
    %s18 = ssub.s32 %s10, %s17
    %p19 = scmp.eq.s32.totalorder %s18, 0
    %s21 = sadd.s32 %s20, 1
    %s22 = scalar_select %p19, %s20, %s21
    %p25 = pneg %p19
    %p26 = scmp.eq.s32.totalorder %s10, 1
    %p27 = por %p25, %p26
    %p28 = scmp.ne.s32.totalorder %s20, %s23
    %p29 = scmp.eq.s32.totalorder %s10, 0
    %p30 = por %p28, %p29
    %p31 = scmp.ne.s32.totalorder %s20, %s23
    %p32 = scmp.eq.s32.totalorder %s15, 1
    %p33 = por %p31, %p32
    %p34 = scmp.ne.s32.totalorder %s23, %s24
    %p35 = scmp.eq.s32.totalorder %s15, 0
    %p36 = por %p34, %p35
    %p37 = scmp.ne.s32.totalorder %s23, %s24
    %p38 = scmp.eq.s32.totalorder %s16, 1
    %p39 = por %p37, %p38
    %p41 = scmp.ne.s32.totalorder %s24, %s40
    %p42 = scmp.eq.s32.totalorder %s16, 0
    %p43 = por %p41, %p42
    %s45 = sadd.s32 %s44, 1
    %p48 = scmp.eq.s32.totalorder %s10, 1
    %p49 = scmp.ne.s32.totalorder %s44, %s46
    %p50 = scmp.eq.s32.totalorder %s10, 0
    %p51 = por %p49, %p50
    %p52 = scmp.ne.s32.totalorder %s44, %s46
    %p53 = scmp.eq.s32.totalorder %s15, 1
    %p54 = por %p52, %p53
    %p55 = scmp.ne.s32.totalorder %s46, %s47
    %p56 = scmp.eq.s32.totalorder %s15, 0
    %p57 = por %p55, %p56
    %p58 = scmp.ne.s32.totalorder %s46, %s47
    %p59 = scmp.eq.s32.totalorder %s16, 1
    %p60 = por %p58, %p59
    %p62 = scmp.ne.s32.totalorder %s47, %s61
    %p63 = scmp.eq.s32.totalorder %s16, 0
    %p64 = por %p62, %p63
    %s65 = ssub.s32 %s10, %s17
    %p66 = scmp.eq.s32.totalorder %s65, 0
    %s68 = sadd.s32 %s67, 1
    %s69 = scalar_select %p66, %s67, %s68
    %p72 = pneg %p66
    %p73 = scmp.eq.s32.totalorder %s10, 1
    %p74 = por %p72, %p73
    %p75 = scmp.ne.s32.totalorder %s67, %s70
    %p76 = scmp.eq.s32.totalorder %s10, 0
    %p77 = por %p75, %p76
    %p78 = scmp.ne.s32.totalorder %s67, %s70
    %p79 = scmp.eq.s32.totalorder %s15, 1
    %p80 = por %p78, %p79
    %p81 = scmp.ne.s32.totalorder %s70, %s71
    %p82 = scmp.eq.s32.totalorder %s15, 0
    %p83 = por %p81, %p82
    %p84 = scmp.ne.s32.totalorder %s70, %s71
    %p85 = scmp.eq.s32.totalorder %s16, 1
    %p86 = por %p84, %p85
    %p88 = scmp.ne.s32.totalorder %s71, %s87
    %p89 = scmp.eq.s32.totalorder %s16, 0
    %p90 = por %p88, %p89
    %s91 = ssub.s32 %s10, %s17
    %p92 = scmp.eq.s32.totalorder %s91, 0
    %s94 = sadd.s32 %s93, 1
    %s95 = scalar_select %p92, %s93, %s94
    %p98 = pneg %p92
    %p99 = scmp.eq.s32.totalorder %s10, 1
    %p100 = por %p98, %p99
    %p101 = scmp.ne.s32.totalorder %s93, %s96
    %p102 = scmp.eq.s32.totalorder %s10, 0
    %p103 = por %p101, %p102
    %p104 = scmp.ne.s32.totalorder %s93, %s96
    %p105 = scmp.eq.s32.totalorder %s15, 1
    %p106 = por %p104, %p105
    %p107 = scmp.ne.s32.totalorder %s96, %s97
    %p108 = scmp.eq.s32.totalorder %s15, 0
    %p109 = por %p107, %p108
    %p110 = scmp.ne.s32.totalorder %s96, %s97
    %p111 = scmp.eq.s32.totalorder %s16, 1
    %p112 = por %p110, %p111
    %p114 = scmp.ne.s32.totalorder %s97, %s113
    %p115 = scmp.eq.s32.totalorder %s16, 0
    %p116 = por %p114, %p115
    %p117 = scmp.le.s32.totalorder 1, %s10
    %p118 = scmp.lt.s32.totalorder %s10, 3
    %p119 = pnand %p117, %p118
    %p120 = pneg %p119
    // Predicated region
    $region9: #{generator_forward.30} parent=5 // pred_check
      _
    $region10: #{generator_forward.30} parent=5 // pred_check_branch
      %122 = sbr.rel (%p119) target = $region12
    $region11: #{generator_forward.30} parent=5 // pred_region
      %s123 = ssub.s32 %s10, 1
      // Predicated region
      $region13: #{generator_forward.30} parent=11 // pred_check
        %p124 = pneg %p57
      $region14: #{generator_forward.30} parent=11 // pred_check_branch
        %126 = sbr.rel (%p124) target = $region16
      $region15: #{generator_forward.30} parent=11 // pred_region
        _
      $region16: #{generator_forward.30} parent=11 // pred_fallthru
        _
    $region12: #{generator_forward.30} parent=5 // pred_fallthru
      _
    %p127 = scmp.lt.s32.totalorder %s10, 2
    // Predicated region
    $region17: #{generator_forward.30} parent=5 // pred_check
      %p128 = pneg %p127
    $region18: #{generator_forward.30} parent=5 // pred_check_branch
      %130 = sbr.rel (%p128) target = $region20
    $region19: #{generator_forward.30} parent=5 // pred_region
      // Predicated region
      $region21: #{generator_forward.30} parent=19 // pred_check
        %p131 = pneg %p30
      $region22: #{generator_forward.30} parent=19 // pred_check_branch
        %133 = sbr.rel (%p131) target = $region24
      $region23: #{generator_forward.30} parent=19 // pred_region
        %p134 = scmp.lt.s32.totalorder %s10, 1
        %s135 = scalar_select %p134, %s10, 1
        %s136 = smul.addr %s135, 4
        %s137 = smul.addr %s136, 8
        %s138 = scalar_lea.vmem %s0, %s137
      $region24: #{generator_forward.30} parent=19 // pred_fallthru
        _
    $region20: #{generator_forward.30} parent=5 // pred_fallthru
      _
    %p139 = scmp.le.s32.totalorder 1, %s10
    %p140 = scmp.lt.s32.totalorder %s10, 3
    %p141 = pnand %p139, %p140
    %p142 = pneg %p141
    // Predicated region
    $region25: #{generator_forward.30} parent=5 // pred_check
      _
    $region26: #{generator_forward.30} parent=5 // pred_check_branch
      %144 = sbr.rel (%p141) target = $region28
    $region27: #{generator_forward.30} parent=5 // pred_region
      %s145 = ssub.s32 %s10, 1
      %p146 = scmp.lt.s32.totalorder %s15, 1
      %s147 = scalar_select %p146, %s15, 1
      %s148 = smul.addr %s147, 4
      %s149 = smul.addr %s148, 8
      %s150 = scalar_lea.vmem %s0, %s149
      %p151 = pneg %p36
      %p152 = pneg %p33
      %p153 = pneg %p57
      %p154 = pneg %p54
      %p155 = pneg %p83
      %p156 = pneg %p80
      %p157 = scmp.lt.s32.totalorder %s15, 1
      %s158 = scalar_select %p157, %s15, 1
      %s159 = smul.addr %s158, 2
      %s160 = smul.addr %s159, 8
      %s161 = scalar_lea.vmem %s2, %s160
      %p162 = pneg %p109
      %p163 = pneg %p106
      %p164 = scmp.lt.s32.totalorder %s15, 1
      %s165 = scalar_select %p164, %s15, 1
      %s166 = smul.addr %s165, 2
      %s167 = smul.addr %s166, 2
      %s168 = scalar_lea.vmem %s3, %s167
      %p169 = scmp.lt.s32.totalorder %s15, 1
      %s170 = scalar_select %p169, %s15, 1
      %s171 = smul.addr %s170, 4
      %s172 = smul.addr %s171, 8
      %s173 = scalar_lea.vmem %s0, %s172
      %p174 = scmp.lt.s32.totalorder %s15, 1
      %s175 = scalar_select %p174, %s15, 1
      %s176 = smul.addr %s175, 2
      %s177 = smul.addr %s176, 8
      %s178 = scalar_lea.vmem %s2, %s177
      %p179 = scmp.lt.s32.totalorder %s15, 1
      %s180 = scalar_select %p179, %s15, 1
      %s181 = smul.addr %s180, 2
      %s182 = smul.addr %s181, 2
      %s183 = scalar_lea.vmem %s3, %s182
      %v185 = vld [vmem:[%s173] sm:$0xff]
      %v186 = vld [vmem:[%s173 + $0x8] sm:$0xff]
      %v187 = vld [vmem:[%s173 + $0x10] sm:$0x1]
      %v188 = vld [vmem:[%s173 + $0x18] sm:$0x1]
      %v189 = vpack.c.bf16 %v185, %v185
      %v190 = vpack.c.bf16 %v186, %v186
      %v191 = vld [vmem:[%s1] sm:$0xff]
      %v192 = vld [vmem:[%s1 + $0x8] sm:$0xff]
      %v193 = vld [vmem:[%s1 + $0x10] sm:$0xff]
      %v194 = vld [vmem:[%s1 + $0x18] sm:$0xff]
      %v195 = vld [vmem:[%s1 + $0x20] sm:$0xff]
      %v196 = vld [vmem:[%s1 + $0x28] sm:$0xff]
      %v197 = vld [vmem:[%s1 + $0x30] sm:$0xff]
      %v198 = vld [vmem:[%s1 + $0x38] sm:$0xff]
      %v199 = vld [vmem:[%s1 + $0x40] sm:$0xff]
      %v200 = vld [vmem:[%s1 + $0x48] sm:$0xff]
      %v201 = vld [vmem:[%s1 + $0x50] sm:$0xff]
      %v202 = vld [vmem:[%s1 + $0x58] sm:$0xff]
      %v203 = vld [vmem:[%s1 + $0x60] sm:$0xff]
      %v204 = vld [vmem:[%s1 + $0x68] sm:$0xff]
      %v205 = vld [vmem:[%s1 + $0x70] sm:$0xff]
      %v206 = vld [vmem:[%s1 + $0x78] sm:$0xff]
      %v207 = vld [vmem:[%s1 + $0x80] sm:$0xff]
      %v208 = vld [vmem:[%s1 + $0x88] sm:$0xff]
      %v209 = vpack.c.bf16 %v187, %v185
      %v210 = vpack.c.bf16 %v188, %v186
      %s211 = scalar_lea.vmem %s1, 144
      %v212 = vld [vmem:[%s211] sm:$0xff]
      %v213 = vld [vmem:[%s211 + $0x8] sm:$0xff]
      %v214 = vld [vmem:[%s211 + $0x10] sm:$0xff]
      %v215 = vld [vmem:[%s211 + $0x18] sm:$0xff]
      %v216 = vld [vmem:[%s211 + $0x20] sm:$0xff]
      %v217 = vld [vmem:[%s211 + $0x28] sm:$0xff]
      %v218 = vld [vmem:[%s211 + $0x30] sm:$0xff]
      %v219 = vld [vmem:[%s211 + $0x38] sm:$0xff]
      %v220 = vld [vmem:[%s211 + $0x40] sm:$0xff]
      %v221 = vld [vmem:[%s211 + $0x48] sm:$0xff]
      %v222 = vld [vmem:[%s211 + $0x50] sm:$0xff]
      %v223 = vld [vmem:[%s211 + $0x58] sm:$0xff]
      %v224 = vld [vmem:[%s211 + $0x60] sm:$0xff]
      %v225 = vld [vmem:[%s211 + $0x68] sm:$0xff]
      %v226 = vld [vmem:[%s211 + $0x70] sm:$0xff]
      %v227 = vld [vmem:[%s211 + $0x78] sm:$0xff]
      %v228 = vld [vmem:[%s211 + $0x80] sm:$0xff]
      %v229 = vld [vmem:[%s211 + $0x88] sm:$0xff]
      %v231 = vshrl.u32 %v209, 16
      %v233 = vshll.u32 %v209, 16
      %v235 = vrot.slane %v233, 1
      %v236 = vor.u32 %v231, %v235
      %v238 = vshrl.u32 %v210, 16
      %v240 = vshll.u32 %v210, 16
      %v242 = vrot.slane %v240, 1
      %v243 = vor.u32 %v238, %v242
      %v263 = vunpack.c.l.b16 %v212
      %v264 = vunpack.c.h.b16 %v212
      %v265 = vunpack.c.l.b16 %v213
      %v266 = vunpack.c.h.b16 %v213
      %v267 = vunpack.c.l.b16 %v214
      %v268 = vunpack.c.h.b16 %v214
      %v269 = vunpack.c.l.b16 %v215
      %v270 = vunpack.c.h.b16 %v215
      %v271 = vunpack.c.l.b16 %v216
      %v272 = vunpack.c.h.b16 %v216
      %v273 = vunpack.c.l.b16 %v217
      %v274 = vunpack.c.h.b16 %v217
      %v275 = vunpack.c.l.b16 %v218
      %v276 = vunpack.c.h.b16 %v218
      %v277 = vunpack.c.l.b16 %v219
      %v278 = vunpack.c.h.b16 %v219
      %v279 = vunpack.c.l.b16 %v220
      %v280 = vunpack.c.h.b16 %v220
      %v281 = vunpack.c.l.b16 %v221
      %v282 = vunpack.c.h.b16 %v221
      %v283 = vunpack.c.l.b16 %v222
      %v284 = vunpack.c.h.b16 %v222
      %v285 = vunpack.c.l.b16 %v223
      %v286 = vunpack.c.h.b16 %v223
      %v287 = vunpack.c.l.b16 %v224
      %v288 = vunpack.c.h.b16 %v224
      %v289 = vunpack.c.l.b16 %v225
      %v290 = vunpack.c.h.b16 %v225
      %v291 = vunpack.c.l.b16 %v226
      %v292 = vunpack.c.h.b16 %v226
      %v293 = vunpack.c.l.b16 %v227
      %v294 = vunpack.c.h.b16 %v227
      %v295 = vunpack.c.l.b16 %v228
      %v296 = vunpack.c.h.b16 %v228
      %v297 = vunpack.c.l.b16 %v229
      %v298 = vunpack.c.h.b16 %v229
      %v299 = vpack.c.b16 %v265, %v263
      %v300 = vpack.c.b16 %v266, %v264
      %v301 = vpack.c.b16 %v269, %v267
      %v302 = vpack.c.b16 %v270, %v268
      %v303 = vpack.c.b16 %v273, %v271
      %v304 = vpack.c.b16 %v274, %v272
      %v305 = vpack.c.b16 %v277, %v275
      %v306 = vpack.c.b16 %v278, %v276
      %v307 = vpack.c.b16 %v281, %v279
      %v308 = vpack.c.b16 %v282, %v280
      %v309 = vpack.c.b16 %v285, %v283
      %v310 = vpack.c.b16 %v286, %v284
      %v311 = vpack.c.b16 %v289, %v287
      %v312 = vpack.c.b16 %v290, %v288
      %v313 = vpack.c.b16 %v293, %v291
      %v314 = vpack.c.b16 %v294, %v292
      %v315 = vpack.c.b16 %v297, %v295
      %v316 = vpack.c.b16 %v298, %v296
      %vm335 = vcmask 130048
      %v337 = vsel %vm335, %v243, 0
      %339 = vmatprep.subr.bf16.mxu0 %v300
      %340 = vmatpush1.bf16.msra.mxu0 %v299
      %341 = vmatprep.subr.bf16.mxu0 %v302
      %342 = vmatpush1.bf16.msra.mxu0 %v301
      %343 = vmatprep.subr.bf16.mxu0 %v304
      %344 = vmatpush1.bf16.msra.mxu0 %v303
      %345 = vmatprep.subr.bf16.mxu0 %v306
      %346 = vmatpush1.bf16.msra.mxu0 %v305
      %347 = vmatprep.subr.bf16.mxu0 %v308
      %348 = vmatpush1.bf16.msra.mxu0 %v307
      %349 = vmatprep.subr.bf16.mxu0 %v310
      %350 = vmatpush1.bf16.msra.mxu0 %v309
      %351 = vmatprep.subr.bf16.mxu0 %v312
      %352 = vmatpush1.bf16.msra.mxu0 %v311
      %353 = vmatprep.subr.bf16.mxu0 %v314
      %354 = vmatpush1.bf16.msra.mxu0 %v313
      %355 = vmatprep.subr.bf16.mxu0 %v316
      %356 = vmatpush1.bf16.msra.mxu0 %v315
      %357 = vmatprep.subr.bf16.mxu0 0
      %358 = vmatpush1.bf16.msra.mxu0 0
      %359 = vmatprep.subr.bf16.mxu0 0
      %360 = vmatpush1.bf16.msra.mxu0 0
      %361 = vmatprep.subr.bf16.mxu0 0
      %362 = vmatpush1.bf16.msra.mxu0 0
      %363 = vmatprep.subr.bf16.mxu0 0
      %364 = vmatpush1.bf16.msra.mxu0 0
      %365 = vmatprep.subr.bf16.mxu0 0
      %366 = vmatpush1.bf16.msra.mxu0 0
      %367 = vmatprep.subr.bf16.mxu0 0
      %368 = vmatpush1.bf16.msra.mxu0 0
      %369 = vmatprep.subr.bf16.mxu0 0
      %370 = vmatpush1.bf16.msra.mxu0 0
      %371 = vmatprep.mubr.bf16.mxu0 %v337
      %372 = vmatmul.mubr.bf16.gmra.mrb[0].mxu0 %v236
      %v373 = vpop.f32.mrb[0].mxu0
      %v374 = vadd.f32 0.0, %v373
      %v375 = vpop.f32.mrb[0].mxu0
      %v376 = vadd.f32 0.0, %v375
      %v377 = vpop.f32.mrb[0].mxu0
      %v378 = vpop.f32.mrb[0].mxu0
      %379 = vdwg.mxu0
      %v398 = vunpack.c.l.b16 %v191
      %v399 = vunpack.c.h.b16 %v191
      %v400 = vunpack.c.l.b16 %v192
      %v401 = vunpack.c.h.b16 %v192
      %v402 = vunpack.c.l.b16 %v193
      %v403 = vunpack.c.h.b16 %v193
      %v404 = vunpack.c.l.b16 %v194
      %v405 = vunpack.c.h.b16 %v194
      %v406 = vunpack.c.l.b16 %v195
      %v407 = vunpack.c.h.b16 %v195
      %v408 = vunpack.c.l.b16 %v196
      %v409 = vunpack.c.h.b16 %v196
      %v410 = vunpack.c.l.b16 %v197
      %v411 = vunpack.c.h.b16 %v197
      %v412 = vunpack.c.l.b16 %v198
      %v413 = vunpack.c.h.b16 %v198
      %v414 = vunpack.c.l.b16 %v199
      %v415 = vunpack.c.h.b16 %v199
      %v416 = vunpack.c.l.b16 %v200
      %v417 = vunpack.c.h.b16 %v200
      %v418 = vunpack.c.l.b16 %v201
      %v419 = vunpack.c.h.b16 %v201
      %v420 = vunpack.c.l.b16 %v202
      %v421 = vunpack.c.h.b16 %v202
      %v422 = vunpack.c.l.b16 %v203
      %v423 = vunpack.c.h.b16 %v203
      %v424 = vunpack.c.l.b16 %v204
      %v425 = vunpack.c.h.b16 %v204
      %v426 = vunpack.c.l.b16 %v205
      %v427 = vunpack.c.h.b16 %v205
      %v428 = vunpack.c.l.b16 %v206
      %v429 = vunpack.c.h.b16 %v206
      %v430 = vunpack.c.l.b16 %v207
      %v431 = vunpack.c.h.b16 %v207
      %v432 = vunpack.c.l.b16 %v208
      %v433 = vunpack.c.h.b16 %v208
      %v434 = vpack.c.b16 %v400, %v398
      %v435 = vpack.c.b16 %v401, %v399
      %v436 = vpack.c.b16 %v404, %v402
      %v437 = vpack.c.b16 %v405, %v403
      %v438 = vpack.c.b16 %v408, %v406
      %v439 = vpack.c.b16 %v409, %v407
      %v440 = vpack.c.b16 %v412, %v410
      %v441 = vpack.c.b16 %v413, %v411
      %v442 = vpack.c.b16 %v416, %v414
      %v443 = vpack.c.b16 %v417, %v415
      %v444 = vpack.c.b16 %v420, %v418
      %v445 = vpack.c.b16 %v421, %v419
      %v446 = vpack.c.b16 %v424, %v422
      %v447 = vpack.c.b16 %v425, %v423
      %v448 = vpack.c.b16 %v428, %v426
      %v449 = vpack.c.b16 %v429, %v427
      %v450 = vpack.c.b16 %v432, %v430
      %v451 = vpack.c.b16 %v433, %v431
      %v471 = vsel %vm335, %v190, 0
      %473 = vmatprep.subr.bf16.mxu0 %v435
      %474 = vmatpush1.bf16.msra.mxu0 %v434
      %475 = vmatprep.subr.bf16.mxu0 %v437
      %476 = vmatpush1.bf16.msra.mxu0 %v436
      %477 = vmatprep.subr.bf16.mxu0 %v439
      %478 = vmatpush1.bf16.msra.mxu0 %v438
      %479 = vmatprep.subr.bf16.mxu0 %v441
      %480 = vmatpush1.bf16.msra.mxu0 %v440
      %481 = vmatprep.subr.bf16.mxu0 %v443
      %482 = vmatpush1.bf16.msra.mxu0 %v442
      %483 = vmatprep.subr.bf16.mxu0 %v445
      %484 = vmatpush1.bf16.msra.mxu0 %v444
      %485 = vmatprep.subr.bf16.mxu0 %v447
      %486 = vmatpush1.bf16.msra.mxu0 %v446
      %487 = vmatprep.subr.bf16.mxu0 %v449
      %488 = vmatpush1.bf16.msra.mxu0 %v448
      %489 = vmatprep.subr.bf16.mxu0 %v451
      %490 = vmatpush1.bf16.msra.mxu0 %v450
      %491 = vmatprep.subr.bf16.mxu0 0
      %492 = vmatpush1.bf16.msra.mxu0 0
      %493 = vmatprep.subr.bf16.mxu0 0
      %494 = vmatpush1.bf16.msra.mxu0 0
      %495 = vmatprep.subr.bf16.mxu0 0
      %496 = vmatpush1.bf16.msra.mxu0 0
      %497 = vmatprep.subr.bf16.mxu0 0
      %498 = vmatpush1.bf16.msra.mxu0 0
      %499 = vmatprep.subr.bf16.mxu0 0
      %500 = vmatpush1.bf16.msra.mxu0 0
      %501 = vmatprep.subr.bf16.mxu0 0
      %502 = vmatpush1.bf16.msra.mxu0 0
      %503 = vmatprep.subr.bf16.mxu0 0
      %504 = vmatpush1.bf16.msra.mxu0 0
      %505 = vmatprep.mubr.bf16.mxu0 %v471
      %506 = vmatmul.mubr.bf16.gmra.mrb[0].mxu0 %v189
      %v507 = vpop.f32.mrb[0].mxu0
      %v508 = vadd.f32 %v374, %v507
      %v509 = vpop.f32.mrb[0].mxu0
      %v510 = vadd.f32 %v376, %v509
      %v511 = vpop.f32.mrb[0].mxu0
      %v512 = vpop.f32.mrb[0].mxu0
      %513 = vdwg.mxu0
      %514 = vst [vmem:[%s178] sm:$0xff] %v508
      %515 = vst [vmem:[%s178 + $0x8] sm:$0xff] %v510
      %v516 = vrot.slane %v508, 4
      %v517 = vadd.f32 %v508, %v516
      %v518 = vrot.slane %v517, 2
      %v519 = vadd.f32 %v517, %v518
      %v520 = vrot.slane %v519, 1
      %v521 = vadd.f32 %v519, %v520
      %v522 = vrot.slane %v510, 4
      %v523 = vadd.f32 %v510, %v522
      %v524 = vrot.slane %v523, 2
      %v525 = vadd.f32 %v523, %v524
      %v526 = vrot.slane %v525, 1
      %v527 = vadd.f32 %v525, %v526
      %v528 = vmul.f32 %v508, %v508
      %v529 = vmul.f32 %v510, %v510
      %v530 = vrot.slane %v528, 4
      %v531 = vadd.f32 %v528, %v530
      %v532 = vrot.slane %v531, 2
      %v533 = vadd.f32 %v531, %v532
      %v534 = vrot.slane %v533, 1
      %v535 = vadd.f32 %v533, %v534
      %v536 = vrot.slane %v529, 4
      %v537 = vadd.f32 %v529, %v536
      %v538 = vrot.slane %v537, 2
      %v539 = vadd.f32 %v537, %v538
      %v540 = vrot.slane %v539, 1
      %v541 = vadd.f32 %v539, %v540
      %vm542 = vcmask 1040384
      %v543 = vsel %vm542, %v521, %v535
      %v544 = vsel %vm542, %v527, %v541
      %v547 = vcombine.low %v543, %v544
      %v549 = vunpack.c.l.s4 1983009808
      %v550 = vunpack.c.0.s8 %v549
      %v551 = vlaneseq
      %v552 = vshrl.u32 %v551, 7
      %v553 = vsub.s32 %v550, %v552
      %v554 = vrot.slane %v547, %v553
      %556 = vst [vmem:[%s183] sm:$0xf] %v554
      %p557 = scmp.lt.s32.totalorder %s15, 1
      %s558 = scalar_select %p557, %s15, 1
      %s559 = smul.addr %s558, 2
      %s560 = smul.addr %s559, 8
      %s561 = scalar_lea.vmem %s2, %s560
      %p562 = scmp.lt.s32.totalorder %s15, 1
      %s563 = scalar_select %p562, %s15, 1
      %s564 = smul.addr %s563, 2
      %s565 = smul.addr %s564, 2
      %s566 = scalar_lea.vmem %s3, %s565
      // Predicated region
      $region29: #{generator_forward.30} parent=27 // pred_check
        %p567 = pneg %p80
      $region30: #{generator_forward.30} parent=27 // pred_check_branch
        %569 = sbr.rel (%p567) target = $region32
      $region31: #{generator_forward.30} parent=27 // pred_region
        _
      $region32: #{generator_forward.30} parent=27 // pred_fallthru
        _
      // Predicated region
      $region33: #{generator_forward.30} parent=27 // pred_check
        %p570 = pneg %p106
      $region34: #{generator_forward.30} parent=27 // pred_check_branch
        %572 = sbr.rel (%p570) target = $region36
      $region35: #{generator_forward.30} parent=27 // pred_region
        _
      $region36: #{generator_forward.30} parent=27 // pred_fallthru
        _
    $region28: #{generator_forward.30} parent=5 // pred_fallthru
      _
    %p573 = scmp.le.s32.totalorder 2, %s10
    // Predicated region
    $region37: #{generator_forward.30} parent=5 // pred_check
      %p574 = pneg %p573
    $region38: #{generator_forward.30} parent=5 // pred_check_branch
      %576 = sbr.rel (%p574) target = $region40
    $region39: #{generator_forward.30} parent=5 // pred_region
      %s577 = ssub.s32 %s10, 2
      // Predicated region
      $region41: #{generator_forward.30} parent=39 // pred_check
        %p578 = pneg %p86
      $region42: #{generator_forward.30} parent=39 // pred_check_branch
        %580 = sbr.rel (%p578) target = $region44
      $region43: #{generator_forward.30} parent=39 // pred_region
        %p581 = scmp.lt.s32.totalorder %s16, 1
        %s582 = scalar_select %p581, %s16, 1
        %s583 = smul.addr %s582, 2
        %s584 = smul.addr %s583, 8
        %s585 = scalar_lea.vmem %s2, %s584
      $region44: #{generator_forward.30} parent=39 // pred_fallthru
        _
      // Predicated region
      $region45: #{generator_forward.30} parent=39 // pred_check
        %p586 = pneg %p112
      $region46: #{generator_forward.30} parent=39 // pred_check_branch
        %588 = sbr.rel (%p586) target = $region48
      $region47: #{generator_forward.30} parent=39 // pred_region
        %p589 = scmp.lt.s32.totalorder %s16, 1
        %s590 = scalar_select %p589, %s16, 1
        %s591 = smul.addr %s590, 2
        %s592 = smul.addr %s591, 2
        %s593 = scalar_lea.vmem %s3, %s592
      $region48: #{generator_forward.30} parent=39 // pred_fallthru
        _
    $region40: #{generator_forward.30} parent=5 // pred_fallthru
      _
  $region6: #{generator_forward.30} parent=0 // loop_footer
    %s14 = sadd.s32 1, %s10
  $region7: #{generator_forward.30} parent=0 // loop_footer_branch
    %9 = sbr.rel target = $region3
  $region8: #{generator_forward.30} parent=0 // loop_exit
    _

// kernel: tile.199
$region0: #{tile.199}
  #allocation0 [shape = 's32[1]{0}', space=sflag, size = 0x4, scoped, tag = 'scoped memory for tile.199']
  %s0 = inlined_call_operand.vmem [shape: f32[8], index: 0, kind: input, shape index: {}]
  %s1 = inlined_call_operand.vmem [shape: f32[22,8], index: 1, kind: output, shape index: {}]
  // Predicated region
  $region2: #{tile.199} parent=0 // pred_check
    _
  $region3: #{tile.199} parent=0 // pred_check_branch
    %3 = sbr.rel (0) target = $region5
  $region4: #{tile.199} parent=0 // pred_region
    _
  $region5: #{tile.199} parent=0 // pred_fallthru
    _
  %v4 = vld [vmem:[%s0] ss:$0 sm:$0xff]
  %5 = vst [vmem:[%s1] sm:$0xff] %v4
  %s6 = scalar_lea.vmem %s1, 8
  %7 = vst [vmem:[%s6] sm:$0xff] %v4
  %s8 = scalar_lea.vmem %s1, 16
  %9 = vst [vmem:[%s8] sm:$0xff] %v4

// kernel: tile.200
$region0: #{tile.200}
  %s0 = inlined_call_operand.vmem [shape: f32[22,8], index: 0, kind: input, shape index: {}]
  %s1 = inlined_call_operand.vmem [shape: f32[1,176], index: 1, kind: output, shape index: {}]
  $region1: #{tile.200} parent=0
    #allocation0 [shape = 'u8[8192]{0}', space=vmem, size = 0x2000, scoped, tag = 'scoped mem for output reshape']
    %s2 = smov 3
    %v3 = vld [vmem:[%s0] ss:$16 sm:%s2]
    %vm4 = vcmask 64512
    %5 = vst.msk [vmem:[#allocation0] ss:$8 sm:$0x3] %vm4, %v3
    %s6 = scalar_lea.vmem %s0, 15
    %v7 = vld [vmem:[%s6] sm:$0x1]
    %8 = vrot.lane.b32.xlu0 %v7, 120
    %v9 = vpop.permute.xlu0 %8
    %vm10 = vcmask 1048512
    %11 = vst.msk [vmem:[#allocation0] sm:$0x1] %vm10, %v9
    %s12 = scalar_lea.vmem %s0, 14
    %v13 = vld [vmem:[%s12] sm:$0x1]
    %14 = vrot.lane.b32.xlu0 %v13, 112
    %v15 = vpop.permute.xlu0 %14
    %vm16 = vcmask 982912
    %17 = vst.msk [vmem:[#allocation0] sm:$0x1] %vm16, %v15
    %s18 = scalar_lea.vmem %s0, 13
    %v19 = vld [vmem:[%s18] sm:$0x1]
    %20 = vrot.lane.b32.xlu0 %v19, 104
    %v21 = vpop.permute.xlu0 %20
    %vm22 = vcmask 917312
    %23 = vst.msk [vmem:[#allocation0] sm:$0x1] %vm22, %v21
    %s24 = scalar_lea.vmem %s0, 12
    %v25 = vld [vmem:[%s24] sm:$0x1]
    %26 = vrot.lane.b32.xlu0 %v25, 96
    %v27 = vpop.permute.xlu0 %26
    %vm28 = vcmask 851712
    %29 = vst.msk [vmem:[#allocation0] sm:$0x1] %vm28, %v27
    %s30 = scalar_lea.vmem %s0, 11
    %v31 = vld [vmem:[%s30] sm:$0x1]
    %32 = vrot.lane.b32.xlu0 %v31, 88
    %v33 = vpop.permute.xlu0 %32
    %vm34 = vcmask 786112
    %35 = vst.msk [vmem:[#allocation0] sm:$0x1] %vm34, %v33
    %s36 = scalar_lea.vmem %s0, 10
    %v37 = vld [vmem:[%s36] sm:$0x1]
    %38 = vrot.lane.b32.xlu0 %v37, 80
    %v39 = vpop.permute.xlu0 %38
    %vm40 = vcmask 720512
    %41 = vst.msk [vmem:[#allocation0] sm:$0x1] %vm40, %v39
    %s42 = scalar_lea.vmem %s0, 9
    %v43 = vld [vmem:[%s42] sm:$0x1]
    %44 = vrot.lane.b32.xlu0 %v43, 72
    %v45 = vpop.permute.xlu0 %44
    %vm46 = vcmask 654912
    %47 = vst.msk [vmem:[#allocation0] sm:$0x1] %vm46, %v45
    %s48 = scalar_lea.vmem %s0, 8
    %v49 = vld [vmem:[%s48] sm:$0x1]
    %50 = vrot.lane.b32.xlu0 %v49, 64
    %v51 = vpop.permute.xlu0 %50
    %vm52 = vcmask 589312
    %53 = vst.msk [vmem:[#allocation0] sm:$0x1] %vm52, %v51
    %s54 = scalar_lea.vmem %s0, 7
    %v55 = vld [vmem:[%s54] sm:$0x1]
    %56 = vrot.lane.b32.xlu0 %v55, 56
    %v57 = vpop.permute.xlu0 %56
    %vm58 = vcmask 523712
    %59 = vst.msk [vmem:[#allocation0] sm:$0x1] %vm58, %v57
    %s60 = scalar_lea.vmem %s0, 6
    %v61 = vld [vmem:[%s60] sm:$0x1]
    %62 = vrot.lane.b32.xlu0 %v61, 48
    %v63 = vpop.permute.xlu0 %62
    %vm64 = vcmask 458112
    %65 = vst.msk [vmem:[#allocation0] sm:$0x1] %vm64, %v63
    %s66 = scalar_lea.vmem %s0, 5
    %s67 = smov 3
    %v68 = vld [vmem:[%s66] ss:$16 sm:%s67]
    %69 = vrot.lane.b32.xlu0 %v68, 40
    %v70 = vpop.permute.xlu0 %69
    %vm71 = vcmask 392512
    %72 = vst.msk [vmem:[#allocation0] ss:$8 sm:$0x3] %vm71, %v70
    %s73 = scalar_lea.vmem %s0, 4
    %s74 = smov 3
    %v75 = vld [vmem:[%s73] ss:$16 sm:%s74]
    %76 = vrot.lane.b32.xlu0 %v75, 32
    %v77 = vpop.permute.xlu0 %76
    %vm78 = vcmask 326912
    %79 = vst.msk [vmem:[#allocation0] ss:$8 sm:$0x3] %vm78, %v77
    %s80 = scalar_lea.vmem %s0, 3
    %s81 = smov 3
    %v82 = vld [vmem:[%s80] ss:$16 sm:%s81]
    %83 = vrot.lane.b32.xlu0 %v82, 24
    %v84 = vpop.permute.xlu0 %83
    %vm85 = vcmask 261312
    %86 = vst.msk [vmem:[#allocation0] ss:$8 sm:$0x3] %vm85, %v84
    %s87 = scalar_lea.vmem %s0, 2
    %s88 = smov 3
    %v89 = vld [vmem:[%s87] ss:$16 sm:%s88]
    %90 = vrot.lane.b32.xlu0 %v89, 16
    %v91 = vpop.permute.xlu0 %90
    %vm92 = vcmask 195712
    %93 = vst.msk [vmem:[#allocation0] ss:$8 sm:$0x3] %vm92, %v91
    %s94 = scalar_lea.vmem %s0, 1
    %s95 = smov 3
    %v96 = vld [vmem:[%s94] ss:$16 sm:%s95]
    %97 = vrot.lane.b32.xlu0 %v96, 8
    %v98 = vpop.permute.xlu0 %97
    %vm99 = vcmask 130112
    %100 = vst.msk [vmem:[#allocation0] ss:$8 sm:$0x3] %vm99, %v98
    %s102 = sshllo.u32 0, 1
    %v104 = vld [vmem:[#allocation0] sm:%s102]
    %s105 = sshllo.u32 0, 1
    %106 = vst [vmem:[%s1] sm:%s105] %v104
    %s107 = scalar_lea.vmem [#allocation0], 8
    %v108 = vld [vmem:[%s107] sm:%s102]
    %s109 = sshllo.u32 0, 1
    %s110 = scalar_lea.vmem %s1, 1
    %111 = vst [vmem:[%s110] sm:%s109] %v108

// kernel: tile.194
$region0: #{tile.194}
  #allocation0 [shape = 's32[1]{0}', space=sflag, size = 0x4, scoped, tag = 'scoped memory for tile.194']
  %s0 = inlined_call_operand.vmem [shape: f32[4], index: 0, kind: input, shape index: {}]
  %s1 = inlined_call_operand.vmem [shape: f32[16,4], index: 1, kind: output, shape index: {}]
  // Predicated region
  $region2: #{tile.194} parent=0 // pred_check
    _
  $region3: #{tile.194} parent=0 // pred_check_branch
    %3 = sbr.rel (0) target = $region5
  $region4: #{tile.194} parent=0 // pred_region
    _
  $region5: #{tile.194} parent=0 // pred_fallthru
    _
  %v4 = vld [vmem:[%s0] ss:$0 sm:$0xff]
  %5 = vst [vmem:[%s1] sm:$0xff] %v4
  %s6 = scalar_lea.vmem %s1, 8
  %7 = vst [vmem:[%s6] sm:$0xff] %v4

// kernel: tile.195
$region0: #{tile.195}
  %s0 = inlined_call_operand.vmem [shape: f32[16,4], index: 0, kind: input, shape index: {}]
  %s1 = inlined_call_operand.vmem [shape: f32[1,64], index: 1, kind: output, shape index: {}]
  $region1: #{tile.195} parent=0
    #allocation0 [shape = 'u8[4096]{0}', space=vmem, size = 0x1000, scoped, tag = 'scoped mem for output reshape']
    %v2 = vld [vmem:[%s0] sm:$0x1]
    %vm3 = vcmask 31744
    %4 = vst.msk [vmem:[#allocation0] sm:$0x1] %vm3, %v2
    %s5 = scalar_lea.vmem %s0, 15
    %v6 = vld [vmem:[%s5] sm:$0x1]
    %7 = vrot.lane.b32.xlu0 %v6, 60
    %v8 = vpop.permute.xlu0 %7
    %vm9 = vcmask 523744
    %10 = vst.msk [vmem:[#allocation0] sm:$0x1] %vm9, %v8
    %s11 = scalar_lea.vmem %s0, 14
    %v12 = vld [vmem:[%s11] sm:$0x1]
    %13 = vrot.lane.b32.xlu0 %v12, 56
    %v14 = vpop.permute.xlu0 %13
    %vm15 = vcmask 490944
    %16 = vst.msk [vmem:[#allocation0] sm:$0x1] %vm15, %v14
    %s17 = scalar_lea.vmem %s0, 13
    %v18 = vld [vmem:[%s17] sm:$0x1]
    %19 = vrot.lane.b32.xlu0 %v18, 52
    %v20 = vpop.permute.xlu0 %19
    %vm21 = vcmask 458144
    %22 = vst.msk [vmem:[#allocation0] sm:$0x1] %vm21, %v20
    %s23 = scalar_lea.vmem %s0, 12
    %v24 = vld [vmem:[%s23] sm:$0x1]
    %25 = vrot.lane.b32.xlu0 %v24, 48
    %v26 = vpop.permute.xlu0 %25
    %vm27 = vcmask 425344
    %28 = vst.msk [vmem:[#allocation0] sm:$0x1] %vm27, %v26
    %s29 = scalar_lea.vmem %s0, 11
    %v30 = vld [vmem:[%s29] sm:$0x1]
    %31 = vrot.lane.b32.xlu0 %v30, 44
    %v32 = vpop.permute.xlu0 %31
    %vm33 = vcmask 392544
    %34 = vst.msk [vmem:[#allocation0] sm:$0x1] %vm33, %v32
    %s35 = scalar_lea.vmem %s0, 10
    %v36 = vld [vmem:[%s35] sm:$0x1]
    %37 = vrot.lane.b32.xlu0 %v36, 40
    %v38 = vpop.permute.xlu0 %37
    %vm39 = vcmask 359744
    %40 = vst.msk [vmem:[#allocation0] sm:$0x1] %vm39, %v38
    %s41 = scalar_lea.vmem %s0, 9
    %v42 = vld [vmem:[%s41] sm:$0x1]
    %43 = vrot.lane.b32.xlu0 %v42, 36
    %v44 = vpop.permute.xlu0 %43
    %vm45 = vcmask 326944
    %46 = vst.msk [vmem:[#allocation0] sm:$0x1] %vm45, %v44
    %s47 = scalar_lea.vmem %s0, 8
    %v48 = vld [vmem:[%s47] sm:$0x1]
    %49 = vrot.lane.b32.xlu0 %v48, 32
    %v50 = vpop.permute.xlu0 %49
    %vm51 = vcmask 294144
    %52 = vst.msk [vmem:[#allocation0] sm:$0x1] %vm51, %v50
    %s53 = scalar_lea.vmem %s0, 7
    %v54 = vld [vmem:[%s53] sm:$0x1]
    %55 = vrot.lane.b32.xlu0 %v54, 28
    %v56 = vpop.permute.xlu0 %55
    %vm57 = vcmask 261344
    %58 = vst.msk [vmem:[#allocation0] sm:$0x1] %vm57, %v56
    %s59 = scalar_lea.vmem %s0, 6
    %v60 = vld [vmem:[%s59] sm:$0x1]
    %61 = vrot.lane.b32.xlu0 %v60, 24
    %v62 = vpop.permute.xlu0 %61
    %vm63 = vcmask 228544
    %64 = vst.msk [vmem:[#allocation0] sm:$0x1] %vm63, %v62
    %s65 = scalar_lea.vmem %s0, 5
    %v66 = vld [vmem:[%s65] sm:$0x1]
    %67 = vrot.lane.b32.xlu0 %v66, 20
    %v68 = vpop.permute.xlu0 %67
    %vm69 = vcmask 195744
    %70 = vst.msk [vmem:[#allocation0] sm:$0x1] %vm69, %v68
    %s71 = scalar_lea.vmem %s0, 4
    %v72 = vld [vmem:[%s71] sm:$0x1]
    %73 = vrot.lane.b32.xlu0 %v72, 16
    %v74 = vpop.permute.xlu0 %73
    %vm75 = vcmask 162944
    %76 = vst.msk [vmem:[#allocation0] sm:$0x1] %vm75, %v74
    %s77 = scalar_lea.vmem %s0, 3
    %v78 = vld [vmem:[%s77] sm:$0x1]
    %79 = vrot.lane.b32.xlu0 %v78, 12
    %v80 = vpop.permute.xlu0 %79
    %vm81 = vcmask 130144
    %82 = vst.msk [vmem:[#allocation0] sm:$0x1] %vm81, %v80
    %s83 = scalar_lea.vmem %s0, 2
    %v84 = vld [vmem:[%s83] sm:$0x1]
    %85 = vrot.lane.b32.xlu0 %v84, 8
    %v86 = vpop.permute.xlu0 %85
    %vm87 = vcmask 97344
    %88 = vst.msk [vmem:[#allocation0] sm:$0x1] %vm87, %v86
    %s89 = scalar_lea.vmem %s0, 1
    %v90 = vld [vmem:[%s89] sm:$0x1]
    %91 = vrot.lane.b32.xlu0 %v90, 4
    %v92 = vpop.permute.xlu0 %91
    %vm93 = vcmask 64544
    %94 = vst.msk [vmem:[#allocation0] sm:$0x1] %vm93, %v92
    %s96 = sshllo.u32 0, 1
    %v98 = vld [vmem:[#allocation0] sm:%s96]
    %s99 = sshllo.u32 0, 1
    %100 = vst [vmem:[%s1] sm:%s99] %v98

// kernel: generator_forward.31
$region0: #{generator_forward.31}
  #allocation0 [shape = 'u32[]', space=smem, size = 0x4, offset = 0x4, fixed_abs, tag = 'smem constant byte address 0x4 - core index']
  #allocation1 [shape = 'u32[144,128]{1,0:T(1,128)}', space=vmem, size = 0x12000, scoped, tag = 'internal scratch']
  %s0 = inlined_call_operand.vmem [shape: f32[2,22,176], index: 0, kind: input, shape index: {}]
  %s1 = inlined_call_operand.vmem [shape: f32[1,176], index: 1, kind: input, shape index: {}]
  %s2 = inlined_call_operand.vmem [shape: f32[1,176], index: 2, kind: input, shape index: {}]
  %s3 = inlined_call_operand.vmem [shape: bf16[7,176,64], index: 3, kind: input, shape index: {}]
  %s4 = inlined_call_operand.vmem [shape: f32[1,64], index: 4, kind: input, shape index: {}]
  %s5 = inlined_call_operand.vmem [shape: f32[2,16,64], index: 5, kind: output, shape index: {}]
  %s6 = sld [smem:[#allocation0]]
  $region53: #{generator_forward.31} parent=0
    _
  %s8 = ssub.s32 1, %s6
  %s9 = scalar_select 0, %s8, %s6
  loop: start=0, step=1, limit=4
  $region2: #{generator_forward.31} parent=0 // loop_pre_header
    _
  $region3: #{generator_forward.31} parent=0 // loop_header
    %s11 = sphi 0, %s15
    %p12 = scmp.ge.s32.totalorder %s11, 4
    %s21 = sphi 0, %s23
    %s24 = sphi 0, %s21
    %s25 = sphi 0, %s24
    %s41 = sphi 0, %s25
    %s45 = sphi 0, %s45
    %s47 = sphi 0, %s45
    %s48 = sphi 0, %s47
    %s62 = sphi 0, %s48
    %s66 = sphi 0, %s66
    %s68 = sphi 0, %s66
    %s69 = sphi 0, %s68
    %s83 = sphi 0, %s69
    %s87 = sphi 0, %s87
    %s89 = sphi 0, %s87
    %s90 = sphi 0, %s89
    %s104 = sphi 0, %s90
    %s108 = sphi 0, %s108
    %s110 = sphi 0, %s108
    %s111 = sphi 0, %s110
    %s125 = sphi 0, %s111
    %s131 = sphi 0, %s133
    %s134 = sphi 0, %s131
    %s135 = sphi 0, %s134
    %s151 = sphi 0, %s135
  $region4: #{generator_forward.31} parent=0 // loop_header_branch
    %14 = sbr.rel (%p12) target = $region8
  $region5: #{generator_forward.31} parent=0 // loop_body
    %s16 = ssub.s32 %s11, 1
    %s17 = ssub.s32 %s11, 2
    %s18 = sadd.s32 %s11, 1
    %s19 = ssub.s32 %s11, %s18
    %p20 = scmp.eq.s32.totalorder %s19, 0
    %s22 = sadd.s32 %s21, 1
    %s23 = scalar_select %p20, %s21, %s22
    %p26 = pneg %p20
    %p27 = scmp.eq.s32.totalorder %s11, 1
    %p28 = por %p26, %p27
    %p29 = scmp.ne.s32.totalorder %s21, %s24
    %p30 = scmp.eq.s32.totalorder %s11, 0
    %p31 = por %p29, %p30
    %p32 = scmp.ne.s32.totalorder %s21, %s24
    %p33 = scmp.eq.s32.totalorder %s16, 1
    %p34 = por %p32, %p33
    %p35 = scmp.ne.s32.totalorder %s24, %s25
    %p36 = scmp.eq.s32.totalorder %s16, 0
    %p37 = por %p35, %p36
    %p38 = scmp.ne.s32.totalorder %s24, %s25
    %p39 = scmp.eq.s32.totalorder %s17, 1
    %p40 = por %p38, %p39
    %p42 = scmp.ne.s32.totalorder %s25, %s41
    %p43 = scmp.eq.s32.totalorder %s17, 0
    %p44 = por %p42, %p43
    %s46 = sadd.s32 %s45, 1
    %p49 = scmp.eq.s32.totalorder %s11, 1
    %p50 = scmp.ne.s32.totalorder %s45, %s47
    %p51 = scmp.eq.s32.totalorder %s11, 0
    %p52 = por %p50, %p51
    %p53 = scmp.ne.s32.totalorder %s45, %s47
    %p54 = scmp.eq.s32.totalorder %s16, 1
    %p55 = por %p53, %p54
    %p56 = scmp.ne.s32.totalorder %s47, %s48
    %p57 = scmp.eq.s32.totalorder %s16, 0
    %p58 = por %p56, %p57
    %p59 = scmp.ne.s32.totalorder %s47, %s48
    %p60 = scmp.eq.s32.totalorder %s17, 1
    %p61 = por %p59, %p60
    %p63 = scmp.ne.s32.totalorder %s48, %s62
    %p64 = scmp.eq.s32.totalorder %s17, 0
    %p65 = por %p63, %p64
    %s67 = sadd.s32 %s66, 1
    %p70 = scmp.eq.s32.totalorder %s11, 1
    %p71 = scmp.ne.s32.totalorder %s66, %s68
    %p72 = scmp.eq.s32.totalorder %s11, 0
    %p73 = por %p71, %p72
    %p74 = scmp.ne.s32.totalorder %s66, %s68
    %p75 = scmp.eq.s32.totalorder %s16, 1
    %p76 = por %p74, %p75
    %p77 = scmp.ne.s32.totalorder %s68, %s69
    %p78 = scmp.eq.s32.totalorder %s16, 0
    %p79 = por %p77, %p78
    %p80 = scmp.ne.s32.totalorder %s68, %s69
    %p81 = scmp.eq.s32.totalorder %s17, 1
    %p82 = por %p80, %p81
    %p84 = scmp.ne.s32.totalorder %s69, %s83
    %p85 = scmp.eq.s32.totalorder %s17, 0
    %p86 = por %p84, %p85
    %s88 = sadd.s32 %s87, 1
    %p91 = scmp.eq.s32.totalorder %s11, 1
    %p92 = scmp.ne.s32.totalorder %s87, %s89
    %p93 = scmp.eq.s32.totalorder %s11, 0
    %p94 = por %p92, %p93
    %p95 = scmp.ne.s32.totalorder %s87, %s89
    %p96 = scmp.eq.s32.totalorder %s16, 1
    %p97 = por %p95, %p96
    %p98 = scmp.ne.s32.totalorder %s89, %s90
    %p99 = scmp.eq.s32.totalorder %s16, 0
    %p100 = por %p98, %p99
    %p101 = scmp.ne.s32.totalorder %s89, %s90
    %p102 = scmp.eq.s32.totalorder %s17, 1
    %p103 = por %p101, %p102
    %p105 = scmp.ne.s32.totalorder %s90, %s104
    %p106 = scmp.eq.s32.totalorder %s17, 0
    %p107 = por %p105, %p106
    %s109 = sadd.s32 %s108, 1
    %p112 = scmp.eq.s32.totalorder %s11, 1
    %p113 = scmp.ne.s32.totalorder %s108, %s110
    %p114 = scmp.eq.s32.totalorder %s11, 0
    %p115 = por %p113, %p114
    %p116 = scmp.ne.s32.totalorder %s108, %s110
    %p117 = scmp.eq.s32.totalorder %s16, 1
    %p118 = por %p116, %p117
    %p119 = scmp.ne.s32.totalorder %s110, %s111
    %p120 = scmp.eq.s32.totalorder %s16, 0
    %p121 = por %p119, %p120
    %p122 = scmp.ne.s32.totalorder %s110, %s111
    %p123 = scmp.eq.s32.totalorder %s17, 1
    %p124 = por %p122, %p123
    %p126 = scmp.ne.s32.totalorder %s111, %s125
    %p127 = scmp.eq.s32.totalorder %s17, 0
    %p128 = por %p126, %p127
    %s129 = ssub.s32 %s11, %s18
    %p130 = scmp.eq.s32.totalorder %s129, 0
    %s132 = sadd.s32 %s131, 1
    %s133 = scalar_select %p130, %s131, %s132
    %p136 = pneg %p130
    %p137 = scmp.eq.s32.totalorder %s11, 1
    %p138 = por %p136, %p137
    %p139 = scmp.ne.s32.totalorder %s131, %s134
    %p140 = scmp.eq.s32.totalorder %s11, 0
    %p141 = por %p139, %p140
    %p142 = scmp.ne.s32.totalorder %s131, %s134
    %p143 = scmp.eq.s32.totalorder %s16, 1
    %p144 = por %p142, %p143
    %p145 = scmp.ne.s32.totalorder %s134, %s135
    %p146 = scmp.eq.s32.totalorder %s16, 0
    %p147 = por %p145, %p146
    %p148 = scmp.ne.s32.totalorder %s134, %s135
    %p149 = scmp.eq.s32.totalorder %s17, 1
    %p150 = por %p148, %p149
    %p152 = scmp.ne.s32.totalorder %s135, %s151
    %p153 = scmp.eq.s32.totalorder %s17, 0
    %p154 = por %p152, %p153
    %p155 = scmp.le.s32.totalorder 1, %s11
    %p156 = scmp.lt.s32.totalorder %s11, 3
    %p157 = pnand %p155, %p156
    %p158 = pneg %p157
    // Predicated region
    $region9: #{generator_forward.31} parent=5 // pred_check
      _
    $region10: #{generator_forward.31} parent=5 // pred_check_branch
      %160 = sbr.rel (%p157) target = $region12
    $region11: #{generator_forward.31} parent=5 // pred_region
      %s161 = ssub.s32 %s11, 1
      // Predicated region
      $region13: #{generator_forward.31} parent=11 // pred_check
        %p162 = pneg %p58
      $region14: #{generator_forward.31} parent=11 // pred_check_branch
        %164 = sbr.rel (%p162) target = $region16
      $region15: #{generator_forward.31} parent=11 // pred_region
        _
      $region16: #{generator_forward.31} parent=11 // pred_fallthru
        _
      // Predicated region
      $region17: #{generator_forward.31} parent=11 // pred_check
        %p165 = pneg %p79
      $region18: #{generator_forward.31} parent=11 // pred_check_branch
        %167 = sbr.rel (%p165) target = $region20
      $region19: #{generator_forward.31} parent=11 // pred_region
        _
      $region20: #{generator_forward.31} parent=11 // pred_fallthru
        _
      // Predicated region
      $region21: #{generator_forward.31} parent=11 // pred_check
        %p168 = pneg %p100
      $region22: #{generator_forward.31} parent=11 // pred_check_branch
        %170 = sbr.rel (%p168) target = $region24
      $region23: #{generator_forward.31} parent=11 // pred_region
        _
      $region24: #{generator_forward.31} parent=11 // pred_fallthru
        _
      // Predicated region
      $region25: #{generator_forward.31} parent=11 // pred_check
        %p171 = pneg %p121
      $region26: #{generator_forward.31} parent=11 // pred_check_branch
        %173 = sbr.rel (%p171) target = $region28
      $region27: #{generator_forward.31} parent=11 // pred_region
        _
      $region28: #{generator_forward.31} parent=11 // pred_fallthru
        _
    $region12: #{generator_forward.31} parent=5 // pred_fallthru
      _
    %p174 = scmp.lt.s32.totalorder %s11, 2
    // Predicated region
    $region29: #{generator_forward.31} parent=5 // pred_check
      %p175 = pneg %p174
    $region30: #{generator_forward.31} parent=5 // pred_check_branch
      %177 = sbr.rel (%p175) target = $region32
    $region31: #{generator_forward.31} parent=5 // pred_region
      // Predicated region
      $region33: #{generator_forward.31} parent=31 // pred_check
        %p178 = pneg %p31
      $region34: #{generator_forward.31} parent=31 // pred_check_branch
        %180 = sbr.rel (%p178) target = $region36
      $region35: #{generator_forward.31} parent=31 // pred_region
        %p181 = scmp.lt.s32.totalorder %s11, 1
        %s182 = scalar_select %p181, %s11, 1
        %s183 = smul.addr %s182, 6
        %s184 = smul.addr %s183, 8
        %s185 = scalar_lea.vmem %s0, %s184
      $region36: #{generator_forward.31} parent=31 // pred_fallthru
        _
    $region32: #{generator_forward.31} parent=5 // pred_fallthru
      _
    %p186 = scmp.le.s32.totalorder 1, %s11
    %p187 = scmp.lt.s32.totalorder %s11, 3
    %p188 = pnand %p186, %p187
    %p189 = pneg %p188
    // Predicated region
    $region37: #{generator_forward.31} parent=5 // pred_check
      _
    $region38: #{generator_forward.31} parent=5 // pred_check_branch
      %191 = sbr.rel (%p188) target = $region40
    $region39: #{generator_forward.31} parent=5 // pred_region
      %s192 = ssub.s32 %s11, 1
      %p193 = scmp.lt.s32.totalorder %s16, 1
      %s194 = scalar_select %p193, %s16, 1
      %s195 = smul.addr %s194, 6
      %s196 = smul.addr %s195, 8
      %s197 = scalar_lea.vmem %s0, %s196
      %p198 = pneg %p37
      %p199 = pneg %p34
      %p200 = pneg %p58
      %p201 = pneg %p55
      %p202 = pneg %p79
      %p203 = pneg %p76
      %p204 = pneg %p100
      %p205 = pneg %p97
      %p206 = pneg %p121
      %p207 = pneg %p118
      %p208 = pneg %p147
      %p209 = pneg %p144
      %p210 = scmp.lt.s32.totalorder %s16, 1
      %s211 = scalar_select %p210, %s16, 1
      %s212 = smul.addr %s211, 2
      %s213 = smul.addr %s212, 8
      %s214 = scalar_lea.vmem %s5, %s213
      %p215 = scmp.lt.s32.totalorder %s16, 1
      %s216 = scalar_select %p215, %s16, 1
      %s217 = smul.addr %s216, 6
      %s218 = smul.addr %s217, 8
      %s219 = scalar_lea.vmem %s0, %s218
      %p220 = scmp.lt.s32.totalorder %s16, 1
      %s221 = scalar_select %p220, %s16, 1
      %s222 = smul.addr %s221, 2
      %s223 = smul.addr %s222, 8
      %s224 = scalar_lea.vmem %s5, %s223
      %v226 = vld [vmem:[%s219] sm:$0xff]
      %v227 = vld [vmem:[%s219 + $0x8] sm:$0xff]
      %v228 = vld [vmem:[%s219 + $0x10] sm:$0xff]
      %v229 = vld [vmem:[%s219 + $0x18] sm:$0xff]
      %v230 = vld [vmem:[%s219 + $0x20] sm:$0x3f]
      %v231 = vld [vmem:[%s219 + $0x28] sm:$0x3f]
      %v232 = vld [vmem:[%s1] sm:$0x3]
      %v234 = vlaneseq
      %v235 = vshrl.u32 %v234, 7
      %v236 = vsub.s32 0, %v235
      %v237 = vrot.slane %v232, %v236
      %v238 = vlaneseq
      %v239 = vshrl.u32 %v238, 7
      %v240 = vsub.s32 1, %v239
      %v241 = vrot.slane %v232, %v240
      %v244 = vmul.f32 %v226, %v237
      %v245 = vmul.f32 %v227, %v241
      %v246 = vmul.f32 %v228, %v237
      %v247 = vmul.f32 %v229, %v241
      %v248 = vmul.f32 %v230, %v237
      %v249 = vmul.f32 %v231, %v241
      %v250 = vld [vmem:[%s2] sm:$0x3]
      %v252 = vlaneseq
      %v253 = vshrl.u32 %v252, 7
      %v254 = vsub.s32 0, %v253
      %v255 = vrot.slane %v250, %v254
      %v256 = vlaneseq
      %v257 = vshrl.u32 %v256, 7
      %v258 = vsub.s32 1, %v257
      %v259 = vrot.slane %v250, %v258
      %v262 = vadd.f32 %v244, %v255
      %v263 = vadd.f32 %v245, %v259
      %v264 = vadd.f32 %v246, %v255
      %v265 = vadd.f32 %v247, %v259
      %v266 = vadd.f32 %v248, %v255
      %v267 = vadd.f32 %v249, %v259
      %v268 = vmax.f32 %v262, 0.0
      %v269 = vmax.f32 %v263, 0.0
      %v270 = vmax.f32 %v264, 0.0
      %v271 = vmax.f32 %v265, 0.0
      %v272 = vmax.f32 %v266, 0.0
      %v273 = vmax.f32 %v267, 0.0
      %v274 = vpack.c.bf16 %v270, %v268
      %v275 = vpack.c.bf16 %v271, %v269
      %v276 = vld [vmem:[%s3] sm:$0xf]
      %v277 = vld [vmem:[%s3 + $0x4] sm:$0xf]
      %v278 = vld [vmem:[%s3 + $0x8] sm:$0xf]
      %v279 = vld [vmem:[%s3 + $0xc] sm:$0xf]
      %v280 = vld [vmem:[%s3 + $0x10] sm:$0xf]
      %v281 = vld [vmem:[%s3 + $0x14] sm:$0xf]
      %v282 = vld [vmem:[%s3 + $0x18] sm:$0xf]
      %v283 = vld [vmem:[%s3 + $0x1c] sm:$0xf]
      %v284 = vld [vmem:[%s3 + $0x20] sm:$0xf]
      %v285 = vld [vmem:[%s3 + $0x24] sm:$0xf]
      %v286 = vld [vmem:[%s3 + $0x28] sm:$0xf]
      %v287 = vld [vmem:[%s3 + $0x2c] sm:$0xf]
      %v288 = vld [vmem:[%s3 + $0x30] sm:$0xf]
      %v289 = vld [vmem:[%s3 + $0x34] sm:$0xf]
      %v290 = vld [vmem:[%s3 + $0x38] sm:$0xf]
      %v291 = vld [vmem:[%s3 + $0x3c] sm:$0xf]
      %v292 = vld [vmem:[%s3 + $0x40] sm:$0xf]
      %v293 = vld [vmem:[%s3 + $0x44] sm:$0xf]
      %v294 = vld [vmem:[%s3 + $0x48] sm:$0xf]
      %v295 = vld [vmem:[%s3 + $0x4c] sm:$0xf]
      %v296 = vld [vmem:[%s3 + $0x50] sm:$0xf]
      %v297 = vld [vmem:[%s3 + $0x54] sm:$0xf]
      %v298 = vpack.c.bf16 %v272, %v272
      %v299 = vpack.c.bf16 %v273, %v273
      %s300 = scalar_lea.vmem %s3, 88
      %v301 = vld [vmem:[%s300] sm:$0xf]
      %v302 = vld [vmem:[%s300 + $0x4] sm:$0xf]
      %v303 = vld [vmem:[%s300 + $0x8] sm:$0xf]
      %v304 = vld [vmem:[%s300 + $0xc] sm:$0xf]
      %v305 = vld [vmem:[%s300 + $0x10] sm:$0xf]
      %v306 = vld [vmem:[%s300 + $0x14] sm:$0xf]
      %v307 = vld [vmem:[%s300 + $0x18] sm:$0xf]
      %v308 = vld [vmem:[%s300 + $0x1c] sm:$0xf]
      %v309 = vld [vmem:[%s300 + $0x20] sm:$0xf]
      %v310 = vld [vmem:[%s300 + $0x24] sm:$0xf]
      %v311 = vld [vmem:[%s300 + $0x28] sm:$0xf]
      %v312 = vld [vmem:[%s300 + $0x2c] sm:$0xf]
      %v313 = vld [vmem:[%s300 + $0x30] sm:$0xf]
      %v314 = vld [vmem:[%s300 + $0x34] sm:$0xf]
      %v315 = vld [vmem:[%s300 + $0x38] sm:$0xf]
      %v316 = vld [vmem:[%s300 + $0x3c] sm:$0xf]
      %v317 = vld [vmem:[%s300 + $0x40] sm:$0xf]
      %v318 = vld [vmem:[%s300 + $0x44] sm:$0xf]
      %v319 = vld [vmem:[%s300 + $0x48] sm:$0xf]
      %v320 = vld [vmem:[%s300 + $0x4c] sm:$0xf]
      %v321 = vld [vmem:[%s300 + $0x50] sm:$0xf]
      %v322 = vld [vmem:[%s300 + $0x54] sm:$0xf]
      %vm323 = vsmask.f32 7424
      %v325 = vshrl.u32 %v274, 16
      %v327 = vshll.u32 %v274, 16
      %v329 = vrot.slane %v327, 1
      %v330 = vor.u32 %v325, %v329
      %v332 = vshll.u32 %v298, 16
      %v334 = vrot.slane %v332, 1
      %v335 = vsel %vm323, %v330, %v334
      %v337 = vshrl.u32 %v275, 16
      %v339 = vshll.u32 %v275, 16
      %v341 = vrot.slane %v339, 1
      %v342 = vor.u32 %v337, %v341
      %v344 = vshll.u32 %v299, 16
      %v346 = vrot.slane %v344, 1
      %v347 = vsel %vm323, %v342, %v346
      %v371 = vunpack.c.l.b16 %v301
      %v372 = vunpack.c.l.b16 %v302
      %v373 = vunpack.c.l.b16 %v303
      %v374 = vunpack.c.l.b16 %v304
      %v375 = vunpack.c.l.b16 %v305
      %v376 = vunpack.c.l.b16 %v306
      %v377 = vunpack.c.l.b16 %v307
      %v378 = vunpack.c.l.b16 %v308
      %v379 = vunpack.c.l.b16 %v309
      %v380 = vunpack.c.l.b16 %v310
      %v381 = vunpack.c.l.b16 %v311
      %v382 = vunpack.c.l.b16 %v312
      %v383 = vunpack.c.l.b16 %v313
      %v384 = vunpack.c.l.b16 %v314
      %v385 = vunpack.c.l.b16 %v315
      %v386 = vunpack.c.l.b16 %v316
      %v387 = vunpack.c.l.b16 %v317
      %v388 = vunpack.c.l.b16 %v318
      %v389 = vunpack.c.l.b16 %v319
      %v390 = vunpack.c.l.b16 %v320
      %v391 = vunpack.c.l.b16 %v321
      %v392 = vunpack.c.l.b16 %v322
      %v393 = vpack.c.b16 %v372, %v371
      %v394 = vpack.c.b16 %v374, %v373
      %v395 = vpack.c.b16 %v376, %v375
      %v396 = vpack.c.b16 %v378, %v377
      %v397 = vpack.c.b16 %v380, %v379
      %v398 = vpack.c.b16 %v382, %v381
      %v399 = vpack.c.b16 %v384, %v383
      %v400 = vpack.c.b16 %v386, %v385
      %v401 = vpack.c.b16 %v388, %v387
      %v402 = vpack.c.b16 %v390, %v389
      %v403 = vpack.c.b16 %v392, %v391
      %vm415 = vcmask 392192
      %v417 = vsel %vm415, %v347, 0
      %419 = vmatprep.subr.bf16.mxu0 0
      %420 = vmatpush1.bf16.msra.mxu0 %v393
      %421 = vmatprep.subr.bf16.mxu0 0
      %422 = vmatpush1.bf16.msra.mxu0 %v394
      %423 = vmatprep.subr.bf16.mxu0 0
      %424 = vmatpush1.bf16.msra.mxu0 %v395
      %425 = vmatprep.subr.bf16.mxu0 0
      %426 = vmatpush1.bf16.msra.mxu0 %v396
      %427 = vmatprep.subr.bf16.mxu0 0
      %428 = vmatpush1.bf16.msra.mxu0 %v397
      %429 = vmatprep.subr.bf16.mxu0 0
      %430 = vmatpush1.bf16.msra.mxu0 %v398
      %431 = vmatprep.subr.bf16.mxu0 0
      %432 = vmatpush1.bf16.msra.mxu0 %v399
      %433 = vmatprep.subr.bf16.mxu0 0
      %434 = vmatpush1.bf16.msra.mxu0 %v400
      %435 = vmatprep.subr.bf16.mxu0 0
      %436 = vmatpush1.bf16.msra.mxu0 %v401
      %437 = vmatprep.subr.bf16.mxu0 0
      %438 = vmatpush1.bf16.msra.mxu0 %v402
      %439 = vmatprep.subr.bf16.mxu0 0
      %440 = vmatpush1.bf16.msra.mxu0 %v403
      %441 = vmatprep.subr.bf16.mxu0 0
      %442 = vmatpush1.bf16.msra.mxu0 0
      %443 = vmatprep.subr.bf16.mxu0 0
      %444 = vmatpush1.bf16.msra.mxu0 0
      %445 = vmatprep.subr.bf16.mxu0 0
      %446 = vmatpush1.bf16.msra.mxu0 0
      %447 = vmatprep.subr.bf16.mxu0 0
      %448 = vmatpush1.bf16.msra.mxu0 0
      %449 = vmatprep.subr.bf16.mxu0 0
      %450 = vmatpush1.bf16.msra.mxu0 0
      %451 = vmatprep.mubr.bf16.mxu0 %v417
      %452 = vmatmul.mubr.bf16.gmra.mrb[0].mxu0 %v335
      %v453 = vpop.f32.mrb[0].mxu0
      %v454 = vadd.f32 0.0, %v453
      %v455 = vpop.f32.mrb[0].mxu0
      %v456 = vpop.f32.mrb[0].mxu0
      %v457 = vadd.f32 0.0, %v456
      %v458 = vpop.f32.mrb[0].mxu0
      %459 = vdwg.mxu0
      %v482 = vunpack.c.l.b16 %v276
      %v483 = vunpack.c.l.b16 %v277
      %v484 = vunpack.c.l.b16 %v278
      %v485 = vunpack.c.l.b16 %v279
      %v486 = vunpack.c.l.b16 %v280
      %v487 = vunpack.c.l.b16 %v281
      %v488 = vunpack.c.l.b16 %v282
      %v489 = vunpack.c.l.b16 %v283
      %v490 = vunpack.c.l.b16 %v284
      %v491 = vunpack.c.l.b16 %v285
      %v492 = vunpack.c.l.b16 %v286
      %v493 = vunpack.c.l.b16 %v287
      %v494 = vunpack.c.l.b16 %v288
      %v495 = vunpack.c.l.b16 %v289
      %v496 = vunpack.c.l.b16 %v290
      %v497 = vunpack.c.l.b16 %v291
      %v498 = vunpack.c.l.b16 %v292
      %v499 = vunpack.c.l.b16 %v293
      %v500 = vunpack.c.l.b16 %v294
      %v501 = vunpack.c.l.b16 %v295
      %v502 = vunpack.c.l.b16 %v296
      %v503 = vunpack.c.l.b16 %v297
      %v504 = vpack.c.b16 %v483, %v482
      %v505 = vpack.c.b16 %v485, %v484
      %v506 = vpack.c.b16 %v487, %v486
      %v507 = vpack.c.b16 %v489, %v488
      %v508 = vpack.c.b16 %v491, %v490
      %v509 = vpack.c.b16 %v493, %v492
      %v510 = vpack.c.b16 %v495, %v494
      %v511 = vpack.c.b16 %v497, %v496
      %v512 = vpack.c.b16 %v499, %v498
      %v513 = vpack.c.b16 %v501, %v500
      %v514 = vpack.c.b16 %v503, %v502
      %v526 = vsel %vm415, %v275, 0
      %528 = vmatprep.subr.bf16.mxu0 0
      %529 = vmatpush1.bf16.msra.mxu0 %v504
      %530 = vmatprep.subr.bf16.mxu0 0
      %531 = vmatpush1.bf16.msra.mxu0 %v505
      %532 = vmatprep.subr.bf16.mxu0 0
      %533 = vmatpush1.bf16.msra.mxu0 %v506
      %534 = vmatprep.subr.bf16.mxu0 0
      %535 = vmatpush1.bf16.msra.mxu0 %v507
      %536 = vmatprep.subr.bf16.mxu0 0
      %537 = vmatpush1.bf16.msra.mxu0 %v508
      %538 = vmatprep.subr.bf16.mxu0 0
      %539 = vmatpush1.bf16.msra.mxu0 %v509
      %540 = vmatprep.subr.bf16.mxu0 0
      %541 = vmatpush1.bf16.msra.mxu0 %v510
      %542 = vmatprep.subr.bf16.mxu0 0
      %543 = vmatpush1.bf16.msra.mxu0 %v511
      %544 = vmatprep.subr.bf16.mxu0 0
      %545 = vmatpush1.bf16.msra.mxu0 %v512
      %546 = vmatprep.subr.bf16.mxu0 0
      %547 = vmatpush1.bf16.msra.mxu0 %v513
      %548 = vmatprep.subr.bf16.mxu0 0
      %549 = vmatpush1.bf16.msra.mxu0 %v514
      %550 = vmatprep.subr.bf16.mxu0 0
      %551 = vmatpush1.bf16.msra.mxu0 0
      %552 = vmatprep.subr.bf16.mxu0 0
      %553 = vmatpush1.bf16.msra.mxu0 0
      %554 = vmatprep.subr.bf16.mxu0 0
      %555 = vmatpush1.bf16.msra.mxu0 0
      %556 = vmatprep.subr.bf16.mxu0 0
      %557 = vmatpush1.bf16.msra.mxu0 0
      %558 = vmatprep.subr.bf16.mxu0 0
      %559 = vmatpush1.bf16.msra.mxu0 0
      %560 = vmatprep.mubr.bf16.mxu0 %v526
      %561 = vmatmul.mubr.bf16.gmra.mrb[0].mxu0 %v274
      %v562 = vpop.f32.mrb[0].mxu0
      %v563 = vadd.f32 %v454, %v562
      %v564 = vpop.f32.mrb[0].mxu0
      %v565 = vpop.f32.mrb[0].mxu0
      %v566 = vadd.f32 %v457, %v565
      %v567 = vpop.f32.mrb[0].mxu0
      %568 = vdwg.mxu0
      %s569 = scalar_lea.vmem %s3, 176
      %v570 = vld [vmem:[%s569] sm:$0xf]
      %v571 = vld [vmem:[%s569 + $0x4] sm:$0xf]
      %v572 = vld [vmem:[%s569 + $0x8] sm:$0xf]
      %v573 = vld [vmem:[%s569 + $0xc] sm:$0xf]
      %v574 = vld [vmem:[%s569 + $0x10] sm:$0xf]
      %v575 = vld [vmem:[%s569 + $0x14] sm:$0xf]
      %v576 = vld [vmem:[%s569 + $0x18] sm:$0xf]
      %v577 = vld [vmem:[%s569 + $0x1c] sm:$0xf]
      %v578 = vld [vmem:[%s569 + $0x20] sm:$0xf]
      %v579 = vld [vmem:[%s569 + $0x24] sm:$0xf]
      %v580 = vld [vmem:[%s569 + $0x28] sm:$0xf]
      %v581 = vld [vmem:[%s569 + $0x2c] sm:$0xf]
      %v582 = vld [vmem:[%s569 + $0x30] sm:$0xf]
      %v583 = vld [vmem:[%s569 + $0x34] sm:$0xf]
      %v584 = vld [vmem:[%s569 + $0x38] sm:$0xf]
      %v585 = vld [vmem:[%s569 + $0x3c] sm:$0xf]
      %v586 = vld [vmem:[%s569 + $0x40] sm:$0xf]
      %v587 = vld [vmem:[%s569 + $0x44] sm:$0xf]
      %v588 = vld [vmem:[%s569 + $0x48] sm:$0xf]
      %v589 = vld [vmem:[%s569 + $0x4c] sm:$0xf]
      %v590 = vld [vmem:[%s569 + $0x50] sm:$0xf]
      %v591 = vld [vmem:[%s569 + $0x54] sm:$0xf]
      %vm596 = vcmask 1046528
      %v597 = vrot.slane %v274, 1
      %v598 = vrot.slane %v298, 1
      %v599 = vsel %vm596, %v597, %v598
      %v600 = vrot.slane %v275, 1
      %v601 = vrot.slane %v299, 1
      %v602 = vsel %vm596, %v600, %v601
      %v626 = vunpack.c.l.b16 %v570
      %v627 = vunpack.c.l.b16 %v571
      %v628 = vunpack.c.l.b16 %v572
      %v629 = vunpack.c.l.b16 %v573
      %v630 = vunpack.c.l.b16 %v574
      %v631 = vunpack.c.l.b16 %v575
      %v632 = vunpack.c.l.b16 %v576
      %v633 = vunpack.c.l.b16 %v577
      %v634 = vunpack.c.l.b16 %v578
      %v635 = vunpack.c.l.b16 %v579
      %v636 = vunpack.c.l.b16 %v580
      %v637 = vunpack.c.l.b16 %v581
      %v638 = vunpack.c.l.b16 %v582
      %v639 = vunpack.c.l.b16 %v583
      %v640 = vunpack.c.l.b16 %v584
      %v641 = vunpack.c.l.b16 %v585
      %v642 = vunpack.c.l.b16 %v586
      %v643 = vunpack.c.l.b16 %v587
      %v644 = vunpack.c.l.b16 %v588
      %v645 = vunpack.c.l.b16 %v589
      %v646 = vunpack.c.l.b16 %v590
      %v647 = vunpack.c.l.b16 %v591
      %v648 = vpack.c.b16 %v627, %v626
      %v649 = vpack.c.b16 %v629, %v628
      %v650 = vpack.c.b16 %v631, %v630
      %v651 = vpack.c.b16 %v633, %v632
      %v652 = vpack.c.b16 %v635, %v634
      %v653 = vpack.c.b16 %v637, %v636
      %v654 = vpack.c.b16 %v639, %v638
      %v655 = vpack.c.b16 %v641, %v640
      %v656 = vpack.c.b16 %v643, %v642
      %v657 = vpack.c.b16 %v645, %v644
      %v658 = vpack.c.b16 %v647, %v646
      %v671 = vsel %vm415, %v602, 0
      %673 = vmatprep.subr.bf16.mxu0 0
      %674 = vmatpush1.bf16.msra.mxu0 %v648
      %675 = vmatprep.subr.bf16.mxu0 0
      %676 = vmatpush1.bf16.msra.mxu0 %v649
      %677 = vmatprep.subr.bf16.mxu0 0
      %678 = vmatpush1.bf16.msra.mxu0 %v650
      %679 = vmatprep.subr.bf16.mxu0 0
      %680 = vmatpush1.bf16.msra.mxu0 %v651
      %681 = vmatprep.subr.bf16.mxu0 0
      %682 = vmatpush1.bf16.msra.mxu0 %v652
      %683 = vmatprep.subr.bf16.mxu0 0
      %684 = vmatpush1.bf16.msra.mxu0 %v653
      %685 = vmatprep.subr.bf16.mxu0 0
      %686 = vmatpush1.bf16.msra.mxu0 %v654
      %687 = vmatprep.subr.bf16.mxu0 0
      %688 = vmatpush1.bf16.msra.mxu0 %v655
      %689 = vmatprep.subr.bf16.mxu0 0
      %690 = vmatpush1.bf16.msra.mxu0 %v656
      %691 = vmatprep.subr.bf16.mxu0 0
      %692 = vmatpush1.bf16.msra.mxu0 %v657
      %693 = vmatprep.subr.bf16.mxu0 0
      %694 = vmatpush1.bf16.msra.mxu0 %v658
      %695 = vmatprep.subr.bf16.mxu0 0
      %696 = vmatpush1.bf16.msra.mxu0 0
      %697 = vmatprep.subr.bf16.mxu0 0
      %698 = vmatpush1.bf16.msra.mxu0 0
      %699 = vmatprep.subr.bf16.mxu0 0
      %700 = vmatpush1.bf16.msra.mxu0 0
      %701 = vmatprep.subr.bf16.mxu0 0
      %702 = vmatpush1.bf16.msra.mxu0 0
      %703 = vmatprep.subr.bf16.mxu0 0
      %704 = vmatpush1.bf16.msra.mxu0 0
      %705 = vmatprep.mubr.bf16.mxu0 %v671
      %706 = vmatmul.mubr.bf16.gmra.mrb[0].mxu0 %v599
      %v707 = vpop.f32.mrb[0].mxu0
      %v708 = vadd.f32 0.0, %v707
      %v709 = vpop.f32.mrb[0].mxu0
      %v710 = vpop.f32.mrb[0].mxu0
      %v711 = vadd.f32 0.0, %v710
      %v712 = vpop.f32.mrb[0].mxu0
      %713 = vdwg.mxu0
      %v714 = vadd.f32 %v563, %v708
      %v715 = vadd.f32 %v566, %v711
      %s716 = scalar_lea.vmem %s3, 264
      %v717 = vld [vmem:[%s716] sm:$0xf]
      %v718 = vld [vmem:[%s716 + $0x4] sm:$0xf]
      %v719 = vld [vmem:[%s716 + $0x8] sm:$0xf]
      %v720 = vld [vmem:[%s716 + $0xc] sm:$0xf]
      %v721 = vld [vmem:[%s716 + $0x10] sm:$0xf]
      %v722 = vld [vmem:[%s716 + $0x14] sm:$0xf]
      %v723 = vld [vmem:[%s716 + $0x18] sm:$0xf]
      %v724 = vld [vmem:[%s716 + $0x1c] sm:$0xf]
      %v725 = vld [vmem:[%s716 + $0x20] sm:$0xf]
      %v726 = vld [vmem:[%s716 + $0x24] sm:$0xf]
      %v727 = vld [vmem:[%s716 + $0x28] sm:$0xf]
      %v728 = vld [vmem:[%s716 + $0x2c] sm:$0xf]
      %v729 = vld [vmem:[%s716 + $0x30] sm:$0xf]
      %v730 = vld [vmem:[%s716 + $0x34] sm:$0xf]
      %v731 = vld [vmem:[%s716 + $0x38] sm:$0xf]
      %v732 = vld [vmem:[%s716 + $0x3c] sm:$0xf]
      %v733 = vld [vmem:[%s716 + $0x40] sm:$0xf]
      %v734 = vld [vmem:[%s716 + $0x44] sm:$0xf]
      %v735 = vld [vmem:[%s716 + $0x48] sm:$0xf]
      %v736 = vld [vmem:[%s716 + $0x4c] sm:$0xf]
      %v737 = vld [vmem:[%s716 + $0x50] sm:$0xf]
      %v738 = vld [vmem:[%s716 + $0x54] sm:$0xf]
      %vm739 = vsmask.f32 6400
      %v740 = vrot.slane %v325, 1
      %v741 = vrot.slane %v327, 2
      %v742 = vor.u32 %v740, %v741
      %v743 = vshrl.u32 %v298, 16
      %v745 = vrot.slane %v743, 1
      %v746 = vrot.slane %v332, 2
      %v747 = vor.u32 %v745, %v746
      %v748 = vsel %vm739, %v742, %v747
      %v749 = vrot.slane %v337, 1
      %v750 = vrot.slane %v339, 2
      %v751 = vor.u32 %v749, %v750
      %v752 = vshrl.u32 %v299, 16
      %v754 = vrot.slane %v752, 1
      %v755 = vrot.slane %v344, 2
      %v756 = vor.u32 %v754, %v755
      %v757 = vsel %vm739, %v751, %v756
      %v781 = vunpack.c.l.b16 %v717
      %v782 = vunpack.c.l.b16 %v718
      %v783 = vunpack.c.l.b16 %v719
      %v784 = vunpack.c.l.b16 %v720
      %v785 = vunpack.c.l.b16 %v721
      %v786 = vunpack.c.l.b16 %v722
      %v787 = vunpack.c.l.b16 %v723
      %v788 = vunpack.c.l.b16 %v724
      %v789 = vunpack.c.l.b16 %v725
      %v790 = vunpack.c.l.b16 %v726
      %v791 = vunpack.c.l.b16 %v727
      %v792 = vunpack.c.l.b16 %v728
      %v793 = vunpack.c.l.b16 %v729
      %v794 = vunpack.c.l.b16 %v730
      %v795 = vunpack.c.l.b16 %v731
      %v796 = vunpack.c.l.b16 %v732
      %v797 = vunpack.c.l.b16 %v733
      %v798 = vunpack.c.l.b16 %v734
      %v799 = vunpack.c.l.b16 %v735
      %v800 = vunpack.c.l.b16 %v736
      %v801 = vunpack.c.l.b16 %v737
      %v802 = vunpack.c.l.b16 %v738
      %v803 = vpack.c.b16 %v782, %v781
      %v804 = vpack.c.b16 %v784, %v783
      %v805 = vpack.c.b16 %v786, %v785
      %v806 = vpack.c.b16 %v788, %v787
      %v807 = vpack.c.b16 %v790, %v789
      %v808 = vpack.c.b16 %v792, %v791
      %v809 = vpack.c.b16 %v794, %v793
      %v810 = vpack.c.b16 %v796, %v795
      %v811 = vpack.c.b16 %v798, %v797
      %v812 = vpack.c.b16 %v800, %v799
      %v813 = vpack.c.b16 %v802, %v801
      %v826 = vsel %vm415, %v757, 0
      %828 = vmatprep.subr.bf16.mxu0 0
      %829 = vmatpush1.bf16.msra.mxu0 %v803
      %830 = vmatprep.subr.bf16.mxu0 0
      %831 = vmatpush1.bf16.msra.mxu0 %v804
      %832 = vmatprep.subr.bf16.mxu0 0
      %833 = vmatpush1.bf16.msra.mxu0 %v805
      %834 = vmatprep.subr.bf16.mxu0 0
      %835 = vmatpush1.bf16.msra.mxu0 %v806
      %836 = vmatprep.subr.bf16.mxu0 0
      %837 = vmatpush1.bf16.msra.mxu0 %v807
      %838 = vmatprep.subr.bf16.mxu0 0
      %839 = vmatpush1.bf16.msra.mxu0 %v808
      %840 = vmatprep.subr.bf16.mxu0 0
      %841 = vmatpush1.bf16.msra.mxu0 %v809
      %842 = vmatprep.subr.bf16.mxu0 0
      %843 = vmatpush1.bf16.msra.mxu0 %v810
      %844 = vmatprep.subr.bf16.mxu0 0
      %845 = vmatpush1.bf16.msra.mxu0 %v811
      %846 = vmatprep.subr.bf16.mxu0 0
      %847 = vmatpush1.bf16.msra.mxu0 %v812
      %848 = vmatprep.subr.bf16.mxu0 0
      %849 = vmatpush1.bf16.msra.mxu0 %v813
      %850 = vmatprep.subr.bf16.mxu0 0
      %851 = vmatpush1.bf16.msra.mxu0 0
      %852 = vmatprep.subr.bf16.mxu0 0
      %853 = vmatpush1.bf16.msra.mxu0 0
      %854 = vmatprep.subr.bf16.mxu0 0
      %855 = vmatpush1.bf16.msra.mxu0 0
      %856 = vmatprep.subr.bf16.mxu0 0
      %857 = vmatpush1.bf16.msra.mxu0 0
      %858 = vmatprep.subr.bf16.mxu0 0
      %859 = vmatpush1.bf16.msra.mxu0 0
      %860 = vmatprep.mubr.bf16.mxu0 %v826
      %861 = vmatmul.mubr.bf16.gmra.mrb[0].mxu0 %v748
      %v862 = vpop.f32.mrb[0].mxu0
      %v863 = vadd.f32 0.0, %v862
      %v864 = vpop.f32.mrb[0].mxu0
      %v865 = vpop.f32.mrb[0].mxu0
      %v866 = vadd.f32 0.0, %v865
      %v867 = vpop.f32.mrb[0].mxu0
      %868 = vdwg.mxu0
      %v869 = vadd.f32 %v714, %v863
      %v870 = vadd.f32 %v715, %v866
      %s871 = scalar_lea.vmem %s3, 352
      %v872 = vld [vmem:[%s871] sm:$0xf]
      %v873 = vld [vmem:[%s871 + $0x4] sm:$0xf]
      %v874 = vld [vmem:[%s871 + $0x8] sm:$0xf]
      %v875 = vld [vmem:[%s871 + $0xc] sm:$0xf]
      %v876 = vld [vmem:[%s871 + $0x10] sm:$0xf]
      %v877 = vld [vmem:[%s871 + $0x14] sm:$0xf]
      %v878 = vld [vmem:[%s871 + $0x18] sm:$0xf]
      %v879 = vld [vmem:[%s871 + $0x1c] sm:$0xf]
      %v880 = vld [vmem:[%s871 + $0x20] sm:$0xf]
      %v881 = vld [vmem:[%s871 + $0x24] sm:$0xf]
      %v882 = vld [vmem:[%s871 + $0x28] sm:$0xf]
      %v883 = vld [vmem:[%s871 + $0x2c] sm:$0xf]
      %v884 = vld [vmem:[%s871 + $0x30] sm:$0xf]
      %v885 = vld [vmem:[%s871 + $0x34] sm:$0xf]
      %v886 = vld [vmem:[%s871 + $0x38] sm:$0xf]
      %v887 = vld [vmem:[%s871 + $0x3c] sm:$0xf]
      %v888 = vld [vmem:[%s871 + $0x40] sm:$0xf]
      %v889 = vld [vmem:[%s871 + $0x44] sm:$0xf]
      %v890 = vld [vmem:[%s871 + $0x48] sm:$0xf]
      %v891 = vld [vmem:[%s871 + $0x4c] sm:$0xf]
      %v892 = vld [vmem:[%s871 + $0x50] sm:$0xf]
      %v893 = vld [vmem:[%s871 + $0x54] sm:$0xf]
      %vm894 = vcmask 1045504
      %v895 = vrot.slane %v274, 2
      %v896 = vrot.slane %v298, 2
      %v897 = vsel %vm894, %v895, %v896
      %v898 = vrot.slane %v275, 2
      %v899 = vrot.slane %v299, 2
      %v900 = vsel %vm894, %v898, %v899
      %v924 = vunpack.c.l.b16 %v872
      %v925 = vunpack.c.l.b16 %v873
      %v926 = vunpack.c.l.b16 %v874
      %v927 = vunpack.c.l.b16 %v875
      %v928 = vunpack.c.l.b16 %v876
      %v929 = vunpack.c.l.b16 %v877
      %v930 = vunpack.c.l.b16 %v878
      %v931 = vunpack.c.l.b16 %v879
      %v932 = vunpack.c.l.b16 %v880
      %v933 = vunpack.c.l.b16 %v881
      %v934 = vunpack.c.l.b16 %v882
      %v935 = vunpack.c.l.b16 %v883
      %v936 = vunpack.c.l.b16 %v884
      %v937 = vunpack.c.l.b16 %v885
      %v938 = vunpack.c.l.b16 %v886
      %v939 = vunpack.c.l.b16 %v887
      %v940 = vunpack.c.l.b16 %v888
      %v941 = vunpack.c.l.b16 %v889
      %v942 = vunpack.c.l.b16 %v890
      %v943 = vunpack.c.l.b16 %v891
      %v944 = vunpack.c.l.b16 %v892
      %v945 = vunpack.c.l.b16 %v893
      %v946 = vpack.c.b16 %v925, %v924
      %v947 = vpack.c.b16 %v927, %v926
      %v948 = vpack.c.b16 %v929, %v928
      %v949 = vpack.c.b16 %v931, %v930
      %v950 = vpack.c.b16 %v933, %v932
      %v951 = vpack.c.b16 %v935, %v934
      %v952 = vpack.c.b16 %v937, %v936
      %v953 = vpack.c.b16 %v939, %v938
      %v954 = vpack.c.b16 %v941, %v940
      %v955 = vpack.c.b16 %v943, %v942
      %v956 = vpack.c.b16 %v945, %v944
      %v969 = vsel %vm415, %v900, 0
      %971 = vmatprep.subr.bf16.mxu0 0
      %972 = vmatpush1.bf16.msra.mxu0 %v946
      %973 = vmatprep.subr.bf16.mxu0 0
      %974 = vmatpush1.bf16.msra.mxu0 %v947
      %975 = vmatprep.subr.bf16.mxu0 0
      %976 = vmatpush1.bf16.msra.mxu0 %v948
      %977 = vmatprep.subr.bf16.mxu0 0
      %978 = vmatpush1.bf16.msra.mxu0 %v949
      %979 = vmatprep.subr.bf16.mxu0 0
      %980 = vmatpush1.bf16.msra.mxu0 %v950
      %981 = vmatprep.subr.bf16.mxu0 0
      %982 = vmatpush1.bf16.msra.mxu0 %v951
      %983 = vmatprep.subr.bf16.mxu0 0
      %984 = vmatpush1.bf16.msra.mxu0 %v952
      %985 = vmatprep.subr.bf16.mxu0 0
      %986 = vmatpush1.bf16.msra.mxu0 %v953
      %987 = vmatprep.subr.bf16.mxu0 0
      %988 = vmatpush1.bf16.msra.mxu0 %v954
      %989 = vmatprep.subr.bf16.mxu0 0
      %990 = vmatpush1.bf16.msra.mxu0 %v955
      %991 = vmatprep.subr.bf16.mxu0 0
      %992 = vmatpush1.bf16.msra.mxu0 %v956
      %993 = vmatprep.subr.bf16.mxu0 0
      %994 = vmatpush1.bf16.msra.mxu0 0
      %995 = vmatprep.subr.bf16.mxu0 0
      %996 = vmatpush1.bf16.msra.mxu0 0
      %997 = vmatprep.subr.bf16.mxu0 0
      %998 = vmatpush1.bf16.msra.mxu0 0
      %999 = vmatprep.subr.bf16.mxu0 0
      %1000 = vmatpush1.bf16.msra.mxu0 0
      %1001 = vmatprep.subr.bf16.mxu0 0
      %1002 = vmatpush1.bf16.msra.mxu0 0
      %1003 = vmatprep.mubr.bf16.mxu0 %v969
      %1004 = vmatmul.mubr.bf16.gmra.mrb[0].mxu0 %v897
      %v1005 = vpop.f32.mrb[0].mxu0
      %v1006 = vadd.f32 0.0, %v1005
      %v1007 = vpop.f32.mrb[0].mxu0
      %v1008 = vpop.f32.mrb[0].mxu0
      %v1009 = vadd.f32 0.0, %v1008
      %v1010 = vpop.f32.mrb[0].mxu0
      %1011 = vdwg.mxu0
      %v1012 = vadd.f32 %v869, %v1006
      %v1013 = vadd.f32 %v870, %v1009
      %s1014 = scalar_lea.vmem %s3, 440
      %v1015 = vld [vmem:[%s1014] sm:$0xf]
      %v1016 = vld [vmem:[%s1014 + $0x4] sm:$0xf]
      %v1017 = vld [vmem:[%s1014 + $0x8] sm:$0xf]
      %v1018 = vld [vmem:[%s1014 + $0xc] sm:$0xf]
      %v1019 = vld [vmem:[%s1014 + $0x10] sm:$0xf]
      %v1020 = vld [vmem:[%s1014 + $0x14] sm:$0xf]
      %v1021 = vld [vmem:[%s1014 + $0x18] sm:$0xf]
      %v1022 = vld [vmem:[%s1014 + $0x1c] sm:$0xf]
      %v1023 = vld [vmem:[%s1014 + $0x20] sm:$0xf]
      %v1024 = vld [vmem:[%s1014 + $0x24] sm:$0xf]
      %v1025 = vld [vmem:[%s1014 + $0x28] sm:$0xf]
      %v1026 = vld [vmem:[%s1014 + $0x2c] sm:$0xf]
      %v1027 = vld [vmem:[%s1014 + $0x30] sm:$0xf]
      %v1028 = vld [vmem:[%s1014 + $0x34] sm:$0xf]
      %v1029 = vld [vmem:[%s1014 + $0x38] sm:$0xf]
      %v1030 = vld [vmem:[%s1014 + $0x3c] sm:$0xf]
      %v1031 = vld [vmem:[%s1014 + $0x40] sm:$0xf]
      %v1032 = vld [vmem:[%s1014 + $0x44] sm:$0xf]
      %v1033 = vld [vmem:[%s1014 + $0x48] sm:$0xf]
      %v1034 = vld [vmem:[%s1014 + $0x4c] sm:$0xf]
      %v1035 = vld [vmem:[%s1014 + $0x50] sm:$0xf]
      %v1036 = vld [vmem:[%s1014 + $0x54] sm:$0xf]
      %vm1037 = vsmask.f32 5376
      %v1038 = vrot.slane %v325, 2
      %v1039 = vrot.slane %v327, 3
      %v1040 = vor.u32 %v1038, %v1039
      %v1041 = vrot.slane %v743, 2
      %v1042 = vrot.slane %v332, 3
      %v1043 = vor.u32 %v1041, %v1042
      %v1044 = vsel %vm1037, %v1040, %v1043
      %v1045 = vrot.slane %v337, 2
      %v1046 = vrot.slane %v339, 3
      %v1047 = vor.u32 %v1045, %v1046
      %v1048 = vrot.slane %v752, 2
      %v1049 = vrot.slane %v344, 3
      %v1050 = vor.u32 %v1048, %v1049
      %v1051 = vsel %vm1037, %v1047, %v1050
      %v1075 = vunpack.c.l.b16 %v1015
      %v1076 = vunpack.c.l.b16 %v1016
      %v1077 = vunpack.c.l.b16 %v1017
      %v1078 = vunpack.c.l.b16 %v1018
      %v1079 = vunpack.c.l.b16 %v1019
      %v1080 = vunpack.c.l.b16 %v1020
      %v1081 = vunpack.c.l.b16 %v1021
      %v1082 = vunpack.c.l.b16 %v1022
      %v1083 = vunpack.c.l.b16 %v1023
      %v1084 = vunpack.c.l.b16 %v1024
      %v1085 = vunpack.c.l.b16 %v1025
      %v1086 = vunpack.c.l.b16 %v1026
      %v1087 = vunpack.c.l.b16 %v1027
      %v1088 = vunpack.c.l.b16 %v1028
      %v1089 = vunpack.c.l.b16 %v1029
      %v1090 = vunpack.c.l.b16 %v1030
      %v1091 = vunpack.c.l.b16 %v1031
      %v1092 = vunpack.c.l.b16 %v1032
      %v1093 = vunpack.c.l.b16 %v1033
      %v1094 = vunpack.c.l.b16 %v1034
      %v1095 = vunpack.c.l.b16 %v1035
      %v1096 = vunpack.c.l.b16 %v1036
      %v1097 = vpack.c.b16 %v1076, %v1075
      %v1098 = vpack.c.b16 %v1078, %v1077
      %v1099 = vpack.c.b16 %v1080, %v1079
      %v1100 = vpack.c.b16 %v1082, %v1081
      %v1101 = vpack.c.b16 %v1084, %v1083
      %v1102 = vpack.c.b16 %v1086, %v1085
      %v1103 = vpack.c.b16 %v1088, %v1087
      %v1104 = vpack.c.b16 %v1090, %v1089
      %v1105 = vpack.c.b16 %v1092, %v1091
      %v1106 = vpack.c.b16 %v1094, %v1093
      %v1107 = vpack.c.b16 %v1096, %v1095
      %v1120 = vsel %vm415, %v1051, 0
      %1122 = vmatprep.subr.bf16.mxu0 0
      %1123 = vmatpush1.bf16.msra.mxu0 %v1097
      %1124 = vmatprep.subr.bf16.mxu0 0
      %1125 = vmatpush1.bf16.msra.mxu0 %v1098
      %1126 = vmatprep.subr.bf16.mxu0 0
      %1127 = vmatpush1.bf16.msra.mxu0 %v1099
      %1128 = vmatprep.subr.bf16.mxu0 0
      %1129 = vmatpush1.bf16.msra.mxu0 %v1100
      %1130 = vmatprep.subr.bf16.mxu0 0
      %1131 = vmatpush1.bf16.msra.mxu0 %v1101
      %1132 = vmatprep.subr.bf16.mxu0 0
      %1133 = vmatpush1.bf16.msra.mxu0 %v1102
      %1134 = vmatprep.subr.bf16.mxu0 0
      %1135 = vmatpush1.bf16.msra.mxu0 %v1103
      %1136 = vmatprep.subr.bf16.mxu0 0
      %1137 = vmatpush1.bf16.msra.mxu0 %v1104
      %1138 = vmatprep.subr.bf16.mxu0 0
      %1139 = vmatpush1.bf16.msra.mxu0 %v1105
      %1140 = vmatprep.subr.bf16.mxu0 0
      %1141 = vmatpush1.bf16.msra.mxu0 %v1106
      %1142 = vmatprep.subr.bf16.mxu0 0
      %1143 = vmatpush1.bf16.msra.mxu0 %v1107
      %1144 = vmatprep.subr.bf16.mxu0 0
      %1145 = vmatpush1.bf16.msra.mxu0 0
      %1146 = vmatprep.subr.bf16.mxu0 0
      %1147 = vmatpush1.bf16.msra.mxu0 0
      %1148 = vmatprep.subr.bf16.mxu0 0
      %1149 = vmatpush1.bf16.msra.mxu0 0
      %1150 = vmatprep.subr.bf16.mxu0 0
      %1151 = vmatpush1.bf16.msra.mxu0 0
      %1152 = vmatprep.subr.bf16.mxu0 0
      %1153 = vmatpush1.bf16.msra.mxu0 0
      %1154 = vmatprep.mubr.bf16.mxu0 %v1120
      %1155 = vmatmul.mubr.bf16.gmra.mrb[0].mxu0 %v1044
      %v1156 = vpop.f32.mrb[0].mxu0
      %v1157 = vadd.f32 0.0, %v1156
      %v1158 = vpop.f32.mrb[0].mxu0
      %v1159 = vpop.f32.mrb[0].mxu0
      %v1160 = vadd.f32 0.0, %v1159
      %v1161 = vpop.f32.mrb[0].mxu0
      %1162 = vdwg.mxu0
      %v1163 = vadd.f32 %v1012, %v1157
      %v1164 = vadd.f32 %v1013, %v1160
      %s1165 = scalar_lea.vmem %s3, 528
      %v1166 = vld [vmem:[%s1165] sm:$0xf]
      %v1167 = vld [vmem:[%s1165 + $0x4] sm:$0xf]
      %v1168 = vld [vmem:[%s1165 + $0x8] sm:$0xf]
      %v1169 = vld [vmem:[%s1165 + $0xc] sm:$0xf]
      %v1170 = vld [vmem:[%s1165 + $0x10] sm:$0xf]
      %v1171 = vld [vmem:[%s1165 + $0x14] sm:$0xf]
      %v1172 = vld [vmem:[%s1165 + $0x18] sm:$0xf]
      %v1173 = vld [vmem:[%s1165 + $0x1c] sm:$0xf]
      %v1174 = vld [vmem:[%s1165 + $0x20] sm:$0xf]
      %v1175 = vld [vmem:[%s1165 + $0x24] sm:$0xf]
      %v1176 = vld [vmem:[%s1165 + $0x28] sm:$0xf]
      %v1177 = vld [vmem:[%s1165 + $0x2c] sm:$0xf]
      %v1178 = vld [vmem:[%s1165 + $0x30] sm:$0xf]
      %v1179 = vld [vmem:[%s1165 + $0x34] sm:$0xf]
      %v1180 = vld [vmem:[%s1165 + $0x38] sm:$0xf]
      %v1181 = vld [vmem:[%s1165 + $0x3c] sm:$0xf]
      %v1182 = vld [vmem:[%s1165 + $0x40] sm:$0xf]
      %v1183 = vld [vmem:[%s1165 + $0x44] sm:$0xf]
      %v1184 = vld [vmem:[%s1165 + $0x48] sm:$0xf]
      %v1185 = vld [vmem:[%s1165 + $0x4c] sm:$0xf]
      %v1186 = vld [vmem:[%s1165 + $0x50] sm:$0xf]
      %v1187 = vld [vmem:[%s1165 + $0x54] sm:$0xf]
      %vm1188 = vcmask 1044480
      %v1189 = vrot.slane %v274, 3
      %v1190 = vrot.slane %v298, 3
      %v1191 = vsel %vm1188, %v1189, %v1190
      %v1192 = vrot.slane %v275, 3
      %v1193 = vrot.slane %v299, 3
      %v1194 = vsel %vm1188, %v1192, %v1193
      %v1218 = vunpack.c.l.b16 %v1166
      %v1219 = vunpack.c.l.b16 %v1167
      %v1220 = vunpack.c.l.b16 %v1168
      %v1221 = vunpack.c.l.b16 %v1169
      %v1222 = vunpack.c.l.b16 %v1170
      %v1223 = vunpack.c.l.b16 %v1171
      %v1224 = vunpack.c.l.b16 %v1172
      %v1225 = vunpack.c.l.b16 %v1173
      %v1226 = vunpack.c.l.b16 %v1174
      %v1227 = vunpack.c.l.b16 %v1175
      %v1228 = vunpack.c.l.b16 %v1176
      %v1229 = vunpack.c.l.b16 %v1177
      %v1230 = vunpack.c.l.b16 %v1178
      %v1231 = vunpack.c.l.b16 %v1179
      %v1232 = vunpack.c.l.b16 %v1180
      %v1233 = vunpack.c.l.b16 %v1181
      %v1234 = vunpack.c.l.b16 %v1182
      %v1235 = vunpack.c.l.b16 %v1183
      %v1236 = vunpack.c.l.b16 %v1184
      %v1237 = vunpack.c.l.b16 %v1185
      %v1238 = vunpack.c.l.b16 %v1186
      %v1239 = vunpack.c.l.b16 %v1187
      %v1240 = vpack.c.b16 %v1219, %v1218
      %v1241 = vpack.c.b16 %v1221, %v1220
      %v1242 = vpack.c.b16 %v1223, %v1222
      %v1243 = vpack.c.b16 %v1225, %v1224
      %v1244 = vpack.c.b16 %v1227, %v1226
      %v1245 = vpack.c.b16 %v1229, %v1228
      %v1246 = vpack.c.b16 %v1231, %v1230
      %v1247 = vpack.c.b16 %v1233, %v1232
      %v1248 = vpack.c.b16 %v1235, %v1234
      %v1249 = vpack.c.b16 %v1237, %v1236
      %v1250 = vpack.c.b16 %v1239, %v1238
      %v1263 = vsel %vm415, %v1194, 0
      %1265 = vmatprep.subr.bf16.mxu0 0
      %1266 = vmatpush1.bf16.msra.mxu0 %v1240
      %1267 = vmatprep.subr.bf16.mxu0 0
      %1268 = vmatpush1.bf16.msra.mxu0 %v1241
      %1269 = vmatprep.subr.bf16.mxu0 0
      %1270 = vmatpush1.bf16.msra.mxu0 %v1242
      %1271 = vmatprep.subr.bf16.mxu0 0
      %1272 = vmatpush1.bf16.msra.mxu0 %v1243
      %1273 = vmatprep.subr.bf16.mxu0 0
      %1274 = vmatpush1.bf16.msra.mxu0 %v1244
      %1275 = vmatprep.subr.bf16.mxu0 0
      %1276 = vmatpush1.bf16.msra.mxu0 %v1245
      %1277 = vmatprep.subr.bf16.mxu0 0
      %1278 = vmatpush1.bf16.msra.mxu0 %v1246
      %1279 = vmatprep.subr.bf16.mxu0 0
      %1280 = vmatpush1.bf16.msra.mxu0 %v1247
      %1281 = vmatprep.subr.bf16.mxu0 0
      %1282 = vmatpush1.bf16.msra.mxu0 %v1248
      %1283 = vmatprep.subr.bf16.mxu0 0
      %1284 = vmatpush1.bf16.msra.mxu0 %v1249
      %1285 = vmatprep.subr.bf16.mxu0 0
      %1286 = vmatpush1.bf16.msra.mxu0 %v1250
      %1287 = vmatprep.subr.bf16.mxu0 0
      %1288 = vmatpush1.bf16.msra.mxu0 0
      %1289 = vmatprep.subr.bf16.mxu0 0
      %1290 = vmatpush1.bf16.msra.mxu0 0
      %1291 = vmatprep.subr.bf16.mxu0 0
      %1292 = vmatpush1.bf16.msra.mxu0 0
      %1293 = vmatprep.subr.bf16.mxu0 0
      %1294 = vmatpush1.bf16.msra.mxu0 0
      %1295 = vmatprep.subr.bf16.mxu0 0
      %1296 = vmatpush1.bf16.msra.mxu0 0
      %1297 = vmatprep.mubr.bf16.mxu0 %v1263
      %1298 = vmatmul.mubr.bf16.gmra.mrb[0].mxu0 %v1191
      %v1299 = vpop.f32.mrb[0].mxu0
      %v1300 = vadd.f32 0.0, %v1299
      %v1301 = vpop.f32.mrb[0].mxu0
      %v1302 = vpop.f32.mrb[0].mxu0
      %v1303 = vadd.f32 0.0, %v1302
      %v1304 = vpop.f32.mrb[0].mxu0
      %1305 = vdwg.mxu0
      %v1306 = vadd.f32 %v1163, %v1300
      %v1307 = vadd.f32 %v1164, %v1303
      %v1308 = vld [vmem:[%s4] sm:$0x1]
      %v1310 = vlaneseq
      %v1311 = vshrl.u32 %v1310, 7
      %v1312 = vsub.s32 0, %v1311
      %v1313 = vrot.slane %v1308, %v1312
      %v1315 = vadd.f32 %v1306, %v1313
      %v1316 = vadd.f32 %v1307, %v1313
      %v1317 = vsub.f32 0.0, %v1315
      %v1318 = vsub.f32 0.0, %v1316
      %v1319 = vmul.f32 %v1317, 1.442695
      %v1320 = vpow.pop %v1319
      %v1321 = vmul.f32 %v1318, 1.442695
      %v1322 = vpow.pop %v1321
      %v1323 = vadd.f32 %v1320, 1.0
      %v1324 = vadd.f32 %v1322, 1.0
      %v1325 = vrcp.pop %v1323
      %v1326 = vrcp.pop %v1324
      %vm1327 = vcmask 523264
      %1328 = vst.msk [vmem:[%s224] sm:$0xff] %vm1327, %v1325
      %1329 = vst.msk [vmem:[%s224 + $0x8] sm:$0xff] %vm1327, %v1326
      %p1330 = scmp.lt.s32.totalorder %s16, 1
      %s1331 = scalar_select %p1330, %s16, 1
      %s1332 = smul.addr %s1331, 2
      %s1333 = smul.addr %s1332, 8
      %s1334 = scalar_lea.vmem %s5, %s1333
      // Predicated region
      $region41: #{generator_forward.31} parent=39 // pred_check
        %p1335 = pneg %p144
      $region42: #{generator_forward.31} parent=39 // pred_check_branch
        %1337 = sbr.rel (%p1335) target = $region44
      $region43: #{generator_forward.31} parent=39 // pred_region
        _
      $region44: #{generator_forward.31} parent=39 // pred_fallthru
        _
    $region40: #{generator_forward.31} parent=5 // pred_fallthru
      _
    %p1338 = scmp.le.s32.totalorder 2, %s11
    // Predicated region
    $region45: #{generator_forward.31} parent=5 // pred_check
      %p1339 = pneg %p1338
    $region46: #{generator_forward.31} parent=5 // pred_check_branch
      %1341 = sbr.rel (%p1339) target = $region48
    $region47: #{generator_forward.31} parent=5 // pred_region
      %s1342 = ssub.s32 %s11, 2
      // Predicated region
      $region49: #{generator_forward.31} parent=47 // pred_check
        %p1343 = pneg %p150
      $region50: #{generator_forward.31} parent=47 // pred_check_branch
        %1345 = sbr.rel (%p1343) target = $region52
      $region51: #{generator_forward.31} parent=47 // pred_region
        %p1346 = scmp.lt.s32.totalorder %s17, 1
        %s1347 = scalar_select %p1346, %s17, 1
        %s1348 = smul.addr %s1347, 2
        %s1349 = smul.addr %s1348, 8
        %s1350 = scalar_lea.vmem %s5, %s1349
      $region52: #{generator_forward.31} parent=47 // pred_fallthru
        _
    $region48: #{generator_forward.31} parent=5 // pred_fallthru
      _
  $region6: #{generator_forward.31} parent=0 // loop_footer
    %s15 = sadd.s32 1, %s11
  $region7: #{generator_forward.31} parent=0 // loop_footer_branch
    %10 = sbr.rel target = $region3
  $region8: #{generator_forward.31} parent=0 // loop_exit
    _

</llo_original>
